<compile_context>
chip_gen: v6e
topology: v6e:2x2x1
jax: 0.10.0
libtpu: 0.0.40
codegen_flags: <defaults>
</compile_context>

<pallas_src>
import functools

import jax
import jax.numpy as jnp
from jax.experimental import pallas as pl
from jax.experimental.pallas import tpu as pltpu


MXU_DTYPE = jnp.bfloat16   # matmul operand dtype (accumulation stays f32)
ACT_DTYPE = jnp.bfloat16   # inter-layer activation dtype in HBM


def _round_up(x, m):
    return (x + m - 1) // m * m


def _tpu_generation():
    try:
        kind = jax.devices()[0].device_kind.lower()
    except Exception:
        return 0
    if "v5 lite" in kind or "v5e" in kind or "v5lite" in kind:
        return 5
    if "v6" in kind:
        return 6
    if "v7" in kind:
        return 7
    return 0


_TPU_GEN = _tpu_generation()
if _TPU_GEN == 5:
    _TM_MAX, _TN_MAX, _TK_MAX = 512, 128, 512     # matches 4x128^2 MXU, 16 MiB scoped VMEM
else:
    _TM_MAX, _TN_MAX, _TK_MAX = 1024, 256, 512    # v6e / v7x / unknown


# ----------------------------------------------------------------------------
# Pallas kernels
# ----------------------------------------------------------------------------
def _matmul_bias_kernel(x_ref, w_ref, b_ref, o_ref, acc_ref, *, tk, tn, apply_lrelu):
    """Tiled out = x @ w (+ b) (+ LeakyReLU(0.2)).  K is the last grid axis.
    The weight ref holds the FULL (Kp, Cp) matrix resident in VMEM; the
    (tk, tn) tile is sliced in-kernel with aligned offsets."""
    j = pl.program_id(1)
    k = pl.program_id(2)

    @pl.when(k == 0)
    def _():
        acc_ref[...] = jnp.zeros_like(acc_ref)

    koff = pl.multiple_of(k * tk, tk)
    joff = pl.multiple_of(j * tn, tn)
    w_tile = w_ref[pl.ds(koff, tk), pl.ds(joff, tn)]
    acc_ref[...] += jnp.dot(x_ref[...], w_tile, preferred_element_type=jnp.float32)

    # bias + activation only on the final K step.
    @pl.when(k == pl.num_programs(2) - 1)
    def _():
        out = acc_ref[...] + b_ref[...]
        if apply_lrelu:
            out = jnp.where(out >= 0, out, 0.2 * out)
        o_ref[...] = out.astype(o_ref.dtype)


def _inorm_stats_kernel(x_ref, mean_ref, rstd_ref, *, inv_hw):
    """Accumulate per-(n, c) sum / sum-sq over HW tiles (reduction axis last),
    finalize to mean / rsqrt(var + eps) on the last step.  Stats in f32."""
    k = pl.program_id(2)

    @pl.when(k == 0)
    def _():
        mean_ref[...] = jnp.zeros_like(mean_ref)
        rstd_ref[...] = jnp.zeros_like(rstd_ref)

    x = x_ref[...].astype(jnp.float32)                       # (1, thw, tc)
    mean_ref[...] += jnp.sum(x, axis=1, keepdims=True)
    rstd_ref[...] += jnp.sum(x * x, axis=1, keepdims=True)

    @pl.when(k == pl.num_programs(2) - 1)
    def _():
        m = mean_ref[...] * inv_hw
        # One-pass variance in f32; clamp at 0 to guard against cancellation
        # turning var slightly negative for large-mean activations.
        var = jnp.maximum(rstd_ref[...] * inv_hw - m * m, 0.0)
        mean_ref[...] = m
        rstd_ref[...] = jax.lax.rsqrt(var + 1e-5)


def _inorm_apply_kernel(x_ref, mean_ref, rstd_ref, o_ref):
    """Normalize + LeakyReLU(0.2); stats in f32, output bf16."""
    x = x_ref[...].astype(jnp.float32)
    xn = (x - mean_ref[...]) * rstd_ref[...]
    o_ref[...] = jnp.where(xn >= 0, xn, 0.2 * xn).astype(o_ref.dtype)


# ----------------------------------------------------------------------------
# Pallas wrappers
# ----------------------------------------------------------------------------
def pallas_matmul_bias(x, w, b, *, apply_lrelu, out_dtype):
    """x: (M, K), w: (K, C), b: (1, C) -> (M, C) out_dtype.

    Pads M/K/C up to tile-friendly, lane-dense (multiple-of-128) sizes, runs a
    (M/tm, C/tn, K/tk) tiled bf16 MXU matmul with an f32 VMEM accumulator and
    a fully VMEM-resident weight, then slices the valid region back out.
    """
    M, K = x.shape
    _, C = w.shape

    tm = min(_TM_MAX, _round_up(M, 16))
    tk = min(_TK_MAX, _round_up(K, 128))
    tn = min(_TN_MAX, _round_up(C, 128))
    Mp, Kp, Cp = _round_up(M, tm), _round_up(K, tk), _round_up(C, tn)

    # cast BEFORE pad so padding runs on half-width data.
    xp = jnp.pad(x.astype(MXU_DTYPE), ((0, Mp - M), (0, Kp - K)))
    wp = jnp.pad(w.astype(MXU_DTYPE), ((0, Kp - K), (0, Cp - C)))
    bp = jnp.pad(b.astype(jnp.float32), ((0, 0), (0, Cp - C)))   # bias stays f32

    kernel = functools.partial(_matmul_bias_kernel, tk=tk, tn=tn,
                               apply_lrelu=apply_lrelu)
    out = pl.pallas_call(
        kernel,
        out_shape=jax.ShapeDtypeStruct((Mp, Cp), out_dtype),
        grid_spec=pltpu.PrefetchScalarGridSpec(
            num_scalar_prefetch=0,
            grid=(Mp // tm, Cp // tn, Kp // tk),
            in_specs=[
                pl.BlockSpec((tm, tk), lambda i, j, k: (i, k)),
                # full weight, constant index -> DMA'd once, resident in VMEM
                pl.BlockSpec((Kp, Cp), lambda i, j, k: (0, 0)),
                pl.BlockSpec((1, tn), lambda i, j, k: (0, j)),
            ],
            out_specs=pl.BlockSpec((tm, tn), lambda i, j, k: (i, j)),
            scratch_shapes=[pltpu.VMEM((tm, tn), jnp.float32)],
        ),
        compiler_params=pltpu.CompilerParams(
            dimension_semantics=("parallel", "parallel", "arbitrary")),
    )(xp, wp, bp)
    return out[:M, :C]


def _pick_hw_tile(hw, cap=2048):
    """Largest divisor of hw that is a multiple of 16 and <= cap (or hw if small)."""
    if hw <= cap:
        return hw
    t = cap - (cap % 16)
    while t >= 16:
        if hw % t == 0:
            return t
        t -= 16
    return hw  # fallback: full extent for odd sizes


def pallas_instance_norm_lrelu(x):
    """x: (N, HW, C) (bf16 or f32), C a multiple of 128 -> (N, HW, C) bf16.

    Two sweeps so VMEM use is image-size independent: (1) stats kernel with HW
    tiled on an 'arbitrary' reduction axis accumulating into resident f32
    (N,1,C) outputs, (2) all-parallel normalize + LeakyReLU to bf16.
    """
    N, HW, C = x.shape
    tc = min(C, 256)
    assert C % tc == 0
    thw = _pick_hw_tile(HW)
    grid = (N, C // tc, HW // thw)

    mean, rstd = pl.pallas_call(
        functools.partial(_inorm_stats_kernel, inv_hw=1.0 / HW),
        out_shape=(jax.ShapeDtypeStruct((N, 1, C), jnp.float32),
                   jax.ShapeDtypeStruct((N, 1, C), jnp.float32)),
        grid=grid,
        in_specs=[pl.BlockSpec((1, thw, tc), lambda n, c, k: (n, k, c))],
        out_specs=(pl.BlockSpec((1, 1, tc), lambda n, c, k: (n, 0, c)),
                   pl.BlockSpec((1, 1, tc), lambda n, c, k: (n, 0, c))),
        compiler_params=pltpu.CompilerParams(
            dimension_semantics=("parallel", "parallel", "arbitrary")),
    )(x)

    return pl.pallas_call(
        _inorm_apply_kernel,
        out_shape=jax.ShapeDtypeStruct((N, HW, C), ACT_DTYPE),
        grid=grid,
        in_specs=[pl.BlockSpec((1, thw, tc), lambda n, c, k: (n, k, c)),
                  pl.BlockSpec((1, 1, tc), lambda n, c, k: (n, 0, c)),
                  pl.BlockSpec((1, 1, tc), lambda n, c, k: (n, 0, c))],
        out_specs=pl.BlockSpec((1, thw, tc), lambda n, c, k: (n, k, c)),
        compiler_params=pltpu.CompilerParams(
            dimension_semantics=("parallel", "parallel", "parallel")),
    )(x, mean, rstd)


# ----------------------------------------------------------------------------
# Conv layer = im2col (glue) + Pallas tiled matmul (+ optional IN/LReLU kernels)
# ----------------------------------------------------------------------------
def _im2col(x, k, stride, pad):
    """x: (N, H, W, C) -> (N*Ho*Wo, k*k*C) with (ki, kj, cin) flattening."""
    x = jnp.pad(x, ((0, 0), pad[0], pad[1], (0, 0)))
    N, Hp, Wp, C = x.shape
    Ho = (Hp - k) // stride + 1
    Wo = (Wp - k) // stride + 1
    cols = []
    for i in range(k):
        for j in range(k):
            cols.append(
                x[:, i:i + (Ho - 1) * stride + 1:stride,
                     j:j + (Wo - 1) * stride + 1:stride, :]
            )
    p = jnp.stack(cols, axis=3)                  # (N, Ho, Wo, k*k, C)
    return p.reshape(N * Ho * Wo, k * k * C), Ho, Wo


def conv_layer(x_nhwc, w, b, *, stride, pad, norm, act, out_dtype):
    """PyTorch-equivalent Conv2d (OIHW weights) [+ InstanceNorm2d] [+ LeakyReLU]."""
    Cout, Cin, kh, kw = w.shape
    N = x_nhwc.shape[0]
    patches, Ho, Wo = _im2col(x_nhwc, kh, stride, pad)
    # weight (Cout, Cin, kh, kw) -> (kh*kw*Cin, Cout) matching im2col ordering
    w_mat = jnp.transpose(w, (2, 3, 1, 0)).reshape(kh * kw * Cin, Cout)
    b_vec = (b if b is not None else jnp.zeros((Cout,), jnp.float32)).reshape(1, Cout)
    y = pallas_matmul_bias(patches, w_mat, b_vec,
                           apply_lrelu=(act and not norm),
                           out_dtype=(ACT_DTYPE if norm else out_dtype))
    y = y.reshape(N, Ho * Wo, Cout)
    if norm:
        y = pallas_instance_norm_lrelu(y)        # fused LeakyReLU, bf16 out
    return y.reshape(N, Ho, Wo, Cout)


# ----------------------------------------------------------------------------
# Discriminator forward (matches the PyTorch module)
# ----------------------------------------------------------------------------
def discriminator_forward(params, img_A, img_B):
    # inputs are NCHW (PyTorch convention)
    x = jnp.concatenate([img_A, img_B], axis=1)                  # (N, 6, H, W)
    x = jnp.transpose(x, (0, 2, 3, 1)).astype(ACT_DTYPE)         # -> NHWC, bf16
    p11 = ((1, 1), (1, 1))
    x = conv_layer(x, params["w1"], params["b1"], stride=2, pad=p11,
                   norm=False, act=True, out_dtype=ACT_DTYPE)
    x = conv_layer(x, params["w2"], params["b2"], stride=2, pad=p11,
                   norm=True, act=True, out_dtype=ACT_DTYPE)
    x = conv_layer(x, params["w3"], params["b3"], stride=2, pad=p11,
                   norm=True, act=True, out_dtype=ACT_DTYPE)
    x = conv_layer(x, params["w4"], params["b4"], stride=2, pad=p11,
                   norm=True, act=True, out_dtype=ACT_DTYPE)
    # ZeroPad2d((1,0,1,0)) followed by Conv2d(512, 1, 4, padding=1, bias=False)
    # == single conv with asymmetric padding ((top=2,bottom=1),(left=2,right=1))
    x = conv_layer(x, params["w5"], None, stride=1, pad=((2, 1), (2, 1)),
                   norm=False, act=False, out_dtype=jnp.float32)
    return jnp.transpose(x, (0, 3, 1, 2))                        # -> NCHW, f32


# ----------------------------------------------------------------------------
# Pure-JAX f32 reference (for correctness check)
# ----------------------------------------------------------------------------
def _ref_forward(params, img_A, img_B):
    def conv(x, w, b, stride, pad):
        y = jax.lax.conv_general_dilated(
            x, w, (stride, stride), pad, dimension_numbers=("NCHW", "OIHW", "NCHW"))
        return y if b is None else y + b[None, :, None, None]

    def inorm(x):
        m = jnp.mean(x, axis=(2, 3), keepdims=True)
        v = jnp.mean((x - m) ** 2, axis=(2, 3), keepdims=True)
        return (x - m) / jnp.sqrt(v + 1e-5)

    lrelu = lambda t: jnp.where(t >= 0, t, 0.2 * t)
    x = jnp.concatenate([img_A, img_B], axis=1)
    p11 = ((1, 1), (1, 1))
    x = lrelu(conv(x, params["w1"], params["b1"], 2, p11))
    x = lrelu(inorm(conv(x, params["w2"], params["b2"], 2, p11)))
    x = lrelu(inorm(conv(x, params["w3"], params["b3"], 2, p11)))
    x = lrelu(inorm(conv(x, params["w4"], params["b4"], 2, p11)))
    x = conv(x, params["w5"], None, 1, ((2, 1), (2, 1)))
    return x


# ----------------------------------------------------------------------------
# Parameter init (deterministic, in-script)
# ----------------------------------------------------------------------------
def init_params(key):
    shapes = {
        "w1": (64, 6, 4, 4),    "b1": (64,),
        "w2": (128, 64, 4, 4),  "b2": (128,),
        "w3": (256, 128, 4, 4), "b3": (256,),
        "w4": (512, 256, 4, 4), "b4": (512,),
        "w5": (1, 512, 4, 4),
    }
    params = {}
    keys = jax.random.split(key, len(shapes))
    for (name, shape), k in zip(sorted(shapes.items()), keys):
        params[name] = 0.05 * jax.random.normal(k, shape, dtype=jnp.float32)
    return params


if __name__ == "__main__":
    key = jax.random.PRNGKey(0)
    kp, ka, kb = jax.random.split(key, 3)
    params = init_params(kp)

    # small but valid shapes: (N=2, C=3, H=W=32) -> output (2, 1, 2, 2)
    img_A = jax.random.normal(ka, (2, 3, 32, 32), dtype=jnp.float32)
    img_B = jax.random.normal(kb, (2, 3, 32, 32), dtype=jnp.float32)

    fwd = jax.jit(discriminator_forward)
    out = jax.block_until_ready(fwd(params, img_A, img_B))
    ref = jax.block_until_ready(_ref_forward(params, img_A, img_B))

    assert out.shape == (2, 1, 2, 2), out.shape
    # bf16 MXU inputs + bf16 inter-layer activations give ~1-3% relative error
    # vs the f32 reference; check against the output scale (a wiring bug would
    # produce errors on the order of the scale itself).
    err = float(jnp.max(jnp.abs(out.astype(jnp.float32) - ref)))
    scale = float(jnp.max(jnp.abs(ref)))
    assert err <= 0.1 * scale + 0.1, (err, scale)
    print("KERNEL_OK")
</pallas_src>

<mosaic_0001>
module attributes {stable_mosaic.version = 11 : i64} {
  func.func @_matmul_bias_kernel(%arg0: i32, %arg1: i32, %arg2: i32, %arg3: memref<512x128xbf16, #tpu.memory_space<vmem>>, %arg4: memref<128x128xbf16, #tpu.memory_space<vmem>>, %arg5: memref<1x128xf32, #tpu.memory_space<vmem>>, %arg6: memref<512x128xbf16, #tpu.memory_space<vmem>>, %arg7: memref<512x128xf32, #tpu.memory_space<vmem>>) attributes {dimension_semantics = [#tpu.dimension_semantics<parallel>, #tpu.dimension_semantics<parallel>, #tpu.dimension_semantics<arbitrary>], iteration_bounds = array<i64: 1, 1, 1>, scalar_prefetch = 0 : i64, scratch_operands = 1 : i64, tpu.core_type = #tpu.core_type<tc>, window_params = [{transform_indices = @transform_0, window_bounds = array<i64: 512, 128>}, {pipeline_mode = #tpu.pipeline_mode<synchronous>, transform_indices = @transform_1, window_bounds = array<i64: 128, 128>}, {transform_indices = @transform_2, window_bounds = array<i64: 1, 128>}, {transform_indices = @transform_3, window_bounds = array<i64: 512, 128>}]} {
    %c0_i32 = arith.constant 0 : i32
    %0 = arith.cmpi eq, %arg2, %c0_i32 : i32
    %1 = arith.extui %0 : i1 to i32
    %c0_i32_0 = arith.constant 0 : i32
    %2 = arith.cmpi ne, %1, %c0_i32_0 : i32
    scf.if %2 {
      %cst_9 = arith.constant 0.000000e+00 : f32
      %18 = vector.broadcast %cst_9 : f32 to vector<512x128xf32>
      %c0_10 = arith.constant 0 : index
      %c0_11 = arith.constant 0 : index
      %19 = vector.load %arg7[%c0_10, %c0_11] : memref<512x128xf32, #tpu.memory_space<vmem>>, vector<512x128xf32>
      tpu.vector_store %arg7[%c0_10, %c0_11], %18 {strides = array<i32>} : memref<512x128xf32, #tpu.memory_space<vmem>>, vector<512x128xf32>,
    } else {
    }
    %c128_i32 = arith.constant 128 : i32
    %3 = arith.muli %arg2, %c128_i32 : i32
    %4 = tpu.assume_multiple %3, 128 : i32
    %c128_i32_1 = arith.constant 128 : i32
    %5 = arith.muli %arg1, %c128_i32_1 : i32
    %6 = tpu.assume_multiple %5, 128 : i32
    %7 = arith.index_cast %4 : i32 to index
    %8 = arith.index_cast %6 : i32 to index
    %9 = vector.load %arg4[%7, %8] : memref<128x128xbf16, #tpu.memory_space<vmem>>, vector<128x128xbf16>
    %c0 = arith.constant 0 : index
    %c0_2 = arith.constant 0 : index
    %10 = vector.load %arg7[%c0, %c0_2] : memref<512x128xf32, #tpu.memory_space<vmem>>, vector<512x128xf32>
    %c0_3 = arith.constant 0 : index
    %c0_4 = arith.constant 0 : index
    %11 = vector.load %arg3[%c0_3, %c0_4] : memref<512x128xbf16, #tpu.memory_space<vmem>>, vector<512x128xbf16>
    %cst = arith.constant dense<0.000000e+00> : vector<512x128xf32>
    %12 = tpu.matmul %11, %9, %cst {dimension_numbers = #tpu.dot_dimension_numbers<[1], [0], [0], [1], [0, 0, 1, 1], [], []>} : vector<512x128xbf16>, vector<128x128xbf16>, vector<512x128xf32> -> vector<512x128xf32>
    %13 = arith.addf %10, %12 : vector<512x128xf32>
    %c0_5 = arith.constant 0 : index
    %c0_6 = arith.constant 0 : index
    %14 = vector.load %arg7[%c0_5, %c0_6] : memref<512x128xf32, #tpu.memory_space<vmem>>, vector<512x128xf32>
    tpu.vector_store %arg7[%c0_5, %c0_6], %13 {strides = array<i32>} : memref<512x128xf32, #tpu.memory_space<vmem>>, vector<512x128xf32>,
    %c0_i32_7 = arith.constant 0 : i32
    %15 = arith.cmpi eq, %arg2, %c0_i32_7 : i32
    %16 = arith.extui %15 : i1 to i32
    %c0_i32_8 = arith.constant 0 : i32
    %17 = arith.cmpi ne, %16, %c0_i32_8 : i32
    scf.if %17 {
      %c0_9 = arith.constant 0 : index
      %c0_10 = arith.constant 0 : index
      %18 = vector.load %arg7[%c0_9, %c0_10] : memref<512x128xf32, #tpu.memory_space<vmem>>, vector<512x128xf32>
      %c0_11 = arith.constant 0 : index
      %c0_12 = arith.constant 0 : index
      %19 = vector.load %arg5[%c0_11, %c0_12] : memref<1x128xf32, #tpu.memory_space<vmem>>, vector<1x128xf32>
      %20 = vector.broadcast %19 : vector<1x128xf32> to vector<512x128xf32>
      %21 = arith.addf %18, %20 : vector<512x128xf32>
      %cst_13 = arith.constant 0.000000e+00 : f32
      %22 = vector.broadcast %cst_13 : f32 to vector<512x128xf32>
      %23 = arith.cmpf oge, %21, %22 : vector<512x128xf32>
      %cst_14 = arith.constant 2.000000e-01 : f32
      %24 = vector.broadcast %cst_14 : f32 to vector<512x128xf32>
      %25 = arith.mulf %24, %21 : vector<512x128xf32>
      %26 = arith.select %23, %21, %25 : vector<512x128xi1>, vector<512x128xf32>
      %27 = arith.truncf %26 : vector<512x128xf32> to vector<512x128xbf16>
      %c0_15 = arith.constant 0 : index
      %c0_16 = arith.constant 0 : index
      %28 = vector.load %arg6[%c0_15, %c0_16] : memref<512x128xbf16, #tpu.memory_space<vmem>>, vector<512x128xbf16>
      tpu.vector_store %arg6[%c0_15, %c0_16], %27 {strides = array<i32>} : memref<512x128xbf16, #tpu.memory_space<vmem>>, vector<512x128xbf16>,
    } else {
    }
    return
  }
  func.func @transform_0(%arg0: i32, %arg1: i32, %arg2: i32) -> (i32, i32) {
    %c0_i32 = arith.constant 0 : i32
    return %arg0, %arg2 : i32, i32
  }
  func.func @transform_1(%arg0: i32, %arg1: i32, %arg2: i32) -> (i32, i32) {
    %c0_i32 = arith.constant 0 : i32
    %c0_i32_0 = arith.constant 0 : i32
    %c0_i32_1 = arith.constant 0 : i32
    return %c0_i32, %c0_i32_0 : i32, i32
  }
  func.func @transform_2(%arg0: i32, %arg1: i32, %arg2: i32) -> (i32, i32) {
    %c0_i32 = arith.constant 0 : i32
    %c0_i32_0 = arith.constant 0 : i32
    return %c0_i32, %arg1 : i32, i32
  }
  func.func @transform_3(%arg0: i32, %arg1: i32, %arg2: i32) -> (i32, i32) {
    %c0_i32 = arith.constant 0 : i32
    return %arg0, %arg1 : i32, i32
  }
}

module attributes {stable_mosaic.version = 11 : i64} {
  func.func @_matmul_bias_kernel(%arg0: i32, %arg1: i32, %arg2: i32, %arg3: memref<128x512xbf16, #tpu.memory_space<vmem>>, %arg4: memref<1024x128xbf16, #tpu.memory_space<vmem>>, %arg5: memref<1x128xf32, #tpu.memory_space<vmem>>, %arg6: memref<128x128xbf16, #tpu.memory_space<vmem>>, %arg7: memref<128x128xf32, #tpu.memory_space<vmem>>) attributes {dimension_semantics = [#tpu.dimension_semantics<parallel>, #tpu.dimension_semantics<parallel>, #tpu.dimension_semantics<arbitrary>], iteration_bounds = array<i64: 1, 1, 2>, scalar_prefetch = 0 : i64, scratch_operands = 1 : i64, tpu.core_type = #tpu.core_type<tc>, window_params = [{transform_indices = @transform_0, window_bounds = array<i64: 128, 512>}, {pipeline_mode = #tpu.pipeline_mode<synchronous>, transform_indices = @transform_1, window_bounds = array<i64: 1024, 128>}, {transform_indices = @transform_2, window_bounds = array<i64: 1, 128>}, {transform_indices = @transform_3, window_bounds = array<i64: 128, 128>}]} {
    %c0_i32 = arith.constant 0 : i32
    %0 = arith.cmpi eq, %arg2, %c0_i32 : i32
    %1 = arith.extui %0 : i1 to i32
    %c0_i32_0 = arith.constant 0 : i32
    %2 = arith.cmpi ne, %1, %c0_i32_0 : i32
    scf.if %2 {
      %cst_7 = arith.constant 0.000000e+00 : f32
      %18 = vector.broadcast %cst_7 : f32 to vector<128x128xf32>
      %c0_8 = arith.constant 0 : index
      %c0_9 = arith.constant 0 : index
      %19 = vector.load %arg7[%c0_8, %c0_9] : memref<128x128xf32, #tpu.memory_space<vmem>>, vector<128x128xf32>
      tpu.vector_store %arg7[%c0_8, %c0_9], %18 {strides = array<i32>} : memref<128x128xf32, #tpu.memory_space<vmem>>, vector<128x128xf32>,
    } else {
    }
    %c512_i32 = arith.constant 512 : i32
    %3 = arith.muli %arg2, %c512_i32 : i32
    %4 = tpu.assume_multiple %3, 512 : i32
    %c128_i32 = arith.constant 128 : i32
    %5 = arith.muli %arg1, %c128_i32 : i32
    %6 = tpu.assume_multiple %5, 128 : i32
    %7 = arith.index_cast %4 : i32 to index
    %8 = arith.index_cast %6 : i32 to index
    %9 = vector.load %arg4[%7, %8] : memref<1024x128xbf16, #tpu.memory_space<vmem>>, vector<512x128xbf16>
    %c0 = arith.constant 0 : index
    %c0_1 = arith.constant 0 : index
    %10 = vector.load %arg7[%c0, %c0_1] : memref<128x128xf32, #tpu.memory_space<vmem>>, vector<128x128xf32>
    %c0_2 = arith.constant 0 : index
    %c0_3 = arith.constant 0 : index
    %11 = vector.load %arg3[%c0_2, %c0_3] : memref<128x512xbf16, #tpu.memory_space<vmem>>, vector<128x512xbf16>
    %cst = arith.constant dense<0.000000e+00> : vector<128x128xf32>
    %12 = tpu.matmul %11, %9, %cst {dimension_numbers = #tpu.dot_dimension_numbers<[1], [0], [0], [1], [0, 0, 1, 1], [], []>} : vector<128x512xbf16>, vector<512x128xbf16>, vector<128x128xf32> -> vector<128x128xf32>
    %13 = arith.addf %10, %12 : vector<128x128xf32>
    %c0_4 = arith.constant 0 : index
    %c0_5 = arith.constant 0 : index
    %14 = vector.load %arg7[%c0_4, %c0_5] : memref<128x128xf32, #tpu.memory_space<vmem>>, vector<128x128xf32>
    tpu.vector_store %arg7[%c0_4, %c0_5], %13 {strides = array<i32>} : memref<128x128xf32, #tpu.memory_space<vmem>>, vector<128x128xf32>,
    %c1_i32 = arith.constant 1 : i32
    %15 = arith.cmpi eq, %arg2, %c1_i32 : i32
    %16 = arith.extui %15 : i1 to i32
    %c0_i32_6 = arith.constant 0 : i32
    %17 = arith.cmpi ne, %16, %c0_i32_6 : i32
    scf.if %17 {
      %c0_7 = arith.constant 0 : index
      %c0_8 = arith.constant 0 : index
      %18 = vector.load %arg7[%c0_7, %c0_8] : memref<128x128xf32, #tpu.memory_space<vmem>>, vector<128x128xf32>
      %c0_9 = arith.constant 0 : index
      %c0_10 = arith.constant 0 : index
      %19 = vector.load %arg5[%c0_9, %c0_10] : memref<1x128xf32, #tpu.memory_space<vmem>>, vector<1x128xf32>
      %20 = vector.broadcast %19 : vector<1x128xf32> to vector<128x128xf32>
      %21 = arith.addf %18, %20 : vector<128x128xf32>
      %22 = arith.truncf %21 : vector<128x128xf32> to vector<128x128xbf16>
      %c0_11 = arith.constant 0 : index
      %c0_12 = arith.constant 0 : index
      %23 = vector.load %arg6[%c0_11, %c0_12] : memref<128x128xbf16, #tpu.memory_space<vmem>>, vector<128x128xbf16>
      tpu.vector_store %arg6[%c0_11, %c0_12], %22 {strides = array<i32>} : memref<128x128xbf16, #tpu.memory_space<vmem>>, vector<128x128xbf16>,
    } else {
    }
    return
  }
  func.func @transform_0(%arg0: i32, %arg1: i32, %arg2: i32) -> (i32, i32) {
    %c0_i32 = arith.constant 0 : i32
    return %arg0, %arg2 : i32, i32
  }
  func.func @transform_1(%arg0: i32, %arg1: i32, %arg2: i32) -> (i32, i32) {
    %c0_i32 = arith.constant 0 : i32
    %c0_i32_0 = arith.constant 0 : i32
    %c0_i32_1 = arith.constant 0 : i32
    return %c0_i32, %c0_i32_0 : i32, i32
  }
  func.func @transform_2(%arg0: i32, %arg1: i32, %arg2: i32) -> (i32, i32) {
    %c0_i32 = arith.constant 0 : i32
    %c0_i32_0 = arith.constant 0 : i32
    return %c0_i32, %arg1 : i32, i32
  }
  func.func @transform_3(%arg0: i32, %arg1: i32, %arg2: i32) -> (i32, i32) {
    %c0_i32 = arith.constant 0 : i32
    return %arg0, %arg1 : i32, i32
  }
}

module attributes {stable_mosaic.version = 11 : i64} {
  func.func @_inorm_stats_kernel(%arg0: i32, %arg1: i32, %arg2: i32, %arg3: memref<1x64x128xbf16, #tpu.memory_space<vmem>>, %arg4: memref<1x1x128xf32, #tpu.memory_space<vmem>>, %arg5: memref<1x1x128xf32, #tpu.memory_space<vmem>>) attributes {dimension_semantics = [#tpu.dimension_semantics<parallel>, #tpu.dimension_semantics<parallel>, #tpu.dimension_semantics<arbitrary>], iteration_bounds = array<i64: 2, 1, 1>, scalar_prefetch = 0 : i64, scratch_operands = 0 : i64, tpu.core_type = #tpu.core_type<tc>, window_params = [{transform_indices = @transform_0, window_bounds = array<i64: 1, 64, 128>}, {transform_indices = @transform_1, window_bounds = array<i64: 1, 1, 128>}, {transform_indices = @transform_2, window_bounds = array<i64: 1, 1, 128>}]} {
    %c0_i32 = arith.constant 0 : i32
    %0 = arith.cmpi eq, %arg2, %c0_i32 : i32
    %1 = arith.extui %0 : i1 to i32
    %c0_i32_0 = arith.constant 0 : i32
    %2 = arith.cmpi ne, %1, %c0_i32_0 : i32
    scf.if %2 {
      %cst_18 = arith.constant 0.000000e+00 : f32
      %19 = vector.broadcast %cst_18 : f32 to vector<1x1x128xf32>
      %c0_19 = arith.constant 0 : index
      %c0_20 = arith.constant 0 : index
      %c0_21 = arith.constant 0 : index
      %20 = vector.load %arg4[%c0_19, %c0_20, %c0_21] : memref<1x1x128xf32, #tpu.memory_space<vmem>>, vector<1x1x128xf32>
      tpu.vector_store %arg4[%c0_19, %c0_20, %c0_21], %19 {strides = array<i32>} : memref<1x1x128xf32, #tpu.memory_space<vmem>>, vector<1x1x128xf32>,
      %cst_22 = arith.constant 0.000000e+00 : f32
      %21 = vector.broadcast %cst_22 : f32 to vector<1x1x128xf32>
      %c0_23 = arith.constant 0 : index
      %c0_24 = arith.constant 0 : index
      %c0_25 = arith.constant 0 : index
      %22 = vector.load %arg5[%c0_23, %c0_24, %c0_25] : memref<1x1x128xf32, #tpu.memory_space<vmem>>, vector<1x1x128xf32>
      tpu.vector_store %arg5[%c0_23, %c0_24, %c0_25], %21 {strides = array<i32>} : memref<1x1x128xf32, #tpu.memory_space<vmem>>, vector<1x1x128xf32>,
    } else {
    }
    %c0 = arith.constant 0 : index
    %c0_1 = arith.constant 0 : index
    %c0_2 = arith.constant 0 : index
    %3 = vector.load %arg3[%c0, %c0_1, %c0_2] : memref<1x64x128xbf16, #tpu.memory_space<vmem>>, vector<1x64x128xbf16>
    %4 = arith.extf %3 : vector<1x64x128xbf16> to vector<1x64x128xf32>
    %c0_3 = arith.constant 0 : index
    %c0_4 = arith.constant 0 : index
    %c0_5 = arith.constant 0 : index
    %5 = vector.load %arg4[%c0_3, %c0_4, %c0_5] : memref<1x1x128xf32, #tpu.memory_space<vmem>>, vector<1x1x128xf32>
    %cst = arith.constant dense<0.000000e+00> : vector<1x128xf32>
    %6 = vector.multi_reduction <add>, %4, %cst [1] : vector<1x64x128xf32> to vector<1x128xf32>
    %7 = vector.shape_cast %6 : vector<1x128xf32> to vector<1x1x128xf32>
    %8 = arith.addf %5, %7 : vector<1x1x128xf32>
    %c0_6 = arith.constant 0 : index
    %c0_7 = arith.constant 0 : index
    %c0_8 = arith.constant 0 : index
    %9 = vector.load %arg4[%c0_6, %c0_7, %c0_8] : memref<1x1x128xf32, #tpu.memory_space<vmem>>, vector<1x1x128xf32>
    tpu.vector_store %arg4[%c0_6, %c0_7, %c0_8], %8 {strides = array<i32>} : memref<1x1x128xf32, #tpu.memory_space<vmem>>, vector<1x1x128xf32>,
    %c0_9 = arith.constant 0 : index
    %c0_10 = arith.constant 0 : index
    %c0_11 = arith.constant 0 : index
    %10 = vector.load %arg5[%c0_9, %c0_10, %c0_11] : memref<1x1x128xf32, #tpu.memory_space<vmem>>, vector<1x1x128xf32>
    %11 = arith.mulf %4, %4 : vector<1x64x128xf32>
    %cst_12 = arith.constant dense<0.000000e+00> : vector<1x128xf32>
    %12 = vector.multi_reduction <add>, %11, %cst_12 [1] : vector<1x64x128xf32> to vector<1x128xf32>
    %13 = vector.shape_cast %12 : vector<1x128xf32> to vector<1x1x128xf32>
    %14 = arith.addf %10, %13 : vector<1x1x128xf32>
    %c0_13 = arith.constant 0 : index
    %c0_14 = arith.constant 0 : index
    %c0_15 = arith.constant 0 : index
    %15 = vector.load %arg5[%c0_13, %c0_14, %c0_15] : memref<1x1x128xf32, #tpu.memory_space<vmem>>, vector<1x1x128xf32>
    tpu.vector_store %arg5[%c0_13, %c0_14, %c0_15], %14 {strides = array<i32>} : memref<1x1x128xf32, #tpu.memory_space<vmem>>, vector<1x1x128xf32>,
    %c0_i32_16 = arith.constant 0 : i32
    %16 = arith.cmpi eq, %arg2, %c0_i32_16 : i32
    %17 = arith.extui %16 : i1 to i32
    %c0_i32_17 = arith.constant 0 : i32
    %18 = arith.cmpi ne, %17, %c0_i32_17 : i32
    scf.if %18 {
      %c0_18 = arith.constant 0 : index
      %c0_19 = arith.constant 0 : index
      %c0_20 = arith.constant 0 : index
      %19 = vector.load %arg4[%c0_18, %c0_19, %c0_20] : memref<1x1x128xf32, #tpu.memory_space<vmem>>, vector<1x1x128xf32>
      %cst_21 = arith.constant 1.562500e-02 : f32
      %20 = vector.broadcast %cst_21 : f32 to vector<1x1x128xf32>
      %21 = arith.mulf %19, %20 : vector<1x1x128xf32>
      %c0_22 = arith.constant 0 : index
      %c0_23 = arith.constant 0 : index
      %c0_24 = arith.constant 0 : index
      %22 = vector.load %arg5[%c0_22, %c0_23, %c0_24] : memref<1x1x128xf32, #tpu.memory_space<vmem>>, vector<1x1x128xf32>
      %cst_25 = arith.constant 1.562500e-02 : f32
      %23 = vector.broadcast %cst_25 : f32 to vector<1x1x128xf32>
      %24 = arith.mulf %22, %23 : vector<1x1x128xf32>
      %25 = arith.mulf %21, %21 : vector<1x1x128xf32>
      %26 = arith.subf %24, %25 : vector<1x1x128xf32>
      %cst_26 = arith.constant 0.000000e+00 : f32
      %27 = vector.broadcast %cst_26 : f32 to vector<1x1x128xf32>
      %28 = arith.maximumf %26, %27 : vector<1x1x128xf32>
      %c0_27 = arith.constant 0 : index
      %c0_28 = arith.constant 0 : index
      %c0_29 = arith.constant 0 : index
      %29 = vector.load %arg4[%c0_27, %c0_28, %c0_29] : memref<1x1x128xf32, #tpu.memory_space<vmem>>, vector<1x1x128xf32>
      tpu.vector_store %arg4[%c0_27, %c0_28, %c0_29], %21 {strides = array<i32>} : memref<1x1x128xf32, #tpu.memory_space<vmem>>, vector<1x1x128xf32>,
      %cst_30 = arith.constant 9.99999974E-6 : f32
      %30 = vector.broadcast %cst_30 : f32 to vector<1x1x128xf32>
      %31 = arith.addf %28, %30 : vector<1x1x128xf32>
      %32 = math.rsqrt %31 : vector<1x1x128xf32>
      %c0_31 = arith.constant 0 : index
      %c0_32 = arith.constant 0 : index
      %c0_33 = arith.constant 0 : index
      %33 = vector.load %arg5[%c0_31, %c0_32, %c0_33] : memref<1x1x128xf32, #tpu.memory_space<vmem>>, vector<1x1x128xf32>
      tpu.vector_store %arg5[%c0_31, %c0_32, %c0_33], %32 {strides = array<i32>} : memref<1x1x128xf32, #tpu.memory_space<vmem>>, vector<1x1x128xf32>,
    } else {
    }
    return
  }
  func.func @transform_0(%arg0: i32, %arg1: i32, %arg2: i32) -> (i32, i32, i32) {
    %c0_i32 = arith.constant 0 : i32
    return %arg0, %arg2, %arg1 : i32, i32, i32
  }
  func.func @transform_1(%arg0: i32, %arg1: i32, %arg2: i32) -> (i32, i32, i32) {
    %c0_i32 = arith.constant 0 : i32
    %c0_i32_0 = arith.constant 0 : i32
    return %arg0, %c0_i32, %arg1 : i32, i32, i32
  }
  func.func @transform_2(%arg0: i32, %arg1: i32, %arg2: i32) -> (i32, i32, i32) {
    %c0_i32 = arith.constant 0 : i32
    %c0_i32_0 = arith.constant 0 : i32
    return %arg0, %c0_i32, %arg1 : i32, i32, i32
  }
}

module attributes {stable_mosaic.version = 11 : i64} {
  func.func @_inorm_apply_kernel(%arg0: i32, %arg1: i32, %arg2: i32, %arg3: memref<1x64x128xbf16, #tpu.memory_space<vmem>>, %arg4: memref<1x1x128xf32, #tpu.memory_space<vmem>>, %arg5: memref<1x1x128xf32, #tpu.memory_space<vmem>>, %arg6: memref<1x64x128xbf16, #tpu.memory_space<vmem>>) attributes {dimension_semantics = [#tpu.dimension_semantics<parallel>, #tpu.dimension_semantics<parallel>, #tpu.dimension_semantics<parallel>], iteration_bounds = array<i64: 2, 1, 1>, scalar_prefetch = 0 : i64, scratch_operands = 0 : i64, tpu.core_type = #tpu.core_type<tc>, window_params = [{transform_indices = @transform_0, window_bounds = array<i64: 1, 64, 128>}, {transform_indices = @transform_1, window_bounds = array<i64: 1, 1, 128>}, {transform_indices = @transform_2, window_bounds = array<i64: 1, 1, 128>}, {transform_indices = @transform_3, window_bounds = array<i64: 1, 64, 128>}]} {
    %c0 = arith.constant 0 : index
    %c0_0 = arith.constant 0 : index
    %c0_1 = arith.constant 0 : index
    %0 = vector.load %arg3[%c0, %c0_0, %c0_1] : memref<1x64x128xbf16, #tpu.memory_space<vmem>>, vector<1x64x128xbf16>
    %1 = arith.extf %0 : vector<1x64x128xbf16> to vector<1x64x128xf32>
    %c0_2 = arith.constant 0 : index
    %c0_3 = arith.constant 0 : index
    %c0_4 = arith.constant 0 : index
    %2 = vector.load %arg4[%c0_2, %c0_3, %c0_4] : memref<1x1x128xf32, #tpu.memory_space<vmem>>, vector<1x1x128xf32>
    %3 = vector.broadcast %2 : vector<1x1x128xf32> to vector<1x64x128xf32>
    %4 = arith.subf %1, %3 : vector<1x64x128xf32>
    %c0_5 = arith.constant 0 : index
    %c0_6 = arith.constant 0 : index
    %c0_7 = arith.constant 0 : index
    %5 = vector.load %arg5[%c0_5, %c0_6, %c0_7] : memref<1x1x128xf32, #tpu.memory_space<vmem>>, vector<1x1x128xf32>
    %6 = vector.broadcast %5 : vector<1x1x128xf32> to vector<1x64x128xf32>
    %7 = arith.mulf %4, %6 : vector<1x64x128xf32>
    %cst = arith.constant 0.000000e+00 : f32
    %8 = vector.broadcast %cst : f32 to vector<1x64x128xf32>
    %9 = arith.cmpf oge, %7, %8 : vector<1x64x128xf32>
    %cst_8 = arith.constant 2.000000e-01 : f32
    %10 = vector.broadcast %cst_8 : f32 to vector<1x64x128xf32>
    %11 = arith.mulf %10, %7 : vector<1x64x128xf32>
    %12 = arith.select %9, %7, %11 : vector<1x64x128xi1>, vector<1x64x128xf32>
    %13 = arith.truncf %12 : vector<1x64x128xf32> to vector<1x64x128xbf16>
    %c0_9 = arith.constant 0 : index
    %c0_10 = arith.constant 0 : index
    %c0_11 = arith.constant 0 : index
    %14 = vector.load %arg6[%c0_9, %c0_10, %c0_11] : memref<1x64x128xbf16, #tpu.memory_space<vmem>>, vector<1x64x128xbf16>
    tpu.vector_store %arg6[%c0_9, %c0_10, %c0_11], %13 {strides = array<i32>} : memref<1x64x128xbf16, #tpu.memory_space<vmem>>, vector<1x64x128xbf16>,
    return
  }
  func.func @transform_0(%arg0: i32, %arg1: i32, %arg2: i32) -> (i32, i32, i32) {
    %c0_i32 = arith.constant 0 : i32
    return %arg0, %arg2, %arg1 : i32, i32, i32
  }
  func.func @transform_1(%arg0: i32, %arg1: i32, %arg2: i32) -> (i32, i32, i32) {
    %c0_i32 = arith.constant 0 : i32
    %c0_i32_0 = arith.constant 0 : i32
    return %arg0, %c0_i32, %arg1 : i32, i32, i32
  }
  func.func @transform_2(%arg0: i32, %arg1: i32, %arg2: i32) -> (i32, i32, i32) {
    %c0_i32 = arith.constant 0 : i32
    %c0_i32_0 = arith.constant 0 : i32
    return %arg0, %c0_i32, %arg1 : i32, i32, i32
  }
  func.func @transform_3(%arg0: i32, %arg1: i32, %arg2: i32) -> (i32, i32, i32) {
    %c0_i32 = arith.constant 0 : i32
    return %arg0, %arg2, %arg1 : i32, i32, i32
  }
}

module attributes {stable_mosaic.version = 11 : i64} {
  func.func @_matmul_bias_kernel(%arg0: i32, %arg1: i32, %arg2: i32, %arg3: memref<32x512xbf16, #tpu.memory_space<vmem>>, %arg4: memref<2048x256xbf16, #tpu.memory_space<vmem>>, %arg5: memref<1x256xf32, #tpu.memory_space<vmem>>, %arg6: memref<32x256xbf16, #tpu.memory_space<vmem>>, %arg7: memref<32x256xf32, #tpu.memory_space<vmem>>) attributes {dimension_semantics = [#tpu.dimension_semantics<parallel>, #tpu.dimension_semantics<parallel>, #tpu.dimension_semantics<arbitrary>], iteration_bounds = array<i64: 1, 1, 4>, scalar_prefetch = 0 : i64, scratch_operands = 1 : i64, tpu.core_type = #tpu.core_type<tc>, window_params = [{transform_indices = @transform_0, window_bounds = array<i64: 32, 512>}, {pipeline_mode = #tpu.pipeline_mode<synchronous>, transform_indices = @transform_1, window_bounds = array<i64: 2048, 256>}, {transform_indices = @transform_2, window_bounds = array<i64: 1, 256>}, {transform_indices = @transform_3, window_bounds = array<i64: 32, 256>}]} {
    %c0_i32 = arith.constant 0 : i32
    %0 = arith.cmpi eq, %arg2, %c0_i32 : i32
    %1 = arith.extui %0 : i1 to i32
    %c0_i32_0 = arith.constant 0 : i32
    %2 = arith.cmpi ne, %1, %c0_i32_0 : i32
    scf.if %2 {
      %cst_7 = arith.constant 0.000000e+00 : f32
      %18 = vector.broadcast %cst_7 : f32 to vector<32x256xf32>
      %c0_8 = arith.constant 0 : index
      %c0_9 = arith.constant 0 : index
      %19 = vector.load %arg7[%c0_8, %c0_9] : memref<32x256xf32, #tpu.memory_space<vmem>>, vector<32x256xf32>
      tpu.vector_store %arg7[%c0_8, %c0_9], %18 {strides = array<i32>} : memref<32x256xf32, #tpu.memory_space<vmem>>, vector<32x256xf32>,
    } else {
    }
    %c512_i32 = arith.constant 512 : i32
    %3 = arith.muli %arg2, %c512_i32 : i32
    %4 = tpu.assume_multiple %3, 512 : i32
    %c256_i32 = arith.constant 256 : i32
    %5 = arith.muli %arg1, %c256_i32 : i32
    %6 = tpu.assume_multiple %5, 256 : i32
    %7 = arith.index_cast %4 : i32 to index
    %8 = arith.index_cast %6 : i32 to index
    %9 = vector.load %arg4[%7, %8] : memref<2048x256xbf16, #tpu.memory_space<vmem>>, vector<512x256xbf16>
    %c0 = arith.constant 0 : index
    %c0_1 = arith.constant 0 : index
    %10 = vector.load %arg7[%c0, %c0_1] : memref<32x256xf32, #tpu.memory_space<vmem>>, vector<32x256xf32>
    %c0_2 = arith.constant 0 : index
    %c0_3 = arith.constant 0 : index
    %11 = vector.load %arg3[%c0_2, %c0_3] : memref<32x512xbf16, #tpu.memory_space<vmem>>, vector<32x512xbf16>
    %cst = arith.constant dense<0.000000e+00> : vector<32x256xf32>
    %12 = tpu.matmul %11, %9, %cst {dimension_numbers = #tpu.dot_dimension_numbers<[1], [0], [0], [1], [0, 0, 1, 1], [], []>} : vector<32x512xbf16>, vector<512x256xbf16>, vector<32x256xf32> -> vector<32x256xf32>
    %13 = arith.addf %10, %12 : vector<32x256xf32>
    %c0_4 = arith.constant 0 : index
    %c0_5 = arith.constant 0 : index
    %14 = vector.load %arg7[%c0_4, %c0_5] : memref<32x256xf32, #tpu.memory_space<vmem>>, vector<32x256xf32>
    tpu.vector_store %arg7[%c0_4, %c0_5], %13 {strides = array<i32>} : memref<32x256xf32, #tpu.memory_space<vmem>>, vector<32x256xf32>,
    %c3_i32 = arith.constant 3 : i32
    %15 = arith.cmpi eq, %arg2, %c3_i32 : i32
    %16 = arith.extui %15 : i1 to i32
    %c0_i32_6 = arith.constant 0 : i32
    %17 = arith.cmpi ne, %16, %c0_i32_6 : i32
    scf.if %17 {
      %c0_7 = arith.constant 0 : index
      %c0_8 = arith.constant 0 : index
      %18 = vector.load %arg7[%c0_7, %c0_8] : memref<32x256xf32, #tpu.memory_space<vmem>>, vector<32x256xf32>
      %c0_9 = arith.constant 0 : index
      %c0_10 = arith.constant 0 : index
      %19 = vector.load %arg5[%c0_9, %c0_10] : memref<1x256xf32, #tpu.memory_space<vmem>>, vector<1x256xf32>
      %20 = vector.broadcast %19 : vector<1x256xf32> to vector<32x256xf32>
      %21 = arith.addf %18, %20 : vector<32x256xf32>
      %22 = arith.truncf %21 : vector<32x256xf32> to vector<32x256xbf16>
      %c0_11 = arith.constant 0 : index
      %c0_12 = arith.constant 0 : index
      %23 = vector.load %arg6[%c0_11, %c0_12] : memref<32x256xbf16, #tpu.memory_space<vmem>>, vector<32x256xbf16>
      tpu.vector_store %arg6[%c0_11, %c0_12], %22 {strides = array<i32>} : memref<32x256xbf16, #tpu.memory_space<vmem>>, vector<32x256xbf16>,
    } else {
    }
    return
  }
  func.func @transform_0(%arg0: i32, %arg1: i32, %arg2: i32) -> (i32, i32) {
    %c0_i32 = arith.constant 0 : i32
    return %arg0, %arg2 : i32, i32
  }
  func.func @transform_1(%arg0: i32, %arg1: i32, %arg2: i32) -> (i32, i32) {
    %c0_i32 = arith.constant 0 : i32
    %c0_i32_0 = arith.constant 0 : i32
    %c0_i32_1 = arith.constant 0 : i32
    return %c0_i32, %c0_i32_0 : i32, i32
  }
  func.func @transform_2(%arg0: i32, %arg1: i32, %arg2: i32) -> (i32, i32) {
    %c0_i32 = arith.constant 0 : i32
    %c0_i32_0 = arith.constant 0 : i32
    return %c0_i32, %arg1 : i32, i32
  }
  func.func @transform_3(%arg0: i32, %arg1: i32, %arg2: i32) -> (i32, i32) {
    %c0_i32 = arith.constant 0 : i32
    return %arg0, %arg1 : i32, i32
  }
}

module attributes {stable_mosaic.version = 11 : i64} {
  func.func @_inorm_stats_kernel(%arg0: i32, %arg1: i32, %arg2: i32, %arg3: memref<1x16x256xbf16, #tpu.memory_space<vmem>>, %arg4: memref<1x1x256xf32, #tpu.memory_space<vmem>>, %arg5: memref<1x1x256xf32, #tpu.memory_space<vmem>>) attributes {dimension_semantics = [#tpu.dimension_semantics<parallel>, #tpu.dimension_semantics<parallel>, #tpu.dimension_semantics<arbitrary>], iteration_bounds = array<i64: 2, 1, 1>, scalar_prefetch = 0 : i64, scratch_operands = 0 : i64, tpu.core_type = #tpu.core_type<tc>, window_params = [{transform_indices = @transform_0, window_bounds = array<i64: 1, 16, 256>}, {transform_indices = @transform_1, window_bounds = array<i64: 1, 1, 256>}, {transform_indices = @transform_2, window_bounds = array<i64: 1, 1, 256>}]} {
    %c0_i32 = arith.constant 0 : i32
    %0 = arith.cmpi eq, %arg2, %c0_i32 : i32
    %1 = arith.extui %0 : i1 to i32
    %c0_i32_0 = arith.constant 0 : i32
    %2 = arith.cmpi ne, %1, %c0_i32_0 : i32
    scf.if %2 {
      %cst_18 = arith.constant 0.000000e+00 : f32
      %19 = vector.broadcast %cst_18 : f32 to vector<1x1x256xf32>
      %c0_19 = arith.constant 0 : index
      %c0_20 = arith.constant 0 : index
      %c0_21 = arith.constant 0 : index
      %20 = vector.load %arg4[%c0_19, %c0_20, %c0_21] : memref<1x1x256xf32, #tpu.memory_space<vmem>>, vector<1x1x256xf32>
      tpu.vector_store %arg4[%c0_19, %c0_20, %c0_21], %19 {strides = array<i32>} : memref<1x1x256xf32, #tpu.memory_space<vmem>>, vector<1x1x256xf32>,
      %cst_22 = arith.constant 0.000000e+00 : f32
      %21 = vector.broadcast %cst_22 : f32 to vector<1x1x256xf32>
      %c0_23 = arith.constant 0 : index
      %c0_24 = arith.constant 0 : index
      %c0_25 = arith.constant 0 : index
      %22 = vector.load %arg5[%c0_23, %c0_24, %c0_25] : memref<1x1x256xf32, #tpu.memory_space<vmem>>, vector<1x1x256xf32>
      tpu.vector_store %arg5[%c0_23, %c0_24, %c0_25], %21 {strides = array<i32>} : memref<1x1x256xf32, #tpu.memory_space<vmem>>, vector<1x1x256xf32>,
    } else {
    }
    %c0 = arith.constant 0 : index
    %c0_1 = arith.constant 0 : index
    %c0_2 = arith.constant 0 : index
    %3 = vector.load %arg3[%c0, %c0_1, %c0_2] : memref<1x16x256xbf16, #tpu.memory_space<vmem>>, vector<1x16x256xbf16>
    %4 = arith.extf %3 : vector<1x16x256xbf16> to vector<1x16x256xf32>
    %c0_3 = arith.constant 0 : index
    %c0_4 = arith.constant 0 : index
    %c0_5 = arith.constant 0 : index
    %5 = vector.load %arg4[%c0_3, %c0_4, %c0_5] : memref<1x1x256xf32, #tpu.memory_space<vmem>>, vector<1x1x256xf32>
    %cst = arith.constant dense<0.000000e+00> : vector<1x256xf32>
    %6 = vector.multi_reduction <add>, %4, %cst [1] : vector<1x16x256xf32> to vector<1x256xf32>
    %7 = vector.shape_cast %6 : vector<1x256xf32> to vector<1x1x256xf32>
    %8 = arith.addf %5, %7 : vector<1x1x256xf32>
    %c0_6 = arith.constant 0 : index
    %c0_7 = arith.constant 0 : index
    %c0_8 = arith.constant 0 : index
    %9 = vector.load %arg4[%c0_6, %c0_7, %c0_8] : memref<1x1x256xf32, #tpu.memory_space<vmem>>, vector<1x1x256xf32>
    tpu.vector_store %arg4[%c0_6, %c0_7, %c0_8], %8 {strides = array<i32>} : memref<1x1x256xf32, #tpu.memory_space<vmem>>, vector<1x1x256xf32>,
    %c0_9 = arith.constant 0 : index
    %c0_10 = arith.constant 0 : index
    %c0_11 = arith.constant 0 : index
    %10 = vector.load %arg5[%c0_9, %c0_10, %c0_11] : memref<1x1x256xf32, #tpu.memory_space<vmem>>, vector<1x1x256xf32>
    %11 = arith.mulf %4, %4 : vector<1x16x256xf32>
    %cst_12 = arith.constant dense<0.000000e+00> : vector<1x256xf32>
    %12 = vector.multi_reduction <add>, %11, %cst_12 [1] : vector<1x16x256xf32> to vector<1x256xf32>
    %13 = vector.shape_cast %12 : vector<1x256xf32> to vector<1x1x256xf32>
    %14 = arith.addf %10, %13 : vector<1x1x256xf32>
    %c0_13 = arith.constant 0 : index
    %c0_14 = arith.constant 0 : index
    %c0_15 = arith.constant 0 : index
    %15 = vector.load %arg5[%c0_13, %c0_14, %c0_15] : memref<1x1x256xf32, #tpu.memory_space<vmem>>, vector<1x1x256xf32>
    tpu.vector_store %arg5[%c0_13, %c0_14, %c0_15], %14 {strides = array<i32>} : memref<1x1x256xf32, #tpu.memory_space<vmem>>, vector<1x1x256xf32>,
    %c0_i32_16 = arith.constant 0 : i32
    %16 = arith.cmpi eq, %arg2, %c0_i32_16 : i32
    %17 = arith.extui %16 : i1 to i32
    %c0_i32_17 = arith.constant 0 : i32
    %18 = arith.cmpi ne, %17, %c0_i32_17 : i32
    scf.if %18 {
      %c0_18 = arith.constant 0 : index
      %c0_19 = arith.constant 0 : index
      %c0_20 = arith.constant 0 : index
      %19 = vector.load %arg4[%c0_18, %c0_19, %c0_20] : memref<1x1x256xf32, #tpu.memory_space<vmem>>, vector<1x1x256xf32>
      %cst_21 = arith.constant 6.250000e-02 : f32
      %20 = vector.broadcast %cst_21 : f32 to vector<1x1x256xf32>
      %21 = arith.mulf %19, %20 : vector<1x1x256xf32>
      %c0_22 = arith.constant 0 : index
      %c0_23 = arith.constant 0 : index
      %c0_24 = arith.constant 0 : index
      %22 = vector.load %arg5[%c0_22, %c0_23, %c0_24] : memref<1x1x256xf32, #tpu.memory_space<vmem>>, vector<1x1x256xf32>
      %cst_25 = arith.constant 6.250000e-02 : f32
      %23 = vector.broadcast %cst_25 : f32 to vector<1x1x256xf32>
      %24 = arith.mulf %22, %23 : vector<1x1x256xf32>
      %25 = arith.mulf %21, %21 : vector<1x1x256xf32>
      %26 = arith.subf %24, %25 : vector<1x1x256xf32>
      %cst_26 = arith.constant 0.000000e+00 : f32
      %27 = vector.broadcast %cst_26 : f32 to vector<1x1x256xf32>
      %28 = arith.maximumf %26, %27 : vector<1x1x256xf32>
      %c0_27 = arith.constant 0 : index
      %c0_28 = arith.constant 0 : index
      %c0_29 = arith.constant 0 : index
      %29 = vector.load %arg4[%c0_27, %c0_28, %c0_29] : memref<1x1x256xf32, #tpu.memory_space<vmem>>, vector<1x1x256xf32>
      tpu.vector_store %arg4[%c0_27, %c0_28, %c0_29], %21 {strides = array<i32>} : memref<1x1x256xf32, #tpu.memory_space<vmem>>, vector<1x1x256xf32>,
      %cst_30 = arith.constant 9.99999974E-6 : f32
      %30 = vector.broadcast %cst_30 : f32 to vector<1x1x256xf32>
      %31 = arith.addf %28, %30 : vector<1x1x256xf32>
      %32 = math.rsqrt %31 : vector<1x1x256xf32>
      %c0_31 = arith.constant 0 : index
      %c0_32 = arith.constant 0 : index
      %c0_33 = arith.constant 0 : index
      %33 = vector.load %arg5[%c0_31, %c0_32, %c0_33] : memref<1x1x256xf32, #tpu.memory_space<vmem>>, vector<1x1x256xf32>
      tpu.vector_store %arg5[%c0_31, %c0_32, %c0_33], %32 {strides = array<i32>} : memref<1x1x256xf32, #tpu.memory_space<vmem>>, vector<1x1x256xf32>,
    } else {
    }
    return
  }
  func.func @transform_0(%arg0: i32, %arg1: i32, %arg2: i32) -> (i32, i32, i32) {
    %c0_i32 = arith.constant 0 : i32
    return %arg0, %arg2, %arg1 : i32, i32, i32
  }
  func.func @transform_1(%arg0: i32, %arg1: i32, %arg2: i32) -> (i32, i32, i32) {
    %c0_i32 = arith.constant 0 : i32
    %c0_i32_0 = arith.constant 0 : i32
    return %arg0, %c0_i32, %arg1 : i32, i32, i32
  }
  func.func @transform_2(%arg0: i32, %arg1: i32, %arg2: i32) -> (i32, i32, i32) {
    %c0_i32 = arith.constant 0 : i32
    %c0_i32_0 = arith.constant 0 : i32
    return %arg0, %c0_i32, %arg1 : i32, i32, i32
  }
}

module attributes {stable_mosaic.version = 11 : i64} {
  func.func @_inorm_apply_kernel(%arg0: i32, %arg1: i32, %arg2: i32, %arg3: memref<1x16x256xbf16, #tpu.memory_space<vmem>>, %arg4: memref<1x1x256xf32, #tpu.memory_space<vmem>>, %arg5: memref<1x1x256xf32, #tpu.memory_space<vmem>>, %arg6: memref<1x16x256xbf16, #tpu.memory_space<vmem>>) attributes {dimension_semantics = [#tpu.dimension_semantics<parallel>, #tpu.dimension_semantics<parallel>, #tpu.dimension_semantics<parallel>], iteration_bounds = array<i64: 2, 1, 1>, scalar_prefetch = 0 : i64, scratch_operands = 0 : i64, tpu.core_type = #tpu.core_type<tc>, window_params = [{transform_indices = @transform_0, window_bounds = array<i64: 1, 16, 256>}, {transform_indices = @transform_1, window_bounds = array<i64: 1, 1, 256>}, {transform_indices = @transform_2, window_bounds = array<i64: 1, 1, 256>}, {transform_indices = @transform_3, window_bounds = array<i64: 1, 16, 256>}]} {
    %c0 = arith.constant 0 : index
    %c0_0 = arith.constant 0 : index
    %c0_1 = arith.constant 0 : index
    %0 = vector.load %arg3[%c0, %c0_0, %c0_1] : memref<1x16x256xbf16, #tpu.memory_space<vmem>>, vector<1x16x256xbf16>
    %1 = arith.extf %0 : vector<1x16x256xbf16> to vector<1x16x256xf32>
    %c0_2 = arith.constant 0 : index
    %c0_3 = arith.constant 0 : index
    %c0_4 = arith.constant 0 : index
    %2 = vector.load %arg4[%c0_2, %c0_3, %c0_4] : memref<1x1x256xf32, #tpu.memory_space<vmem>>, vector<1x1x256xf32>
    %3 = vector.broadcast %2 : vector<1x1x256xf32> to vector<1x16x256xf32>
    %4 = arith.subf %1, %3 : vector<1x16x256xf32>
    %c0_5 = arith.constant 0 : index
    %c0_6 = arith.constant 0 : index
    %c0_7 = arith.constant 0 : index
    %5 = vector.load %arg5[%c0_5, %c0_6, %c0_7] : memref<1x1x256xf32, #tpu.memory_space<vmem>>, vector<1x1x256xf32>
    %6 = vector.broadcast %5 : vector<1x1x256xf32> to vector<1x16x256xf32>
    %7 = arith.mulf %4, %6 : vector<1x16x256xf32>
    %cst = arith.constant 0.000000e+00 : f32
    %8 = vector.broadcast %cst : f32 to vector<1x16x256xf32>
    %9 = arith.cmpf oge, %7, %8 : vector<1x16x256xf32>
    %cst_8 = arith.constant 2.000000e-01 : f32
    %10 = vector.broadcast %cst_8 : f32 to vector<1x16x256xf32>
    %11 = arith.mulf %10, %7 : vector<1x16x256xf32>
    %12 = arith.select %9, %7, %11 : vector<1x16x256xi1>, vector<1x16x256xf32>
    %13 = arith.truncf %12 : vector<1x16x256xf32> to vector<1x16x256xbf16>
    %c0_9 = arith.constant 0 : index
    %c0_10 = arith.constant 0 : index
    %c0_11 = arith.constant 0 : index
    %14 = vector.load %arg6[%c0_9, %c0_10, %c0_11] : memref<1x16x256xbf16, #tpu.memory_space<vmem>>, vector<1x16x256xbf16>
    tpu.vector_store %arg6[%c0_9, %c0_10, %c0_11], %13 {strides = array<i32>} : memref<1x16x256xbf16, #tpu.memory_space<vmem>>, vector<1x16x256xbf16>,
    return
  }
  func.func @transform_0(%arg0: i32, %arg1: i32, %arg2: i32) -> (i32, i32, i32) {
    %c0_i32 = arith.constant 0 : i32
    return %arg0, %arg2, %arg1 : i32, i32, i32
  }
  func.func @transform_1(%arg0: i32, %arg1: i32, %arg2: i32) -> (i32, i32, i32) {
    %c0_i32 = arith.constant 0 : i32
    %c0_i32_0 = arith.constant 0 : i32
    return %arg0, %c0_i32, %arg1 : i32, i32, i32
  }
  func.func @transform_2(%arg0: i32, %arg1: i32, %arg2: i32) -> (i32, i32, i32) {
    %c0_i32 = arith.constant 0 : i32
    %c0_i32_0 = arith.constant 0 : i32
    return %arg0, %c0_i32, %arg1 : i32, i32, i32
  }
  func.func @transform_3(%arg0: i32, %arg1: i32, %arg2: i32) -> (i32, i32, i32) {
    %c0_i32 = arith.constant 0 : i32
    return %arg0, %arg2, %arg1 : i32, i32, i32
  }
}

module attributes {stable_mosaic.version = 11 : i64} {
  func.func @_matmul_bias_kernel(%arg0: i32, %arg1: i32, %arg2: i32, %arg3: memref<16x512xbf16, #tpu.memory_space<vmem>>, %arg4: memref<4096x512xbf16, #tpu.memory_space<vmem>>, %arg5: memref<1x256xf32, #tpu.memory_space<vmem>>, %arg6: memref<16x256xbf16, #tpu.memory_space<vmem>>, %arg7: memref<16x256xf32, #tpu.memory_space<vmem>>) attributes {dimension_semantics = [#tpu.dimension_semantics<parallel>, #tpu.dimension_semantics<parallel>, #tpu.dimension_semantics<arbitrary>], iteration_bounds = array<i64: 1, 2, 8>, scalar_prefetch = 0 : i64, scratch_operands = 1 : i64, tpu.core_type = #tpu.core_type<tc>, window_params = [{transform_indices = @transform_0, window_bounds = array<i64: 16, 512>}, {pipeline_mode = #tpu.pipeline_mode<synchronous>, transform_indices = @transform_1, window_bounds = array<i64: 4096, 512>}, {transform_indices = @transform_2, window_bounds = array<i64: 1, 256>}, {transform_indices = @transform_3, window_bounds = array<i64: 16, 256>}]} {
    %c0_i32 = arith.constant 0 : i32
    %0 = arith.cmpi eq, %arg2, %c0_i32 : i32
    %1 = arith.extui %0 : i1 to i32
    %c0_i32_0 = arith.constant 0 : i32
    %2 = arith.cmpi ne, %1, %c0_i32_0 : i32
    scf.if %2 {
      %cst_7 = arith.constant 0.000000e+00 : f32
      %18 = vector.broadcast %cst_7 : f32 to vector<16x256xf32>
      %c0_8 = arith.constant 0 : index
      %c0_9 = arith.constant 0 : index
      %19 = vector.load %arg7[%c0_8, %c0_9] : memref<16x256xf32, #tpu.memory_space<vmem>>, vector<16x256xf32>
      tpu.vector_store %arg7[%c0_8, %c0_9], %18 {strides = array<i32>} : memref<16x256xf32, #tpu.memory_space<vmem>>, vector<16x256xf32>,
    } else {
    }
    %c512_i32 = arith.constant 512 : i32
    %3 = arith.muli %arg2, %c512_i32 : i32
    %4 = tpu.assume_multiple %3, 512 : i32
    %c256_i32 = arith.constant 256 : i32
    %5 = arith.muli %arg1, %c256_i32 : i32
    %6 = tpu.assume_multiple %5, 256 : i32
    %7 = arith.index_cast %4 : i32 to index
    %8 = arith.index_cast %6 : i32 to index
    %9 = vector.load %arg4[%7, %8] : memref<4096x512xbf16, #tpu.memory_space<vmem>>, vector<512x256xbf16>
    %c0 = arith.constant 0 : index
    %c0_1 = arith.constant 0 : index
    %10 = vector.load %arg7[%c0, %c0_1] : memref<16x256xf32, #tpu.memory_space<vmem>>, vector<16x256xf32>
    %c0_2 = arith.constant 0 : index
    %c0_3 = arith.constant 0 : index
    %11 = vector.load %arg3[%c0_2, %c0_3] : memref<16x512xbf16, #tpu.memory_space<vmem>>, vector<16x512xbf16>
    %cst = arith.constant dense<0.000000e+00> : vector<16x256xf32>
    %12 = tpu.matmul %11, %9, %cst {dimension_numbers = #tpu.dot_dimension_numbers<[1], [0], [0], [1], [0, 0, 1, 1], [], []>} : vector<16x512xbf16>, vector<512x256xbf16>, vector<16x256xf32> -> vector<16x256xf32>
    %13 = arith.addf %10, %12 : vector<16x256xf32>
    %c0_4 = arith.constant 0 : index
    %c0_5 = arith.constant 0 : index
    %14 = vector.load %arg7[%c0_4, %c0_5] : memref<16x256xf32, #tpu.memory_space<vmem>>, vector<16x256xf32>
    tpu.vector_store %arg7[%c0_4, %c0_5], %13 {strides = array<i32>} : memref<16x256xf32, #tpu.memory_space<vmem>>, vector<16x256xf32>,
    %c7_i32 = arith.constant 7 : i32
    %15 = arith.cmpi eq, %arg2, %c7_i32 : i32
    %16 = arith.extui %15 : i1 to i32
    %c0_i32_6 = arith.constant 0 : i32
    %17 = arith.cmpi ne, %16, %c0_i32_6 : i32
    scf.if %17 {
      %c0_7 = arith.constant 0 : index
      %c0_8 = arith.constant 0 : index
      %18 = vector.load %arg7[%c0_7, %c0_8] : memref<16x256xf32, #tpu.memory_space<vmem>>, vector<16x256xf32>
      %c0_9 = arith.constant 0 : index
      %c0_10 = arith.constant 0 : index
      %19 = vector.load %arg5[%c0_9, %c0_10] : memref<1x256xf32, #tpu.memory_space<vmem>>, vector<1x256xf32>
      %20 = vector.broadcast %19 : vector<1x256xf32> to vector<16x256xf32>
      %21 = arith.addf %18, %20 : vector<16x256xf32>
      %22 = arith.truncf %21 : vector<16x256xf32> to vector<16x256xbf16>
      %c0_11 = arith.constant 0 : index
      %c0_12 = arith.constant 0 : index
      %23 = vector.load %arg6[%c0_11, %c0_12] : memref<16x256xbf16, #tpu.memory_space<vmem>>, vector<16x256xbf16>
      tpu.vector_store %arg6[%c0_11, %c0_12], %22 {strides = array<i32>} : memref<16x256xbf16, #tpu.memory_space<vmem>>, vector<16x256xbf16>,
    } else {
    }
    return
  }
  func.func @transform_0(%arg0: i32, %arg1: i32, %arg2: i32) -> (i32, i32) {
    %c0_i32 = arith.constant 0 : i32
    return %arg0, %arg2 : i32, i32
  }
  func.func @transform_1(%arg0: i32, %arg1: i32, %arg2: i32) -> (i32, i32) {
    %c0_i32 = arith.constant 0 : i32
    %c0_i32_0 = arith.constant 0 : i32
    %c0_i32_1 = arith.constant 0 : i32
    return %c0_i32, %c0_i32_0 : i32, i32
  }
  func.func @transform_2(%arg0: i32, %arg1: i32, %arg2: i32) -> (i32, i32) {
    %c0_i32 = arith.constant 0 : i32
    %c0_i32_0 = arith.constant 0 : i32
    return %c0_i32, %arg1 : i32, i32
  }
  func.func @transform_3(%arg0: i32, %arg1: i32, %arg2: i32) -> (i32, i32) {
    %c0_i32 = arith.constant 0 : i32
    return %arg0, %arg1 : i32, i32
  }
}

module attributes {stable_mosaic.version = 11 : i64} {
  func.func @_inorm_stats_kernel(%arg0: i32, %arg1: i32, %arg2: i32, %arg3: memref<1x4x256xbf16, #tpu.memory_space<vmem>>, %arg4: memref<1x1x256xf32, #tpu.memory_space<vmem>>, %arg5: memref<1x1x256xf32, #tpu.memory_space<vmem>>) attributes {dimension_semantics = [#tpu.dimension_semantics<parallel>, #tpu.dimension_semantics<parallel>, #tpu.dimension_semantics<arbitrary>], iteration_bounds = array<i64: 2, 2, 1>, scalar_prefetch = 0 : i64, scratch_operands = 0 : i64, tpu.core_type = #tpu.core_type<tc>, window_params = [{transform_indices = @transform_0, window_bounds = array<i64: 1, 4, 256>}, {transform_indices = @transform_1, window_bounds = array<i64: 1, 1, 256>}, {transform_indices = @transform_2, window_bounds = array<i64: 1, 1, 256>}]} {
    %c0_i32 = arith.constant 0 : i32
    %0 = arith.cmpi eq, %arg2, %c0_i32 : i32
    %1 = arith.extui %0 : i1 to i32
    %c0_i32_0 = arith.constant 0 : i32
    %2 = arith.cmpi ne, %1, %c0_i32_0 : i32
    scf.if %2 {
      %cst_18 = arith.constant 0.000000e+00 : f32
      %19 = vector.broadcast %cst_18 : f32 to vector<1x1x256xf32>
      %c0_19 = arith.constant 0 : index
      %c0_20 = arith.constant 0 : index
      %c0_21 = arith.constant 0 : index
      %20 = vector.load %arg4[%c0_19, %c0_20, %c0_21] : memref<1x1x256xf32, #tpu.memory_space<vmem>>, vector<1x1x256xf32>
      tpu.vector_store %arg4[%c0_19, %c0_20, %c0_21], %19 {strides = array<i32>} : memref<1x1x256xf32, #tpu.memory_space<vmem>>, vector<1x1x256xf32>,
      %cst_22 = arith.constant 0.000000e+00 : f32
      %21 = vector.broadcast %cst_22 : f32 to vector<1x1x256xf32>
      %c0_23 = arith.constant 0 : index
      %c0_24 = arith.constant 0 : index
      %c0_25 = arith.constant 0 : index
      %22 = vector.load %arg5[%c0_23, %c0_24, %c0_25] : memref<1x1x256xf32, #tpu.memory_space<vmem>>, vector<1x1x256xf32>
      tpu.vector_store %arg5[%c0_23, %c0_24, %c0_25], %21 {strides = array<i32>} : memref<1x1x256xf32, #tpu.memory_space<vmem>>, vector<1x1x256xf32>,
    } else {
    }
    %c0 = arith.constant 0 : index
    %c0_1 = arith.constant 0 : index
    %c0_2 = arith.constant 0 : index
    %3 = vector.load %arg3[%c0, %c0_1, %c0_2] : memref<1x4x256xbf16, #tpu.memory_space<vmem>>, vector<1x4x256xbf16>
    %4 = arith.extf %3 : vector<1x4x256xbf16> to vector<1x4x256xf32>
    %c0_3 = arith.constant 0 : index
    %c0_4 = arith.constant 0 : index
    %c0_5 = arith.constant 0 : index
    %5 = vector.load %arg4[%c0_3, %c0_4, %c0_5] : memref<1x1x256xf32, #tpu.memory_space<vmem>>, vector<1x1x256xf32>
    %cst = arith.constant dense<0.000000e+00> : vector<1x256xf32>
    %6 = vector.multi_reduction <add>, %4, %cst [1] : vector<1x4x256xf32> to vector<1x256xf32>
    %7 = vector.shape_cast %6 : vector<1x256xf32> to vector<1x1x256xf32>
    %8 = arith.addf %5, %7 : vector<1x1x256xf32>
    %c0_6 = arith.constant 0 : index
    %c0_7 = arith.constant 0 : index
    %c0_8 = arith.constant 0 : index
    %9 = vector.load %arg4[%c0_6, %c0_7, %c0_8] : memref<1x1x256xf32, #tpu.memory_space<vmem>>, vector<1x1x256xf32>
    tpu.vector_store %arg4[%c0_6, %c0_7, %c0_8], %8 {strides = array<i32>} : memref<1x1x256xf32, #tpu.memory_space<vmem>>, vector<1x1x256xf32>,
    %c0_9 = arith.constant 0 : index
    %c0_10 = arith.constant 0 : index
    %c0_11 = arith.constant 0 : index
    %10 = vector.load %arg5[%c0_9, %c0_10, %c0_11] : memref<1x1x256xf32, #tpu.memory_space<vmem>>, vector<1x1x256xf32>
    %11 = arith.mulf %4, %4 : vector<1x4x256xf32>
    %cst_12 = arith.constant dense<0.000000e+00> : vector<1x256xf32>
    %12 = vector.multi_reduction <add>, %11, %cst_12 [1] : vector<1x4x256xf32> to vector<1x256xf32>
    %13 = vector.shape_cast %12 : vector<1x256xf32> to vector<1x1x256xf32>
    %14 = arith.addf %10, %13 : vector<1x1x256xf32>
    %c0_13 = arith.constant 0 : index
    %c0_14 = arith.constant 0 : index
    %c0_15 = arith.constant 0 : index
    %15 = vector.load %arg5[%c0_13, %c0_14, %c0_15] : memref<1x1x256xf32, #tpu.memory_space<vmem>>, vector<1x1x256xf32>
    tpu.vector_store %arg5[%c0_13, %c0_14, %c0_15], %14 {strides = array<i32>} : memref<1x1x256xf32, #tpu.memory_space<vmem>>, vector<1x1x256xf32>,
    %c0_i32_16 = arith.constant 0 : i32
    %16 = arith.cmpi eq, %arg2, %c0_i32_16 : i32
    %17 = arith.extui %16 : i1 to i32
    %c0_i32_17 = arith.constant 0 : i32
    %18 = arith.cmpi ne, %17, %c0_i32_17 : i32
    scf.if %18 {
      %c0_18 = arith.constant 0 : index
      %c0_19 = arith.constant 0 : index
      %c0_20 = arith.constant 0 : index
      %19 = vector.load %arg4[%c0_18, %c0_19, %c0_20] : memref<1x1x256xf32, #tpu.memory_space<vmem>>, vector<1x1x256xf32>
      %cst_21 = arith.constant 2.500000e-01 : f32
      %20 = vector.broadcast %cst_21 : f32 to vector<1x1x256xf32>
      %21 = arith.mulf %19, %20 : vector<1x1x256xf32>
      %c0_22 = arith.constant 0 : index
      %c0_23 = arith.constant 0 : index
      %c0_24 = arith.constant 0 : index
      %22 = vector.load %arg5[%c0_22, %c0_23, %c0_24] : memref<1x1x256xf32, #tpu.memory_space<vmem>>, vector<1x1x256xf32>
      %cst_25 = arith.constant 2.500000e-01 : f32
      %23 = vector.broadcast %cst_25 : f32 to vector<1x1x256xf32>
      %24 = arith.mulf %22, %23 : vector<1x1x256xf32>
      %25 = arith.mulf %21, %21 : vector<1x1x256xf32>
      %26 = arith.subf %24, %25 : vector<1x1x256xf32>
      %cst_26 = arith.constant 0.000000e+00 : f32
      %27 = vector.broadcast %cst_26 : f32 to vector<1x1x256xf32>
      %28 = arith.maximumf %26, %27 : vector<1x1x256xf32>
      %c0_27 = arith.constant 0 : index
      %c0_28 = arith.constant 0 : index
      %c0_29 = arith.constant 0 : index
      %29 = vector.load %arg4[%c0_27, %c0_28, %c0_29] : memref<1x1x256xf32, #tpu.memory_space<vmem>>, vector<1x1x256xf32>
      tpu.vector_store %arg4[%c0_27, %c0_28, %c0_29], %21 {strides = array<i32>} : memref<1x1x256xf32, #tpu.memory_space<vmem>>, vector<1x1x256xf32>,
      %cst_30 = arith.constant 9.99999974E-6 : f32
      %30 = vector.broadcast %cst_30 : f32 to vector<1x1x256xf32>
      %31 = arith.addf %28, %30 : vector<1x1x256xf32>
      %32 = math.rsqrt %31 : vector<1x1x256xf32>
      %c0_31 = arith.constant 0 : index
      %c0_32 = arith.constant 0 : index
      %c0_33 = arith.constant 0 : index
      %33 = vector.load %arg5[%c0_31, %c0_32, %c0_33] : memref<1x1x256xf32, #tpu.memory_space<vmem>>, vector<1x1x256xf32>
      tpu.vector_store %arg5[%c0_31, %c0_32, %c0_33], %32 {strides = array<i32>} : memref<1x1x256xf32, #tpu.memory_space<vmem>>, vector<1x1x256xf32>,
    } else {
    }
    return
  }
  func.func @transform_0(%arg0: i32, %arg1: i32, %arg2: i32) -> (i32, i32, i32) {
    %c0_i32 = arith.constant 0 : i32
    return %arg0, %arg2, %arg1 : i32, i32, i32
  }
  func.func @transform_1(%arg0: i32, %arg1: i32, %arg2: i32) -> (i32, i32, i32) {
    %c0_i32 = arith.constant 0 : i32
    %c0_i32_0 = arith.constant 0 : i32
    return %arg0, %c0_i32, %arg1 : i32, i32, i32
  }
  func.func @transform_2(%arg0: i32, %arg1: i32, %arg2: i32) -> (i32, i32, i32) {
    %c0_i32 = arith.constant 0 : i32
    %c0_i32_0 = arith.constant 0 : i32
    return %arg0, %c0_i32, %arg1 : i32, i32, i32
  }
}

module attributes {stable_mosaic.version = 11 : i64} {
  func.func @_inorm_apply_kernel(%arg0: i32, %arg1: i32, %arg2: i32, %arg3: memref<1x4x256xbf16, #tpu.memory_space<vmem>>, %arg4: memref<1x1x256xf32, #tpu.memory_space<vmem>>, %arg5: memref<1x1x256xf32, #tpu.memory_space<vmem>>, %arg6: memref<1x4x256xbf16, #tpu.memory_space<vmem>>) attributes {dimension_semantics = [#tpu.dimension_semantics<parallel>, #tpu.dimension_semantics<parallel>, #tpu.dimension_semantics<parallel>], iteration_bounds = array<i64: 2, 2, 1>, scalar_prefetch = 0 : i64, scratch_operands = 0 : i64, tpu.core_type = #tpu.core_type<tc>, window_params = [{transform_indices = @transform_0, window_bounds = array<i64: 1, 4, 256>}, {transform_indices = @transform_1, window_bounds = array<i64: 1, 1, 256>}, {transform_indices = @transform_2, window_bounds = array<i64: 1, 1, 256>}, {transform_indices = @transform_3, window_bounds = array<i64: 1, 4, 256>}]} {
    %c0 = arith.constant 0 : index
    %c0_0 = arith.constant 0 : index
    %c0_1 = arith.constant 0 : index
    %0 = vector.load %arg3[%c0, %c0_0, %c0_1] : memref<1x4x256xbf16, #tpu.memory_space<vmem>>, vector<1x4x256xbf16>
    %1 = arith.extf %0 : vector<1x4x256xbf16> to vector<1x4x256xf32>
    %c0_2 = arith.constant 0 : index
    %c0_3 = arith.constant 0 : index
    %c0_4 = arith.constant 0 : index
    %2 = vector.load %arg4[%c0_2, %c0_3, %c0_4] : memref<1x1x256xf32, #tpu.memory_space<vmem>>, vector<1x1x256xf32>
    %3 = vector.broadcast %2 : vector<1x1x256xf32> to vector<1x4x256xf32>
    %4 = arith.subf %1, %3 : vector<1x4x256xf32>
    %c0_5 = arith.constant 0 : index
    %c0_6 = arith.constant 0 : index
    %c0_7 = arith.constant 0 : index
    %5 = vector.load %arg5[%c0_5, %c0_6, %c0_7] : memref<1x1x256xf32, #tpu.memory_space<vmem>>, vector<1x1x256xf32>
    %6 = vector.broadcast %5 : vector<1x1x256xf32> to vector<1x4x256xf32>
    %7 = arith.mulf %4, %6 : vector<1x4x256xf32>
    %cst = arith.constant 0.000000e+00 : f32
    %8 = vector.broadcast %cst : f32 to vector<1x4x256xf32>
    %9 = arith.cmpf oge, %7, %8 : vector<1x4x256xf32>
    %cst_8 = arith.constant 2.000000e-01 : f32
    %10 = vector.broadcast %cst_8 : f32 to vector<1x4x256xf32>
    %11 = arith.mulf %10, %7 : vector<1x4x256xf32>
    %12 = arith.select %9, %7, %11 : vector<1x4x256xi1>, vector<1x4x256xf32>
    %13 = arith.truncf %12 : vector<1x4x256xf32> to vector<1x4x256xbf16>
    %c0_9 = arith.constant 0 : index
    %c0_10 = arith.constant 0 : index
    %c0_11 = arith.constant 0 : index
    %14 = vector.load %arg6[%c0_9, %c0_10, %c0_11] : memref<1x4x256xbf16, #tpu.memory_space<vmem>>, vector<1x4x256xbf16>
    tpu.vector_store %arg6[%c0_9, %c0_10, %c0_11], %13 {strides = array<i32>} : memref<1x4x256xbf16, #tpu.memory_space<vmem>>, vector<1x4x256xbf16>,
    return
  }
  func.func @transform_0(%arg0: i32, %arg1: i32, %arg2: i32) -> (i32, i32, i32) {
    %c0_i32 = arith.constant 0 : i32
    return %arg0, %arg2, %arg1 : i32, i32, i32
  }
  func.func @transform_1(%arg0: i32, %arg1: i32, %arg2: i32) -> (i32, i32, i32) {
    %c0_i32 = arith.constant 0 : i32
    %c0_i32_0 = arith.constant 0 : i32
    return %arg0, %c0_i32, %arg1 : i32, i32, i32
  }
  func.func @transform_2(%arg0: i32, %arg1: i32, %arg2: i32) -> (i32, i32, i32) {
    %c0_i32 = arith.constant 0 : i32
    %c0_i32_0 = arith.constant 0 : i32
    return %arg0, %c0_i32, %arg1 : i32, i32, i32
  }
  func.func @transform_3(%arg0: i32, %arg1: i32, %arg2: i32) -> (i32, i32, i32) {
    %c0_i32 = arith.constant 0 : i32
    return %arg0, %arg2, %arg1 : i32, i32, i32
  }
}

module attributes {stable_mosaic.version = 11 : i64} {
  func.func @_matmul_bias_kernel(%arg0: i32, %arg1: i32, %arg2: i32, %arg3: memref<16x512xbf16, #tpu.memory_space<vmem>>, %arg4: memref<8192x128xbf16, #tpu.memory_space<vmem>>, %arg5: memref<1x128xf32, #tpu.memory_space<vmem>>, %arg6: memref<16x128xf32, #tpu.memory_space<vmem>>, %arg7: memref<16x128xf32, #tpu.memory_space<vmem>>) attributes {dimension_semantics = [#tpu.dimension_semantics<parallel>, #tpu.dimension_semantics<parallel>, #tpu.dimension_semantics<arbitrary>], iteration_bounds = array<i64: 1, 1, 16>, scalar_prefetch = 0 : i64, scratch_operands = 1 : i64, tpu.core_type = #tpu.core_type<tc>, window_params = [{transform_indices = @transform_0, window_bounds = array<i64: 16, 512>}, {pipeline_mode = #tpu.pipeline_mode<synchronous>, transform_indices = @transform_1, window_bounds = array<i64: 8192, 128>}, {transform_indices = @transform_2, window_bounds = array<i64: 1, 128>}, {transform_indices = @transform_3, window_bounds = array<i64: 16, 128>}]} {
    %c0_i32 = arith.constant 0 : i32
    %0 = arith.cmpi eq, %arg2, %c0_i32 : i32
    %1 = arith.extui %0 : i1 to i32
    %c0_i32_0 = arith.constant 0 : i32
    %2 = arith.cmpi ne, %1, %c0_i32_0 : i32
    scf.if %2 {
      %cst_7 = arith.constant 0.000000e+00 : f32
      %18 = vector.broadcast %cst_7 : f32 to vector<16x128xf32>
      %c0_8 = arith.constant 0 : index
      %c0_9 = arith.constant 0 : index
      %19 = vector.load %arg7[%c0_8, %c0_9] : memref<16x128xf32, #tpu.memory_space<vmem>>, vector<16x128xf32>
      tpu.vector_store %arg7[%c0_8, %c0_9], %18 {strides = array<i32>} : memref<16x128xf32, #tpu.memory_space<vmem>>, vector<16x128xf32>,
    } else {
    }
    %c512_i32 = arith.constant 512 : i32
    %3 = arith.muli %arg2, %c512_i32 : i32
    %4 = tpu.assume_multiple %3, 512 : i32
    %c128_i32 = arith.constant 128 : i32
    %5 = arith.muli %arg1, %c128_i32 : i32
    %6 = tpu.assume_multiple %5, 128 : i32
    %7 = arith.index_cast %4 : i32 to index
    %8 = arith.index_cast %6 : i32 to index
    %9 = vector.load %arg4[%7, %8] : memref<8192x128xbf16, #tpu.memory_space<vmem>>, vector<512x128xbf16>
    %c0 = arith.constant 0 : index
    %c0_1 = arith.constant 0 : index
    %10 = vector.load %arg7[%c0, %c0_1] : memref<16x128xf32, #tpu.memory_space<vmem>>, vector<16x128xf32>
    %c0_2 = arith.constant 0 : index
    %c0_3 = arith.constant 0 : index
    %11 = vector.load %arg3[%c0_2, %c0_3] : memref<16x512xbf16, #tpu.memory_space<vmem>>, vector<16x512xbf16>
    %cst = arith.constant dense<0.000000e+00> : vector<16x128xf32>
    %12 = tpu.matmul %11, %9, %cst {dimension_numbers = #tpu.dot_dimension_numbers<[1], [0], [0], [1], [0, 0, 1, 1], [], []>} : vector<16x512xbf16>, vector<512x128xbf16>, vector<16x128xf32> -> vector<16x128xf32>
    %13 = arith.addf %10, %12 : vector<16x128xf32>
    %c0_4 = arith.constant 0 : index
    %c0_5 = arith.constant 0 : index
    %14 = vector.load %arg7[%c0_4, %c0_5] : memref<16x128xf32, #tpu.memory_space<vmem>>, vector<16x128xf32>
    tpu.vector_store %arg7[%c0_4, %c0_5], %13 {strides = array<i32>} : memref<16x128xf32, #tpu.memory_space<vmem>>, vector<16x128xf32>,
    %c15_i32 = arith.constant 15 : i32
    %15 = arith.cmpi eq, %arg2, %c15_i32 : i32
    %16 = arith.extui %15 : i1 to i32
    %c0_i32_6 = arith.constant 0 : i32
    %17 = arith.cmpi ne, %16, %c0_i32_6 : i32
    scf.if %17 {
      %c0_7 = arith.constant 0 : index
      %c0_8 = arith.constant 0 : index
      %18 = vector.load %arg7[%c0_7, %c0_8] : memref<16x128xf32, #tpu.memory_space<vmem>>, vector<16x128xf32>
      %c0_9 = arith.constant 0 : index
      %c0_10 = arith.constant 0 : index
      %19 = vector.load %arg5[%c0_9, %c0_10] : memref<1x128xf32, #tpu.memory_space<vmem>>, vector<1x128xf32>
      %20 = vector.broadcast %19 : vector<1x128xf32> to vector<16x128xf32>
      %21 = arith.addf %18, %20 : vector<16x128xf32>
      %c0_11 = arith.constant 0 : index
      %c0_12 = arith.constant 0 : index
      %22 = vector.load %arg6[%c0_11, %c0_12] : memref<16x128xf32, #tpu.memory_space<vmem>>, vector<16x128xf32>
      tpu.vector_store %arg6[%c0_11, %c0_12], %21 {strides = array<i32>} : memref<16x128xf32, #tpu.memory_space<vmem>>, vector<16x128xf32>,
    } else {
    }
    return
  }
  func.func @transform_0(%arg0: i32, %arg1: i32, %arg2: i32) -> (i32, i32) {
    %c0_i32 = arith.constant 0 : i32
    return %arg0, %arg2 : i32, i32
  }
  func.func @transform_1(%arg0: i32, %arg1: i32, %arg2: i32) -> (i32, i32) {
    %c0_i32 = arith.constant 0 : i32
    %c0_i32_0 = arith.constant 0 : i32
    %c0_i32_1 = arith.constant 0 : i32
    return %c0_i32, %c0_i32_0 : i32, i32
  }
  func.func @transform_2(%arg0: i32, %arg1: i32, %arg2: i32) -> (i32, i32) {
    %c0_i32 = arith.constant 0 : i32
    %c0_i32_0 = arith.constant 0 : i32
    return %c0_i32, %arg1 : i32, i32
  }
  func.func @transform_3(%arg0: i32, %arg1: i32, %arg2: i32) -> (i32, i32) {
    %c0_i32 = arith.constant 0 : i32
    return %arg0, %arg1 : i32, i32
  }
}

</mosaic_0001>

<llo_original>
// kernel: discriminator_forward.11
$region0: #{discriminator_forward.11}
  #allocation0 [shape = 'u32[]', space=smem, size = 0x4, offset = 0x4, fixed_abs, tag = 'smem constant byte address 0x4 - core index']
  #allocation1 [shape = 'u32[144,128]{1,0:T(1,128)}', space=vmem, size = 0x12000, scoped, tag = 'internal scratch']
  #allocation2 [shape = 'f32[512,128]{1,0:T(8,128)}', space=vmem, size = 0x40000, scoped, tag = 'scratch operand']
  %s0 = inlined_call_operand.vmem [shape: bf16[512,128], index: 0, kind: input, shape index: {}]
  %s1 = inlined_call_operand.vmem [shape: bf16[128,128], index: 1, kind: input, shape index: {}]
  %s2 = inlined_call_operand.vmem [shape: f32[1,128], index: 2, kind: input, shape index: {}]
  %s3 = inlined_call_operand.vmem [shape: bf16[512,128], index: 3, kind: output, shape index: {}]
  %s4 = sld [smem:[#allocation0]]
  $region30: #{discriminator_forward.11} parent=0
    _
  %s6 = ssub.s32 1, %s4
  %s7 = scalar_select 0, %s6, %s4
  // Predicated region
  $region2: #{discriminator_forward.11} parent=0 // pred_check
    _
  $region3: #{discriminator_forward.11} parent=0 // pred_check_branch
    %9 = sbr.rel (0) target = $region5
  $region4: #{discriminator_forward.11} parent=0 // pred_region
    _
  $region5: #{discriminator_forward.11} parent=0 // pred_fallthru
    _
  // Predicated region
  $region6: #{discriminator_forward.11} parent=0 // pred_check
    _
  $region7: #{discriminator_forward.11} parent=0 // pred_check_branch
    %11 = sbr.rel (0) target = $region9
  $region8: #{discriminator_forward.11} parent=0 // pred_region
    _
  $region9: #{discriminator_forward.11} parent=0 // pred_fallthru
    _
  // Predicated region
  $region10: #{discriminator_forward.11} parent=0 // pred_check
    _
  $region11: #{discriminator_forward.11} parent=0 // pred_check_branch
    %13 = sbr.rel (0) target = $region13
  $region12: #{discriminator_forward.11} parent=0 // pred_region
    _
  $region13: #{discriminator_forward.11} parent=0 // pred_fallthru
    _
  %p15 = scmp.eq.s32.totalorder 0, 0
  // Predicated region
  $region14: #{discriminator_forward.11} parent=0 // pred_check
    %p16 = pneg %p15
  $region15: #{discriminator_forward.11} parent=0 // pred_check_branch
    %18 = sbr.rel (%p16) target = $region17
  $region16: #{discriminator_forward.11} parent=0 // pred_region
    %19 = vst [vmem:[#allocation2] sm:$0xff] 0.0
    %20 = vst [vmem:[#allocation2 + $0x8] sm:$0xff] 0.0
    %21 = vst [vmem:[#allocation2 + $0x10] sm:$0xff] 0.0
    %22 = vst [vmem:[#allocation2 + $0x18] sm:$0xff] 0.0
    %23 = vst [vmem:[#allocation2 + $0x20] sm:$0xff] 0.0
    %24 = vst [vmem:[#allocation2 + $0x28] sm:$0xff] 0.0
    %25 = vst [vmem:[#allocation2 + $0x30] sm:$0xff] 0.0
    %26 = vst [vmem:[#allocation2 + $0x38] sm:$0xff] 0.0
    %27 = vst [vmem:[#allocation2 + $0x40] sm:$0xff] 0.0
    %28 = vst [vmem:[#allocation2 + $0x48] sm:$0xff] 0.0
    %29 = vst [vmem:[#allocation2 + $0x50] sm:$0xff] 0.0
    %30 = vst [vmem:[#allocation2 + $0x58] sm:$0xff] 0.0
    %31 = vst [vmem:[#allocation2 + $0x60] sm:$0xff] 0.0
    %32 = vst [vmem:[#allocation2 + $0x68] sm:$0xff] 0.0
    %33 = vst [vmem:[#allocation2 + $0x70] sm:$0xff] 0.0
    %34 = vst [vmem:[#allocation2 + $0x78] sm:$0xff] 0.0
    %35 = vst [vmem:[#allocation2 + $0x80] sm:$0xff] 0.0
    %36 = vst [vmem:[#allocation2 + $0x88] sm:$0xff] 0.0
    %37 = vst [vmem:[#allocation2 + $0x90] sm:$0xff] 0.0
    %38 = vst [vmem:[#allocation2 + $0x98] sm:$0xff] 0.0
    %39 = vst [vmem:[#allocation2 + $0xa0] sm:$0xff] 0.0
    %40 = vst [vmem:[#allocation2 + $0xa8] sm:$0xff] 0.0
    %41 = vst [vmem:[#allocation2 + $0xb0] sm:$0xff] 0.0
    %42 = vst [vmem:[#allocation2 + $0xb8] sm:$0xff] 0.0
    %43 = vst [vmem:[#allocation2 + $0xc0] sm:$0xff] 0.0
    %44 = vst [vmem:[#allocation2 + $0xc8] sm:$0xff] 0.0
    %45 = vst [vmem:[#allocation2 + $0xd0] sm:$0xff] 0.0
    %46 = vst [vmem:[#allocation2 + $0xd8] sm:$0xff] 0.0
    %47 = vst [vmem:[#allocation2 + $0xe0] sm:$0xff] 0.0
    %48 = vst [vmem:[#allocation2 + $0xe8] sm:$0xff] 0.0
    %49 = vst [vmem:[#allocation2 + $0xf0] sm:$0xff] 0.0
    %50 = vst [vmem:[#allocation2 + $0xf8] sm:$0xff] 0.0
    %51 = vst [vmem:[#allocation2 + $0x100] sm:$0xff] 0.0
    %52 = vst [vmem:[#allocation2 + $0x108] sm:$0xff] 0.0
    %53 = vst [vmem:[#allocation2 + $0x110] sm:$0xff] 0.0
    %54 = vst [vmem:[#allocation2 + $0x118] sm:$0xff] 0.0
    %55 = vst [vmem:[#allocation2 + $0x120] sm:$0xff] 0.0
    %56 = vst [vmem:[#allocation2 + $0x128] sm:$0xff] 0.0
    %57 = vst [vmem:[#allocation2 + $0x130] sm:$0xff] 0.0
    %58 = vst [vmem:[#allocation2 + $0x138] sm:$0xff] 0.0
    %59 = vst [vmem:[#allocation2 + $0x140] sm:$0xff] 0.0
    %60 = vst [vmem:[#allocation2 + $0x148] sm:$0xff] 0.0
    %61 = vst [vmem:[#allocation2 + $0x150] sm:$0xff] 0.0
    %62 = vst [vmem:[#allocation2 + $0x158] sm:$0xff] 0.0
    %63 = vst [vmem:[#allocation2 + $0x160] sm:$0xff] 0.0
    %64 = vst [vmem:[#allocation2 + $0x168] sm:$0xff] 0.0
    %65 = vst [vmem:[#allocation2 + $0x170] sm:$0xff] 0.0
    %66 = vst [vmem:[#allocation2 + $0x178] sm:$0xff] 0.0
    %67 = vst [vmem:[#allocation2 + $0x180] sm:$0xff] 0.0
    %68 = vst [vmem:[#allocation2 + $0x188] sm:$0xff] 0.0
    %69 = vst [vmem:[#allocation2 + $0x190] sm:$0xff] 0.0
    %70 = vst [vmem:[#allocation2 + $0x198] sm:$0xff] 0.0
    %71 = vst [vmem:[#allocation2 + $0x1a0] sm:$0xff] 0.0
    %72 = vst [vmem:[#allocation2 + $0x1a8] sm:$0xff] 0.0
    %73 = vst [vmem:[#allocation2 + $0x1b0] sm:$0xff] 0.0
    %74 = vst [vmem:[#allocation2 + $0x1b8] sm:$0xff] 0.0
    %75 = vst [vmem:[#allocation2 + $0x1c0] sm:$0xff] 0.0
    %76 = vst [vmem:[#allocation2 + $0x1c8] sm:$0xff] 0.0
    %77 = vst [vmem:[#allocation2 + $0x1d0] sm:$0xff] 0.0
    %78 = vst [vmem:[#allocation2 + $0x1d8] sm:$0xff] 0.0
    %79 = vst [vmem:[#allocation2 + $0x1e0] sm:$0xff] 0.0
    %80 = vst [vmem:[#allocation2 + $0x1e8] sm:$0xff] 0.0
    %81 = vst [vmem:[#allocation2 + $0x1f0] sm:$0xff] 0.0
    %82 = vst [vmem:[#allocation2 + $0x1f8] sm:$0xff] 0.0
  $region17: #{discriminator_forward.11} parent=0 // pred_fallthru
    _
  %s83 = smul.u32 0, 128
  %s84 = smul.u32 0, 128
  %s85 = sshra.s32 %s84, 7
  %s86 = sand.u32 %s84, 127
  %s87 = sshra.s32 %s83, 3
  %s88 = sand.u32 %s83, 7
  %s89 = sadd.s32 %s85, %s87
  %s90 = smul.addr %s89, 4
  %s91 = scalar_lea.vmem %s1, %s90
  %v92 = vld [vmem:[%s91] sm:$0xf]
  %v93 = vld [vmem:[%s91 + $0x4] sm:$0xf]
  %v94 = vld [vmem:[%s91 + $0x8] sm:$0xf]
  %v95 = vld [vmem:[%s91 + $0xc] sm:$0xf]
  %v96 = vld [vmem:[%s91 + $0x10] sm:$0xf]
  %v97 = vld [vmem:[%s91 + $0x14] sm:$0xf]
  %v98 = vld [vmem:[%s91 + $0x18] sm:$0xf]
  %v99 = vld [vmem:[%s91 + $0x1c] sm:$0xf]
  %v100 = vld [vmem:[%s91 + $0x20] sm:$0xf]
  %v101 = vld [vmem:[%s91 + $0x24] sm:$0xf]
  %v102 = vld [vmem:[%s91 + $0x28] sm:$0xf]
  %v103 = vld [vmem:[%s91 + $0x2c] sm:$0xf]
  %v104 = vld [vmem:[%s91 + $0x30] sm:$0xf]
  %v105 = vld [vmem:[%s91 + $0x34] sm:$0xf]
  %v106 = vld [vmem:[%s91 + $0x38] sm:$0xf]
  %v107 = vld [vmem:[%s91 + $0x3c] sm:$0xf]
  %v108 = vld [vmem:[#allocation2] sm:$0xff]
  %v109 = vld [vmem:[#allocation2 + $0x8] sm:$0xff]
  %v110 = vld [vmem:[#allocation2 + $0x10] sm:$0xff]
  %v111 = vld [vmem:[#allocation2 + $0x18] sm:$0xff]
  %v112 = vld [vmem:[#allocation2 + $0x20] sm:$0xff]
  %v113 = vld [vmem:[#allocation2 + $0x28] sm:$0xff]
  %v114 = vld [vmem:[#allocation2 + $0x30] sm:$0xff]
  %v115 = vld [vmem:[#allocation2 + $0x38] sm:$0xff]
  %v116 = vld [vmem:[#allocation2 + $0x40] sm:$0xff]
  %v117 = vld [vmem:[#allocation2 + $0x48] sm:$0xff]
  %v118 = vld [vmem:[#allocation2 + $0x50] sm:$0xff]
  %v119 = vld [vmem:[#allocation2 + $0x58] sm:$0xff]
  %v120 = vld [vmem:[#allocation2 + $0x60] sm:$0xff]
  %v121 = vld [vmem:[#allocation2 + $0x68] sm:$0xff]
  %v122 = vld [vmem:[#allocation2 + $0x70] sm:$0xff]
  %v123 = vld [vmem:[#allocation2 + $0x78] sm:$0xff]
  %v124 = vld [vmem:[#allocation2 + $0x80] sm:$0xff]
  %v125 = vld [vmem:[#allocation2 + $0x88] sm:$0xff]
  %v126 = vld [vmem:[#allocation2 + $0x90] sm:$0xff]
  %v127 = vld [vmem:[#allocation2 + $0x98] sm:$0xff]
  %v128 = vld [vmem:[#allocation2 + $0xa0] sm:$0xff]
  %v129 = vld [vmem:[#allocation2 + $0xa8] sm:$0xff]
  %v130 = vld [vmem:[#allocation2 + $0xb0] sm:$0xff]
  %v131 = vld [vmem:[#allocation2 + $0xb8] sm:$0xff]
  %v132 = vld [vmem:[#allocation2 + $0xc0] sm:$0xff]
  %v133 = vld [vmem:[#allocation2 + $0xc8] sm:$0xff]
  %v134 = vld [vmem:[#allocation2 + $0xd0] sm:$0xff]
  %v135 = vld [vmem:[#allocation2 + $0xd8] sm:$0xff]
  %v136 = vld [vmem:[#allocation2 + $0xe0] sm:$0xff]
  %v137 = vld [vmem:[#allocation2 + $0xe8] sm:$0xff]
  %v138 = vld [vmem:[#allocation2 + $0xf0] sm:$0xff]
  %v139 = vld [vmem:[#allocation2 + $0xf8] sm:$0xff]
  %v140 = vld [vmem:[#allocation2 + $0x100] sm:$0xff]
  %v141 = vld [vmem:[#allocation2 + $0x108] sm:$0xff]
  %v142 = vld [vmem:[#allocation2 + $0x110] sm:$0xff]
  %v143 = vld [vmem:[#allocation2 + $0x118] sm:$0xff]
  %v144 = vld [vmem:[#allocation2 + $0x120] sm:$0xff]
  %v145 = vld [vmem:[#allocation2 + $0x128] sm:$0xff]
  %v146 = vld [vmem:[#allocation2 + $0x130] sm:$0xff]
  %v147 = vld [vmem:[#allocation2 + $0x138] sm:$0xff]
  %v148 = vld [vmem:[#allocation2 + $0x140] sm:$0xff]
  %v149 = vld [vmem:[#allocation2 + $0x148] sm:$0xff]
  %v150 = vld [vmem:[#allocation2 + $0x150] sm:$0xff]
  %v151 = vld [vmem:[#allocation2 + $0x158] sm:$0xff]
  %v152 = vld [vmem:[#allocation2 + $0x160] sm:$0xff]
  %v153 = vld [vmem:[#allocation2 + $0x168] sm:$0xff]
  %v154 = vld [vmem:[#allocation2 + $0x170] sm:$0xff]
  %v155 = vld [vmem:[#allocation2 + $0x178] sm:$0xff]
  %v156 = vld [vmem:[#allocation2 + $0x180] sm:$0xff]
  %v157 = vld [vmem:[#allocation2 + $0x188] sm:$0xff]
  %v158 = vld [vmem:[#allocation2 + $0x190] sm:$0xff]
  %v159 = vld [vmem:[#allocation2 + $0x198] sm:$0xff]
  %v160 = vld [vmem:[#allocation2 + $0x1a0] sm:$0xff]
  %v161 = vld [vmem:[#allocation2 + $0x1a8] sm:$0xff]
  %v162 = vld [vmem:[#allocation2 + $0x1b0] sm:$0xff]
  %v163 = vld [vmem:[#allocation2 + $0x1b8] sm:$0xff]
  %v164 = vld [vmem:[#allocation2 + $0x1c0] sm:$0xff]
  %v165 = vld [vmem:[#allocation2 + $0x1c8] sm:$0xff]
  %v166 = vld [vmem:[#allocation2 + $0x1d0] sm:$0xff]
  %v167 = vld [vmem:[#allocation2 + $0x1d8] sm:$0xff]
  %v168 = vld [vmem:[#allocation2 + $0x1e0] sm:$0xff]
  %v169 = vld [vmem:[#allocation2 + $0x1e8] sm:$0xff]
  %v170 = vld [vmem:[#allocation2 + $0x1f0] sm:$0xff]
  %v171 = vld [vmem:[#allocation2 + $0x1f8] sm:$0xff]
  %v172 = vld [vmem:[%s0] sm:$0xf]
  %v173 = vld [vmem:[%s0 + $0x4] sm:$0xf]
  %v174 = vld [vmem:[%s0 + $0x8] sm:$0xf]
  %v175 = vld [vmem:[%s0 + $0xc] sm:$0xf]
  %v176 = vld [vmem:[%s0 + $0x10] sm:$0xf]
  %v177 = vld [vmem:[%s0 + $0x14] sm:$0xf]
  %v178 = vld [vmem:[%s0 + $0x18] sm:$0xf]
  %v179 = vld [vmem:[%s0 + $0x1c] sm:$0xf]
  %v180 = vld [vmem:[%s0 + $0x20] sm:$0xf]
  %v181 = vld [vmem:[%s0 + $0x24] sm:$0xf]
  %v182 = vld [vmem:[%s0 + $0x28] sm:$0xf]
  %v183 = vld [vmem:[%s0 + $0x2c] sm:$0xf]
  %v184 = vld [vmem:[%s0 + $0x30] sm:$0xf]
  %v185 = vld [vmem:[%s0 + $0x34] sm:$0xf]
  %v186 = vld [vmem:[%s0 + $0x38] sm:$0xf]
  %v187 = vld [vmem:[%s0 + $0x3c] sm:$0xf]
  %v188 = vld [vmem:[%s0 + $0x40] sm:$0xf]
  %v189 = vld [vmem:[%s0 + $0x44] sm:$0xf]
  %v190 = vld [vmem:[%s0 + $0x48] sm:$0xf]
  %v191 = vld [vmem:[%s0 + $0x4c] sm:$0xf]
  %v192 = vld [vmem:[%s0 + $0x50] sm:$0xf]
  %v193 = vld [vmem:[%s0 + $0x54] sm:$0xf]
  %v194 = vld [vmem:[%s0 + $0x58] sm:$0xf]
  %v195 = vld [vmem:[%s0 + $0x5c] sm:$0xf]
  %v196 = vld [vmem:[%s0 + $0x60] sm:$0xf]
  %v197 = vld [vmem:[%s0 + $0x64] sm:$0xf]
  %v198 = vld [vmem:[%s0 + $0x68] sm:$0xf]
  %v199 = vld [vmem:[%s0 + $0x6c] sm:$0xf]
  %v200 = vld [vmem:[%s0 + $0x70] sm:$0xf]
  %v201 = vld [vmem:[%s0 + $0x74] sm:$0xf]
  %v202 = vld [vmem:[%s0 + $0x78] sm:$0xf]
  %v203 = vld [vmem:[%s0 + $0x7c] sm:$0xf]
  %v204 = vld [vmem:[%s0 + $0x80] sm:$0xf]
  %v205 = vld [vmem:[%s0 + $0x84] sm:$0xf]
  %v206 = vld [vmem:[%s0 + $0x88] sm:$0xf]
  %v207 = vld [vmem:[%s0 + $0x8c] sm:$0xf]
  %v208 = vld [vmem:[%s0 + $0x90] sm:$0xf]
  %v209 = vld [vmem:[%s0 + $0x94] sm:$0xf]
  %v210 = vld [vmem:[%s0 + $0x98] sm:$0xf]
  %v211 = vld [vmem:[%s0 + $0x9c] sm:$0xf]
  %v212 = vld [vmem:[%s0 + $0xa0] sm:$0xf]
  %v213 = vld [vmem:[%s0 + $0xa4] sm:$0xf]
  %v214 = vld [vmem:[%s0 + $0xa8] sm:$0xf]
  %v215 = vld [vmem:[%s0 + $0xac] sm:$0xf]
  %v216 = vld [vmem:[%s0 + $0xb0] sm:$0xf]
  %v217 = vld [vmem:[%s0 + $0xb4] sm:$0xf]
  %v218 = vld [vmem:[%s0 + $0xb8] sm:$0xf]
  %v219 = vld [vmem:[%s0 + $0xbc] sm:$0xf]
  %v220 = vld [vmem:[%s0 + $0xc0] sm:$0xf]
  %v221 = vld [vmem:[%s0 + $0xc4] sm:$0xf]
  %v222 = vld [vmem:[%s0 + $0xc8] sm:$0xf]
  %v223 = vld [vmem:[%s0 + $0xcc] sm:$0xf]
  %v224 = vld [vmem:[%s0 + $0xd0] sm:$0xf]
  %v225 = vld [vmem:[%s0 + $0xd4] sm:$0xf]
  %v226 = vld [vmem:[%s0 + $0xd8] sm:$0xf]
  %v227 = vld [vmem:[%s0 + $0xdc] sm:$0xf]
  %v228 = vld [vmem:[%s0 + $0xe0] sm:$0xf]
  %v229 = vld [vmem:[%s0 + $0xe4] sm:$0xf]
  %v230 = vld [vmem:[%s0 + $0xe8] sm:$0xf]
  %v231 = vld [vmem:[%s0 + $0xec] sm:$0xf]
  %v232 = vld [vmem:[%s0 + $0xf0] sm:$0xf]
  %v233 = vld [vmem:[%s0 + $0xf4] sm:$0xf]
  %v234 = vld [vmem:[%s0 + $0xf8] sm:$0xf]
  %v235 = vld [vmem:[%s0 + $0xfc] sm:$0xf]
  %v300 = vunpack.c.l.b16 %v172
  %v301 = vunpack.c.l.b16 %v173
  %v302 = vunpack.c.l.b16 %v174
  %v303 = vunpack.c.l.b16 %v175
  %v304 = vunpack.c.l.b16 %v176
  %v305 = vunpack.c.l.b16 %v177
  %v306 = vunpack.c.l.b16 %v178
  %v307 = vunpack.c.l.b16 %v179
  %v308 = vunpack.c.l.b16 %v180
  %v309 = vunpack.c.l.b16 %v181
  %v310 = vunpack.c.l.b16 %v182
  %v311 = vunpack.c.l.b16 %v183
  %v312 = vunpack.c.l.b16 %v184
  %v313 = vunpack.c.l.b16 %v185
  %v314 = vunpack.c.l.b16 %v186
  %v315 = vunpack.c.l.b16 %v187
  %v316 = vunpack.c.l.b16 %v188
  %v317 = vunpack.c.l.b16 %v189
  %v318 = vunpack.c.l.b16 %v190
  %v319 = vunpack.c.l.b16 %v191
  %v320 = vunpack.c.l.b16 %v192
  %v321 = vunpack.c.l.b16 %v193
  %v322 = vunpack.c.l.b16 %v194
  %v323 = vunpack.c.l.b16 %v195
  %v324 = vunpack.c.l.b16 %v196
  %v325 = vunpack.c.l.b16 %v197
  %v326 = vunpack.c.l.b16 %v198
  %v327 = vunpack.c.l.b16 %v199
  %v328 = vunpack.c.l.b16 %v200
  %v329 = vunpack.c.l.b16 %v201
  %v330 = vunpack.c.l.b16 %v202
  %v331 = vunpack.c.l.b16 %v203
  %v332 = vunpack.c.l.b16 %v204
  %v333 = vunpack.c.l.b16 %v205
  %v334 = vunpack.c.l.b16 %v206
  %v335 = vunpack.c.l.b16 %v207
  %v336 = vunpack.c.l.b16 %v208
  %v337 = vunpack.c.l.b16 %v209
  %v338 = vunpack.c.l.b16 %v210
  %v339 = vunpack.c.l.b16 %v211
  %v340 = vunpack.c.l.b16 %v212
  %v341 = vunpack.c.l.b16 %v213
  %v342 = vunpack.c.l.b16 %v214
  %v343 = vunpack.c.l.b16 %v215
  %v344 = vunpack.c.l.b16 %v216
  %v345 = vunpack.c.l.b16 %v217
  %v346 = vunpack.c.l.b16 %v218
  %v347 = vunpack.c.l.b16 %v219
  %v348 = vunpack.c.l.b16 %v220
  %v349 = vunpack.c.l.b16 %v221
  %v350 = vunpack.c.l.b16 %v222
  %v351 = vunpack.c.l.b16 %v223
  %v352 = vunpack.c.l.b16 %v224
  %v353 = vunpack.c.l.b16 %v225
  %v354 = vunpack.c.l.b16 %v226
  %v355 = vunpack.c.l.b16 %v227
  %v356 = vunpack.c.l.b16 %v228
  %v357 = vunpack.c.l.b16 %v229
  %v358 = vunpack.c.l.b16 %v230
  %v359 = vunpack.c.l.b16 %v231
  %v360 = vunpack.c.l.b16 %v232
  %v361 = vunpack.c.l.b16 %v233
  %v362 = vunpack.c.l.b16 %v234
  %v363 = vunpack.c.l.b16 %v235
  %v364 = vpack.c.b16 %v301, %v300
  %v365 = vpack.c.b16 %v303, %v302
  %v366 = vpack.c.b16 %v305, %v304
  %v367 = vpack.c.b16 %v307, %v306
  %v368 = vpack.c.b16 %v309, %v308
  %v369 = vpack.c.b16 %v311, %v310
  %v370 = vpack.c.b16 %v313, %v312
  %v371 = vpack.c.b16 %v315, %v314
  %v372 = vpack.c.b16 %v317, %v316
  %v373 = vpack.c.b16 %v319, %v318
  %v374 = vpack.c.b16 %v321, %v320
  %v375 = vpack.c.b16 %v323, %v322
  %v376 = vpack.c.b16 %v325, %v324
  %v377 = vpack.c.b16 %v327, %v326
  %v378 = vpack.c.b16 %v329, %v328
  %v379 = vpack.c.b16 %v331, %v330
  %v380 = vpack.c.b16 %v333, %v332
  %v381 = vpack.c.b16 %v335, %v334
  %v382 = vpack.c.b16 %v337, %v336
  %v383 = vpack.c.b16 %v339, %v338
  %v384 = vpack.c.b16 %v341, %v340
  %v385 = vpack.c.b16 %v343, %v342
  %v386 = vpack.c.b16 %v345, %v344
  %v387 = vpack.c.b16 %v347, %v346
  %v388 = vpack.c.b16 %v349, %v348
  %v389 = vpack.c.b16 %v351, %v350
  %v390 = vpack.c.b16 %v353, %v352
  %v391 = vpack.c.b16 %v355, %v354
  %v392 = vpack.c.b16 %v357, %v356
  %v393 = vpack.c.b16 %v359, %v358
  %v394 = vpack.c.b16 %v361, %v360
  %v395 = vpack.c.b16 %v363, %v362
  %v444 = vunpack.c.l.b16 %v92
  %v445 = vunpack.c.l.b16 %v93
  %v446 = vunpack.c.l.b16 %v94
  %v447 = vunpack.c.l.b16 %v95
  %v448 = vunpack.c.l.b16 %v96
  %v449 = vunpack.c.l.b16 %v97
  %v450 = vunpack.c.l.b16 %v98
  %v451 = vunpack.c.l.b16 %v99
  %v452 = vunpack.c.l.b16 %v100
  %v453 = vunpack.c.l.b16 %v101
  %v454 = vunpack.c.l.b16 %v102
  %v455 = vunpack.c.l.b16 %v103
  %v456 = vunpack.c.l.b16 %v104
  %v457 = vunpack.c.l.b16 %v105
  %v458 = vunpack.c.l.b16 %v106
  %v459 = vunpack.c.l.b16 %v107
  %v460 = vpack.c.b16 %v445, %v444
  %v461 = vpack.c.b16 %v447, %v446
  %v462 = vpack.c.b16 %v449, %v448
  %v463 = vpack.c.b16 %v451, %v450
  %v464 = vpack.c.b16 %v453, %v452
  %v465 = vpack.c.b16 %v455, %v454
  %v466 = vpack.c.b16 %v457, %v456
  %v467 = vpack.c.b16 %v459, %v458
  %476 = vmatprep.subr.bf16.mxu0 0
  %477 = vmatpush1.bf16.msra.mxu0 %v467
  %478 = vmatprep.subr.bf16.mxu0 0
  %479 = vmatpush1.bf16.msra.mxu0 %v466
  %480 = vmatprep.subr.bf16.mxu0 0
  %481 = vmatpush1.bf16.msra.mxu0 %v465
  %482 = vmatprep.subr.bf16.mxu0 0
  %483 = vmatpush1.bf16.msra.mxu0 %v464
  %484 = vmatprep.subr.bf16.mxu0 0
  %485 = vmatpush1.bf16.msra.mxu0 %v463
  %486 = vmatprep.subr.bf16.mxu0 0
  %487 = vmatpush1.bf16.msra.mxu0 %v462
  %488 = vmatprep.subr.bf16.mxu0 0
  %489 = vmatpush1.bf16.msra.mxu0 %v461
  %490 = vmatprep.subr.bf16.mxu0 0
  %491 = vmatpush1.bf16.msra.mxu0 %v460
  %492 = vmatprep.subr.bf16.mxu0 0
  %493 = vmatpush2.bf16.msra.mxu0 0
  %494 = vmatprep.subr.bf16.mxu0 0
  %495 = vmatpush2.bf16.msra.mxu0 0
  %496 = vmatprep.subr.bf16.mxu0 0
  %497 = vmatpush2.bf16.msra.mxu0 0
  %498 = vmatprep.subr.bf16.mxu0 0
  %499 = vmatpush2.bf16.msra.mxu0 0
  %500 = vmatprep.subr.bf16.mxu0 0
  %501 = vmatpush2.bf16.msra.mxu0 0
  %502 = vmatprep.subr.bf16.mxu0 0
  %503 = vmatpush2.bf16.msra.mxu0 0
  %504 = vmatprep.subr.bf16.mxu0 0
  %505 = vmatpush2.bf16.msra.mxu0 0
  %506 = vmatprep.subr.bf16.mxu0 0
  %507 = vmatpush2.bf16.msra.mxu0 0
  %508 = vmatprep.mubr.bf16.mxu0 0
  %509 = vmatmul.mubr.bf16.gmra.mxu0 %v364
  %v510 = vpop.f32.mrf.mxu0
  %v511 = vadd.f32 0.0, %v510
  %v512 = vpop.f32.mrf.mxu0
  %v513 = vpop.f32.mrf.mxu0
  %v514 = vadd.f32 0.0, %v513
  %v515 = vpop.f32.mrf.mxu0
  %516 = vmatprep.mubr.bf16.mxu0 0
  %517 = vmatmul.mubr.bf16.gmra.mxu0 %v365
  %v518 = vpop.f32.mrf.mxu0
  %v519 = vadd.f32 0.0, %v518
  %v520 = vpop.f32.mrf.mxu0
  %v521 = vpop.f32.mrf.mxu0
  %v522 = vadd.f32 0.0, %v521
  %v523 = vpop.f32.mrf.mxu0
  %524 = vmatprep.mubr.bf16.mxu0 0
  %525 = vmatmul.mubr.bf16.gmra.mxu0 %v366
  %v526 = vpop.f32.mrf.mxu0
  %v527 = vadd.f32 0.0, %v526
  %v528 = vpop.f32.mrf.mxu0
  %v529 = vpop.f32.mrf.mxu0
  %v530 = vadd.f32 0.0, %v529
  %v531 = vpop.f32.mrf.mxu0
  %532 = vmatprep.mubr.bf16.mxu0 0
  %533 = vmatmul.mubr.bf16.gmra.mxu0 %v367
  %v534 = vpop.f32.mrf.mxu0
  %v535 = vadd.f32 0.0, %v534
  %v536 = vpop.f32.mrf.mxu0
  %v537 = vpop.f32.mrf.mxu0
  %v538 = vadd.f32 0.0, %v537
  %v539 = vpop.f32.mrf.mxu0
  %540 = vmatprep.mubr.bf16.mxu0 0
  %541 = vmatmul.mubr.bf16.gmra.mxu0 %v368
  %v542 = vpop.f32.mrf.mxu0
  %v543 = vadd.f32 0.0, %v542
  %v544 = vpop.f32.mrf.mxu0
  %v545 = vpop.f32.mrf.mxu0
  %v546 = vadd.f32 0.0, %v545
  %v547 = vpop.f32.mrf.mxu0
  %548 = vmatprep.mubr.bf16.mxu0 0
  %549 = vmatmul.mubr.bf16.gmra.mxu0 %v369
  %v550 = vpop.f32.mrf.mxu0
  %v551 = vadd.f32 0.0, %v550
  %v552 = vpop.f32.mrf.mxu0
  %v553 = vpop.f32.mrf.mxu0
  %v554 = vadd.f32 0.0, %v553
  %v555 = vpop.f32.mrf.mxu0
  %556 = vmatprep.mubr.bf16.mxu0 0
  %557 = vmatmul.mubr.bf16.gmra.mxu0 %v370
  %v558 = vpop.f32.mrf.mxu0
  %v559 = vadd.f32 0.0, %v558
  %v560 = vpop.f32.mrf.mxu0
  %v561 = vpop.f32.mrf.mxu0
  %v562 = vadd.f32 0.0, %v561
  %v563 = vpop.f32.mrf.mxu0
  %564 = vmatprep.mubr.bf16.mxu0 0
  %565 = vmatmul.mubr.bf16.gmra.mxu0 %v371
  %v566 = vpop.f32.mrf.mxu0
  %v567 = vadd.f32 0.0, %v566
  %v568 = vpop.f32.mrf.mxu0
  %v569 = vpop.f32.mrf.mxu0
  %v570 = vadd.f32 0.0, %v569
  %v571 = vpop.f32.mrf.mxu0
  %572 = vmatprep.mubr.bf16.mxu0 0
  %573 = vmatmul.mubr.bf16.gmra.mxu0 %v372
  %v574 = vpop.f32.mrf.mxu0
  %v575 = vadd.f32 0.0, %v574
  %v576 = vpop.f32.mrf.mxu0
  %v577 = vpop.f32.mrf.mxu0
  %v578 = vadd.f32 0.0, %v577
  %v579 = vpop.f32.mrf.mxu0
  %580 = vmatprep.mubr.bf16.mxu0 0
  %581 = vmatmul.mubr.bf16.gmra.mxu0 %v373
  %v582 = vpop.f32.mrf.mxu0
  %v583 = vadd.f32 0.0, %v582
  %v584 = vpop.f32.mrf.mxu0
  %v585 = vpop.f32.mrf.mxu0
  %v586 = vadd.f32 0.0, %v585
  %v587 = vpop.f32.mrf.mxu0
  %588 = vmatprep.mubr.bf16.mxu0 0
  %589 = vmatmul.mubr.bf16.gmra.mxu0 %v374
  %v590 = vpop.f32.mrf.mxu0
  %v591 = vadd.f32 0.0, %v590
  %v592 = vpop.f32.mrf.mxu0
  %v593 = vpop.f32.mrf.mxu0
  %v594 = vadd.f32 0.0, %v593
  %v595 = vpop.f32.mrf.mxu0
  %596 = vmatprep.mubr.bf16.mxu0 0
  %597 = vmatmul.mubr.bf16.gmra.mxu0 %v375
  %v598 = vpop.f32.mrf.mxu0
  %v599 = vadd.f32 0.0, %v598
  %v600 = vpop.f32.mrf.mxu0
  %v601 = vpop.f32.mrf.mxu0
  %v602 = vadd.f32 0.0, %v601
  %v603 = vpop.f32.mrf.mxu0
  %604 = vmatprep.mubr.bf16.mxu0 0
  %605 = vmatmul.mubr.bf16.gmra.mxu0 %v376
  %v606 = vpop.f32.mrf.mxu0
  %v607 = vadd.f32 0.0, %v606
  %v608 = vpop.f32.mrf.mxu0
  %v609 = vpop.f32.mrf.mxu0
  %v610 = vadd.f32 0.0, %v609
  %v611 = vpop.f32.mrf.mxu0
  %612 = vmatprep.mubr.bf16.mxu0 0
  %613 = vmatmul.mubr.bf16.gmra.mxu0 %v377
  %v614 = vpop.f32.mrf.mxu0
  %v615 = vadd.f32 0.0, %v614
  %v616 = vpop.f32.mrf.mxu0
  %v617 = vpop.f32.mrf.mxu0
  %v618 = vadd.f32 0.0, %v617
  %v619 = vpop.f32.mrf.mxu0
  %620 = vmatprep.mubr.bf16.mxu0 0
  %621 = vmatmul.mubr.bf16.gmra.mxu0 %v378
  %v622 = vpop.f32.mrf.mxu0
  %v623 = vadd.f32 0.0, %v622
  %v624 = vpop.f32.mrf.mxu0
  %v625 = vpop.f32.mrf.mxu0
  %v626 = vadd.f32 0.0, %v625
  %v627 = vpop.f32.mrf.mxu0
  %628 = vmatprep.mubr.bf16.mxu0 0
  %629 = vmatmul.mubr.bf16.gmra.mxu0 %v379
  %v630 = vpop.f32.mrf.mxu0
  %v631 = vadd.f32 0.0, %v630
  %v632 = vpop.f32.mrf.mxu0
  %v633 = vpop.f32.mrf.mxu0
  %v634 = vadd.f32 0.0, %v633
  %v635 = vpop.f32.mrf.mxu0
  %636 = vmatprep.mubr.bf16.mxu0 0
  %637 = vmatmul.mubr.bf16.gmra.mxu0 %v380
  %v638 = vpop.f32.mrf.mxu0
  %v639 = vadd.f32 0.0, %v638
  %v640 = vpop.f32.mrf.mxu0
  %v641 = vpop.f32.mrf.mxu0
  %v642 = vadd.f32 0.0, %v641
  %v643 = vpop.f32.mrf.mxu0
  %644 = vmatprep.mubr.bf16.mxu0 0
  %645 = vmatmul.mubr.bf16.gmra.mxu0 %v381
  %v646 = vpop.f32.mrf.mxu0
  %v647 = vadd.f32 0.0, %v646
  %v648 = vpop.f32.mrf.mxu0
  %v649 = vpop.f32.mrf.mxu0
  %v650 = vadd.f32 0.0, %v649
  %v651 = vpop.f32.mrf.mxu0
  %652 = vmatprep.mubr.bf16.mxu0 0
  %653 = vmatmul.mubr.bf16.gmra.mxu0 %v382
  %v654 = vpop.f32.mrf.mxu0
  %v655 = vadd.f32 0.0, %v654
  %v656 = vpop.f32.mrf.mxu0
  %v657 = vpop.f32.mrf.mxu0
  %v658 = vadd.f32 0.0, %v657
  %v659 = vpop.f32.mrf.mxu0
  %660 = vmatprep.mubr.bf16.mxu0 0
  %661 = vmatmul.mubr.bf16.gmra.mxu0 %v383
  %v662 = vpop.f32.mrf.mxu0
  %v663 = vadd.f32 0.0, %v662
  %v664 = vpop.f32.mrf.mxu0
  %v665 = vpop.f32.mrf.mxu0
  %v666 = vadd.f32 0.0, %v665
  %v667 = vpop.f32.mrf.mxu0
  %668 = vmatprep.mubr.bf16.mxu0 0
  %669 = vmatmul.mubr.bf16.gmra.mxu0 %v384
  %v670 = vpop.f32.mrf.mxu0
  %v671 = vadd.f32 0.0, %v670
  %v672 = vpop.f32.mrf.mxu0
  %v673 = vpop.f32.mrf.mxu0
  %v674 = vadd.f32 0.0, %v673
  %v675 = vpop.f32.mrf.mxu0
  %676 = vmatprep.mubr.bf16.mxu0 0
  %677 = vmatmul.mubr.bf16.gmra.mxu0 %v385
  %v678 = vpop.f32.mrf.mxu0
  %v679 = vadd.f32 0.0, %v678
  %v680 = vpop.f32.mrf.mxu0
  %v681 = vpop.f32.mrf.mxu0
  %v682 = vadd.f32 0.0, %v681
  %v683 = vpop.f32.mrf.mxu0
  %684 = vmatprep.mubr.bf16.mxu0 0
  %685 = vmatmul.mubr.bf16.gmra.mxu0 %v386
  %v686 = vpop.f32.mrf.mxu0
  %v687 = vadd.f32 0.0, %v686
  %v688 = vpop.f32.mrf.mxu0
  %v689 = vpop.f32.mrf.mxu0
  %v690 = vadd.f32 0.0, %v689
  %v691 = vpop.f32.mrf.mxu0
  %692 = vmatprep.mubr.bf16.mxu0 0
  %693 = vmatmul.mubr.bf16.gmra.mxu0 %v387
  %v694 = vpop.f32.mrf.mxu0
  %v695 = vadd.f32 0.0, %v694
  %v696 = vpop.f32.mrf.mxu0
  %v697 = vpop.f32.mrf.mxu0
  %v698 = vadd.f32 0.0, %v697
  %v699 = vpop.f32.mrf.mxu0
  %700 = vmatprep.mubr.bf16.mxu0 0
  %701 = vmatmul.mubr.bf16.gmra.mxu0 %v388
  %v702 = vpop.f32.mrf.mxu0
  %v703 = vadd.f32 0.0, %v702
  %v704 = vpop.f32.mrf.mxu0
  %v705 = vpop.f32.mrf.mxu0
  %v706 = vadd.f32 0.0, %v705
  %v707 = vpop.f32.mrf.mxu0
  %708 = vmatprep.mubr.bf16.mxu0 0
  %709 = vmatmul.mubr.bf16.gmra.mxu0 %v389
  %v710 = vpop.f32.mrf.mxu0
  %v711 = vadd.f32 0.0, %v710
  %v712 = vpop.f32.mrf.mxu0
  %v713 = vpop.f32.mrf.mxu0
  %v714 = vadd.f32 0.0, %v713
  %v715 = vpop.f32.mrf.mxu0
  %716 = vmatprep.mubr.bf16.mxu0 0
  %717 = vmatmul.mubr.bf16.gmra.mxu0 %v390
  %v718 = vpop.f32.mrf.mxu0
  %v719 = vadd.f32 0.0, %v718
  %v720 = vpop.f32.mrf.mxu0
  %v721 = vpop.f32.mrf.mxu0
  %v722 = vadd.f32 0.0, %v721
  %v723 = vpop.f32.mrf.mxu0
  %724 = vmatprep.mubr.bf16.mxu0 0
  %725 = vmatmul.mubr.bf16.gmra.mxu0 %v391
  %v726 = vpop.f32.mrf.mxu0
  %v727 = vadd.f32 0.0, %v726
  %v728 = vpop.f32.mrf.mxu0
  %v729 = vpop.f32.mrf.mxu0
  %v730 = vadd.f32 0.0, %v729
  %v731 = vpop.f32.mrf.mxu0
  %732 = vmatprep.mubr.bf16.mxu0 0
  %733 = vmatmul.mubr.bf16.gmra.mxu0 %v392
  %v734 = vpop.f32.mrf.mxu0
  %v735 = vadd.f32 0.0, %v734
  %v736 = vpop.f32.mrf.mxu0
  %v737 = vpop.f32.mrf.mxu0
  %v738 = vadd.f32 0.0, %v737
  %v739 = vpop.f32.mrf.mxu0
  %740 = vmatprep.mubr.bf16.mxu0 0
  %741 = vmatmul.mubr.bf16.gmra.mxu0 %v393
  %v742 = vpop.f32.mrf.mxu0
  %v743 = vadd.f32 0.0, %v742
  %v744 = vpop.f32.mrf.mxu0
  %v745 = vpop.f32.mrf.mxu0
  %v746 = vadd.f32 0.0, %v745
  %v747 = vpop.f32.mrf.mxu0
  %748 = vmatprep.mubr.bf16.mxu0 0
  %749 = vmatmul.mubr.bf16.gmra.mxu0 %v394
  %v750 = vpop.f32.mrf.mxu0
  %v751 = vadd.f32 0.0, %v750
  %v752 = vpop.f32.mrf.mxu0
  %v753 = vpop.f32.mrf.mxu0
  %v754 = vadd.f32 0.0, %v753
  %v755 = vpop.f32.mrf.mxu0
  %756 = vmatprep.mubr.bf16.mxu0 0
  %757 = vmatmul.mubr.bf16.gmra.mxu0 %v395
  %v758 = vpop.f32.mrf.mxu0
  %v759 = vadd.f32 0.0, %v758
  %v760 = vpop.f32.mrf.mxu0
  %v761 = vpop.f32.mrf.mxu0
  %v762 = vadd.f32 0.0, %v761
  %v763 = vpop.f32.mrf.mxu0
  %764 = vdwg.mxu0
  %v765 = vadd.f32 %v108, %v511
  %v766 = vadd.f32 %v109, %v514
  %v767 = vadd.f32 %v110, %v519
  %v768 = vadd.f32 %v111, %v522
  %v769 = vadd.f32 %v112, %v527
  %v770 = vadd.f32 %v113, %v530
  %v771 = vadd.f32 %v114, %v535
  %v772 = vadd.f32 %v115, %v538
  %v773 = vadd.f32 %v116, %v543
  %v774 = vadd.f32 %v117, %v546
  %v775 = vadd.f32 %v118, %v551
  %v776 = vadd.f32 %v119, %v554
  %v777 = vadd.f32 %v120, %v559
  %v778 = vadd.f32 %v121, %v562
  %v779 = vadd.f32 %v122, %v567
  %v780 = vadd.f32 %v123, %v570
  %v781 = vadd.f32 %v124, %v575
  %v782 = vadd.f32 %v125, %v578
  %v783 = vadd.f32 %v126, %v583
  %v784 = vadd.f32 %v127, %v586
  %v785 = vadd.f32 %v128, %v591
  %v786 = vadd.f32 %v129, %v594
  %v787 = vadd.f32 %v130, %v599
  %v788 = vadd.f32 %v131, %v602
  %v789 = vadd.f32 %v132, %v607
  %v790 = vadd.f32 %v133, %v610
  %v791 = vadd.f32 %v134, %v615
  %v792 = vadd.f32 %v135, %v618
  %v793 = vadd.f32 %v136, %v623
  %v794 = vadd.f32 %v137, %v626
  %v795 = vadd.f32 %v138, %v631
  %v796 = vadd.f32 %v139, %v634
  %v797 = vadd.f32 %v140, %v639
  %v798 = vadd.f32 %v141, %v642
  %v799 = vadd.f32 %v142, %v647
  %v800 = vadd.f32 %v143, %v650
  %v801 = vadd.f32 %v144, %v655
  %v802 = vadd.f32 %v145, %v658
  %v803 = vadd.f32 %v146, %v663
  %v804 = vadd.f32 %v147, %v666
  %v805 = vadd.f32 %v148, %v671
  %v806 = vadd.f32 %v149, %v674
  %v807 = vadd.f32 %v150, %v679
  %v808 = vadd.f32 %v151, %v682
  %v809 = vadd.f32 %v152, %v687
  %v810 = vadd.f32 %v153, %v690
  %v811 = vadd.f32 %v154, %v695
  %v812 = vadd.f32 %v155, %v698
  %v813 = vadd.f32 %v156, %v703
  %v814 = vadd.f32 %v157, %v706
  %v815 = vadd.f32 %v158, %v711
  %v816 = vadd.f32 %v159, %v714
  %v817 = vadd.f32 %v160, %v719
  %v818 = vadd.f32 %v161, %v722
  %v819 = vadd.f32 %v162, %v727
  %v820 = vadd.f32 %v163, %v730
  %v821 = vadd.f32 %v164, %v735
  %v822 = vadd.f32 %v165, %v738
  %v823 = vadd.f32 %v166, %v743
  %v824 = vadd.f32 %v167, %v746
  %v825 = vadd.f32 %v168, %v751
  %v826 = vadd.f32 %v169, %v754
  %v827 = vadd.f32 %v170, %v759
  %v828 = vadd.f32 %v171, %v762
  %829 = vst [vmem:[#allocation2] sm:$0xff] %v765
  %830 = vst [vmem:[#allocation2 + $0x8] sm:$0xff] %v766
  %831 = vst [vmem:[#allocation2 + $0x10] sm:$0xff] %v767
  %832 = vst [vmem:[#allocation2 + $0x18] sm:$0xff] %v768
  %833 = vst [vmem:[#allocation2 + $0x20] sm:$0xff] %v769
  %834 = vst [vmem:[#allocation2 + $0x28] sm:$0xff] %v770
  %835 = vst [vmem:[#allocation2 + $0x30] sm:$0xff] %v771
  %836 = vst [vmem:[#allocation2 + $0x38] sm:$0xff] %v772
  %837 = vst [vmem:[#allocation2 + $0x40] sm:$0xff] %v773
  %838 = vst [vmem:[#allocation2 + $0x48] sm:$0xff] %v774
  %839 = vst [vmem:[#allocation2 + $0x50] sm:$0xff] %v775
  %840 = vst [vmem:[#allocation2 + $0x58] sm:$0xff] %v776
  %841 = vst [vmem:[#allocation2 + $0x60] sm:$0xff] %v777
  %842 = vst [vmem:[#allocation2 + $0x68] sm:$0xff] %v778
  %843 = vst [vmem:[#allocation2 + $0x70] sm:$0xff] %v779
  %844 = vst [vmem:[#allocation2 + $0x78] sm:$0xff] %v780
  %845 = vst [vmem:[#allocation2 + $0x80] sm:$0xff] %v781
  %846 = vst [vmem:[#allocation2 + $0x88] sm:$0xff] %v782
  %847 = vst [vmem:[#allocation2 + $0x90] sm:$0xff] %v783
  %848 = vst [vmem:[#allocation2 + $0x98] sm:$0xff] %v784
  %849 = vst [vmem:[#allocation2 + $0xa0] sm:$0xff] %v785
  %850 = vst [vmem:[#allocation2 + $0xa8] sm:$0xff] %v786
  %851 = vst [vmem:[#allocation2 + $0xb0] sm:$0xff] %v787
  %852 = vst [vmem:[#allocation2 + $0xb8] sm:$0xff] %v788
  %853 = vst [vmem:[#allocation2 + $0xc0] sm:$0xff] %v789
  %854 = vst [vmem:[#allocation2 + $0xc8] sm:$0xff] %v790
  %855 = vst [vmem:[#allocation2 + $0xd0] sm:$0xff] %v791
  %856 = vst [vmem:[#allocation2 + $0xd8] sm:$0xff] %v792
  %857 = vst [vmem:[#allocation2 + $0xe0] sm:$0xff] %v793
  %858 = vst [vmem:[#allocation2 + $0xe8] sm:$0xff] %v794
  %859 = vst [vmem:[#allocation2 + $0xf0] sm:$0xff] %v795
  %860 = vst [vmem:[#allocation2 + $0xf8] sm:$0xff] %v796
  %861 = vst [vmem:[#allocation2 + $0x100] sm:$0xff] %v797
  %862 = vst [vmem:[#allocation2 + $0x108] sm:$0xff] %v798
  %863 = vst [vmem:[#allocation2 + $0x110] sm:$0xff] %v799
  %864 = vst [vmem:[#allocation2 + $0x118] sm:$0xff] %v800
  %865 = vst [vmem:[#allocation2 + $0x120] sm:$0xff] %v801
  %866 = vst [vmem:[#allocation2 + $0x128] sm:$0xff] %v802
  %867 = vst [vmem:[#allocation2 + $0x130] sm:$0xff] %v803
  %868 = vst [vmem:[#allocation2 + $0x138] sm:$0xff] %v804
  %869 = vst [vmem:[#allocation2 + $0x140] sm:$0xff] %v805
  %870 = vst [vmem:[#allocation2 + $0x148] sm:$0xff] %v806
  %871 = vst [vmem:[#allocation2 + $0x150] sm:$0xff] %v807
  %872 = vst [vmem:[#allocation2 + $0x158] sm:$0xff] %v808
  %873 = vst [vmem:[#allocation2 + $0x160] sm:$0xff] %v809
  %874 = vst [vmem:[#allocation2 + $0x168] sm:$0xff] %v810
  %875 = vst [vmem:[#allocation2 + $0x170] sm:$0xff] %v811
  %876 = vst [vmem:[#allocation2 + $0x178] sm:$0xff] %v812
  %877 = vst [vmem:[#allocation2 + $0x180] sm:$0xff] %v813
  %878 = vst [vmem:[#allocation2 + $0x188] sm:$0xff] %v814
  %879 = vst [vmem:[#allocation2 + $0x190] sm:$0xff] %v815
  %880 = vst [vmem:[#allocation2 + $0x198] sm:$0xff] %v816
  %881 = vst [vmem:[#allocation2 + $0x1a0] sm:$0xff] %v817
  %882 = vst [vmem:[#allocation2 + $0x1a8] sm:$0xff] %v818
  %883 = vst [vmem:[#allocation2 + $0x1b0] sm:$0xff] %v819
  %884 = vst [vmem:[#allocation2 + $0x1b8] sm:$0xff] %v820
  %885 = vst [vmem:[#allocation2 + $0x1c0] sm:$0xff] %v821
  %886 = vst [vmem:[#allocation2 + $0x1c8] sm:$0xff] %v822
  %887 = vst [vmem:[#allocation2 + $0x1d0] sm:$0xff] %v823
  %888 = vst [vmem:[#allocation2 + $0x1d8] sm:$0xff] %v824
  %889 = vst [vmem:[#allocation2 + $0x1e0] sm:$0xff] %v825
  %890 = vst [vmem:[#allocation2 + $0x1e8] sm:$0xff] %v826
  %891 = vst [vmem:[#allocation2 + $0x1f0] sm:$0xff] %v827
  %892 = vst [vmem:[#allocation2 + $0x1f8] sm:$0xff] %v828
  // Predicated region
  $region18: #{discriminator_forward.11} parent=0 // pred_check
    %p893 = pneg %p15
  $region19: #{discriminator_forward.11} parent=0 // pred_check_branch
    %895 = sbr.rel (%p893) target = $region21
  $region20: #{discriminator_forward.11} parent=0 // pred_region
    %v896 = vld [vmem:[#allocation2] sm:$0xff]
    %v897 = vld [vmem:[#allocation2 + $0x8] sm:$0xff]
    %v898 = vld [vmem:[#allocation2 + $0x10] sm:$0xff]
    %v899 = vld [vmem:[#allocation2 + $0x18] sm:$0xff]
    %v900 = vld [vmem:[#allocation2 + $0x20] sm:$0xff]
    %v901 = vld [vmem:[#allocation2 + $0x28] sm:$0xff]
    %v902 = vld [vmem:[#allocation2 + $0x30] sm:$0xff]
    %v903 = vld [vmem:[#allocation2 + $0x38] sm:$0xff]
    %v904 = vld [vmem:[#allocation2 + $0x40] sm:$0xff]
    %v905 = vld [vmem:[#allocation2 + $0x48] sm:$0xff]
    %v906 = vld [vmem:[#allocation2 + $0x50] sm:$0xff]
    %v907 = vld [vmem:[#allocation2 + $0x58] sm:$0xff]
    %v908 = vld [vmem:[#allocation2 + $0x60] sm:$0xff]
    %v909 = vld [vmem:[#allocation2 + $0x68] sm:$0xff]
    %v910 = vld [vmem:[#allocation2 + $0x70] sm:$0xff]
    %v911 = vld [vmem:[#allocation2 + $0x78] sm:$0xff]
    %v912 = vld [vmem:[#allocation2 + $0x80] sm:$0xff]
    %v913 = vld [vmem:[#allocation2 + $0x88] sm:$0xff]
    %v914 = vld [vmem:[#allocation2 + $0x90] sm:$0xff]
    %v915 = vld [vmem:[#allocation2 + $0x98] sm:$0xff]
    %v916 = vld [vmem:[#allocation2 + $0xa0] sm:$0xff]
    %v917 = vld [vmem:[#allocation2 + $0xa8] sm:$0xff]
    %v918 = vld [vmem:[#allocation2 + $0xb0] sm:$0xff]
    %v919 = vld [vmem:[#allocation2 + $0xb8] sm:$0xff]
    %v920 = vld [vmem:[#allocation2 + $0xc0] sm:$0xff]
    %v921 = vld [vmem:[#allocation2 + $0xc8] sm:$0xff]
    %v922 = vld [vmem:[#allocation2 + $0xd0] sm:$0xff]
    %v923 = vld [vmem:[#allocation2 + $0xd8] sm:$0xff]
    %v924 = vld [vmem:[#allocation2 + $0xe0] sm:$0xff]
    %v925 = vld [vmem:[#allocation2 + $0xe8] sm:$0xff]
    %v926 = vld [vmem:[#allocation2 + $0xf0] sm:$0xff]
    %v927 = vld [vmem:[#allocation2 + $0xf8] sm:$0xff]
    %v928 = vld [vmem:[#allocation2 + $0x100] sm:$0xff]
    %v929 = vld [vmem:[#allocation2 + $0x108] sm:$0xff]
    %v930 = vld [vmem:[#allocation2 + $0x110] sm:$0xff]
    %v931 = vld [vmem:[#allocation2 + $0x118] sm:$0xff]
    %v932 = vld [vmem:[#allocation2 + $0x120] sm:$0xff]
    %v933 = vld [vmem:[#allocation2 + $0x128] sm:$0xff]
    %v934 = vld [vmem:[#allocation2 + $0x130] sm:$0xff]
    %v935 = vld [vmem:[#allocation2 + $0x138] sm:$0xff]
    %v936 = vld [vmem:[#allocation2 + $0x140] sm:$0xff]
    %v937 = vld [vmem:[#allocation2 + $0x148] sm:$0xff]
    %v938 = vld [vmem:[#allocation2 + $0x150] sm:$0xff]
    %v939 = vld [vmem:[#allocation2 + $0x158] sm:$0xff]
    %v940 = vld [vmem:[#allocation2 + $0x160] sm:$0xff]
    %v941 = vld [vmem:[#allocation2 + $0x168] sm:$0xff]
    %v942 = vld [vmem:[#allocation2 + $0x170] sm:$0xff]
    %v943 = vld [vmem:[#allocation2 + $0x178] sm:$0xff]
    %v944 = vld [vmem:[#allocation2 + $0x180] sm:$0xff]
    %v945 = vld [vmem:[#allocation2 + $0x188] sm:$0xff]
    %v946 = vld [vmem:[#allocation2 + $0x190] sm:$0xff]
    %v947 = vld [vmem:[#allocation2 + $0x198] sm:$0xff]
    %v948 = vld [vmem:[#allocation2 + $0x1a0] sm:$0xff]
    %v949 = vld [vmem:[#allocation2 + $0x1a8] sm:$0xff]
    %v950 = vld [vmem:[#allocation2 + $0x1b0] sm:$0xff]
    %v951 = vld [vmem:[#allocation2 + $0x1b8] sm:$0xff]
    %v952 = vld [vmem:[#allocation2 + $0x1c0] sm:$0xff]
    %v953 = vld [vmem:[#allocation2 + $0x1c8] sm:$0xff]
    %v954 = vld [vmem:[#allocation2 + $0x1d0] sm:$0xff]
    %v955 = vld [vmem:[#allocation2 + $0x1d8] sm:$0xff]
    %v956 = vld [vmem:[#allocation2 + $0x1e0] sm:$0xff]
    %v957 = vld [vmem:[#allocation2 + $0x1e8] sm:$0xff]
    %v958 = vld [vmem:[#allocation2 + $0x1f0] sm:$0xff]
    %v959 = vld [vmem:[#allocation2 + $0x1f8] sm:$0xff]
    %v960 = vld [vmem:[%s2] sm:$0x1]
    %v962 = vlaneseq
    %v963 = vshrl.u32 %v962, 7
    %v964 = vsub.s32 0, %v963
    %v965 = vrot.slane %v960, %v964
    %v967 = vadd.f32 %v896, %v965
    %v968 = vadd.f32 %v897, %v965
    %v969 = vadd.f32 %v898, %v965
    %v970 = vadd.f32 %v899, %v965
    %v971 = vadd.f32 %v900, %v965
    %v972 = vadd.f32 %v901, %v965
    %v973 = vadd.f32 %v902, %v965
    %v974 = vadd.f32 %v903, %v965
    %v975 = vadd.f32 %v904, %v965
    %v976 = vadd.f32 %v905, %v965
    %v977 = vadd.f32 %v906, %v965
    %v978 = vadd.f32 %v907, %v965
    %v979 = vadd.f32 %v908, %v965
    %v980 = vadd.f32 %v909, %v965
    %v981 = vadd.f32 %v910, %v965
    %v982 = vadd.f32 %v911, %v965
    %v983 = vadd.f32 %v912, %v965
    %v984 = vadd.f32 %v913, %v965
    %v985 = vadd.f32 %v914, %v965
    %v986 = vadd.f32 %v915, %v965
    %v987 = vadd.f32 %v916, %v965
    %v988 = vadd.f32 %v917, %v965
    %v989 = vadd.f32 %v918, %v965
    %v990 = vadd.f32 %v919, %v965
    %v991 = vadd.f32 %v920, %v965
    %v992 = vadd.f32 %v921, %v965
    %v993 = vadd.f32 %v922, %v965
    %v994 = vadd.f32 %v923, %v965
    %v995 = vadd.f32 %v924, %v965
    %v996 = vadd.f32 %v925, %v965
    %v997 = vadd.f32 %v926, %v965
    %v998 = vadd.f32 %v927, %v965
    %v999 = vadd.f32 %v928, %v965
    %v1000 = vadd.f32 %v929, %v965
    %v1001 = vadd.f32 %v930, %v965
    %v1002 = vadd.f32 %v931, %v965
    %v1003 = vadd.f32 %v932, %v965
    %v1004 = vadd.f32 %v933, %v965
    %v1005 = vadd.f32 %v934, %v965
    %v1006 = vadd.f32 %v935, %v965
    %v1007 = vadd.f32 %v936, %v965
    %v1008 = vadd.f32 %v937, %v965
    %v1009 = vadd.f32 %v938, %v965
    %v1010 = vadd.f32 %v939, %v965
    %v1011 = vadd.f32 %v940, %v965
    %v1012 = vadd.f32 %v941, %v965
    %v1013 = vadd.f32 %v942, %v965
    %v1014 = vadd.f32 %v943, %v965
    %v1015 = vadd.f32 %v944, %v965
    %v1016 = vadd.f32 %v945, %v965
    %v1017 = vadd.f32 %v946, %v965
    %v1018 = vadd.f32 %v947, %v965
    %v1019 = vadd.f32 %v948, %v965
    %v1020 = vadd.f32 %v949, %v965
    %v1021 = vadd.f32 %v950, %v965
    %v1022 = vadd.f32 %v951, %v965
    %v1023 = vadd.f32 %v952, %v965
    %v1024 = vadd.f32 %v953, %v965
    %v1025 = vadd.f32 %v954, %v965
    %v1026 = vadd.f32 %v955, %v965
    %v1027 = vadd.f32 %v956, %v965
    %v1028 = vadd.f32 %v957, %v965
    %v1029 = vadd.f32 %v958, %v965
    %v1030 = vadd.f32 %v959, %v965
    %vm1031 = vcmp.ge.f32.partialorder %v967, 0.0
    %vm1032 = vcmp.ge.f32.partialorder %v968, 0.0
    %vm1033 = vcmp.ge.f32.partialorder %v969, 0.0
    %vm1034 = vcmp.ge.f32.partialorder %v970, 0.0
    %vm1035 = vcmp.ge.f32.partialorder %v971, 0.0
    %vm1036 = vcmp.ge.f32.partialorder %v972, 0.0
    %vm1037 = vcmp.ge.f32.partialorder %v973, 0.0
    %vm1038 = vcmp.ge.f32.partialorder %v974, 0.0
    %vm1039 = vcmp.ge.f32.partialorder %v975, 0.0
    %vm1040 = vcmp.ge.f32.partialorder %v976, 0.0
    %vm1041 = vcmp.ge.f32.partialorder %v977, 0.0
    %vm1042 = vcmp.ge.f32.partialorder %v978, 0.0
    %vm1043 = vcmp.ge.f32.partialorder %v979, 0.0
    %vm1044 = vcmp.ge.f32.partialorder %v980, 0.0
    %vm1045 = vcmp.ge.f32.partialorder %v981, 0.0
    %vm1046 = vcmp.ge.f32.partialorder %v982, 0.0
    %vm1047 = vcmp.ge.f32.partialorder %v983, 0.0
    %vm1048 = vcmp.ge.f32.partialorder %v984, 0.0
    %vm1049 = vcmp.ge.f32.partialorder %v985, 0.0
    %vm1050 = vcmp.ge.f32.partialorder %v986, 0.0
    %vm1051 = vcmp.ge.f32.partialorder %v987, 0.0
    %vm1052 = vcmp.ge.f32.partialorder %v988, 0.0
    %vm1053 = vcmp.ge.f32.partialorder %v989, 0.0
    %vm1054 = vcmp.ge.f32.partialorder %v990, 0.0
    %vm1055 = vcmp.ge.f32.partialorder %v991, 0.0
    %vm1056 = vcmp.ge.f32.partialorder %v992, 0.0
    %vm1057 = vcmp.ge.f32.partialorder %v993, 0.0
    %vm1058 = vcmp.ge.f32.partialorder %v994, 0.0
    %vm1059 = vcmp.ge.f32.partialorder %v995, 0.0
    %vm1060 = vcmp.ge.f32.partialorder %v996, 0.0
    %vm1061 = vcmp.ge.f32.partialorder %v997, 0.0
    %vm1062 = vcmp.ge.f32.partialorder %v998, 0.0
    %vm1063 = vcmp.ge.f32.partialorder %v999, 0.0
    %vm1064 = vcmp.ge.f32.partialorder %v1000, 0.0
    %vm1065 = vcmp.ge.f32.partialorder %v1001, 0.0
    %vm1066 = vcmp.ge.f32.partialorder %v1002, 0.0
    %vm1067 = vcmp.ge.f32.partialorder %v1003, 0.0
    %vm1068 = vcmp.ge.f32.partialorder %v1004, 0.0
    %vm1069 = vcmp.ge.f32.partialorder %v1005, 0.0
    %vm1070 = vcmp.ge.f32.partialorder %v1006, 0.0
    %vm1071 = vcmp.ge.f32.partialorder %v1007, 0.0
    %vm1072 = vcmp.ge.f32.partialorder %v1008, 0.0
    %vm1073 = vcmp.ge.f32.partialorder %v1009, 0.0
    %vm1074 = vcmp.ge.f32.partialorder %v1010, 0.0
    %vm1075 = vcmp.ge.f32.partialorder %v1011, 0.0
    %vm1076 = vcmp.ge.f32.partialorder %v1012, 0.0
    %vm1077 = vcmp.ge.f32.partialorder %v1013, 0.0
    %vm1078 = vcmp.ge.f32.partialorder %v1014, 0.0
    %vm1079 = vcmp.ge.f32.partialorder %v1015, 0.0
    %vm1080 = vcmp.ge.f32.partialorder %v1016, 0.0
    %vm1081 = vcmp.ge.f32.partialorder %v1017, 0.0
    %vm1082 = vcmp.ge.f32.partialorder %v1018, 0.0
    %vm1083 = vcmp.ge.f32.partialorder %v1019, 0.0
    %vm1084 = vcmp.ge.f32.partialorder %v1020, 0.0
    %vm1085 = vcmp.ge.f32.partialorder %v1021, 0.0
    %vm1086 = vcmp.ge.f32.partialorder %v1022, 0.0
    %vm1087 = vcmp.ge.f32.partialorder %v1023, 0.0
    %vm1088 = vcmp.ge.f32.partialorder %v1024, 0.0
    %vm1089 = vcmp.ge.f32.partialorder %v1025, 0.0
    %vm1090 = vcmp.ge.f32.partialorder %v1026, 0.0
    %vm1091 = vcmp.ge.f32.partialorder %v1027, 0.0
    %vm1092 = vcmp.ge.f32.partialorder %v1028, 0.0
    %vm1093 = vcmp.ge.f32.partialorder %v1029, 0.0
    %vm1094 = vcmp.ge.f32.partialorder %v1030, 0.0
    %v1095 = vmul.f32 %v967, 0.2
    %v1096 = vmul.f32 %v968, 0.2
    %v1097 = vmul.f32 %v969, 0.2
    %v1098 = vmul.f32 %v970, 0.2
    %v1099 = vmul.f32 %v971, 0.2
    %v1100 = vmul.f32 %v972, 0.2
    %v1101 = vmul.f32 %v973, 0.2
    %v1102 = vmul.f32 %v974, 0.2
    %v1103 = vmul.f32 %v975, 0.2
    %v1104 = vmul.f32 %v976, 0.2
    %v1105 = vmul.f32 %v977, 0.2
    %v1106 = vmul.f32 %v978, 0.2
    %v1107 = vmul.f32 %v979, 0.2
    %v1108 = vmul.f32 %v980, 0.2
    %v1109 = vmul.f32 %v981, 0.2
    %v1110 = vmul.f32 %v982, 0.2
    %v1111 = vmul.f32 %v983, 0.2
    %v1112 = vmul.f32 %v984, 0.2
    %v1113 = vmul.f32 %v985, 0.2
    %v1114 = vmul.f32 %v986, 0.2
    %v1115 = vmul.f32 %v987, 0.2
    %v1116 = vmul.f32 %v988, 0.2
    %v1117 = vmul.f32 %v989, 0.2
    %v1118 = vmul.f32 %v990, 0.2
    %v1119 = vmul.f32 %v991, 0.2
    %v1120 = vmul.f32 %v992, 0.2
    %v1121 = vmul.f32 %v993, 0.2
    %v1122 = vmul.f32 %v994, 0.2
    %v1123 = vmul.f32 %v995, 0.2
    %v1124 = vmul.f32 %v996, 0.2
    %v1125 = vmul.f32 %v997, 0.2
    %v1126 = vmul.f32 %v998, 0.2
    %v1127 = vmul.f32 %v999, 0.2
    %v1128 = vmul.f32 %v1000, 0.2
    %v1129 = vmul.f32 %v1001, 0.2
    %v1130 = vmul.f32 %v1002, 0.2
    %v1131 = vmul.f32 %v1003, 0.2
    %v1132 = vmul.f32 %v1004, 0.2
    %v1133 = vmul.f32 %v1005, 0.2
    %v1134 = vmul.f32 %v1006, 0.2
    %v1135 = vmul.f32 %v1007, 0.2
    %v1136 = vmul.f32 %v1008, 0.2
    %v1137 = vmul.f32 %v1009, 0.2
    %v1138 = vmul.f32 %v1010, 0.2
    %v1139 = vmul.f32 %v1011, 0.2
    %v1140 = vmul.f32 %v1012, 0.2
    %v1141 = vmul.f32 %v1013, 0.2
    %v1142 = vmul.f32 %v1014, 0.2
    %v1143 = vmul.f32 %v1015, 0.2
    %v1144 = vmul.f32 %v1016, 0.2
    %v1145 = vmul.f32 %v1017, 0.2
    %v1146 = vmul.f32 %v1018, 0.2
    %v1147 = vmul.f32 %v1019, 0.2
    %v1148 = vmul.f32 %v1020, 0.2
    %v1149 = vmul.f32 %v1021, 0.2
    %v1150 = vmul.f32 %v1022, 0.2
    %v1151 = vmul.f32 %v1023, 0.2
    %v1152 = vmul.f32 %v1024, 0.2
    %v1153 = vmul.f32 %v1025, 0.2
    %v1154 = vmul.f32 %v1026, 0.2
    %v1155 = vmul.f32 %v1027, 0.2
    %v1156 = vmul.f32 %v1028, 0.2
    %v1157 = vmul.f32 %v1029, 0.2
    %v1158 = vmul.f32 %v1030, 0.2
    %v1159 = vsel %vm1031, %v967, %v1095
    %v1160 = vsel %vm1032, %v968, %v1096
    %v1161 = vsel %vm1033, %v969, %v1097
    %v1162 = vsel %vm1034, %v970, %v1098
    %v1163 = vsel %vm1035, %v971, %v1099
    %v1164 = vsel %vm1036, %v972, %v1100
    %v1165 = vsel %vm1037, %v973, %v1101
    %v1166 = vsel %vm1038, %v974, %v1102
    %v1167 = vsel %vm1039, %v975, %v1103
    %v1168 = vsel %vm1040, %v976, %v1104
    %v1169 = vsel %vm1041, %v977, %v1105
    %v1170 = vsel %vm1042, %v978, %v1106
    %v1171 = vsel %vm1043, %v979, %v1107
    %v1172 = vsel %vm1044, %v980, %v1108
    %v1173 = vsel %vm1045, %v981, %v1109
    %v1174 = vsel %vm1046, %v982, %v1110
    %v1175 = vsel %vm1047, %v983, %v1111
    %v1176 = vsel %vm1048, %v984, %v1112
    %v1177 = vsel %vm1049, %v985, %v1113
    %v1178 = vsel %vm1050, %v986, %v1114
    %v1179 = vsel %vm1051, %v987, %v1115
    %v1180 = vsel %vm1052, %v988, %v1116
    %v1181 = vsel %vm1053, %v989, %v1117
    %v1182 = vsel %vm1054, %v990, %v1118
    %v1183 = vsel %vm1055, %v991, %v1119
    %v1184 = vsel %vm1056, %v992, %v1120
    %v1185 = vsel %vm1057, %v993, %v1121
    %v1186 = vsel %vm1058, %v994, %v1122
    %v1187 = vsel %vm1059, %v995, %v1123
    %v1188 = vsel %vm1060, %v996, %v1124
    %v1189 = vsel %vm1061, %v997, %v1125
    %v1190 = vsel %vm1062, %v998, %v1126
    %v1191 = vsel %vm1063, %v999, %v1127
    %v1192 = vsel %vm1064, %v1000, %v1128
    %v1193 = vsel %vm1065, %v1001, %v1129
    %v1194 = vsel %vm1066, %v1002, %v1130
    %v1195 = vsel %vm1067, %v1003, %v1131
    %v1196 = vsel %vm1068, %v1004, %v1132
    %v1197 = vsel %vm1069, %v1005, %v1133
    %v1198 = vsel %vm1070, %v1006, %v1134
    %v1199 = vsel %vm1071, %v1007, %v1135
    %v1200 = vsel %vm1072, %v1008, %v1136
    %v1201 = vsel %vm1073, %v1009, %v1137
    %v1202 = vsel %vm1074, %v1010, %v1138
    %v1203 = vsel %vm1075, %v1011, %v1139
    %v1204 = vsel %vm1076, %v1012, %v1140
    %v1205 = vsel %vm1077, %v1013, %v1141
    %v1206 = vsel %vm1078, %v1014, %v1142
    %v1207 = vsel %vm1079, %v1015, %v1143
    %v1208 = vsel %vm1080, %v1016, %v1144
    %v1209 = vsel %vm1081, %v1017, %v1145
    %v1210 = vsel %vm1082, %v1018, %v1146
    %v1211 = vsel %vm1083, %v1019, %v1147
    %v1212 = vsel %vm1084, %v1020, %v1148
    %v1213 = vsel %vm1085, %v1021, %v1149
    %v1214 = vsel %vm1086, %v1022, %v1150
    %v1215 = vsel %vm1087, %v1023, %v1151
    %v1216 = vsel %vm1088, %v1024, %v1152
    %v1217 = vsel %vm1089, %v1025, %v1153
    %v1218 = vsel %vm1090, %v1026, %v1154
    %v1219 = vsel %vm1091, %v1027, %v1155
    %v1220 = vsel %vm1092, %v1028, %v1156
    %v1221 = vsel %vm1093, %v1029, %v1157
    %v1222 = vsel %vm1094, %v1030, %v1158
    %v1223 = vpack.c.bf16 %v1160, %v1159
    %v1224 = vpack.c.bf16 %v1162, %v1161
    %v1225 = vpack.c.bf16 %v1164, %v1163
    %v1226 = vpack.c.bf16 %v1166, %v1165
    %v1227 = vpack.c.bf16 %v1168, %v1167
    %v1228 = vpack.c.bf16 %v1170, %v1169
    %v1229 = vpack.c.bf16 %v1172, %v1171
    %v1230 = vpack.c.bf16 %v1174, %v1173
    %v1231 = vpack.c.bf16 %v1176, %v1175
    %v1232 = vpack.c.bf16 %v1178, %v1177
    %v1233 = vpack.c.bf16 %v1180, %v1179
    %v1234 = vpack.c.bf16 %v1182, %v1181
    %v1235 = vpack.c.bf16 %v1184, %v1183
    %v1236 = vpack.c.bf16 %v1186, %v1185
    %v1237 = vpack.c.bf16 %v1188, %v1187
    %v1238 = vpack.c.bf16 %v1190, %v1189
    %v1239 = vpack.c.bf16 %v1192, %v1191
    %v1240 = vpack.c.bf16 %v1194, %v1193
    %v1241 = vpack.c.bf16 %v1196, %v1195
    %v1242 = vpack.c.bf16 %v1198, %v1197
    %v1243 = vpack.c.bf16 %v1200, %v1199
    %v1244 = vpack.c.bf16 %v1202, %v1201
    %v1245 = vpack.c.bf16 %v1204, %v1203
    %v1246 = vpack.c.bf16 %v1206, %v1205
    %v1247 = vpack.c.bf16 %v1208, %v1207
    %v1248 = vpack.c.bf16 %v1210, %v1209
    %v1249 = vpack.c.bf16 %v1212, %v1211
    %v1250 = vpack.c.bf16 %v1214, %v1213
    %v1251 = vpack.c.bf16 %v1216, %v1215
    %v1252 = vpack.c.bf16 %v1218, %v1217
    %v1253 = vpack.c.bf16 %v1220, %v1219
    %v1254 = vpack.c.bf16 %v1222, %v1221
    %v1287 = vunpack.c.l.b16 %v1223
    %v1288 = vunpack.c.h.b16 %v1223
    %v1289 = vunpack.c.l.b16 %v1224
    %v1290 = vunpack.c.h.b16 %v1224
    %v1291 = vunpack.c.l.b16 %v1225
    %v1292 = vunpack.c.h.b16 %v1225
    %v1293 = vunpack.c.l.b16 %v1226
    %v1294 = vunpack.c.h.b16 %v1226
    %v1295 = vunpack.c.l.b16 %v1227
    %v1296 = vunpack.c.h.b16 %v1227
    %v1297 = vunpack.c.l.b16 %v1228
    %v1298 = vunpack.c.h.b16 %v1228
    %v1299 = vunpack.c.l.b16 %v1229
    %v1300 = vunpack.c.h.b16 %v1229
    %v1301 = vunpack.c.l.b16 %v1230
    %v1302 = vunpack.c.h.b16 %v1230
    %v1303 = vunpack.c.l.b16 %v1231
    %v1304 = vunpack.c.h.b16 %v1231
    %v1305 = vunpack.c.l.b16 %v1232
    %v1306 = vunpack.c.h.b16 %v1232
    %v1307 = vunpack.c.l.b16 %v1233
    %v1308 = vunpack.c.h.b16 %v1233
    %v1309 = vunpack.c.l.b16 %v1234
    %v1310 = vunpack.c.h.b16 %v1234
    %v1311 = vunpack.c.l.b16 %v1235
    %v1312 = vunpack.c.h.b16 %v1235
    %v1313 = vunpack.c.l.b16 %v1236
    %v1314 = vunpack.c.h.b16 %v1236
    %v1315 = vunpack.c.l.b16 %v1237
    %v1316 = vunpack.c.h.b16 %v1237
    %v1317 = vunpack.c.l.b16 %v1238
    %v1318 = vunpack.c.h.b16 %v1238
    %v1319 = vunpack.c.l.b16 %v1239
    %v1320 = vunpack.c.h.b16 %v1239
    %v1321 = vunpack.c.l.b16 %v1240
    %v1322 = vunpack.c.h.b16 %v1240
    %v1323 = vunpack.c.l.b16 %v1241
    %v1324 = vunpack.c.h.b16 %v1241
    %v1325 = vunpack.c.l.b16 %v1242
    %v1326 = vunpack.c.h.b16 %v1242
    %v1327 = vunpack.c.l.b16 %v1243
    %v1328 = vunpack.c.h.b16 %v1243
    %v1329 = vunpack.c.l.b16 %v1244
    %v1330 = vunpack.c.h.b16 %v1244
    %v1331 = vunpack.c.l.b16 %v1245
    %v1332 = vunpack.c.h.b16 %v1245
    %v1333 = vunpack.c.l.b16 %v1246
    %v1334 = vunpack.c.h.b16 %v1246
    %v1335 = vunpack.c.l.b16 %v1247
    %v1336 = vunpack.c.h.b16 %v1247
    %v1337 = vunpack.c.l.b16 %v1248
    %v1338 = vunpack.c.h.b16 %v1248
    %v1339 = vunpack.c.l.b16 %v1249
    %v1340 = vunpack.c.h.b16 %v1249
    %v1341 = vunpack.c.l.b16 %v1250
    %v1342 = vunpack.c.h.b16 %v1250
    %v1343 = vunpack.c.l.b16 %v1251
    %v1344 = vunpack.c.h.b16 %v1251
    %v1345 = vunpack.c.l.b16 %v1252
    %v1346 = vunpack.c.h.b16 %v1252
    %v1347 = vunpack.c.l.b16 %v1253
    %v1348 = vunpack.c.h.b16 %v1253
    %v1349 = vunpack.c.l.b16 %v1254
    %v1350 = vunpack.c.h.b16 %v1254
    %v1351 = vpack.c.b16 %v1287, %v1287
    %v1352 = vpack.c.b16 %v1288, %v1288
    %v1353 = vpack.c.b16 %v1289, %v1289
    %v1354 = vpack.c.b16 %v1290, %v1290
    %v1355 = vpack.c.b16 %v1291, %v1291
    %v1356 = vpack.c.b16 %v1292, %v1292
    %v1357 = vpack.c.b16 %v1293, %v1293
    %v1358 = vpack.c.b16 %v1294, %v1294
    %v1359 = vpack.c.b16 %v1295, %v1295
    %v1360 = vpack.c.b16 %v1296, %v1296
    %v1361 = vpack.c.b16 %v1297, %v1297
    %v1362 = vpack.c.b16 %v1298, %v1298
    %v1363 = vpack.c.b16 %v1299, %v1299
    %v1364 = vpack.c.b16 %v1300, %v1300
    %v1365 = vpack.c.b16 %v1301, %v1301
    %v1366 = vpack.c.b16 %v1302, %v1302
    %v1367 = vpack.c.b16 %v1303, %v1303
    %v1368 = vpack.c.b16 %v1304, %v1304
    %v1369 = vpack.c.b16 %v1305, %v1305
    %v1370 = vpack.c.b16 %v1306, %v1306
    %v1371 = vpack.c.b16 %v1307, %v1307
    %v1372 = vpack.c.b16 %v1308, %v1308
    %v1373 = vpack.c.b16 %v1309, %v1309
    %v1374 = vpack.c.b16 %v1310, %v1310
    %v1375 = vpack.c.b16 %v1311, %v1311
    %v1376 = vpack.c.b16 %v1312, %v1312
    %v1377 = vpack.c.b16 %v1313, %v1313
    %v1378 = vpack.c.b16 %v1314, %v1314
    %v1379 = vpack.c.b16 %v1315, %v1315
    %v1380 = vpack.c.b16 %v1316, %v1316
    %v1381 = vpack.c.b16 %v1317, %v1317
    %v1382 = vpack.c.b16 %v1318, %v1318
    %v1383 = vpack.c.b16 %v1319, %v1319
    %v1384 = vpack.c.b16 %v1320, %v1320
    %v1385 = vpack.c.b16 %v1321, %v1321
    %v1386 = vpack.c.b16 %v1322, %v1322
    %v1387 = vpack.c.b16 %v1323, %v1323
    %v1388 = vpack.c.b16 %v1324, %v1324
    %v1389 = vpack.c.b16 %v1325, %v1325
    %v1390 = vpack.c.b16 %v1326, %v1326
    %v1391 = vpack.c.b16 %v1327, %v1327
    %v1392 = vpack.c.b16 %v1328, %v1328
    %v1393 = vpack.c.b16 %v1329, %v1329
    %v1394 = vpack.c.b16 %v1330, %v1330
    %v1395 = vpack.c.b16 %v1331, %v1331
    %v1396 = vpack.c.b16 %v1332, %v1332
    %v1397 = vpack.c.b16 %v1333, %v1333
    %v1398 = vpack.c.b16 %v1334, %v1334
    %v1399 = vpack.c.b16 %v1335, %v1335
    %v1400 = vpack.c.b16 %v1336, %v1336
    %v1401 = vpack.c.b16 %v1337, %v1337
    %v1402 = vpack.c.b16 %v1338, %v1338
    %v1403 = vpack.c.b16 %v1339, %v1339
    %v1404 = vpack.c.b16 %v1340, %v1340
    %v1405 = vpack.c.b16 %v1341, %v1341
    %v1406 = vpack.c.b16 %v1342, %v1342
    %v1407 = vpack.c.b16 %v1343, %v1343
    %v1408 = vpack.c.b16 %v1344, %v1344
    %v1409 = vpack.c.b16 %v1345, %v1345
    %v1410 = vpack.c.b16 %v1346, %v1346
    %v1411 = vpack.c.b16 %v1347, %v1347
    %v1412 = vpack.c.b16 %v1348, %v1348
    %v1413 = vpack.c.b16 %v1349, %v1349
    %v1414 = vpack.c.b16 %v1350, %v1350
    %1479 = vst [vmem:[%s3] sm:$0xf] %v1351
    %1480 = vst [vmem:[%s3 + $0x4] sm:$0xf] %v1352
    %1481 = vst [vmem:[%s3 + $0x8] sm:$0xf] %v1353
    %1482 = vst [vmem:[%s3 + $0xc] sm:$0xf] %v1354
    %1483 = vst [vmem:[%s3 + $0x10] sm:$0xf] %v1355
    %1484 = vst [vmem:[%s3 + $0x14] sm:$0xf] %v1356
    %1485 = vst [vmem:[%s3 + $0x18] sm:$0xf] %v1357
    %1486 = vst [vmem:[%s3 + $0x1c] sm:$0xf] %v1358
    %1487 = vst [vmem:[%s3 + $0x20] sm:$0xf] %v1359
    %1488 = vst [vmem:[%s3 + $0x24] sm:$0xf] %v1360
    %1489 = vst [vmem:[%s3 + $0x28] sm:$0xf] %v1361
    %1490 = vst [vmem:[%s3 + $0x2c] sm:$0xf] %v1362
    %1491 = vst [vmem:[%s3 + $0x30] sm:$0xf] %v1363
    %1492 = vst [vmem:[%s3 + $0x34] sm:$0xf] %v1364
    %1493 = vst [vmem:[%s3 + $0x38] sm:$0xf] %v1365
    %1494 = vst [vmem:[%s3 + $0x3c] sm:$0xf] %v1366
    %1495 = vst [vmem:[%s3 + $0x40] sm:$0xf] %v1367
    %1496 = vst [vmem:[%s3 + $0x44] sm:$0xf] %v1368
    %1497 = vst [vmem:[%s3 + $0x48] sm:$0xf] %v1369
    %1498 = vst [vmem:[%s3 + $0x4c] sm:$0xf] %v1370
    %1499 = vst [vmem:[%s3 + $0x50] sm:$0xf] %v1371
    %1500 = vst [vmem:[%s3 + $0x54] sm:$0xf] %v1372
    %1501 = vst [vmem:[%s3 + $0x58] sm:$0xf] %v1373
    %1502 = vst [vmem:[%s3 + $0x5c] sm:$0xf] %v1374
    %1503 = vst [vmem:[%s3 + $0x60] sm:$0xf] %v1375
    %1504 = vst [vmem:[%s3 + $0x64] sm:$0xf] %v1376
    %1505 = vst [vmem:[%s3 + $0x68] sm:$0xf] %v1377
    %1506 = vst [vmem:[%s3 + $0x6c] sm:$0xf] %v1378
    %1507 = vst [vmem:[%s3 + $0x70] sm:$0xf] %v1379
    %1508 = vst [vmem:[%s3 + $0x74] sm:$0xf] %v1380
    %1509 = vst [vmem:[%s3 + $0x78] sm:$0xf] %v1381
    %1510 = vst [vmem:[%s3 + $0x7c] sm:$0xf] %v1382
    %1511 = vst [vmem:[%s3 + $0x80] sm:$0xf] %v1383
    %1512 = vst [vmem:[%s3 + $0x84] sm:$0xf] %v1384
    %1513 = vst [vmem:[%s3 + $0x88] sm:$0xf] %v1385
    %1514 = vst [vmem:[%s3 + $0x8c] sm:$0xf] %v1386
    %1515 = vst [vmem:[%s3 + $0x90] sm:$0xf] %v1387
    %1516 = vst [vmem:[%s3 + $0x94] sm:$0xf] %v1388
    %1517 = vst [vmem:[%s3 + $0x98] sm:$0xf] %v1389
    %1518 = vst [vmem:[%s3 + $0x9c] sm:$0xf] %v1390
    %1519 = vst [vmem:[%s3 + $0xa0] sm:$0xf] %v1391
    %1520 = vst [vmem:[%s3 + $0xa4] sm:$0xf] %v1392
    %1521 = vst [vmem:[%s3 + $0xa8] sm:$0xf] %v1393
    %1522 = vst [vmem:[%s3 + $0xac] sm:$0xf] %v1394
    %1523 = vst [vmem:[%s3 + $0xb0] sm:$0xf] %v1395
    %1524 = vst [vmem:[%s3 + $0xb4] sm:$0xf] %v1396
    %1525 = vst [vmem:[%s3 + $0xb8] sm:$0xf] %v1397
    %1526 = vst [vmem:[%s3 + $0xbc] sm:$0xf] %v1398
    %1527 = vst [vmem:[%s3 + $0xc0] sm:$0xf] %v1399
    %1528 = vst [vmem:[%s3 + $0xc4] sm:$0xf] %v1400
    %1529 = vst [vmem:[%s3 + $0xc8] sm:$0xf] %v1401
    %1530 = vst [vmem:[%s3 + $0xcc] sm:$0xf] %v1402
    %1531 = vst [vmem:[%s3 + $0xd0] sm:$0xf] %v1403
    %1532 = vst [vmem:[%s3 + $0xd4] sm:$0xf] %v1404
    %1533 = vst [vmem:[%s3 + $0xd8] sm:$0xf] %v1405
    %1534 = vst [vmem:[%s3 + $0xdc] sm:$0xf] %v1406
    %1535 = vst [vmem:[%s3 + $0xe0] sm:$0xf] %v1407
    %1536 = vst [vmem:[%s3 + $0xe4] sm:$0xf] %v1408
    %1537 = vst [vmem:[%s3 + $0xe8] sm:$0xf] %v1409
    %1538 = vst [vmem:[%s3 + $0xec] sm:$0xf] %v1410
    %1539 = vst [vmem:[%s3 + $0xf0] sm:$0xf] %v1411
    %1540 = vst [vmem:[%s3 + $0xf4] sm:$0xf] %v1412
    %1541 = vst [vmem:[%s3 + $0xf8] sm:$0xf] %v1413
    %1542 = vst [vmem:[%s3 + $0xfc] sm:$0xf] %v1414
  $region21: #{discriminator_forward.11} parent=0 // pred_fallthru
    _
  // Predicated region
  $region22: #{discriminator_forward.11} parent=0 // pred_check
    _
  $region23: #{discriminator_forward.11} parent=0 // pred_check_branch
    %1544 = sbr.rel (0) target = $region25
  $region24: #{discriminator_forward.11} parent=0 // pred_region
    _
  $region25: #{discriminator_forward.11} parent=0 // pred_fallthru
    _
  // Predicated region
  $region26: #{discriminator_forward.11} parent=0 // pred_check
    _
  $region27: #{discriminator_forward.11} parent=0 // pred_check_branch
    %1546 = sbr.rel (0) target = $region29
  $region28: #{discriminator_forward.11} parent=0 // pred_region
    _
  $region29: #{discriminator_forward.11} parent=0 // pred_fallthru
    _

// kernel: discriminator_forward.12
$region0: #{discriminator_forward.12}
  #allocation0 [shape = 'u32[]', space=smem, size = 0x4, offset = 0x4, fixed_abs, tag = 'smem constant byte address 0x4 - core index']
  #allocation1 [shape = 'u32[144,128]{1,0:T(1,128)}', space=vmem, size = 0x12000, scoped, tag = 'internal scratch']
  #allocation2 [shape = 'f32[128,128]{1,0:T(8,128)}', space=vmem, size = 0x10000, scoped, tag = 'scratch operand']
  %s0 = inlined_call_operand.vmem [shape: bf16[128,1024], index: 0, kind: input, shape index: {}]
  %s1 = inlined_call_operand.vmem [shape: bf16[1024,128], index: 1, kind: input, shape index: {}]
  %s2 = inlined_call_operand.vmem [shape: f32[1,128], index: 2, kind: input, shape index: {}]
  %s3 = inlined_call_operand.vmem [shape: bf16[128,128], index: 3, kind: output, shape index: {}]
  %s4 = sld [smem:[#allocation0]]
  $region76: #{discriminator_forward.12} parent=0
    _
  %s6 = ssub.s32 1, %s4
  %s7 = scalar_select 0, %s6, %s4
  $region1: #{discriminator_forward.12} parent=0
    #allocation3 [shape = 'u8[262144]{0}', space=vmem, size = 0x40000, scoped, tag = 'input window, operand 0']
    loop: start=0, step=1, limit=4
    $region2: #{discriminator_forward.12} parent=1 // loop_pre_header
      _
    $region3: #{discriminator_forward.12} parent=1 // loop_header
      %s9 = sphi 0, %s13
      %p10 = scmp.ge.s32.totalorder %s9, 4
      %s16 = sphi 0, %s35
      %s17 = sphi 0, %s31
      %s18 = sphi 0, %s27
      %s19 = sphi 0, %s16
      %s20 = sphi 0, %s17
      %s21 = sphi 0, %s18
      %s22 = sphi 0, %s19
      %s23 = sphi 0, %s20
      %s24 = sphi 0, %s21
      %s40 = sphi 0, %s42
      %s43 = sphi 0, %s40
      %s44 = sphi 0, %s43
      %s60 = sphi 0, %s44
      %s64 = sphi 0, %s64
      %s66 = sphi 0, %s64
      %s67 = sphi 0, %s66
      %s81 = sphi 0, %s67
      %s87 = sphi 0, %s89
      %s90 = sphi 0, %s87
      %s91 = sphi 0, %s90
      %s107 = sphi 0, %s91
      %s115 = sphi 0, %s117
      %s118 = sphi 0, %s115
      %s119 = sphi 0, %s118
      %s135 = sphi 0, %s119
    $region4: #{discriminator_forward.12} parent=1 // loop_header_branch
      %12 = sbr.rel (%p10) target = $region8
    $region5: #{discriminator_forward.12} parent=1 // loop_body
      %s14 = ssub.s32 %s9, 1
      %s15 = ssub.s32 %s9, 2
      %s25 = sadd.s32 1, %s18
      %p26 = scmp.ge.s32.totalorder %s25, 2
      %s27 = scalar_select %p26, 0, %s25
      %s28 = sadd.s32 1, %s17
      %s29 = scalar_select %p26, %s28, %s17
      %p30 = scmp.ge.s32.totalorder %s29, 1
      %s31 = scalar_select %p30, 0, %s29
      %s32 = sadd.s32 1, %s16
      %s33 = scalar_select %p30, %s32, %s16
      %p34 = scmp.ge.s32.totalorder %s33, 1
      %s35 = scalar_select %p34, 0, %s33
      %s36 = ssub.s32 %s16, %s35
      %s37 = ssub.s32 %s18, %s27
      %s38 = sor.u32 %s36, %s37
      %p39 = scmp.eq.s32.totalorder %s38, 0
      %s41 = sadd.s32 %s40, 1
      %s42 = scalar_select %p39, %s40, %s41
      %p45 = pneg %p39
      %p46 = scmp.eq.s32.totalorder %s9, 1
      %p47 = por %p45, %p46
      %p48 = scmp.ne.s32.totalorder %s40, %s43
      %p49 = scmp.eq.s32.totalorder %s9, 0
      %p50 = por %p48, %p49
      %p51 = scmp.ne.s32.totalorder %s40, %s43
      %p52 = scmp.eq.s32.totalorder %s14, 1
      %p53 = por %p51, %p52
      %p54 = scmp.ne.s32.totalorder %s43, %s44
      %p55 = scmp.eq.s32.totalorder %s14, 0
      %p56 = por %p54, %p55
      %p57 = scmp.ne.s32.totalorder %s43, %s44
      %p58 = scmp.eq.s32.totalorder %s15, 1
      %p59 = por %p57, %p58
      %p61 = scmp.ne.s32.totalorder %s44, %s60
      %p62 = scmp.eq.s32.totalorder %s15, 0
      %p63 = por %p61, %p62
      %s65 = sadd.s32 %s64, 1
      %p68 = scmp.eq.s32.totalorder %s9, 1
      %p69 = scmp.ne.s32.totalorder %s64, %s66
      %p70 = scmp.eq.s32.totalorder %s9, 0
      %p71 = por %p69, %p70
      %p72 = scmp.ne.s32.totalorder %s64, %s66
      %p73 = scmp.eq.s32.totalorder %s14, 1
      %p74 = por %p72, %p73
      %p75 = scmp.ne.s32.totalorder %s66, %s67
      %p76 = scmp.eq.s32.totalorder %s14, 0
      %p77 = por %p75, %p76
      %p78 = scmp.ne.s32.totalorder %s66, %s67
      %p79 = scmp.eq.s32.totalorder %s15, 1
      %p80 = por %p78, %p79
      %p82 = scmp.ne.s32.totalorder %s67, %s81
      %p83 = scmp.eq.s32.totalorder %s15, 0
      %p84 = por %p82, %p83
      %s85 = ssub.s32 %s17, %s31
      %p86 = scmp.eq.s32.totalorder %s85, 0
      %s88 = sadd.s32 %s87, 1
      %s89 = scalar_select %p86, %s87, %s88
      %p92 = pneg %p86
      %p93 = scmp.eq.s32.totalorder %s9, 1
      %p94 = por %p92, %p93
      %p95 = scmp.ne.s32.totalorder %s87, %s90
      %p96 = scmp.eq.s32.totalorder %s9, 0
      %p97 = por %p95, %p96
      %p98 = scmp.ne.s32.totalorder %s87, %s90
      %p99 = scmp.eq.s32.totalorder %s14, 1
      %p100 = por %p98, %p99
      %p101 = scmp.ne.s32.totalorder %s90, %s91
      %p102 = scmp.eq.s32.totalorder %s14, 0
      %p103 = por %p101, %p102
      %p104 = scmp.ne.s32.totalorder %s90, %s91
      %p105 = scmp.eq.s32.totalorder %s15, 1
      %p106 = por %p104, %p105
      %p108 = scmp.ne.s32.totalorder %s91, %s107
      %p109 = scmp.eq.s32.totalorder %s15, 0
      %p110 = por %p108, %p109
      %s111 = ssub.s32 %s16, %s35
      %s112 = ssub.s32 %s17, %s31
      %s113 = sor.u32 %s111, %s112
      %p114 = scmp.eq.s32.totalorder %s113, 0
      %s116 = sadd.s32 %s115, 1
      %s117 = scalar_select %p114, %s115, %s116
      %p120 = pneg %p114
      %p121 = scmp.eq.s32.totalorder %s9, 1
      %p122 = por %p120, %p121
      %p123 = scmp.ne.s32.totalorder %s115, %s118
      %p124 = scmp.eq.s32.totalorder %s9, 0
      %p125 = por %p123, %p124
      %p126 = scmp.ne.s32.totalorder %s115, %s118
      %p127 = scmp.eq.s32.totalorder %s14, 1
      %p128 = por %p126, %p127
      %p129 = scmp.ne.s32.totalorder %s118, %s119
      %p130 = scmp.eq.s32.totalorder %s14, 0
      %p131 = por %p129, %p130
      %p132 = scmp.ne.s32.totalorder %s118, %s119
      %p133 = scmp.eq.s32.totalorder %s15, 1
      %p134 = por %p132, %p133
      %p136 = scmp.ne.s32.totalorder %s119, %s135
      %p137 = scmp.eq.s32.totalorder %s15, 0
      %p138 = por %p136, %p137
      %p139 = scmp.le.s32.totalorder 1, %s9
      %p140 = scmp.lt.s32.totalorder %s9, 3
      %p141 = pnand %p139, %p140
      %p142 = pneg %p141
      // Predicated region
      $region9: #{discriminator_forward.12} parent=5 // pred_check
        _
      $region10: #{discriminator_forward.12} parent=5 // pred_check_branch
        %144 = sbr.rel (%p141) target = $region12
      $region11: #{discriminator_forward.12} parent=5 // pred_region
        %s145 = ssub.s32 %s9, 1
        // Predicated region
        $region13: #{discriminator_forward.12} parent=11 // pred_check
          %p146 = pneg %p77
        $region14: #{discriminator_forward.12} parent=11 // pred_check_branch
          %148 = sbr.rel (%p146) target = $region16
        $region15: #{discriminator_forward.12} parent=11 // pred_region
          _
        $region16: #{discriminator_forward.12} parent=11 // pred_fallthru
          _
        // Predicated region
        $region17: #{discriminator_forward.12} parent=11 // pred_check
          %p149 = pneg %p103
        $region18: #{discriminator_forward.12} parent=11 // pred_check_branch
          %151 = sbr.rel (%p149) target = $region20
        $region19: #{discriminator_forward.12} parent=11 // pred_region
          %p152 = scmp.lt.s32.totalorder %s20, 0
          %s153 = scalar_select %p152, %s20, 0
          %s154 = scalar_lea.vmem %s2, %s153
        $region20: #{discriminator_forward.12} parent=11 // pred_fallthru
          _
      $region12: #{discriminator_forward.12} parent=5 // pred_fallthru
        _
      %p155 = scmp.lt.s32.totalorder %s9, 2
      // Predicated region
      $region21: #{discriminator_forward.12} parent=5 // pred_check
        %p156 = pneg %p155
      $region22: #{discriminator_forward.12} parent=5 // pred_check_branch
        %158 = sbr.rel (%p156) target = $region24
      $region23: #{discriminator_forward.12} parent=5 // pred_region
        // Predicated region
        $region25: #{discriminator_forward.12} parent=23 // pred_check
          %p159 = pneg %p50
        $region26: #{discriminator_forward.12} parent=23 // pred_check_branch
          %161 = sbr.rel (%p159) target = $region28
        $region27: #{discriminator_forward.12} parent=23 // pred_region
          %s162 = sand.u32 %s40, 1
          %s163 = sand.u32 %s40, 1
          %s164 = smul.addr %s163, 256
          %s165 = scalar_lea.vmem [#allocation3], %s164
          %s166 = smul.u32 16, %s16
          %s167 = smul.u32 4, %s18
          %s168 = smul.addr %s166, 8
          %s169 = sadd.s32 %s167, %s168
          %s170 = smul.addr %s169, 4
          %s171 = scalar_lea.vmem %s0, %s170
          // Predicated region
          $region29: #{discriminator_forward.12} parent=27 // pred_check
            _
          $region30: #{discriminator_forward.12} parent=27 // pred_check_branch
            %173 = sbr.rel (0) target = $region32
          $region31: #{discriminator_forward.12} parent=27 // pred_region
            // Predicated region
            $region33: #{discriminator_forward.12} parent=31 // pred_check
              _
            $region34: #{discriminator_forward.12} parent=31 // pred_check_branch
              %175 = sbr.rel (0) target = $region36
            $region35: #{discriminator_forward.12} parent=31 // pred_region
              loop: start=0, step=1, limit=1
              $region37: #{discriminator_forward.12} parent=35 // loop_pre_header
                _
              $region38: #{discriminator_forward.12} parent=35 // loop_header
                %s177 = sphi 0, %s181
                %p178 = scmp.ge.s32.totalorder %s177, 1
                %s182 = sphi %s171, %s171
                %s183 = sphi %s165, %s165
              $region39: #{discriminator_forward.12} parent=35 // loop_header_branch
                %180 = sbr.rel (%p178) target = $region43
              $region40: #{discriminator_forward.12} parent=35 // loop_body
                %v184 = vld [vmem:[%s182] sm:$0xff]
                %185 = vst [vmem:[%s183] sm:$0xff] %v184
                %v186 = vld [vmem:[%s182 + $0x8] sm:$0xff]
                %187 = vst [vmem:[%s183 + $0x8] sm:$0xff] %v186
                %v188 = vld [vmem:[%s182 + $0x20] sm:$0xff]
                %189 = vst [vmem:[%s183 + $0x10] sm:$0xff] %v188
                %v190 = vld [vmem:[%s182 + $0x28] sm:$0xff]
                %191 = vst [vmem:[%s183 + $0x18] sm:$0xff] %v190
                %v192 = vld [vmem:[%s182 + $0x40] sm:$0xff]
                %193 = vst [vmem:[%s183 + $0x20] sm:$0xff] %v192
                %v194 = vld [vmem:[%s182 + $0x48] sm:$0xff]
                %195 = vst [vmem:[%s183 + $0x28] sm:$0xff] %v194
                %v196 = vld [vmem:[%s182 + $0x60] sm:$0xff]
                %197 = vst [vmem:[%s183 + $0x30] sm:$0xff] %v196
                %v198 = vld [vmem:[%s182 + $0x68] sm:$0xff]
                %199 = vst [vmem:[%s183 + $0x38] sm:$0xff] %v198
                %v200 = vld [vmem:[%s182 + $0x80] sm:$0xff]
                %201 = vst [vmem:[%s183 + $0x40] sm:$0xff] %v200
                %v202 = vld [vmem:[%s182 + $0x88] sm:$0xff]
                %203 = vst [vmem:[%s183 + $0x48] sm:$0xff] %v202
                %v204 = vld [vmem:[%s182 + $0xa0] sm:$0xff]
                %205 = vst [vmem:[%s183 + $0x50] sm:$0xff] %v204
                %v206 = vld [vmem:[%s182 + $0xa8] sm:$0xff]
                %207 = vst [vmem:[%s183 + $0x58] sm:$0xff] %v206
                %v208 = vld [vmem:[%s182 + $0xc0] sm:$0xff]
                %209 = vst [vmem:[%s183 + $0x60] sm:$0xff] %v208
                %v210 = vld [vmem:[%s182 + $0xc8] sm:$0xff]
                %211 = vst [vmem:[%s183 + $0x68] sm:$0xff] %v210
                %v212 = vld [vmem:[%s182 + $0xe0] sm:$0xff]
                %213 = vst [vmem:[%s183 + $0x70] sm:$0xff] %v212
                %v214 = vld [vmem:[%s182 + $0xe8] sm:$0xff]
                %215 = vst [vmem:[%s183 + $0x78] sm:$0xff] %v214
                %v216 = vld [vmem:[%s182 + $0x100] sm:$0xff]
                %217 = vst [vmem:[%s183 + $0x80] sm:$0xff] %v216
                %v218 = vld [vmem:[%s182 + $0x108] sm:$0xff]
                %219 = vst [vmem:[%s183 + $0x88] sm:$0xff] %v218
                %v220 = vld [vmem:[%s182 + $0x120] sm:$0xff]
                %221 = vst [vmem:[%s183 + $0x90] sm:$0xff] %v220
                %v222 = vld [vmem:[%s182 + $0x128] sm:$0xff]
                %223 = vst [vmem:[%s183 + $0x98] sm:$0xff] %v222
                %v224 = vld [vmem:[%s182 + $0x140] sm:$0xff]
                %225 = vst [vmem:[%s183 + $0xa0] sm:$0xff] %v224
                %v226 = vld [vmem:[%s182 + $0x148] sm:$0xff]
                %227 = vst [vmem:[%s183 + $0xa8] sm:$0xff] %v226
                %v228 = vld [vmem:[%s182 + $0x160] sm:$0xff]
                %229 = vst [vmem:[%s183 + $0xb0] sm:$0xff] %v228
                %v230 = vld [vmem:[%s182 + $0x168] sm:$0xff]
                %231 = vst [vmem:[%s183 + $0xb8] sm:$0xff] %v230
                %v232 = vld [vmem:[%s182 + $0x180] sm:$0xff]
                %233 = vst [vmem:[%s183 + $0xc0] sm:$0xff] %v232
                %v234 = vld [vmem:[%s182 + $0x188] sm:$0xff]
                %235 = vst [vmem:[%s183 + $0xc8] sm:$0xff] %v234
                %v236 = vld [vmem:[%s182 + $0x1a0] sm:$0xff]
                %237 = vst [vmem:[%s183 + $0xd0] sm:$0xff] %v236
                %v238 = vld [vmem:[%s182 + $0x1a8] sm:$0xff]
                %239 = vst [vmem:[%s183 + $0xd8] sm:$0xff] %v238
                %v240 = vld [vmem:[%s182 + $0x1c0] sm:$0xff]
                %241 = vst [vmem:[%s183 + $0xe0] sm:$0xff] %v240
                %v242 = vld [vmem:[%s182 + $0x1c8] sm:$0xff]
                %243 = vst [vmem:[%s183 + $0xe8] sm:$0xff] %v242
                %v244 = vld [vmem:[%s182 + $0x1e0] sm:$0xff]
                %245 = vst [vmem:[%s183 + $0xf0] sm:$0xff] %v244
                %v246 = vld [vmem:[%s182 + $0x1e8] sm:$0xff]
                %247 = vst [vmem:[%s183 + $0xf8] sm:$0xff] %v246
              $region41: #{discriminator_forward.12} parent=35 // loop_footer
                %s181 = sadd.s32 1, %s177
              $region42: #{discriminator_forward.12} parent=35 // loop_footer_branch
                %176 = sbr.rel target = $region38
              $region43: #{discriminator_forward.12} parent=35 // loop_exit
                _
            $region36: #{discriminator_forward.12} parent=31 // pred_fallthru
              _
            // Predicated region
            $region44: #{discriminator_forward.12} parent=31 // pred_check
              _
            $region45: #{discriminator_forward.12} parent=31 // pred_check_branch
              %249 = sbr.rel target = $region47
            $region46: #{discriminator_forward.12} parent=31 // pred_region
              _
            $region47: #{discriminator_forward.12} parent=31 // pred_fallthru
              _
          $region32: #{discriminator_forward.12} parent=27 // pred_fallthru
            _
          %250 = vnop
        $region28: #{discriminator_forward.12} parent=23 // pred_fallthru
          _
      $region24: #{discriminator_forward.12} parent=5 // pred_fallthru
        _
      %p251 = scmp.le.s32.totalorder 1, %s9
      %p252 = scmp.lt.s32.totalorder %s9, 3
      %p253 = pnand %p251, %p252
      %p254 = pneg %p253
      // Predicated region
      $region48: #{discriminator_forward.12} parent=5 // pred_check
        _
      $region49: #{discriminator_forward.12} parent=5 // pred_check_branch
        %256 = sbr.rel (%p253) target = $region51
      $region50: #{discriminator_forward.12} parent=5 // pred_region
        %s257 = ssub.s32 %s9, 1
        %s258 = sand.u32 %s43, 1
        %s259 = sand.u32 %s43, 1
        %s260 = smul.addr %s259, 256
        %s261 = scalar_lea.vmem [#allocation3], %s260
        // Predicated region
        $region52: #{discriminator_forward.12} parent=50 // pred_check
          %p262 = pneg %p56
        $region53: #{discriminator_forward.12} parent=50 // pred_check_branch
          %264 = sbr.rel (%p262) target = $region55
        $region54: #{discriminator_forward.12} parent=50 // pred_region
          _
        $region55: #{discriminator_forward.12} parent=50 // pred_fallthru
          _
        %s265 = sand.u32 %s43, 1
        %s266 = sand.u32 %s43, 1
        %s267 = smul.addr %s266, 256
        %s268 = scalar_lea.vmem [#allocation3], %s267
        %p269 = pneg %p56
        %p270 = pneg %p53
        %p271 = pneg %p77
        %p272 = pneg %p74
        %p273 = scmp.lt.s32.totalorder %s20, 0
        %s274 = scalar_select %p273, %s20, 0
        %s275 = scalar_lea.vmem %s2, %s274
        %p276 = pneg %p103
        %p277 = pneg %p100
        %p278 = pneg %p131
        %p279 = pneg %p128
        %s280 = smul.u32 16, %s19
        %p281 = scmp.lt.s32.totalorder %s280, 15
        %s282 = scalar_select %p281, %s280, 15
        %p283 = scmp.lt.s32.totalorder %s20, 0
        %s284 = scalar_select %p283, %s20, 0
        %s285 = sadd.s32 %s284, %s282
        %s286 = smul.addr %s285, 4
        %s287 = scalar_lea.vmem %s3, %s286
        %s288 = smul.u32 16, %s19
        %s289 = smul.u32 4, %s21
        %p290 = scmp.lt.s32.totalorder %s20, 0
        %s291 = scalar_select %p290, %s20, 0
        %s292 = scalar_lea.vmem %s2, %s291
        %s293 = smul.u32 16, %s19
        %p294 = scmp.lt.s32.totalorder %s293, 15
        %s295 = scalar_select %p294, %s293, 15
        %p296 = scmp.lt.s32.totalorder %s20, 0
        %s297 = scalar_select %p296, %s20, 0
        %s298 = sadd.s32 %s297, %s295
        %s299 = smul.addr %s298, 4
        %s300 = scalar_lea.vmem %s3, %s299
        %s301 = smul.u32 16, %s19
        %p303 = scmp.eq.s32.totalorder %s21, 0
        // Predicated region
        $region56: #{discriminator_forward.12} parent=50 // pred_check
          %p304 = pneg %p303
        $region57: #{discriminator_forward.12} parent=50 // pred_check_branch
          %306 = sbr.rel (%p304) target = $region59
        $region58: #{discriminator_forward.12} parent=50 // pred_region
          %307 = vst [vmem:[#allocation2] sm:$0xff] 0.0
          %308 = vst [vmem:[#allocation2 + $0x8] sm:$0xff] 0.0
          %309 = vst [vmem:[#allocation2 + $0x10] sm:$0xff] 0.0
          %310 = vst [vmem:[#allocation2 + $0x18] sm:$0xff] 0.0
          %311 = vst [vmem:[#allocation2 + $0x20] sm:$0xff] 0.0
          %312 = vst [vmem:[#allocation2 + $0x28] sm:$0xff] 0.0
          %313 = vst [vmem:[#allocation2 + $0x30] sm:$0xff] 0.0
          %314 = vst [vmem:[#allocation2 + $0x38] sm:$0xff] 0.0
          %315 = vst [vmem:[#allocation2 + $0x40] sm:$0xff] 0.0
          %316 = vst [vmem:[#allocation2 + $0x48] sm:$0xff] 0.0
          %317 = vst [vmem:[#allocation2 + $0x50] sm:$0xff] 0.0
          %318 = vst [vmem:[#allocation2 + $0x58] sm:$0xff] 0.0
          %319 = vst [vmem:[#allocation2 + $0x60] sm:$0xff] 0.0
          %320 = vst [vmem:[#allocation2 + $0x68] sm:$0xff] 0.0
          %321 = vst [vmem:[#allocation2 + $0x70] sm:$0xff] 0.0
          %322 = vst [vmem:[#allocation2 + $0x78] sm:$0xff] 0.0
        $region59: #{discriminator_forward.12} parent=50 // pred_fallthru
          _
        %s323 = smul.u32 %s21, 512
        %s324 = smul.u32 %s20, 128
        %s325 = sshra.s32 %s324, 7
        %s326 = sand.u32 %s324, 127
        %s327 = sshra.s32 %s323, 3
        %s328 = sand.u32 %s323, 7
        %s329 = sadd.s32 %s325, %s327
        %s330 = smul.addr %s329, 4
        %s331 = scalar_lea.vmem %s1, %s330
        %v332 = vld [vmem:[%s331] sm:$0xf]
        %v333 = vld [vmem:[%s331 + $0x4] sm:$0xf]
        %v334 = vld [vmem:[%s331 + $0x8] sm:$0xf]
        %v335 = vld [vmem:[%s331 + $0xc] sm:$0xf]
        %v336 = vld [vmem:[%s331 + $0x10] sm:$0xf]
        %v337 = vld [vmem:[%s331 + $0x14] sm:$0xf]
        %v338 = vld [vmem:[%s331 + $0x18] sm:$0xf]
        %v339 = vld [vmem:[%s331 + $0x1c] sm:$0xf]
        %v340 = vld [vmem:[%s331 + $0x20] sm:$0xf]
        %v341 = vld [vmem:[%s331 + $0x24] sm:$0xf]
        %v342 = vld [vmem:[%s331 + $0x28] sm:$0xf]
        %v343 = vld [vmem:[%s331 + $0x2c] sm:$0xf]
        %v344 = vld [vmem:[%s331 + $0x30] sm:$0xf]
        %v345 = vld [vmem:[%s331 + $0x34] sm:$0xf]
        %v346 = vld [vmem:[%s331 + $0x38] sm:$0xf]
        %v347 = vld [vmem:[%s331 + $0x3c] sm:$0xf]
        %v348 = vld [vmem:[%s331 + $0x40] sm:$0xf]
        %v349 = vld [vmem:[%s331 + $0x44] sm:$0xf]
        %v350 = vld [vmem:[%s331 + $0x48] sm:$0xf]
        %v351 = vld [vmem:[%s331 + $0x4c] sm:$0xf]
        %v352 = vld [vmem:[%s331 + $0x50] sm:$0xf]
        %v353 = vld [vmem:[%s331 + $0x54] sm:$0xf]
        %v354 = vld [vmem:[%s331 + $0x58] sm:$0xf]
        %v355 = vld [vmem:[%s331 + $0x5c] sm:$0xf]
        %v356 = vld [vmem:[%s331 + $0x60] sm:$0xf]
        %v357 = vld [vmem:[%s331 + $0x64] sm:$0xf]
        %v358 = vld [vmem:[%s331 + $0x68] sm:$0xf]
        %v359 = vld [vmem:[%s331 + $0x6c] sm:$0xf]
        %v360 = vld [vmem:[%s331 + $0x70] sm:$0xf]
        %v361 = vld [vmem:[%s331 + $0x74] sm:$0xf]
        %v362 = vld [vmem:[%s331 + $0x78] sm:$0xf]
        %v363 = vld [vmem:[%s331 + $0x7c] sm:$0xf]
        %v364 = vld [vmem:[%s331 + $0x80] sm:$0xf]
        %v365 = vld [vmem:[%s331 + $0x84] sm:$0xf]
        %v366 = vld [vmem:[%s331 + $0x88] sm:$0xf]
        %v367 = vld [vmem:[%s331 + $0x8c] sm:$0xf]
        %v368 = vld [vmem:[%s331 + $0x90] sm:$0xf]
        %v369 = vld [vmem:[%s331 + $0x94] sm:$0xf]
        %v370 = vld [vmem:[%s331 + $0x98] sm:$0xf]
        %v371 = vld [vmem:[%s331 + $0x9c] sm:$0xf]
        %v372 = vld [vmem:[%s331 + $0xa0] sm:$0xf]
        %v373 = vld [vmem:[%s331 + $0xa4] sm:$0xf]
        %v374 = vld [vmem:[%s331 + $0xa8] sm:$0xf]
        %v375 = vld [vmem:[%s331 + $0xac] sm:$0xf]
        %v376 = vld [vmem:[%s331 + $0xb0] sm:$0xf]
        %v377 = vld [vmem:[%s331 + $0xb4] sm:$0xf]
        %v378 = vld [vmem:[%s331 + $0xb8] sm:$0xf]
        %v379 = vld [vmem:[%s331 + $0xbc] sm:$0xf]
        %v380 = vld [vmem:[%s331 + $0xc0] sm:$0xf]
        %v381 = vld [vmem:[%s331 + $0xc4] sm:$0xf]
        %v382 = vld [vmem:[%s331 + $0xc8] sm:$0xf]
        %v383 = vld [vmem:[%s331 + $0xcc] sm:$0xf]
        %v384 = vld [vmem:[%s331 + $0xd0] sm:$0xf]
        %v385 = vld [vmem:[%s331 + $0xd4] sm:$0xf]
        %v386 = vld [vmem:[%s331 + $0xd8] sm:$0xf]
        %v387 = vld [vmem:[%s331 + $0xdc] sm:$0xf]
        %v388 = vld [vmem:[%s331 + $0xe0] sm:$0xf]
        %v389 = vld [vmem:[%s331 + $0xe4] sm:$0xf]
        %v390 = vld [vmem:[%s331 + $0xe8] sm:$0xf]
        %v391 = vld [vmem:[%s331 + $0xec] sm:$0xf]
        %v392 = vld [vmem:[%s331 + $0xf0] sm:$0xf]
        %v393 = vld [vmem:[%s331 + $0xf4] sm:$0xf]
        %v394 = vld [vmem:[%s331 + $0xf8] sm:$0xf]
        %v395 = vld [vmem:[%s331 + $0xfc] sm:$0xf]
        %v396 = vld [vmem:[#allocation2] sm:$0xff]
        %v397 = vld [vmem:[#allocation2 + $0x8] sm:$0xff]
        %v398 = vld [vmem:[#allocation2 + $0x10] sm:$0xff]
        %v399 = vld [vmem:[#allocation2 + $0x18] sm:$0xff]
        %v400 = vld [vmem:[#allocation2 + $0x20] sm:$0xff]
        %v401 = vld [vmem:[#allocation2 + $0x28] sm:$0xff]
        %v402 = vld [vmem:[#allocation2 + $0x30] sm:$0xff]
        %v403 = vld [vmem:[#allocation2 + $0x38] sm:$0xff]
        %v404 = vld [vmem:[#allocation2 + $0x40] sm:$0xff]
        %v405 = vld [vmem:[#allocation2 + $0x48] sm:$0xff]
        %v406 = vld [vmem:[#allocation2 + $0x50] sm:$0xff]
        %v407 = vld [vmem:[#allocation2 + $0x58] sm:$0xff]
        %v408 = vld [vmem:[#allocation2 + $0x60] sm:$0xff]
        %v409 = vld [vmem:[#allocation2 + $0x68] sm:$0xff]
        %v410 = vld [vmem:[#allocation2 + $0x70] sm:$0xff]
        %v411 = vld [vmem:[#allocation2 + $0x78] sm:$0xff]
        %v412 = vld [vmem:[%s261] sm:$0xff]
        %v413 = vld [vmem:[%s261 + $0x8] sm:$0xff]
        %v414 = vld [vmem:[%s261 + $0x10] sm:$0xff]
        %v415 = vld [vmem:[%s261 + $0x18] sm:$0xff]
        %v416 = vld [vmem:[%s261 + $0x20] sm:$0xff]
        %v417 = vld [vmem:[%s261 + $0x28] sm:$0xff]
        %v418 = vld [vmem:[%s261 + $0x30] sm:$0xff]
        %v419 = vld [vmem:[%s261 + $0x38] sm:$0xff]
        %v420 = vld [vmem:[%s261 + $0x40] sm:$0xff]
        %v421 = vld [vmem:[%s261 + $0x48] sm:$0xff]
        %v422 = vld [vmem:[%s261 + $0x50] sm:$0xff]
        %v423 = vld [vmem:[%s261 + $0x58] sm:$0xff]
        %v424 = vld [vmem:[%s261 + $0x60] sm:$0xff]
        %v425 = vld [vmem:[%s261 + $0x68] sm:$0xff]
        %v426 = vld [vmem:[%s261 + $0x70] sm:$0xff]
        %v427 = vld [vmem:[%s261 + $0x78] sm:$0xff]
        %v428 = vld [vmem:[%s261 + $0x80] sm:$0xff]
        %v429 = vld [vmem:[%s261 + $0x88] sm:$0xff]
        %v430 = vld [vmem:[%s261 + $0x90] sm:$0xff]
        %v431 = vld [vmem:[%s261 + $0x98] sm:$0xff]
        %v432 = vld [vmem:[%s261 + $0xa0] sm:$0xff]
        %v433 = vld [vmem:[%s261 + $0xa8] sm:$0xff]
        %v434 = vld [vmem:[%s261 + $0xb0] sm:$0xff]
        %v435 = vld [vmem:[%s261 + $0xb8] sm:$0xff]
        %v436 = vld [vmem:[%s261 + $0xc0] sm:$0xff]
        %v437 = vld [vmem:[%s261 + $0xc8] sm:$0xff]
        %v438 = vld [vmem:[%s261 + $0xd0] sm:$0xff]
        %v439 = vld [vmem:[%s261 + $0xd8] sm:$0xff]
        %v440 = vld [vmem:[%s261 + $0xe0] sm:$0xff]
        %v441 = vld [vmem:[%s261 + $0xe8] sm:$0xff]
        %v442 = vld [vmem:[%s261 + $0xf0] sm:$0xff]
        %v443 = vld [vmem:[%s261 + $0xf8] sm:$0xff]
        %v476 = vunpack.c.l.b16 %v412
        %v477 = vunpack.c.h.b16 %v412
        %v478 = vunpack.c.l.b16 %v413
        %v479 = vunpack.c.h.b16 %v413
        %v480 = vunpack.c.l.b16 %v414
        %v481 = vunpack.c.h.b16 %v414
        %v482 = vunpack.c.l.b16 %v415
        %v483 = vunpack.c.h.b16 %v415
        %v484 = vunpack.c.l.b16 %v416
        %v485 = vunpack.c.h.b16 %v416
        %v486 = vunpack.c.l.b16 %v417
        %v487 = vunpack.c.h.b16 %v417
        %v488 = vunpack.c.l.b16 %v418
        %v489 = vunpack.c.h.b16 %v418
        %v490 = vunpack.c.l.b16 %v419
        %v491 = vunpack.c.h.b16 %v419
        %v492 = vunpack.c.l.b16 %v420
        %v493 = vunpack.c.h.b16 %v420
        %v494 = vunpack.c.l.b16 %v421
        %v495 = vunpack.c.h.b16 %v421
        %v496 = vunpack.c.l.b16 %v422
        %v497 = vunpack.c.h.b16 %v422
        %v498 = vunpack.c.l.b16 %v423
        %v499 = vunpack.c.h.b16 %v423
        %v500 = vunpack.c.l.b16 %v424
        %v501 = vunpack.c.h.b16 %v424
        %v502 = vunpack.c.l.b16 %v425
        %v503 = vunpack.c.h.b16 %v425
        %v504 = vunpack.c.l.b16 %v426
        %v505 = vunpack.c.h.b16 %v426
        %v506 = vunpack.c.l.b16 %v427
        %v507 = vunpack.c.h.b16 %v427
        %v508 = vunpack.c.l.b16 %v428
        %v509 = vunpack.c.h.b16 %v428
        %v510 = vunpack.c.l.b16 %v429
        %v511 = vunpack.c.h.b16 %v429
        %v512 = vunpack.c.l.b16 %v430
        %v513 = vunpack.c.h.b16 %v430
        %v514 = vunpack.c.l.b16 %v431
        %v515 = vunpack.c.h.b16 %v431
        %v516 = vunpack.c.l.b16 %v432
        %v517 = vunpack.c.h.b16 %v432
        %v518 = vunpack.c.l.b16 %v433
        %v519 = vunpack.c.h.b16 %v433
        %v520 = vunpack.c.l.b16 %v434
        %v521 = vunpack.c.h.b16 %v434
        %v522 = vunpack.c.l.b16 %v435
        %v523 = vunpack.c.h.b16 %v435
        %v524 = vunpack.c.l.b16 %v436
        %v525 = vunpack.c.h.b16 %v436
        %v526 = vunpack.c.l.b16 %v437
        %v527 = vunpack.c.h.b16 %v437
        %v528 = vunpack.c.l.b16 %v438
        %v529 = vunpack.c.h.b16 %v438
        %v530 = vunpack.c.l.b16 %v439
        %v531 = vunpack.c.h.b16 %v439
        %v532 = vunpack.c.l.b16 %v440
        %v533 = vunpack.c.h.b16 %v440
        %v534 = vunpack.c.l.b16 %v441
        %v535 = vunpack.c.h.b16 %v441
        %v536 = vunpack.c.l.b16 %v442
        %v537 = vunpack.c.h.b16 %v442
        %v538 = vunpack.c.l.b16 %v443
        %v539 = vunpack.c.h.b16 %v443
        %v540 = vpack.c.b16 %v480, %v476
        %v541 = vpack.c.b16 %v481, %v477
        %v542 = vpack.c.b16 %v482, %v478
        %v543 = vpack.c.b16 %v483, %v479
        %v544 = vpack.c.b16 %v488, %v484
        %v545 = vpack.c.b16 %v489, %v485
        %v546 = vpack.c.b16 %v490, %v486
        %v547 = vpack.c.b16 %v491, %v487
        %v548 = vpack.c.b16 %v496, %v492
        %v549 = vpack.c.b16 %v497, %v493
        %v550 = vpack.c.b16 %v498, %v494
        %v551 = vpack.c.b16 %v499, %v495
        %v552 = vpack.c.b16 %v504, %v500
        %v553 = vpack.c.b16 %v505, %v501
        %v554 = vpack.c.b16 %v506, %v502
        %v555 = vpack.c.b16 %v507, %v503
        %v556 = vpack.c.b16 %v512, %v508
        %v557 = vpack.c.b16 %v513, %v509
        %v558 = vpack.c.b16 %v514, %v510
        %v559 = vpack.c.b16 %v515, %v511
        %v560 = vpack.c.b16 %v520, %v516
        %v561 = vpack.c.b16 %v521, %v517
        %v562 = vpack.c.b16 %v522, %v518
        %v563 = vpack.c.b16 %v523, %v519
        %v564 = vpack.c.b16 %v528, %v524
        %v565 = vpack.c.b16 %v529, %v525
        %v566 = vpack.c.b16 %v530, %v526
        %v567 = vpack.c.b16 %v531, %v527
        %v568 = vpack.c.b16 %v536, %v532
        %v569 = vpack.c.b16 %v537, %v533
        %v570 = vpack.c.b16 %v538, %v534
        %v571 = vpack.c.b16 %v539, %v535
        %v668 = vunpack.c.l.b16 %v332
        %v669 = vunpack.c.l.b16 %v333
        %v670 = vunpack.c.l.b16 %v334
        %v671 = vunpack.c.l.b16 %v335
        %v672 = vunpack.c.l.b16 %v336
        %v673 = vunpack.c.l.b16 %v337
        %v674 = vunpack.c.l.b16 %v338
        %v675 = vunpack.c.l.b16 %v339
        %v676 = vunpack.c.l.b16 %v340
        %v677 = vunpack.c.l.b16 %v341
        %v678 = vunpack.c.l.b16 %v342
        %v679 = vunpack.c.l.b16 %v343
        %v680 = vunpack.c.l.b16 %v344
        %v681 = vunpack.c.l.b16 %v345
        %v682 = vunpack.c.l.b16 %v346
        %v683 = vunpack.c.l.b16 %v347
        %v684 = vunpack.c.l.b16 %v348
        %v685 = vunpack.c.l.b16 %v349
        %v686 = vunpack.c.l.b16 %v350
        %v687 = vunpack.c.l.b16 %v351
        %v688 = vunpack.c.l.b16 %v352
        %v689 = vunpack.c.l.b16 %v353
        %v690 = vunpack.c.l.b16 %v354
        %v691 = vunpack.c.l.b16 %v355
        %v692 = vunpack.c.l.b16 %v356
        %v693 = vunpack.c.l.b16 %v357
        %v694 = vunpack.c.l.b16 %v358
        %v695 = vunpack.c.l.b16 %v359
        %v696 = vunpack.c.l.b16 %v360
        %v697 = vunpack.c.l.b16 %v361
        %v698 = vunpack.c.l.b16 %v362
        %v699 = vunpack.c.l.b16 %v363
        %v700 = vunpack.c.l.b16 %v364
        %v701 = vunpack.c.l.b16 %v365
        %v702 = vunpack.c.l.b16 %v366
        %v703 = vunpack.c.l.b16 %v367
        %v704 = vunpack.c.l.b16 %v368
        %v705 = vunpack.c.l.b16 %v369
        %v706 = vunpack.c.l.b16 %v370
        %v707 = vunpack.c.l.b16 %v371
        %v708 = vunpack.c.l.b16 %v372
        %v709 = vunpack.c.l.b16 %v373
        %v710 = vunpack.c.l.b16 %v374
        %v711 = vunpack.c.l.b16 %v375
        %v712 = vunpack.c.l.b16 %v376
        %v713 = vunpack.c.l.b16 %v377
        %v714 = vunpack.c.l.b16 %v378
        %v715 = vunpack.c.l.b16 %v379
        %v716 = vunpack.c.l.b16 %v380
        %v717 = vunpack.c.l.b16 %v381
        %v718 = vunpack.c.l.b16 %v382
        %v719 = vunpack.c.l.b16 %v383
        %v720 = vunpack.c.l.b16 %v384
        %v721 = vunpack.c.l.b16 %v385
        %v722 = vunpack.c.l.b16 %v386
        %v723 = vunpack.c.l.b16 %v387
        %v724 = vunpack.c.l.b16 %v388
        %v725 = vunpack.c.l.b16 %v389
        %v726 = vunpack.c.l.b16 %v390
        %v727 = vunpack.c.l.b16 %v391
        %v728 = vunpack.c.l.b16 %v392
        %v729 = vunpack.c.l.b16 %v393
        %v730 = vunpack.c.l.b16 %v394
        %v731 = vunpack.c.l.b16 %v395
        %v732 = vpack.c.b16 %v669, %v668
        %v733 = vpack.c.b16 %v671, %v670
        %v734 = vpack.c.b16 %v673, %v672
        %v735 = vpack.c.b16 %v675, %v674
        %v736 = vpack.c.b16 %v677, %v676
        %v737 = vpack.c.b16 %v679, %v678
        %v738 = vpack.c.b16 %v681, %v680
        %v739 = vpack.c.b16 %v683, %v682
        %v740 = vpack.c.b16 %v685, %v684
        %v741 = vpack.c.b16 %v687, %v686
        %v742 = vpack.c.b16 %v689, %v688
        %v743 = vpack.c.b16 %v691, %v690
        %v744 = vpack.c.b16 %v693, %v692
        %v745 = vpack.c.b16 %v695, %v694
        %v746 = vpack.c.b16 %v697, %v696
        %v747 = vpack.c.b16 %v699, %v698
        %v748 = vpack.c.b16 %v701, %v700
        %v749 = vpack.c.b16 %v703, %v702
        %v750 = vpack.c.b16 %v705, %v704
        %v751 = vpack.c.b16 %v707, %v706
        %v752 = vpack.c.b16 %v709, %v708
        %v753 = vpack.c.b16 %v711, %v710
        %v754 = vpack.c.b16 %v713, %v712
        %v755 = vpack.c.b16 %v715, %v714
        %v756 = vpack.c.b16 %v717, %v716
        %v757 = vpack.c.b16 %v719, %v718
        %v758 = vpack.c.b16 %v721, %v720
        %v759 = vpack.c.b16 %v723, %v722
        %v760 = vpack.c.b16 %v725, %v724
        %v761 = vpack.c.b16 %v727, %v726
        %v762 = vpack.c.b16 %v729, %v728
        %v763 = vpack.c.b16 %v731, %v730
        %796 = vmatprep.subr.bf16.mxu0 0
        %797 = vmatpush1.bf16.msra.mxu0 %v739
        %798 = vmatprep.subr.bf16.mxu0 0
        %799 = vmatpush1.bf16.msra.mxu0 %v738
        %800 = vmatprep.subr.bf16.mxu0 0
        %801 = vmatpush1.bf16.msra.mxu0 %v737
        %802 = vmatprep.subr.bf16.mxu0 0
        %803 = vmatpush1.bf16.msra.mxu0 %v736
        %804 = vmatprep.subr.bf16.mxu0 0
        %805 = vmatpush1.bf16.msra.mxu0 %v735
        %806 = vmatprep.subr.bf16.mxu0 0
        %807 = vmatpush1.bf16.msra.mxu0 %v734
        %808 = vmatprep.subr.bf16.mxu0 0
        %809 = vmatpush1.bf16.msra.mxu0 %v733
        %810 = vmatprep.subr.bf16.mxu0 0
        %811 = vmatpush1.bf16.msra.mxu0 %v732
        %812 = vmatprep.subr.bf16.mxu0 0
        %813 = vmatpush2.bf16.msra.mxu0 %v747
        %814 = vmatprep.subr.bf16.mxu0 0
        %815 = vmatpush2.bf16.msra.mxu0 %v746
        %816 = vmatprep.subr.bf16.mxu0 0
        %817 = vmatpush2.bf16.msra.mxu0 %v745
        %818 = vmatprep.subr.bf16.mxu0 0
        %819 = vmatpush2.bf16.msra.mxu0 %v744
        %820 = vmatprep.subr.bf16.mxu0 0
        %821 = vmatpush2.bf16.msra.mxu0 %v743
        %822 = vmatprep.subr.bf16.mxu0 0
        %823 = vmatpush2.bf16.msra.mxu0 %v742
        %824 = vmatprep.subr.bf16.mxu0 0
        %825 = vmatpush2.bf16.msra.mxu0 %v741
        %826 = vmatprep.subr.bf16.mxu0 0
        %827 = vmatpush2.bf16.msra.mxu0 %v740
        %828 = vmatprep.mubr.bf16.mxu0 %v541
        %829 = vmatmul.mubr.bf16.gmra.mxu0 %v540
        %v830 = vpop.f32.mrf.mxu0
        %v831 = vadd.f32 0.0, %v830
        %v832 = vpop.f32.mrf.mxu0
        %v833 = vpop.f32.mrf.mxu0
        %v834 = vadd.f32 0.0, %v833
        %v835 = vpop.f32.mrf.mxu0
        %836 = vmatprep.mubr.bf16.mxu0 %v545
        %837 = vmatmul.mubr.bf16.gmra.mxu0 %v544
        %v838 = vpop.f32.mrf.mxu0
        %v839 = vadd.f32 0.0, %v838
        %v840 = vpop.f32.mrf.mxu0
        %v841 = vpop.f32.mrf.mxu0
        %v842 = vadd.f32 0.0, %v841
        %v843 = vpop.f32.mrf.mxu0
        %844 = vmatprep.mubr.bf16.mxu0 %v549
        %845 = vmatmul.mubr.bf16.gmra.mxu0 %v548
        %v846 = vpop.f32.mrf.mxu0
        %v847 = vadd.f32 0.0, %v846
        %v848 = vpop.f32.mrf.mxu0
        %v849 = vpop.f32.mrf.mxu0
        %v850 = vadd.f32 0.0, %v849
        %v851 = vpop.f32.mrf.mxu0
        %852 = vmatprep.mubr.bf16.mxu0 %v553
        %853 = vmatmul.mubr.bf16.gmra.mxu0 %v552
        %v854 = vpop.f32.mrf.mxu0
        %v855 = vadd.f32 0.0, %v854
        %v856 = vpop.f32.mrf.mxu0
        %v857 = vpop.f32.mrf.mxu0
        %v858 = vadd.f32 0.0, %v857
        %v859 = vpop.f32.mrf.mxu0
        %860 = vmatprep.mubr.bf16.mxu0 %v557
        %861 = vmatmul.mubr.bf16.gmra.mxu0 %v556
        %v862 = vpop.f32.mrf.mxu0
        %v863 = vadd.f32 0.0, %v862
        %v864 = vpop.f32.mrf.mxu0
        %v865 = vpop.f32.mrf.mxu0
        %v866 = vadd.f32 0.0, %v865
        %v867 = vpop.f32.mrf.mxu0
        %868 = vmatprep.mubr.bf16.mxu0 %v561
        %869 = vmatmul.mubr.bf16.gmra.mxu0 %v560
        %v870 = vpop.f32.mrf.mxu0
        %v871 = vadd.f32 0.0, %v870
        %v872 = vpop.f32.mrf.mxu0
        %v873 = vpop.f32.mrf.mxu0
        %v874 = vadd.f32 0.0, %v873
        %v875 = vpop.f32.mrf.mxu0
        %876 = vmatprep.mubr.bf16.mxu0 %v565
        %877 = vmatmul.mubr.bf16.gmra.mxu0 %v564
        %v878 = vpop.f32.mrf.mxu0
        %v879 = vadd.f32 0.0, %v878
        %v880 = vpop.f32.mrf.mxu0
        %v881 = vpop.f32.mrf.mxu0
        %v882 = vadd.f32 0.0, %v881
        %v883 = vpop.f32.mrf.mxu0
        %884 = vmatprep.mubr.bf16.mxu0 %v569
        %885 = vmatmul.mubr.bf16.gmra.mxu0 %v568
        %v886 = vpop.f32.mrf.mxu0
        %v887 = vadd.f32 0.0, %v886
        %v888 = vpop.f32.mrf.mxu0
        %v889 = vpop.f32.mrf.mxu0
        %v890 = vadd.f32 0.0, %v889
        %v891 = vpop.f32.mrf.mxu0
        %892 = vdwg.mxu0
        %893 = vmatprep.subr.bf16.mxu0 0
        %894 = vmatpush1.bf16.msra.mxu0 %v755
        %895 = vmatprep.subr.bf16.mxu0 0
        %896 = vmatpush1.bf16.msra.mxu0 %v754
        %897 = vmatprep.subr.bf16.mxu0 0
        %898 = vmatpush1.bf16.msra.mxu0 %v753
        %899 = vmatprep.subr.bf16.mxu0 0
        %900 = vmatpush1.bf16.msra.mxu0 %v752
        %901 = vmatprep.subr.bf16.mxu0 0
        %902 = vmatpush1.bf16.msra.mxu0 %v751
        %903 = vmatprep.subr.bf16.mxu0 0
        %904 = vmatpush1.bf16.msra.mxu0 %v750
        %905 = vmatprep.subr.bf16.mxu0 0
        %906 = vmatpush1.bf16.msra.mxu0 %v749
        %907 = vmatprep.subr.bf16.mxu0 0
        %908 = vmatpush1.bf16.msra.mxu0 %v748
        %909 = vmatprep.subr.bf16.mxu0 0
        %910 = vmatpush2.bf16.msra.mxu0 %v763
        %911 = vmatprep.subr.bf16.mxu0 0
        %912 = vmatpush2.bf16.msra.mxu0 %v762
        %913 = vmatprep.subr.bf16.mxu0 0
        %914 = vmatpush2.bf16.msra.mxu0 %v761
        %915 = vmatprep.subr.bf16.mxu0 0
        %916 = vmatpush2.bf16.msra.mxu0 %v760
        %917 = vmatprep.subr.bf16.mxu0 0
        %918 = vmatpush2.bf16.msra.mxu0 %v759
        %919 = vmatprep.subr.bf16.mxu0 0
        %920 = vmatpush2.bf16.msra.mxu0 %v758
        %921 = vmatprep.subr.bf16.mxu0 0
        %922 = vmatpush2.bf16.msra.mxu0 %v757
        %923 = vmatprep.subr.bf16.mxu0 0
        %924 = vmatpush2.bf16.msra.mxu0 %v756
        %925 = vmatprep.mubr.bf16.mxu0 %v543
        %926 = vmatmul.mubr.bf16.gmra.mxu0 %v542
        %v927 = vpop.f32.mrf.mxu0
        %v928 = vadd.f32 %v831, %v927
        %v929 = vpop.f32.mrf.mxu0
        %v930 = vpop.f32.mrf.mxu0
        %v931 = vadd.f32 %v834, %v930
        %v932 = vpop.f32.mrf.mxu0
        %933 = vmatprep.mubr.bf16.mxu0 %v547
        %934 = vmatmul.mubr.bf16.gmra.mxu0 %v546
        %v935 = vpop.f32.mrf.mxu0
        %v936 = vadd.f32 %v839, %v935
        %v937 = vpop.f32.mrf.mxu0
        %v938 = vpop.f32.mrf.mxu0
        %v939 = vadd.f32 %v842, %v938
        %v940 = vpop.f32.mrf.mxu0
        %941 = vmatprep.mubr.bf16.mxu0 %v551
        %942 = vmatmul.mubr.bf16.gmra.mxu0 %v550
        %v943 = vpop.f32.mrf.mxu0
        %v944 = vadd.f32 %v847, %v943
        %v945 = vpop.f32.mrf.mxu0
        %v946 = vpop.f32.mrf.mxu0
        %v947 = vadd.f32 %v850, %v946
        %v948 = vpop.f32.mrf.mxu0
        %949 = vmatprep.mubr.bf16.mxu0 %v555
        %950 = vmatmul.mubr.bf16.gmra.mxu0 %v554
        %v951 = vpop.f32.mrf.mxu0
        %v952 = vadd.f32 %v855, %v951
        %v953 = vpop.f32.mrf.mxu0
        %v954 = vpop.f32.mrf.mxu0
        %v955 = vadd.f32 %v858, %v954
        %v956 = vpop.f32.mrf.mxu0
        %957 = vmatprep.mubr.bf16.mxu0 %v559
        %958 = vmatmul.mubr.bf16.gmra.mxu0 %v558
        %v959 = vpop.f32.mrf.mxu0
        %v960 = vadd.f32 %v863, %v959
        %v961 = vpop.f32.mrf.mxu0
        %v962 = vpop.f32.mrf.mxu0
        %v963 = vadd.f32 %v866, %v962
        %v964 = vpop.f32.mrf.mxu0
        %965 = vmatprep.mubr.bf16.mxu0 %v563
        %966 = vmatmul.mubr.bf16.gmra.mxu0 %v562
        %v967 = vpop.f32.mrf.mxu0
        %v968 = vadd.f32 %v871, %v967
        %v969 = vpop.f32.mrf.mxu0
        %v970 = vpop.f32.mrf.mxu0
        %v971 = vadd.f32 %v874, %v970
        %v972 = vpop.f32.mrf.mxu0
        %973 = vmatprep.mubr.bf16.mxu0 %v567
        %974 = vmatmul.mubr.bf16.gmra.mxu0 %v566
        %v975 = vpop.f32.mrf.mxu0
        %v976 = vadd.f32 %v879, %v975
        %v977 = vpop.f32.mrf.mxu0
        %v978 = vpop.f32.mrf.mxu0
        %v979 = vadd.f32 %v882, %v978
        %v980 = vpop.f32.mrf.mxu0
        %981 = vmatprep.mubr.bf16.mxu0 %v571
        %982 = vmatmul.mubr.bf16.gmra.mxu0 %v570
        %v983 = vpop.f32.mrf.mxu0
        %v984 = vadd.f32 %v887, %v983
        %v985 = vpop.f32.mrf.mxu0
        %v986 = vpop.f32.mrf.mxu0
        %v987 = vadd.f32 %v890, %v986
        %v988 = vpop.f32.mrf.mxu0
        %989 = vdwg.mxu0
        %v990 = vadd.f32 %v396, %v928
        %v991 = vadd.f32 %v397, %v931
        %v992 = vadd.f32 %v398, %v936
        %v993 = vadd.f32 %v399, %v939
        %v994 = vadd.f32 %v400, %v944
        %v995 = vadd.f32 %v401, %v947
        %v996 = vadd.f32 %v402, %v952
        %v997 = vadd.f32 %v403, %v955
        %v998 = vadd.f32 %v404, %v960
        %v999 = vadd.f32 %v405, %v963
        %v1000 = vadd.f32 %v406, %v968
        %v1001 = vadd.f32 %v407, %v971
        %v1002 = vadd.f32 %v408, %v976
        %v1003 = vadd.f32 %v409, %v979
        %v1004 = vadd.f32 %v410, %v984
        %v1005 = vadd.f32 %v411, %v987
        %1006 = vst [vmem:[#allocation2] sm:$0xff] %v990
        %1007 = vst [vmem:[#allocation2 + $0x8] sm:$0xff] %v991
        %1008 = vst [vmem:[#allocation2 + $0x10] sm:$0xff] %v992
        %1009 = vst [vmem:[#allocation2 + $0x18] sm:$0xff] %v993
        %1010 = vst [vmem:[#allocation2 + $0x20] sm:$0xff] %v994
        %1011 = vst [vmem:[#allocation2 + $0x28] sm:$0xff] %v995
        %1012 = vst [vmem:[#allocation2 + $0x30] sm:$0xff] %v996
        %1013 = vst [vmem:[#allocation2 + $0x38] sm:$0xff] %v997
        %1014 = vst [vmem:[#allocation2 + $0x40] sm:$0xff] %v998
        %1015 = vst [vmem:[#allocation2 + $0x48] sm:$0xff] %v999
        %1016 = vst [vmem:[#allocation2 + $0x50] sm:$0xff] %v1000
        %1017 = vst [vmem:[#allocation2 + $0x58] sm:$0xff] %v1001
        %1018 = vst [vmem:[#allocation2 + $0x60] sm:$0xff] %v1002
        %1019 = vst [vmem:[#allocation2 + $0x68] sm:$0xff] %v1003
        %1020 = vst [vmem:[#allocation2 + $0x70] sm:$0xff] %v1004
        %1021 = vst [vmem:[#allocation2 + $0x78] sm:$0xff] %v1005
        %p1022 = scmp.eq.s32.totalorder %s21, 1
        // Predicated region
        $region60: #{discriminator_forward.12} parent=50 // pred_check
          %p1023 = pneg %p1022
        $region61: #{discriminator_forward.12} parent=50 // pred_check_branch
          %1025 = sbr.rel (%p1023) target = $region63
        $region62: #{discriminator_forward.12} parent=50 // pred_region
          %v1026 = vld [vmem:[#allocation2] sm:$0xff]
          %v1027 = vld [vmem:[#allocation2 + $0x8] sm:$0xff]
          %v1028 = vld [vmem:[#allocation2 + $0x10] sm:$0xff]
          %v1029 = vld [vmem:[#allocation2 + $0x18] sm:$0xff]
          %v1030 = vld [vmem:[#allocation2 + $0x20] sm:$0xff]
          %v1031 = vld [vmem:[#allocation2 + $0x28] sm:$0xff]
          %v1032 = vld [vmem:[#allocation2 + $0x30] sm:$0xff]
          %v1033 = vld [vmem:[#allocation2 + $0x38] sm:$0xff]
          %v1034 = vld [vmem:[#allocation2 + $0x40] sm:$0xff]
          %v1035 = vld [vmem:[#allocation2 + $0x48] sm:$0xff]
          %v1036 = vld [vmem:[#allocation2 + $0x50] sm:$0xff]
          %v1037 = vld [vmem:[#allocation2 + $0x58] sm:$0xff]
          %v1038 = vld [vmem:[#allocation2 + $0x60] sm:$0xff]
          %v1039 = vld [vmem:[#allocation2 + $0x68] sm:$0xff]
          %v1040 = vld [vmem:[#allocation2 + $0x70] sm:$0xff]
          %v1041 = vld [vmem:[#allocation2 + $0x78] sm:$0xff]
          %v1042 = vld [vmem:[%s292] sm:$0x1]
          %v1044 = vlaneseq
          %v1045 = vshrl.u32 %v1044, 7
          %v1046 = vsub.s32 0, %v1045
          %v1047 = vrot.slane %v1042, %v1046
          %v1049 = vadd.f32 %v1026, %v1047
          %v1050 = vadd.f32 %v1027, %v1047
          %v1051 = vadd.f32 %v1028, %v1047
          %v1052 = vadd.f32 %v1029, %v1047
          %v1053 = vadd.f32 %v1030, %v1047
          %v1054 = vadd.f32 %v1031, %v1047
          %v1055 = vadd.f32 %v1032, %v1047
          %v1056 = vadd.f32 %v1033, %v1047
          %v1057 = vadd.f32 %v1034, %v1047
          %v1058 = vadd.f32 %v1035, %v1047
          %v1059 = vadd.f32 %v1036, %v1047
          %v1060 = vadd.f32 %v1037, %v1047
          %v1061 = vadd.f32 %v1038, %v1047
          %v1062 = vadd.f32 %v1039, %v1047
          %v1063 = vadd.f32 %v1040, %v1047
          %v1064 = vadd.f32 %v1041, %v1047
          %v1065 = vpack.c.bf16 %v1050, %v1049
          %v1066 = vpack.c.bf16 %v1052, %v1051
          %v1067 = vpack.c.bf16 %v1054, %v1053
          %v1068 = vpack.c.bf16 %v1056, %v1055
          %v1069 = vpack.c.bf16 %v1058, %v1057
          %v1070 = vpack.c.bf16 %v1060, %v1059
          %v1071 = vpack.c.bf16 %v1062, %v1061
          %v1072 = vpack.c.bf16 %v1064, %v1063
          %v1081 = vunpack.c.l.b16 %v1065
          %v1082 = vunpack.c.h.b16 %v1065
          %v1083 = vunpack.c.l.b16 %v1066
          %v1084 = vunpack.c.h.b16 %v1066
          %v1085 = vunpack.c.l.b16 %v1067
          %v1086 = vunpack.c.h.b16 %v1067
          %v1087 = vunpack.c.l.b16 %v1068
          %v1088 = vunpack.c.h.b16 %v1068
          %v1089 = vunpack.c.l.b16 %v1069
          %v1090 = vunpack.c.h.b16 %v1069
          %v1091 = vunpack.c.l.b16 %v1070
          %v1092 = vunpack.c.h.b16 %v1070
          %v1093 = vunpack.c.l.b16 %v1071
          %v1094 = vunpack.c.h.b16 %v1071
          %v1095 = vunpack.c.l.b16 %v1072
          %v1096 = vunpack.c.h.b16 %v1072
          %v1097 = vpack.c.b16 %v1081, %v1081
          %v1098 = vpack.c.b16 %v1082, %v1082
          %v1099 = vpack.c.b16 %v1083, %v1083
          %v1100 = vpack.c.b16 %v1084, %v1084
          %v1101 = vpack.c.b16 %v1085, %v1085
          %v1102 = vpack.c.b16 %v1086, %v1086
          %v1103 = vpack.c.b16 %v1087, %v1087
          %v1104 = vpack.c.b16 %v1088, %v1088
          %v1105 = vpack.c.b16 %v1089, %v1089
          %v1106 = vpack.c.b16 %v1090, %v1090
          %v1107 = vpack.c.b16 %v1091, %v1091
          %v1108 = vpack.c.b16 %v1092, %v1092
          %v1109 = vpack.c.b16 %v1093, %v1093
          %v1110 = vpack.c.b16 %v1094, %v1094
          %v1111 = vpack.c.b16 %v1095, %v1095
          %v1112 = vpack.c.b16 %v1096, %v1096
          %1129 = vst [vmem:[%s300] sm:$0xf] %v1097
          %1130 = vst [vmem:[%s300 + $0x4] sm:$0xf] %v1098
          %1131 = vst [vmem:[%s300 + $0x8] sm:$0xf] %v1099
          %1132 = vst [vmem:[%s300 + $0xc] sm:$0xf] %v1100
          %1133 = vst [vmem:[%s300 + $0x10] sm:$0xf] %v1101
          %1134 = vst [vmem:[%s300 + $0x14] sm:$0xf] %v1102
          %1135 = vst [vmem:[%s300 + $0x18] sm:$0xf] %v1103
          %1136 = vst [vmem:[%s300 + $0x1c] sm:$0xf] %v1104
          %1137 = vst [vmem:[%s300 + $0x20] sm:$0xf] %v1105
          %1138 = vst [vmem:[%s300 + $0x24] sm:$0xf] %v1106
          %1139 = vst [vmem:[%s300 + $0x28] sm:$0xf] %v1107
          %1140 = vst [vmem:[%s300 + $0x2c] sm:$0xf] %v1108
          %1141 = vst [vmem:[%s300 + $0x30] sm:$0xf] %v1109
          %1142 = vst [vmem:[%s300 + $0x34] sm:$0xf] %v1110
          %1143 = vst [vmem:[%s300 + $0x38] sm:$0xf] %v1111
          %1144 = vst [vmem:[%s300 + $0x3c] sm:$0xf] %v1112
        $region63: #{discriminator_forward.12} parent=50 // pred_fallthru
          _
        %s1145 = smul.u32 16, %s19
        %p1146 = scmp.lt.s32.totalorder %s1145, 15
        %s1147 = scalar_select %p1146, %s1145, 15
        %p1148 = scmp.lt.s32.totalorder %s20, 0
        %s1149 = scalar_select %p1148, %s20, 0
        %s1150 = sadd.s32 %s1149, %s1147
        %s1151 = smul.addr %s1150, 4
        %s1152 = scalar_lea.vmem %s3, %s1151
        // Predicated region
        $region64: #{discriminator_forward.12} parent=50 // pred_check
          %p1153 = pneg %p128
        $region65: #{discriminator_forward.12} parent=50 // pred_check_branch
          %1155 = sbr.rel (%p1153) target = $region67
        $region66: #{discriminator_forward.12} parent=50 // pred_region
          %s1156 = smul.u32 16, %s19
        $region67: #{discriminator_forward.12} parent=50 // pred_fallthru
          _
        // Predicated region
        $region68: #{discriminator_forward.12} parent=50 // pred_check
          %p1157 = pneg %p128
        $region69: #{discriminator_forward.12} parent=50 // pred_check_branch
          %1159 = sbr.rel (%p1157) target = $region71
        $region70: #{discriminator_forward.12} parent=50 // pred_region
          %s1160 = smul.u32 16, %s19
          %p1161 = scmp.lt.s32.totalorder %s1160, 15
          %s1162 = scalar_select %p1161, %s1160, 15
          %p1163 = scmp.lt.s32.totalorder %s20, 0
          %s1164 = scalar_select %p1163, %s20, 0
          %s1165 = sadd.s32 %s1164, %s1162
          %s1166 = smul.addr %s1165, 4
          %s1167 = scalar_lea.vmem %s3, %s1166
        $region71: #{discriminator_forward.12} parent=50 // pred_fallthru
          _
      $region51: #{discriminator_forward.12} parent=5 // pred_fallthru
        _
      %p1168 = scmp.le.s32.totalorder 2, %s9
      // Predicated region
      $region72: #{discriminator_forward.12} parent=5 // pred_check
        %p1169 = pneg %p1168
      $region73: #{discriminator_forward.12} parent=5 // pred_check_branch
        %1171 = sbr.rel (%p1169) target = $region75
      $region74: #{discriminator_forward.12} parent=5 // pred_region
        %s1172 = ssub.s32 %s9, 2
      $region75: #{discriminator_forward.12} parent=5 // pred_fallthru
        _
    $region6: #{discriminator_forward.12} parent=1 // loop_footer
      %s13 = sadd.s32 1, %s9
    $region7: #{discriminator_forward.12} parent=1 // loop_footer_branch
      %8 = sbr.rel target = $region3
    $region8: #{discriminator_forward.12} parent=1 // loop_exit
      _

// kernel: discriminator_forward.13
$region0: #{discriminator_forward.13}
  #allocation0 [shape = 'u32[]', space=smem, size = 0x4, offset = 0x4, fixed_abs, tag = 'smem constant byte address 0x4 - core index']
  #allocation1 [shape = 'u32[144,128]{1,0:T(1,128)}', space=vmem, size = 0x12000, scoped, tag = 'internal scratch']
  %s0 = inlined_call_operand.vmem [shape: bf16[2,64,128], index: 0, kind: input, shape index: {}]
  %s1 = inlined_call_operand.vmem [shape: f32[2,1,128], index: 1, kind: output, shape index: {0}]
  %s2 = inlined_call_operand.vmem [shape: f32[2,1,128], index: 2, kind: output, shape index: {1}]
  %3 = xla_tuple %s1, %s2
  %s4 = sld [smem:[#allocation0]]
  $region53: #{discriminator_forward.13} parent=0
    _
  %s6 = ssub.s32 1, %s4
  %s7 = scalar_select 0, %s6, %s4
  loop: start=0, step=1, limit=4
  $region2: #{discriminator_forward.13} parent=0 // loop_pre_header
    _
  $region3: #{discriminator_forward.13} parent=0 // loop_header
    %s9 = sphi 0, %s13
    %p10 = scmp.ge.s32.totalorder %s9, 4
    %s16 = sphi 0, %s35
    %s17 = sphi 0, %s31
    %s18 = sphi 0, %s27
    %s19 = sphi 0, %s16
    %s20 = sphi 0, %s17
    %s21 = sphi 0, %s18
    %s22 = sphi 0, %s19
    %s23 = sphi 0, %s20
    %s24 = sphi 0, %s21
    %s42 = sphi 0, %s44
    %s45 = sphi 0, %s42
    %s46 = sphi 0, %s45
    %s62 = sphi 0, %s46
    %s70 = sphi 0, %s72
    %s73 = sphi 0, %s70
    %s74 = sphi 0, %s73
    %s90 = sphi 0, %s74
    %s98 = sphi 0, %s100
    %s101 = sphi 0, %s98
    %s102 = sphi 0, %s101
    %s118 = sphi 0, %s102
  $region4: #{discriminator_forward.13} parent=0 // loop_header_branch
    %12 = sbr.rel (%p10) target = $region8
  $region5: #{discriminator_forward.13} parent=0 // loop_body
    %s14 = ssub.s32 %s9, 1
    %s15 = ssub.s32 %s9, 2
    %s25 = sadd.s32 1, %s18
    %p26 = scmp.ge.s32.totalorder %s25, 1
    %s27 = scalar_select %p26, 0, %s25
    %s28 = sadd.s32 1, %s17
    %s29 = scalar_select %p26, %s28, %s17
    %p30 = scmp.ge.s32.totalorder %s29, 1
    %s31 = scalar_select %p30, 0, %s29
    %s32 = sadd.s32 1, %s16
    %s33 = scalar_select %p30, %s32, %s16
    %p34 = scmp.ge.s32.totalorder %s33, 2
    %s35 = scalar_select %p34, 0, %s33
    %s36 = ssub.s32 %s16, %s35
    %s37 = ssub.s32 %s18, %s27
    %s38 = sor.u32 %s36, %s37
    %s39 = ssub.s32 %s17, %s31
    %s40 = sor.u32 %s38, %s39
    %p41 = scmp.eq.s32.totalorder %s40, 0
    %s43 = sadd.s32 %s42, 1
    %s44 = scalar_select %p41, %s42, %s43
    %p47 = pneg %p41
    %p48 = scmp.eq.s32.totalorder %s9, 1
    %p49 = por %p47, %p48
    %p50 = scmp.ne.s32.totalorder %s42, %s45
    %p51 = scmp.eq.s32.totalorder %s9, 0
    %p52 = por %p50, %p51
    %p53 = scmp.ne.s32.totalorder %s42, %s45
    %p54 = scmp.eq.s32.totalorder %s14, 1
    %p55 = por %p53, %p54
    %p56 = scmp.ne.s32.totalorder %s45, %s46
    %p57 = scmp.eq.s32.totalorder %s14, 0
    %p58 = por %p56, %p57
    %p59 = scmp.ne.s32.totalorder %s45, %s46
    %p60 = scmp.eq.s32.totalorder %s15, 1
    %p61 = por %p59, %p60
    %p63 = scmp.ne.s32.totalorder %s46, %s62
    %p64 = scmp.eq.s32.totalorder %s15, 0
    %p65 = por %p63, %p64
    %s66 = ssub.s32 %s16, %s35
    %s67 = ssub.s32 %s17, %s31
    %s68 = sor.u32 %s66, %s67
    %p69 = scmp.eq.s32.totalorder %s68, 0
    %s71 = sadd.s32 %s70, 1
    %s72 = scalar_select %p69, %s70, %s71
    %p75 = pneg %p69
    %p76 = scmp.eq.s32.totalorder %s9, 1
    %p77 = por %p75, %p76
    %p78 = scmp.ne.s32.totalorder %s70, %s73
    %p79 = scmp.eq.s32.totalorder %s9, 0
    %p80 = por %p78, %p79
    %p81 = scmp.ne.s32.totalorder %s70, %s73
    %p82 = scmp.eq.s32.totalorder %s14, 1
    %p83 = por %p81, %p82
    %p84 = scmp.ne.s32.totalorder %s73, %s74
    %p85 = scmp.eq.s32.totalorder %s14, 0
    %p86 = por %p84, %p85
    %p87 = scmp.ne.s32.totalorder %s73, %s74
    %p88 = scmp.eq.s32.totalorder %s15, 1
    %p89 = por %p87, %p88
    %p91 = scmp.ne.s32.totalorder %s74, %s90
    %p92 = scmp.eq.s32.totalorder %s15, 0
    %p93 = por %p91, %p92
    %s94 = ssub.s32 %s16, %s35
    %s95 = ssub.s32 %s17, %s31
    %s96 = sor.u32 %s94, %s95
    %p97 = scmp.eq.s32.totalorder %s96, 0
    %s99 = sadd.s32 %s98, 1
    %s100 = scalar_select %p97, %s98, %s99
    %p103 = pneg %p97
    %p104 = scmp.eq.s32.totalorder %s9, 1
    %p105 = por %p103, %p104
    %p106 = scmp.ne.s32.totalorder %s98, %s101
    %p107 = scmp.eq.s32.totalorder %s9, 0
    %p108 = por %p106, %p107
    %p109 = scmp.ne.s32.totalorder %s98, %s101
    %p110 = scmp.eq.s32.totalorder %s14, 1
    %p111 = por %p109, %p110
    %p112 = scmp.ne.s32.totalorder %s101, %s102
    %p113 = scmp.eq.s32.totalorder %s14, 0
    %p114 = por %p112, %p113
    %p115 = scmp.ne.s32.totalorder %s101, %s102
    %p116 = scmp.eq.s32.totalorder %s15, 1
    %p117 = por %p115, %p116
    %p119 = scmp.ne.s32.totalorder %s102, %s118
    %p120 = scmp.eq.s32.totalorder %s15, 0
    %p121 = por %p119, %p120
    %p122 = scmp.le.s32.totalorder 1, %s9
    %p123 = scmp.lt.s32.totalorder %s9, 3
    %p124 = pnand %p122, %p123
    %p125 = pneg %p124
    // Predicated region
    $region9: #{discriminator_forward.13} parent=5 // pred_check
      _
    $region10: #{discriminator_forward.13} parent=5 // pred_check_branch
      %127 = sbr.rel (%p124) target = $region12
    $region11: #{discriminator_forward.13} parent=5 // pred_region
      %s128 = ssub.s32 %s9, 1
    $region12: #{discriminator_forward.13} parent=5 // pred_fallthru
      _
    %p129 = scmp.lt.s32.totalorder %s9, 2
    // Predicated region
    $region13: #{discriminator_forward.13} parent=5 // pred_check
      %p130 = pneg %p129
    $region14: #{discriminator_forward.13} parent=5 // pred_check_branch
      %132 = sbr.rel (%p130) target = $region16
    $region15: #{discriminator_forward.13} parent=5 // pred_region
      // Predicated region
      $region17: #{discriminator_forward.13} parent=15 // pred_check
        %p133 = pneg %p52
      $region18: #{discriminator_forward.13} parent=15 // pred_check_branch
        %135 = sbr.rel (%p133) target = $region20
      $region19: #{discriminator_forward.13} parent=15 // pred_region
        %s136 = smul.u32 8, %s18
        %p137 = scmp.lt.s32.totalorder %s16, 1
        %s138 = scalar_select %p137, %s16, 1
        %p139 = scmp.lt.s32.totalorder %s136, 7
        %s140 = scalar_select %p139, %s136, 7
        %p141 = scmp.lt.s32.totalorder %s17, 0
        %s142 = scalar_select %p141, %s17, 0
        %s143 = sadd.s32 %s142, %s140
        %s144 = smul.addr %s138, 8
        %s145 = sadd.s32 %s143, %s144
        %s146 = smul.addr %s145, 4
        %s147 = scalar_lea.vmem %s0, %s146
        %s148 = smul.u32 8, %s18
      $region20: #{discriminator_forward.13} parent=15 // pred_fallthru
        _
    $region16: #{discriminator_forward.13} parent=5 // pred_fallthru
      _
    %p149 = scmp.le.s32.totalorder 1, %s9
    %p150 = scmp.lt.s32.totalorder %s9, 3
    %p151 = pnand %p149, %p150
    %p152 = pneg %p151
    // Predicated region
    $region21: #{discriminator_forward.13} parent=5 // pred_check
      _
    $region22: #{discriminator_forward.13} parent=5 // pred_check_branch
      %154 = sbr.rel (%p151) target = $region24
    $region23: #{discriminator_forward.13} parent=5 // pred_region
      %s155 = ssub.s32 %s9, 1
      %s156 = smul.u32 8, %s21
      %p157 = scmp.lt.s32.totalorder %s19, 1
      %s158 = scalar_select %p157, %s19, 1
      %p159 = scmp.lt.s32.totalorder %s156, 7
      %s160 = scalar_select %p159, %s156, 7
      %p161 = scmp.lt.s32.totalorder %s20, 0
      %s162 = scalar_select %p161, %s20, 0
      %s163 = sadd.s32 %s162, %s160
      %s164 = smul.addr %s158, 8
      %s165 = sadd.s32 %s163, %s164
      %s166 = smul.addr %s165, 4
      %s167 = scalar_lea.vmem %s0, %s166
      %p168 = pneg %p58
      %p169 = pneg %p55
      %p170 = pneg %p86
      %p171 = pneg %p83
      %p172 = scmp.lt.s32.totalorder %s19, 1
      %s173 = scalar_select %p172, %s19, 1
      %p174 = scmp.lt.s32.totalorder %s20, 0
      %s175 = scalar_select %p174, %s20, 0
      %s176 = sadd.s32 %s175, %s173
      %s177 = scalar_lea.vmem %s1, %s176
      %p178 = pneg %p114
      %p179 = pneg %p111
      %p180 = scmp.lt.s32.totalorder %s19, 1
      %s181 = scalar_select %p180, %s19, 1
      %p182 = scmp.lt.s32.totalorder %s20, 0
      %s183 = scalar_select %p182, %s20, 0
      %s184 = sadd.s32 %s183, %s181
      %s185 = scalar_lea.vmem %s2, %s184
      %s186 = smul.u32 8, %s21
      %p187 = scmp.lt.s32.totalorder %s19, 1
      %s188 = scalar_select %p187, %s19, 1
      %p189 = scmp.lt.s32.totalorder %s186, 7
      %s190 = scalar_select %p189, %s186, 7
      %p191 = scmp.lt.s32.totalorder %s20, 0
      %s192 = scalar_select %p191, %s20, 0
      %s193 = sadd.s32 %s192, %s190
      %s194 = smul.addr %s188, 8
      %s195 = sadd.s32 %s193, %s194
      %s196 = smul.addr %s195, 4
      %s197 = scalar_lea.vmem %s0, %s196
      %s198 = smul.u32 8, %s21
      %p199 = scmp.lt.s32.totalorder %s19, 1
      %s200 = scalar_select %p199, %s19, 1
      %p201 = scmp.lt.s32.totalorder %s20, 0
      %s202 = scalar_select %p201, %s20, 0
      %s203 = sadd.s32 %s202, %s200
      %s204 = scalar_lea.vmem %s1, %s203
      %p205 = scmp.lt.s32.totalorder %s19, 1
      %s206 = scalar_select %p205, %s19, 1
      %p207 = scmp.lt.s32.totalorder %s20, 0
      %s208 = scalar_select %p207, %s20, 0
      %s209 = sadd.s32 %s208, %s206
      %s210 = scalar_lea.vmem %s2, %s209
      %p211 = scmp.eq.s32.totalorder %s21, 0
      // Predicated region
      $region25: #{discriminator_forward.13} parent=23 // pred_check
        %p212 = pneg %p211
      $region26: #{discriminator_forward.13} parent=23 // pred_check_branch
        %214 = sbr.rel (%p212) target = $region28
      $region27: #{discriminator_forward.13} parent=23 // pred_region
        %215 = vst [vmem:[%s204] sm:$0x1] 0.0
        %216 = vst [vmem:[%s210] sm:$0x1] 0.0
      $region28: #{discriminator_forward.13} parent=23 // pred_fallthru
        _
      %v217 = vld [vmem:[%s197] sm:$0xf]
      %v218 = vld [vmem:[%s197 + $0x4] sm:$0xf]
      %v219 = vld [vmem:[%s197 + $0x8] sm:$0xf]
      %v220 = vld [vmem:[%s197 + $0xc] sm:$0xf]
      %v221 = vld [vmem:[%s197 + $0x10] sm:$0xf]
      %v222 = vld [vmem:[%s197 + $0x14] sm:$0xf]
      %v223 = vld [vmem:[%s197 + $0x18] sm:$0xf]
      %v224 = vld [vmem:[%s197 + $0x1c] sm:$0xf]
      %v225 = vunpack.c.l.bf16 %v217
      %v226 = vunpack.c.l.bf16 %v218
      %v227 = vunpack.c.l.bf16 %v219
      %v228 = vunpack.c.l.bf16 %v220
      %v229 = vunpack.c.l.bf16 %v221
      %v230 = vunpack.c.l.bf16 %v222
      %v231 = vunpack.c.l.bf16 %v223
      %v232 = vunpack.c.l.bf16 %v224
      %v233 = vld [vmem:[%s204] sm:$0x1]
      %v234 = vadd.f32 %v225, %v226
      %v235 = vadd.f32 %v234, %v227
      %v236 = vadd.f32 %v235, %v228
      %v237 = vadd.f32 %v236, %v229
      %v238 = vadd.f32 %v237, %v230
      %v239 = vadd.f32 %v238, %v231
      %v240 = vadd.f32 %v239, %v232
      %v241 = vrot.slane %v240, 4
      %v242 = vadd.f32 %v240, %v241
      %v243 = vrot.slane %v242, 2
      %v244 = vadd.f32 %v242, %v243
      %v245 = vrot.slane %v244, 1
      %v246 = vadd.f32 %v244, %v245
      %v247 = vadd.f32 %v233, %v246
      %248 = vst [vmem:[%s204] sm:$0x1] %v247
      %v249 = vld [vmem:[%s210] sm:$0x1]
      %v250 = vmul.f32 %v225, %v225
      %v251 = vmul.f32 %v226, %v226
      %v252 = vmul.f32 %v227, %v227
      %v253 = vmul.f32 %v228, %v228
      %v254 = vmul.f32 %v229, %v229
      %v255 = vmul.f32 %v230, %v230
      %v256 = vmul.f32 %v231, %v231
      %v257 = vmul.f32 %v232, %v232
      %v258 = vadd.f32 %v250, %v251
      %v259 = vadd.f32 %v258, %v252
      %v260 = vadd.f32 %v259, %v253
      %v261 = vadd.f32 %v260, %v254
      %v262 = vadd.f32 %v261, %v255
      %v263 = vadd.f32 %v262, %v256
      %v264 = vadd.f32 %v263, %v257
      %v265 = vrot.slane %v264, 4
      %v266 = vadd.f32 %v264, %v265
      %v267 = vrot.slane %v266, 2
      %v268 = vadd.f32 %v266, %v267
      %v269 = vrot.slane %v268, 1
      %v270 = vadd.f32 %v268, %v269
      %v271 = vadd.f32 %v249, %v270
      %272 = vst [vmem:[%s210] sm:$0x1] %v271
      // Predicated region
      $region29: #{discriminator_forward.13} parent=23 // pred_check
        %p273 = pneg %p211
      $region30: #{discriminator_forward.13} parent=23 // pred_check_branch
        %275 = sbr.rel (%p273) target = $region32
      $region31: #{discriminator_forward.13} parent=23 // pred_region
        %v276 = vld [vmem:[%s204] sm:$0x1]
        %v277 = vmul.f32 %v276, 0.015625
        %v278 = vld [vmem:[%s210] sm:$0x1]
        %v279 = vmul.f32 %v278, 0.015625
        %v280 = vmul.f32 %v277, %v277
        %v281 = vsub.f32 %v279, %v280
        %v282 = vmax.f32 %v281, 0.0
        %283 = vst [vmem:[%s204] sm:$0x1] %v277
        %v284 = vadd.f32 %v282, 1e-05
        %v285 = vrsqrt.pop %v284
        %286 = vst [vmem:[%s210] sm:$0x1] %v285
      $region32: #{discriminator_forward.13} parent=23 // pred_fallthru
        _
      %p287 = scmp.lt.s32.totalorder %s19, 1
      %s288 = scalar_select %p287, %s19, 1
      %p289 = scmp.lt.s32.totalorder %s20, 0
      %s290 = scalar_select %p289, %s20, 0
      %s291 = sadd.s32 %s290, %s288
      %s292 = scalar_lea.vmem %s1, %s291
      %p293 = scmp.lt.s32.totalorder %s19, 1
      %s294 = scalar_select %p293, %s19, 1
      %p295 = scmp.lt.s32.totalorder %s20, 0
      %s296 = scalar_select %p295, %s20, 0
      %s297 = sadd.s32 %s296, %s294
      %s298 = scalar_lea.vmem %s2, %s297
      // Predicated region
      $region33: #{discriminator_forward.13} parent=23 // pred_check
        %p299 = pneg %p83
      $region34: #{discriminator_forward.13} parent=23 // pred_check_branch
        %301 = sbr.rel (%p299) target = $region36
      $region35: #{discriminator_forward.13} parent=23 // pred_region
        _
      $region36: #{discriminator_forward.13} parent=23 // pred_fallthru
        _
      // Predicated region
      $region37: #{discriminator_forward.13} parent=23 // pred_check
        %p302 = pneg %p111
      $region38: #{discriminator_forward.13} parent=23 // pred_check_branch
        %304 = sbr.rel (%p302) target = $region40
      $region39: #{discriminator_forward.13} parent=23 // pred_region
        _
      $region40: #{discriminator_forward.13} parent=23 // pred_fallthru
        _
    $region24: #{discriminator_forward.13} parent=5 // pred_fallthru
      _
    %p305 = scmp.le.s32.totalorder 2, %s9
    // Predicated region
    $region41: #{discriminator_forward.13} parent=5 // pred_check
      %p306 = pneg %p305
    $region42: #{discriminator_forward.13} parent=5 // pred_check_branch
      %308 = sbr.rel (%p306) target = $region44
    $region43: #{discriminator_forward.13} parent=5 // pred_region
      %s309 = ssub.s32 %s9, 2
      // Predicated region
      $region45: #{discriminator_forward.13} parent=43 // pred_check
        %p310 = pneg %p89
      $region46: #{discriminator_forward.13} parent=43 // pred_check_branch
        %312 = sbr.rel (%p310) target = $region48
      $region47: #{discriminator_forward.13} parent=43 // pred_region
        %p313 = scmp.lt.s32.totalorder %s22, 1
        %s314 = scalar_select %p313, %s22, 1
        %p315 = scmp.lt.s32.totalorder %s23, 0
        %s316 = scalar_select %p315, %s23, 0
        %s317 = sadd.s32 %s316, %s314
        %s318 = scalar_lea.vmem %s1, %s317
      $region48: #{discriminator_forward.13} parent=43 // pred_fallthru
        _
      // Predicated region
      $region49: #{discriminator_forward.13} parent=43 // pred_check
        %p319 = pneg %p117
      $region50: #{discriminator_forward.13} parent=43 // pred_check_branch
        %321 = sbr.rel (%p319) target = $region52
      $region51: #{discriminator_forward.13} parent=43 // pred_region
        %p322 = scmp.lt.s32.totalorder %s22, 1
        %s323 = scalar_select %p322, %s22, 1
        %p324 = scmp.lt.s32.totalorder %s23, 0
        %s325 = scalar_select %p324, %s23, 0
        %s326 = sadd.s32 %s325, %s323
        %s327 = scalar_lea.vmem %s2, %s326
      $region52: #{discriminator_forward.13} parent=43 // pred_fallthru
        _
    $region44: #{discriminator_forward.13} parent=5 // pred_fallthru
      _
  $region6: #{discriminator_forward.13} parent=0 // loop_footer
    %s13 = sadd.s32 1, %s9
  $region7: #{discriminator_forward.13} parent=0 // loop_footer_branch
    %8 = sbr.rel target = $region3
  $region8: #{discriminator_forward.13} parent=0 // loop_exit
    _

// kernel: discriminator_forward.14
$region0: #{discriminator_forward.14}
  #allocation0 [shape = 'u32[]', space=smem, size = 0x4, offset = 0x4, fixed_abs, tag = 'smem constant byte address 0x4 - core index']
  #allocation1 [shape = 'u32[144,128]{1,0:T(1,128)}', space=vmem, size = 0x12000, scoped, tag = 'internal scratch']
  %s0 = inlined_call_operand.vmem [shape: bf16[2,64,128], index: 0, kind: input, shape index: {}]
  %s1 = inlined_call_operand.vmem [shape: f32[2,1,128], index: 1, kind: input, shape index: {}]
  %s2 = inlined_call_operand.vmem [shape: f32[2,1,128], index: 2, kind: input, shape index: {}]
  %s3 = inlined_call_operand.vmem [shape: bf16[2,64,128], index: 3, kind: output, shape index: {}]
  %s4 = sld [smem:[#allocation0]]
  $region45: #{discriminator_forward.14} parent=0
    _
  %s6 = ssub.s32 1, %s4
  %s7 = scalar_select 0, %s6, %s4
  loop: start=0, step=1, limit=4
  $region2: #{discriminator_forward.14} parent=0 // loop_pre_header
    _
  $region3: #{discriminator_forward.14} parent=0 // loop_header
    %s9 = sphi 0, %s13
    %p10 = scmp.ge.s32.totalorder %s9, 4
    %s16 = sphi 0, %s35
    %s17 = sphi 0, %s31
    %s18 = sphi 0, %s27
    %s19 = sphi 0, %s16
    %s20 = sphi 0, %s17
    %s21 = sphi 0, %s18
    %s22 = sphi 0, %s19
    %s23 = sphi 0, %s20
    %s24 = sphi 0, %s21
    %s42 = sphi 0, %s44
    %s45 = sphi 0, %s42
    %s46 = sphi 0, %s45
    %s62 = sphi 0, %s46
    %s70 = sphi 0, %s72
    %s73 = sphi 0, %s70
    %s74 = sphi 0, %s73
    %s90 = sphi 0, %s74
    %s98 = sphi 0, %s100
    %s101 = sphi 0, %s98
    %s102 = sphi 0, %s101
    %s118 = sphi 0, %s102
    %s128 = sphi 0, %s130
    %s131 = sphi 0, %s128
    %s132 = sphi 0, %s131
    %s148 = sphi 0, %s132
  $region4: #{discriminator_forward.14} parent=0 // loop_header_branch
    %12 = sbr.rel (%p10) target = $region8
  $region5: #{discriminator_forward.14} parent=0 // loop_body
    %s14 = ssub.s32 %s9, 1
    %s15 = ssub.s32 %s9, 2
    %s25 = sadd.s32 1, %s18
    %p26 = scmp.ge.s32.totalorder %s25, 1
    %s27 = scalar_select %p26, 0, %s25
    %s28 = sadd.s32 1, %s17
    %s29 = scalar_select %p26, %s28, %s17
    %p30 = scmp.ge.s32.totalorder %s29, 1
    %s31 = scalar_select %p30, 0, %s29
    %s32 = sadd.s32 1, %s16
    %s33 = scalar_select %p30, %s32, %s16
    %p34 = scmp.ge.s32.totalorder %s33, 2
    %s35 = scalar_select %p34, 0, %s33
    %s36 = ssub.s32 %s16, %s35
    %s37 = ssub.s32 %s18, %s27
    %s38 = sor.u32 %s36, %s37
    %s39 = ssub.s32 %s17, %s31
    %s40 = sor.u32 %s38, %s39
    %p41 = scmp.eq.s32.totalorder %s40, 0
    %s43 = sadd.s32 %s42, 1
    %s44 = scalar_select %p41, %s42, %s43
    %p47 = pneg %p41
    %p48 = scmp.eq.s32.totalorder %s9, 1
    %p49 = por %p47, %p48
    %p50 = scmp.ne.s32.totalorder %s42, %s45
    %p51 = scmp.eq.s32.totalorder %s9, 0
    %p52 = por %p50, %p51
    %p53 = scmp.ne.s32.totalorder %s42, %s45
    %p54 = scmp.eq.s32.totalorder %s14, 1
    %p55 = por %p53, %p54
    %p56 = scmp.ne.s32.totalorder %s45, %s46
    %p57 = scmp.eq.s32.totalorder %s14, 0
    %p58 = por %p56, %p57
    %p59 = scmp.ne.s32.totalorder %s45, %s46
    %p60 = scmp.eq.s32.totalorder %s15, 1
    %p61 = por %p59, %p60
    %p63 = scmp.ne.s32.totalorder %s46, %s62
    %p64 = scmp.eq.s32.totalorder %s15, 0
    %p65 = por %p63, %p64
    %s66 = ssub.s32 %s16, %s35
    %s67 = ssub.s32 %s17, %s31
    %s68 = sor.u32 %s66, %s67
    %p69 = scmp.eq.s32.totalorder %s68, 0
    %s71 = sadd.s32 %s70, 1
    %s72 = scalar_select %p69, %s70, %s71
    %p75 = pneg %p69
    %p76 = scmp.eq.s32.totalorder %s9, 1
    %p77 = por %p75, %p76
    %p78 = scmp.ne.s32.totalorder %s70, %s73
    %p79 = scmp.eq.s32.totalorder %s9, 0
    %p80 = por %p78, %p79
    %p81 = scmp.ne.s32.totalorder %s70, %s73
    %p82 = scmp.eq.s32.totalorder %s14, 1
    %p83 = por %p81, %p82
    %p84 = scmp.ne.s32.totalorder %s73, %s74
    %p85 = scmp.eq.s32.totalorder %s14, 0
    %p86 = por %p84, %p85
    %p87 = scmp.ne.s32.totalorder %s73, %s74
    %p88 = scmp.eq.s32.totalorder %s15, 1
    %p89 = por %p87, %p88
    %p91 = scmp.ne.s32.totalorder %s74, %s90
    %p92 = scmp.eq.s32.totalorder %s15, 0
    %p93 = por %p91, %p92
    %s94 = ssub.s32 %s16, %s35
    %s95 = ssub.s32 %s17, %s31
    %s96 = sor.u32 %s94, %s95
    %p97 = scmp.eq.s32.totalorder %s96, 0
    %s99 = sadd.s32 %s98, 1
    %s100 = scalar_select %p97, %s98, %s99
    %p103 = pneg %p97
    %p104 = scmp.eq.s32.totalorder %s9, 1
    %p105 = por %p103, %p104
    %p106 = scmp.ne.s32.totalorder %s98, %s101
    %p107 = scmp.eq.s32.totalorder %s9, 0
    %p108 = por %p106, %p107
    %p109 = scmp.ne.s32.totalorder %s98, %s101
    %p110 = scmp.eq.s32.totalorder %s14, 1
    %p111 = por %p109, %p110
    %p112 = scmp.ne.s32.totalorder %s101, %s102
    %p113 = scmp.eq.s32.totalorder %s14, 0
    %p114 = por %p112, %p113
    %p115 = scmp.ne.s32.totalorder %s101, %s102
    %p116 = scmp.eq.s32.totalorder %s15, 1
    %p117 = por %p115, %p116
    %p119 = scmp.ne.s32.totalorder %s102, %s118
    %p120 = scmp.eq.s32.totalorder %s15, 0
    %p121 = por %p119, %p120
    %s122 = ssub.s32 %s16, %s35
    %s123 = ssub.s32 %s18, %s27
    %s124 = sor.u32 %s122, %s123
    %s125 = ssub.s32 %s17, %s31
    %s126 = sor.u32 %s124, %s125
    %p127 = scmp.eq.s32.totalorder %s126, 0
    %s129 = sadd.s32 %s128, 1
    %s130 = scalar_select %p127, %s128, %s129
    %p133 = pneg %p127
    %p134 = scmp.eq.s32.totalorder %s9, 1
    %p135 = por %p133, %p134
    %p136 = scmp.ne.s32.totalorder %s128, %s131
    %p137 = scmp.eq.s32.totalorder %s9, 0
    %p138 = por %p136, %p137
    %p139 = scmp.ne.s32.totalorder %s128, %s131
    %p140 = scmp.eq.s32.totalorder %s14, 1
    %p141 = por %p139, %p140
    %p142 = scmp.ne.s32.totalorder %s131, %s132
    %p143 = scmp.eq.s32.totalorder %s14, 0
    %p144 = por %p142, %p143
    %p145 = scmp.ne.s32.totalorder %s131, %s132
    %p146 = scmp.eq.s32.totalorder %s15, 1
    %p147 = por %p145, %p146
    %p149 = scmp.ne.s32.totalorder %s132, %s148
    %p150 = scmp.eq.s32.totalorder %s15, 0
    %p151 = por %p149, %p150
    %p152 = scmp.le.s32.totalorder 1, %s9
    %p153 = scmp.lt.s32.totalorder %s9, 3
    %p154 = pnand %p152, %p153
    %p155 = pneg %p154
    // Predicated region
    $region9: #{discriminator_forward.14} parent=5 // pred_check
      _
    $region10: #{discriminator_forward.14} parent=5 // pred_check_branch
      %157 = sbr.rel (%p154) target = $region12
    $region11: #{discriminator_forward.14} parent=5 // pred_region
      %s158 = ssub.s32 %s9, 1
    $region12: #{discriminator_forward.14} parent=5 // pred_fallthru
      _
    %p159 = scmp.lt.s32.totalorder %s9, 2
    // Predicated region
    $region13: #{discriminator_forward.14} parent=5 // pred_check
      %p160 = pneg %p159
    $region14: #{discriminator_forward.14} parent=5 // pred_check_branch
      %162 = sbr.rel (%p160) target = $region16
    $region15: #{discriminator_forward.14} parent=5 // pred_region
      // Predicated region
      $region17: #{discriminator_forward.14} parent=15 // pred_check
        %p163 = pneg %p52
      $region18: #{discriminator_forward.14} parent=15 // pred_check_branch
        %165 = sbr.rel (%p163) target = $region20
      $region19: #{discriminator_forward.14} parent=15 // pred_region
        %s166 = smul.u32 8, %s18
        %p167 = scmp.lt.s32.totalorder %s16, 1
        %s168 = scalar_select %p167, %s16, 1
        %p169 = scmp.lt.s32.totalorder %s166, 7
        %s170 = scalar_select %p169, %s166, 7
        %p171 = scmp.lt.s32.totalorder %s17, 0
        %s172 = scalar_select %p171, %s17, 0
        %s173 = sadd.s32 %s172, %s170
        %s174 = smul.addr %s168, 8
        %s175 = sadd.s32 %s173, %s174
        %s176 = smul.addr %s175, 4
        %s177 = scalar_lea.vmem %s0, %s176
        %s178 = smul.u32 8, %s18
      $region20: #{discriminator_forward.14} parent=15 // pred_fallthru
        _
      // Predicated region
      $region21: #{discriminator_forward.14} parent=15 // pred_check
        %p179 = pneg %p80
      $region22: #{discriminator_forward.14} parent=15 // pred_check_branch
        %181 = sbr.rel (%p179) target = $region24
      $region23: #{discriminator_forward.14} parent=15 // pred_region
        %p182 = scmp.lt.s32.totalorder %s16, 1
        %s183 = scalar_select %p182, %s16, 1
        %p184 = scmp.lt.s32.totalorder %s17, 0
        %s185 = scalar_select %p184, %s17, 0
        %s186 = sadd.s32 %s185, %s183
        %s187 = scalar_lea.vmem %s1, %s186
      $region24: #{discriminator_forward.14} parent=15 // pred_fallthru
        _
      // Predicated region
      $region25: #{discriminator_forward.14} parent=15 // pred_check
        %p188 = pneg %p108
      $region26: #{discriminator_forward.14} parent=15 // pred_check_branch
        %190 = sbr.rel (%p188) target = $region28
      $region27: #{discriminator_forward.14} parent=15 // pred_region
        %p191 = scmp.lt.s32.totalorder %s16, 1
        %s192 = scalar_select %p191, %s16, 1
        %p193 = scmp.lt.s32.totalorder %s17, 0
        %s194 = scalar_select %p193, %s17, 0
        %s195 = sadd.s32 %s194, %s192
        %s196 = scalar_lea.vmem %s2, %s195
      $region28: #{discriminator_forward.14} parent=15 // pred_fallthru
        _
    $region16: #{discriminator_forward.14} parent=5 // pred_fallthru
      _
    %p197 = scmp.le.s32.totalorder 1, %s9
    %p198 = scmp.lt.s32.totalorder %s9, 3
    %p199 = pnand %p197, %p198
    %p200 = pneg %p199
    // Predicated region
    $region29: #{discriminator_forward.14} parent=5 // pred_check
      _
    $region30: #{discriminator_forward.14} parent=5 // pred_check_branch
      %202 = sbr.rel (%p199) target = $region32
    $region31: #{discriminator_forward.14} parent=5 // pred_region
      %s203 = ssub.s32 %s9, 1
      %s204 = smul.u32 8, %s21
      %p205 = scmp.lt.s32.totalorder %s19, 1
      %s206 = scalar_select %p205, %s19, 1
      %p207 = scmp.lt.s32.totalorder %s204, 7
      %s208 = scalar_select %p207, %s204, 7
      %p209 = scmp.lt.s32.totalorder %s20, 0
      %s210 = scalar_select %p209, %s20, 0
      %s211 = sadd.s32 %s210, %s208
      %s212 = smul.addr %s206, 8
      %s213 = sadd.s32 %s211, %s212
      %s214 = smul.addr %s213, 4
      %s215 = scalar_lea.vmem %s0, %s214
      %p216 = pneg %p58
      %p217 = pneg %p55
      %p218 = scmp.lt.s32.totalorder %s19, 1
      %s219 = scalar_select %p218, %s19, 1
      %p220 = scmp.lt.s32.totalorder %s20, 0
      %s221 = scalar_select %p220, %s20, 0
      %s222 = sadd.s32 %s221, %s219
      %s223 = scalar_lea.vmem %s1, %s222
      %p224 = pneg %p86
      %p225 = pneg %p83
      %p226 = scmp.lt.s32.totalorder %s19, 1
      %s227 = scalar_select %p226, %s19, 1
      %p228 = scmp.lt.s32.totalorder %s20, 0
      %s229 = scalar_select %p228, %s20, 0
      %s230 = sadd.s32 %s229, %s227
      %s231 = scalar_lea.vmem %s2, %s230
      %p232 = pneg %p114
      %p233 = pneg %p111
      %p234 = pneg %p144
      %p235 = pneg %p141
      %s236 = smul.u32 8, %s21
      %p237 = scmp.lt.s32.totalorder %s19, 1
      %s238 = scalar_select %p237, %s19, 1
      %p239 = scmp.lt.s32.totalorder %s236, 7
      %s240 = scalar_select %p239, %s236, 7
      %p241 = scmp.lt.s32.totalorder %s20, 0
      %s242 = scalar_select %p241, %s20, 0
      %s243 = sadd.s32 %s242, %s240
      %s244 = smul.addr %s238, 8
      %s245 = sadd.s32 %s243, %s244
      %s246 = smul.addr %s245, 4
      %s247 = scalar_lea.vmem %s3, %s246
      %s248 = smul.u32 8, %s21
      %p249 = scmp.lt.s32.totalorder %s19, 1
      %s250 = scalar_select %p249, %s19, 1
      %p251 = scmp.lt.s32.totalorder %s248, 7
      %s252 = scalar_select %p251, %s248, 7
      %p253 = scmp.lt.s32.totalorder %s20, 0
      %s254 = scalar_select %p253, %s20, 0
      %s255 = sadd.s32 %s254, %s252
      %s256 = smul.addr %s250, 8
      %s257 = sadd.s32 %s255, %s256
      %s258 = smul.addr %s257, 4
      %s259 = scalar_lea.vmem %s0, %s258
      %s260 = smul.u32 8, %s21
      %p261 = scmp.lt.s32.totalorder %s19, 1
      %s262 = scalar_select %p261, %s19, 1
      %p263 = scmp.lt.s32.totalorder %s20, 0
      %s264 = scalar_select %p263, %s20, 0
      %s265 = sadd.s32 %s264, %s262
      %s266 = scalar_lea.vmem %s1, %s265
      %p267 = scmp.lt.s32.totalorder %s19, 1
      %s268 = scalar_select %p267, %s19, 1
      %p269 = scmp.lt.s32.totalorder %s20, 0
      %s270 = scalar_select %p269, %s20, 0
      %s271 = sadd.s32 %s270, %s268
      %s272 = scalar_lea.vmem %s2, %s271
      %s273 = smul.u32 8, %s21
      %p274 = scmp.lt.s32.totalorder %s19, 1
      %s275 = scalar_select %p274, %s19, 1
      %p276 = scmp.lt.s32.totalorder %s273, 7
      %s277 = scalar_select %p276, %s273, 7
      %p278 = scmp.lt.s32.totalorder %s20, 0
      %s279 = scalar_select %p278, %s20, 0
      %s280 = sadd.s32 %s279, %s277
      %s281 = smul.addr %s275, 8
      %s282 = sadd.s32 %s280, %s281
      %s283 = smul.addr %s282, 4
      %s284 = scalar_lea.vmem %s3, %s283
      %s285 = smul.u32 8, %s21
      %v286 = vld [vmem:[%s259] sm:$0xf]
      %v287 = vld [vmem:[%s259 + $0x4] sm:$0xf]
      %v288 = vld [vmem:[%s259 + $0x8] sm:$0xf]
      %v289 = vld [vmem:[%s259 + $0xc] sm:$0xf]
      %v290 = vld [vmem:[%s259 + $0x10] sm:$0xf]
      %v291 = vld [vmem:[%s259 + $0x14] sm:$0xf]
      %v292 = vld [vmem:[%s259 + $0x18] sm:$0xf]
      %v293 = vld [vmem:[%s259 + $0x1c] sm:$0xf]
      %v294 = vunpack.c.l.bf16 %v286
      %v295 = vunpack.c.l.bf16 %v287
      %v296 = vunpack.c.l.bf16 %v288
      %v297 = vunpack.c.l.bf16 %v289
      %v298 = vunpack.c.l.bf16 %v290
      %v299 = vunpack.c.l.bf16 %v291
      %v300 = vunpack.c.l.bf16 %v292
      %v301 = vunpack.c.l.bf16 %v293
      %v302 = vld [vmem:[%s266] sm:$0x1]
      %v304 = vlaneseq
      %v305 = vshrl.u32 %v304, 7
      %v306 = vsub.s32 0, %v305
      %v307 = vrot.slane %v302, %v306
      %v309 = vsub.f32 %v294, %v307
      %v310 = vsub.f32 %v295, %v307
      %v311 = vsub.f32 %v296, %v307
      %v312 = vsub.f32 %v297, %v307
      %v313 = vsub.f32 %v298, %v307
      %v314 = vsub.f32 %v299, %v307
      %v315 = vsub.f32 %v300, %v307
      %v316 = vsub.f32 %v301, %v307
      %v317 = vld [vmem:[%s272] sm:$0x1]
      %v319 = vlaneseq
      %v320 = vshrl.u32 %v319, 7
      %v321 = vsub.s32 0, %v320
      %v322 = vrot.slane %v317, %v321
      %v324 = vmul.f32 %v309, %v322
      %v325 = vmul.f32 %v310, %v322
      %v326 = vmul.f32 %v311, %v322
      %v327 = vmul.f32 %v312, %v322
      %v328 = vmul.f32 %v313, %v322
      %v329 = vmul.f32 %v314, %v322
      %v330 = vmul.f32 %v315, %v322
      %v331 = vmul.f32 %v316, %v322
      %vm332 = vcmp.ge.f32.partialorder %v324, 0.0
      %vm333 = vcmp.ge.f32.partialorder %v325, 0.0
      %vm334 = vcmp.ge.f32.partialorder %v326, 0.0
      %vm335 = vcmp.ge.f32.partialorder %v327, 0.0
      %vm336 = vcmp.ge.f32.partialorder %v328, 0.0
      %vm337 = vcmp.ge.f32.partialorder %v329, 0.0
      %vm338 = vcmp.ge.f32.partialorder %v330, 0.0
      %vm339 = vcmp.ge.f32.partialorder %v331, 0.0
      %v340 = vmul.f32 %v324, 0.2
      %v341 = vmul.f32 %v325, 0.2
      %v342 = vmul.f32 %v326, 0.2
      %v343 = vmul.f32 %v327, 0.2
      %v344 = vmul.f32 %v328, 0.2
      %v345 = vmul.f32 %v329, 0.2
      %v346 = vmul.f32 %v330, 0.2
      %v347 = vmul.f32 %v331, 0.2
      %v348 = vsel %vm332, %v324, %v340
      %v349 = vsel %vm333, %v325, %v341
      %v350 = vsel %vm334, %v326, %v342
      %v351 = vsel %vm335, %v327, %v343
      %v352 = vsel %vm336, %v328, %v344
      %v353 = vsel %vm337, %v329, %v345
      %v354 = vsel %vm338, %v330, %v346
      %v355 = vsel %vm339, %v331, %v347
      %v356 = vpack.c.bf16 %v349, %v348
      %v357 = vpack.c.bf16 %v351, %v350
      %v358 = vpack.c.bf16 %v353, %v352
      %v359 = vpack.c.bf16 %v355, %v354
      %v364 = vunpack.c.l.b16 %v356
      %v365 = vunpack.c.h.b16 %v356
      %v366 = vunpack.c.l.b16 %v357
      %v367 = vunpack.c.h.b16 %v357
      %v368 = vunpack.c.l.b16 %v358
      %v369 = vunpack.c.h.b16 %v358
      %v370 = vunpack.c.l.b16 %v359
      %v371 = vunpack.c.h.b16 %v359
      %v372 = vpack.c.b16 %v364, %v364
      %v373 = vpack.c.b16 %v365, %v365
      %v374 = vpack.c.b16 %v366, %v366
      %v375 = vpack.c.b16 %v367, %v367
      %v376 = vpack.c.b16 %v368, %v368
      %v377 = vpack.c.b16 %v369, %v369
      %v378 = vpack.c.b16 %v370, %v370
      %v379 = vpack.c.b16 %v371, %v371
      %388 = vst [vmem:[%s284] sm:$0xf] %v372
      %389 = vst [vmem:[%s284 + $0x4] sm:$0xf] %v373
      %390 = vst [vmem:[%s284 + $0x8] sm:$0xf] %v374
      %391 = vst [vmem:[%s284 + $0xc] sm:$0xf] %v375
      %392 = vst [vmem:[%s284 + $0x10] sm:$0xf] %v376
      %393 = vst [vmem:[%s284 + $0x14] sm:$0xf] %v377
      %394 = vst [vmem:[%s284 + $0x18] sm:$0xf] %v378
      %395 = vst [vmem:[%s284 + $0x1c] sm:$0xf] %v379
      %s396 = smul.u32 8, %s21
      %p397 = scmp.lt.s32.totalorder %s19, 1
      %s398 = scalar_select %p397, %s19, 1
      %p399 = scmp.lt.s32.totalorder %s396, 7
      %s400 = scalar_select %p399, %s396, 7
      %p401 = scmp.lt.s32.totalorder %s20, 0
      %s402 = scalar_select %p401, %s20, 0
      %s403 = sadd.s32 %s402, %s400
      %s404 = smul.addr %s398, 8
      %s405 = sadd.s32 %s403, %s404
      %s406 = smul.addr %s405, 4
      %s407 = scalar_lea.vmem %s3, %s406
      // Predicated region
      $region33: #{discriminator_forward.14} parent=31 // pred_check
        %p408 = pneg %p141
      $region34: #{discriminator_forward.14} parent=31 // pred_check_branch
        %410 = sbr.rel (%p408) target = $region36
      $region35: #{discriminator_forward.14} parent=31 // pred_region
        %s411 = smul.u32 8, %s21
      $region36: #{discriminator_forward.14} parent=31 // pred_fallthru
        _
    $region32: #{discriminator_forward.14} parent=5 // pred_fallthru
      _
    %p412 = scmp.le.s32.totalorder 2, %s9
    // Predicated region
    $region37: #{discriminator_forward.14} parent=5 // pred_check
      %p413 = pneg %p412
    $region38: #{discriminator_forward.14} parent=5 // pred_check_branch
      %415 = sbr.rel (%p413) target = $region40
    $region39: #{discriminator_forward.14} parent=5 // pred_region
      %s416 = ssub.s32 %s9, 2
      // Predicated region
      $region41: #{discriminator_forward.14} parent=39 // pred_check
        %p417 = pneg %p147
      $region42: #{discriminator_forward.14} parent=39 // pred_check_branch
        %419 = sbr.rel (%p417) target = $region44
      $region43: #{discriminator_forward.14} parent=39 // pred_region
        %s420 = smul.u32 8, %s24
        %p421 = scmp.lt.s32.totalorder %s22, 1
        %s422 = scalar_select %p421, %s22, 1
        %p423 = scmp.lt.s32.totalorder %s420, 7
        %s424 = scalar_select %p423, %s420, 7
        %p425 = scmp.lt.s32.totalorder %s23, 0
        %s426 = scalar_select %p425, %s23, 0
        %s427 = sadd.s32 %s426, %s424
        %s428 = smul.addr %s422, 8
        %s429 = sadd.s32 %s427, %s428
        %s430 = smul.addr %s429, 4
        %s431 = scalar_lea.vmem %s3, %s430
      $region44: #{discriminator_forward.14} parent=39 // pred_fallthru
        _
    $region40: #{discriminator_forward.14} parent=5 // pred_fallthru
      _
  $region6: #{discriminator_forward.14} parent=0 // loop_footer
    %s13 = sadd.s32 1, %s9
  $region7: #{discriminator_forward.14} parent=0 // loop_footer_branch
    %8 = sbr.rel target = $region3
  $region8: #{discriminator_forward.14} parent=0 // loop_exit
    _

// kernel: discriminator_forward.15
$region0: #{discriminator_forward.15}
  #allocation0 [shape = 'u32[]', space=smem, size = 0x4, offset = 0x4, fixed_abs, tag = 'smem constant byte address 0x4 - core index']
  #allocation1 [shape = 'u32[144,128]{1,0:T(1,128)}', space=vmem, size = 0x12000, scoped, tag = 'internal scratch']
  #allocation2 [shape = 'f32[32,256]{1,0:T(8,128)}', space=vmem, size = 0x8000, scoped, tag = 'scratch operand']
  %s0 = inlined_call_operand.vmem [shape: bf16[32,2048], index: 0, kind: input, shape index: {}]
  %s1 = inlined_call_operand.vmem [shape: bf16[2048,256], index: 1, kind: input, shape index: {}]
  %s2 = inlined_call_operand.vmem [shape: f32[1,256], index: 2, kind: input, shape index: {}]
  %s3 = inlined_call_operand.vmem [shape: bf16[32,256], index: 3, kind: output, shape index: {}]
  %s4 = sld [smem:[#allocation0]]
  $region76: #{discriminator_forward.15} parent=0
    _
  %s6 = ssub.s32 1, %s4
  %s7 = scalar_select 0, %s6, %s4
  $region1: #{discriminator_forward.15} parent=0
    #allocation3 [shape = 'u8[65536]{0}', space=vmem, size = 0x10000, scoped, tag = 'input window, operand 0']
    loop: start=0, step=1, limit=6
    $region2: #{discriminator_forward.15} parent=1 // loop_pre_header
      _
    $region3: #{discriminator_forward.15} parent=1 // loop_header
      %s9 = sphi 0, %s13
      %p10 = scmp.ge.s32.totalorder %s9, 6
      %s16 = sphi 0, %s35
      %s17 = sphi 0, %s31
      %s18 = sphi 0, %s27
      %s19 = sphi 0, %s16
      %s20 = sphi 0, %s17
      %s21 = sphi 0, %s18
      %s22 = sphi 0, %s19
      %s23 = sphi 0, %s20
      %s24 = sphi 0, %s21
      %s40 = sphi 0, %s42
      %s43 = sphi 0, %s40
      %s44 = sphi 0, %s43
      %s60 = sphi 0, %s44
      %s64 = sphi 0, %s64
      %s66 = sphi 0, %s64
      %s67 = sphi 0, %s66
      %s81 = sphi 0, %s67
      %s87 = sphi 0, %s89
      %s90 = sphi 0, %s87
      %s91 = sphi 0, %s90
      %s107 = sphi 0, %s91
      %s115 = sphi 0, %s117
      %s118 = sphi 0, %s115
      %s119 = sphi 0, %s118
      %s135 = sphi 0, %s119
    $region4: #{discriminator_forward.15} parent=1 // loop_header_branch
      %12 = sbr.rel (%p10) target = $region8
    $region5: #{discriminator_forward.15} parent=1 // loop_body
      %s14 = ssub.s32 %s9, 1
      %s15 = ssub.s32 %s9, 2
      %s25 = sadd.s32 1, %s18
      %p26 = scmp.ge.s32.totalorder %s25, 4
      %s27 = scalar_select %p26, 0, %s25
      %s28 = sadd.s32 1, %s17
      %s29 = scalar_select %p26, %s28, %s17
      %p30 = scmp.ge.s32.totalorder %s29, 1
      %s31 = scalar_select %p30, 0, %s29
      %s32 = sadd.s32 1, %s16
      %s33 = scalar_select %p30, %s32, %s16
      %p34 = scmp.ge.s32.totalorder %s33, 1
      %s35 = scalar_select %p34, 0, %s33
      %s36 = ssub.s32 %s16, %s35
      %s37 = ssub.s32 %s18, %s27
      %s38 = sor.u32 %s36, %s37
      %p39 = scmp.eq.s32.totalorder %s38, 0
      %s41 = sadd.s32 %s40, 1
      %s42 = scalar_select %p39, %s40, %s41
      %p45 = pneg %p39
      %p46 = scmp.eq.s32.totalorder %s9, 3
      %p47 = por %p45, %p46
      %p48 = scmp.ne.s32.totalorder %s40, %s43
      %p49 = scmp.eq.s32.totalorder %s9, 0
      %p50 = por %p48, %p49
      %p51 = scmp.ne.s32.totalorder %s40, %s43
      %p52 = scmp.eq.s32.totalorder %s14, 3
      %p53 = por %p51, %p52
      %p54 = scmp.ne.s32.totalorder %s43, %s44
      %p55 = scmp.eq.s32.totalorder %s14, 0
      %p56 = por %p54, %p55
      %p57 = scmp.ne.s32.totalorder %s43, %s44
      %p58 = scmp.eq.s32.totalorder %s15, 3
      %p59 = por %p57, %p58
      %p61 = scmp.ne.s32.totalorder %s44, %s60
      %p62 = scmp.eq.s32.totalorder %s15, 0
      %p63 = por %p61, %p62
      %s65 = sadd.s32 %s64, 1
      %p68 = scmp.eq.s32.totalorder %s9, 3
      %p69 = scmp.ne.s32.totalorder %s64, %s66
      %p70 = scmp.eq.s32.totalorder %s9, 0
      %p71 = por %p69, %p70
      %p72 = scmp.ne.s32.totalorder %s64, %s66
      %p73 = scmp.eq.s32.totalorder %s14, 3
      %p74 = por %p72, %p73
      %p75 = scmp.ne.s32.totalorder %s66, %s67
      %p76 = scmp.eq.s32.totalorder %s14, 0
      %p77 = por %p75, %p76
      %p78 = scmp.ne.s32.totalorder %s66, %s67
      %p79 = scmp.eq.s32.totalorder %s15, 3
      %p80 = por %p78, %p79
      %p82 = scmp.ne.s32.totalorder %s67, %s81
      %p83 = scmp.eq.s32.totalorder %s15, 0
      %p84 = por %p82, %p83
      %s85 = ssub.s32 %s17, %s31
      %p86 = scmp.eq.s32.totalorder %s85, 0
      %s88 = sadd.s32 %s87, 1
      %s89 = scalar_select %p86, %s87, %s88
      %p92 = pneg %p86
      %p93 = scmp.eq.s32.totalorder %s9, 3
      %p94 = por %p92, %p93
      %p95 = scmp.ne.s32.totalorder %s87, %s90
      %p96 = scmp.eq.s32.totalorder %s9, 0
      %p97 = por %p95, %p96
      %p98 = scmp.ne.s32.totalorder %s87, %s90
      %p99 = scmp.eq.s32.totalorder %s14, 3
      %p100 = por %p98, %p99
      %p101 = scmp.ne.s32.totalorder %s90, %s91
      %p102 = scmp.eq.s32.totalorder %s14, 0
      %p103 = por %p101, %p102
      %p104 = scmp.ne.s32.totalorder %s90, %s91
      %p105 = scmp.eq.s32.totalorder %s15, 3
      %p106 = por %p104, %p105
      %p108 = scmp.ne.s32.totalorder %s91, %s107
      %p109 = scmp.eq.s32.totalorder %s15, 0
      %p110 = por %p108, %p109
      %s111 = ssub.s32 %s16, %s35
      %s112 = ssub.s32 %s17, %s31
      %s113 = sor.u32 %s111, %s112
      %p114 = scmp.eq.s32.totalorder %s113, 0
      %s116 = sadd.s32 %s115, 1
      %s117 = scalar_select %p114, %s115, %s116
      %p120 = pneg %p114
      %p121 = scmp.eq.s32.totalorder %s9, 3
      %p122 = por %p120, %p121
      %p123 = scmp.ne.s32.totalorder %s115, %s118
      %p124 = scmp.eq.s32.totalorder %s9, 0
      %p125 = por %p123, %p124
      %p126 = scmp.ne.s32.totalorder %s115, %s118
      %p127 = scmp.eq.s32.totalorder %s14, 3
      %p128 = por %p126, %p127
      %p129 = scmp.ne.s32.totalorder %s118, %s119
      %p130 = scmp.eq.s32.totalorder %s14, 0
      %p131 = por %p129, %p130
      %p132 = scmp.ne.s32.totalorder %s118, %s119
      %p133 = scmp.eq.s32.totalorder %s15, 3
      %p134 = por %p132, %p133
      %p136 = scmp.ne.s32.totalorder %s119, %s135
      %p137 = scmp.eq.s32.totalorder %s15, 0
      %p138 = por %p136, %p137
      %p139 = scmp.le.s32.totalorder 1, %s9
      %p140 = scmp.lt.s32.totalorder %s9, 5
      %p141 = pnand %p139, %p140
      %p142 = pneg %p141
      // Predicated region
      $region9: #{discriminator_forward.15} parent=5 // pred_check
        _
      $region10: #{discriminator_forward.15} parent=5 // pred_check_branch
        %144 = sbr.rel (%p141) target = $region12
      $region11: #{discriminator_forward.15} parent=5 // pred_region
        %s145 = ssub.s32 %s9, 1
        // Predicated region
        $region13: #{discriminator_forward.15} parent=11 // pred_check
          %p146 = pneg %p77
        $region14: #{discriminator_forward.15} parent=11 // pred_check_branch
          %148 = sbr.rel (%p146) target = $region16
        $region15: #{discriminator_forward.15} parent=11 // pred_region
          _
        $region16: #{discriminator_forward.15} parent=11 // pred_fallthru
          _
        // Predicated region
        $region17: #{discriminator_forward.15} parent=11 // pred_check
          %p149 = pneg %p103
        $region18: #{discriminator_forward.15} parent=11 // pred_check_branch
          %151 = sbr.rel (%p149) target = $region20
        $region19: #{discriminator_forward.15} parent=11 // pred_region
          %s152 = smul.u32 2, %s20
          %p153 = scmp.lt.s32.totalorder %s152, 1
          %s154 = scalar_select %p153, %s152, 1
          %s155 = scalar_lea.vmem %s2, %s154
          %s156 = smul.u32 2, %s20
        $region20: #{discriminator_forward.15} parent=11 // pred_fallthru
          _
      $region12: #{discriminator_forward.15} parent=5 // pred_fallthru
        _
      %p157 = scmp.lt.s32.totalorder %s9, 4
      // Predicated region
      $region21: #{discriminator_forward.15} parent=5 // pred_check
        %p158 = pneg %p157
      $region22: #{discriminator_forward.15} parent=5 // pred_check_branch
        %160 = sbr.rel (%p158) target = $region24
      $region23: #{discriminator_forward.15} parent=5 // pred_region
        // Predicated region
        $region25: #{discriminator_forward.15} parent=23 // pred_check
          %p161 = pneg %p50
        $region26: #{discriminator_forward.15} parent=23 // pred_check_branch
          %163 = sbr.rel (%p161) target = $region28
        $region27: #{discriminator_forward.15} parent=23 // pred_region
          %s164 = sand.u32 %s40, 1
          %s165 = sand.u32 %s40, 1
          %s166 = smul.addr %s165, 64
          %s167 = scalar_lea.vmem [#allocation3], %s166
          %s168 = smul.u32 4, %s16
          %s169 = smul.u32 4, %s18
          %s170 = smul.addr %s168, 16
          %s171 = sadd.s32 %s169, %s170
          %s172 = smul.addr %s171, 4
          %s173 = scalar_lea.vmem %s0, %s172
          // Predicated region
          $region29: #{discriminator_forward.15} parent=27 // pred_check
            _
          $region30: #{discriminator_forward.15} parent=27 // pred_check_branch
            %175 = sbr.rel (0) target = $region32
          $region31: #{discriminator_forward.15} parent=27 // pred_region
            // Predicated region
            $region33: #{discriminator_forward.15} parent=31 // pred_check
              _
            $region34: #{discriminator_forward.15} parent=31 // pred_check_branch
              %177 = sbr.rel (0) target = $region36
            $region35: #{discriminator_forward.15} parent=31 // pred_region
              loop: start=0, step=1, limit=1
              $region37: #{discriminator_forward.15} parent=35 // loop_pre_header
                _
              $region38: #{discriminator_forward.15} parent=35 // loop_header
                %s179 = sphi 0, %s183
                %p180 = scmp.ge.s32.totalorder %s179, 1
                %s184 = sphi %s173, %s173
                %s185 = sphi %s167, %s167
              $region39: #{discriminator_forward.15} parent=35 // loop_header_branch
                %182 = sbr.rel (%p180) target = $region43
              $region40: #{discriminator_forward.15} parent=35 // loop_body
                %v186 = vld [vmem:[%s184] sm:$0xff]
                %187 = vst [vmem:[%s185] sm:$0xff] %v186
                %v188 = vld [vmem:[%s184 + $0x8] sm:$0xff]
                %189 = vst [vmem:[%s185 + $0x8] sm:$0xff] %v188
                %v190 = vld [vmem:[%s184 + $0x40] sm:$0xff]
                %191 = vst [vmem:[%s185 + $0x10] sm:$0xff] %v190
                %v192 = vld [vmem:[%s184 + $0x48] sm:$0xff]
                %193 = vst [vmem:[%s185 + $0x18] sm:$0xff] %v192
                %v194 = vld [vmem:[%s184 + $0x80] sm:$0xff]
                %195 = vst [vmem:[%s185 + $0x20] sm:$0xff] %v194
                %v196 = vld [vmem:[%s184 + $0x88] sm:$0xff]
                %197 = vst [vmem:[%s185 + $0x28] sm:$0xff] %v196
                %v198 = vld [vmem:[%s184 + $0xc0] sm:$0xff]
                %199 = vst [vmem:[%s185 + $0x30] sm:$0xff] %v198
                %v200 = vld [vmem:[%s184 + $0xc8] sm:$0xff]
                %201 = vst [vmem:[%s185 + $0x38] sm:$0xff] %v200
              $region41: #{discriminator_forward.15} parent=35 // loop_footer
                %s183 = sadd.s32 1, %s179
              $region42: #{discriminator_forward.15} parent=35 // loop_footer_branch
                %178 = sbr.rel target = $region38
              $region43: #{discriminator_forward.15} parent=35 // loop_exit
                _
            $region36: #{discriminator_forward.15} parent=31 // pred_fallthru
              _
            // Predicated region
            $region44: #{discriminator_forward.15} parent=31 // pred_check
              _
            $region45: #{discriminator_forward.15} parent=31 // pred_check_branch
              %203 = sbr.rel target = $region47
            $region46: #{discriminator_forward.15} parent=31 // pred_region
              _
            $region47: #{discriminator_forward.15} parent=31 // pred_fallthru
              _
          $region32: #{discriminator_forward.15} parent=27 // pred_fallthru
            _
          %204 = vnop
        $region28: #{discriminator_forward.15} parent=23 // pred_fallthru
          _
      $region24: #{discriminator_forward.15} parent=5 // pred_fallthru
        _
      %p205 = scmp.le.s32.totalorder 1, %s9
      %p206 = scmp.lt.s32.totalorder %s9, 5
      %p207 = pnand %p205, %p206
      %p208 = pneg %p207
      // Predicated region
      $region48: #{discriminator_forward.15} parent=5 // pred_check
        _
      $region49: #{discriminator_forward.15} parent=5 // pred_check_branch
        %210 = sbr.rel (%p207) target = $region51
      $region50: #{discriminator_forward.15} parent=5 // pred_region
        %s211 = ssub.s32 %s9, 1
        %s212 = sand.u32 %s43, 1
        %s213 = sand.u32 %s43, 1
        %s214 = smul.addr %s213, 64
        %s215 = scalar_lea.vmem [#allocation3], %s214
        // Predicated region
        $region52: #{discriminator_forward.15} parent=50 // pred_check
          %p216 = pneg %p56
        $region53: #{discriminator_forward.15} parent=50 // pred_check_branch
          %218 = sbr.rel (%p216) target = $region55
        $region54: #{discriminator_forward.15} parent=50 // pred_region
          _
        $region55: #{discriminator_forward.15} parent=50 // pred_fallthru
          _
        %s219 = sand.u32 %s43, 1
        %s220 = sand.u32 %s43, 1
        %s221 = smul.addr %s220, 64
        %s222 = scalar_lea.vmem [#allocation3], %s221
        %p223 = pneg %p56
        %p224 = pneg %p53
        %p225 = pneg %p77
        %p226 = pneg %p74
        %s227 = smul.u32 2, %s20
        %p228 = scmp.lt.s32.totalorder %s227, 1
        %s229 = scalar_select %p228, %s227, 1
        %s230 = scalar_lea.vmem %s2, %s229
        %p231 = pneg %p103
        %p232 = pneg %p100
        %p233 = pneg %p131
        %p234 = pneg %p128
        %s235 = smul.u32 4, %s19
        %s236 = smul.u32 2, %s20
        %p237 = scmp.lt.s32.totalorder %s235, 3
        %s238 = scalar_select %p237, %s235, 3
        %p239 = scmp.lt.s32.totalorder %s236, 1
        %s240 = scalar_select %p239, %s236, 1
        %s241 = smul.addr %s238, 2
        %s242 = sadd.s32 %s240, %s241
        %s243 = smul.addr %s242, 4
        %s244 = scalar_lea.vmem %s3, %s243
        %s245 = smul.u32 4, %s19
        %s246 = smul.u32 4, %s21
        %s247 = smul.u32 2, %s20
        %p248 = scmp.lt.s32.totalorder %s247, 1
        %s249 = scalar_select %p248, %s247, 1
        %s250 = scalar_lea.vmem %s2, %s249
        %s251 = smul.u32 2, %s20
        %s252 = smul.u32 4, %s19
        %s253 = smul.u32 2, %s20
        %p254 = scmp.lt.s32.totalorder %s252, 3
        %s255 = scalar_select %p254, %s252, 3
        %p256 = scmp.lt.s32.totalorder %s253, 1
        %s257 = scalar_select %p256, %s253, 1
        %s258 = smul.addr %s255, 2
        %s259 = sadd.s32 %s257, %s258
        %s260 = smul.addr %s259, 4
        %s261 = scalar_lea.vmem %s3, %s260
        %s262 = smul.u32 4, %s19
        %s263 = smul.u32 2, %s20
        %p264 = scmp.eq.s32.totalorder %s21, 0
        // Predicated region
        $region56: #{discriminator_forward.15} parent=50 // pred_check
          %p265 = pneg %p264
        $region57: #{discriminator_forward.15} parent=50 // pred_check_branch
          %267 = sbr.rel (%p265) target = $region59
        $region58: #{discriminator_forward.15} parent=50 // pred_region
          %268 = vst [vmem:[#allocation2] sm:$0xff] 0.0
          %269 = vst [vmem:[#allocation2 + $0x8] sm:$0xff] 0.0
          %270 = vst [vmem:[#allocation2 + $0x10] sm:$0xff] 0.0
          %271 = vst [vmem:[#allocation2 + $0x18] sm:$0xff] 0.0
          %272 = vst [vmem:[#allocation2 + $0x20] sm:$0xff] 0.0
          %273 = vst [vmem:[#allocation2 + $0x28] sm:$0xff] 0.0
          %274 = vst [vmem:[#allocation2 + $0x30] sm:$0xff] 0.0
          %275 = vst [vmem:[#allocation2 + $0x38] sm:$0xff] 0.0
        $region59: #{discriminator_forward.15} parent=50 // pred_fallthru
          _
        %s276 = smul.u32 %s21, 512
        %s277 = smul.u32 %s20, 256
        %s278 = sshra.s32 %s277, 7
        %s279 = sand.u32 %s277, 127
        %s280 = sshra.s32 %s276, 3
        %s281 = sand.u32 %s276, 7
        %s282 = smul.u32 %s280, 2
        %s283 = sadd.s32 %s278, %s282
        %s284 = smul.addr %s283, 4
        %s285 = scalar_lea.vmem %s1, %s284
        %v286 = vld [vmem:[%s285] sm:$0xff]
        %v287 = vld [vmem:[%s285 + $0x8] sm:$0xff]
        %v288 = vld [vmem:[%s285 + $0x10] sm:$0xff]
        %v289 = vld [vmem:[%s285 + $0x18] sm:$0xff]
        %v290 = vld [vmem:[%s285 + $0x20] sm:$0xff]
        %v291 = vld [vmem:[%s285 + $0x28] sm:$0xff]
        %v292 = vld [vmem:[%s285 + $0x30] sm:$0xff]
        %v293 = vld [vmem:[%s285 + $0x38] sm:$0xff]
        %v294 = vld [vmem:[%s285 + $0x40] sm:$0xff]
        %v295 = vld [vmem:[%s285 + $0x48] sm:$0xff]
        %v296 = vld [vmem:[%s285 + $0x50] sm:$0xff]
        %v297 = vld [vmem:[%s285 + $0x58] sm:$0xff]
        %v298 = vld [vmem:[%s285 + $0x60] sm:$0xff]
        %v299 = vld [vmem:[%s285 + $0x68] sm:$0xff]
        %v300 = vld [vmem:[%s285 + $0x70] sm:$0xff]
        %v301 = vld [vmem:[%s285 + $0x78] sm:$0xff]
        %v302 = vld [vmem:[%s285 + $0x80] sm:$0xff]
        %v303 = vld [vmem:[%s285 + $0x88] sm:$0xff]
        %v304 = vld [vmem:[%s285 + $0x90] sm:$0xff]
        %v305 = vld [vmem:[%s285 + $0x98] sm:$0xff]
        %v306 = vld [vmem:[%s285 + $0xa0] sm:$0xff]
        %v307 = vld [vmem:[%s285 + $0xa8] sm:$0xff]
        %v308 = vld [vmem:[%s285 + $0xb0] sm:$0xff]
        %v309 = vld [vmem:[%s285 + $0xb8] sm:$0xff]
        %v310 = vld [vmem:[%s285 + $0xc0] sm:$0xff]
        %v311 = vld [vmem:[%s285 + $0xc8] sm:$0xff]
        %v312 = vld [vmem:[%s285 + $0xd0] sm:$0xff]
        %v313 = vld [vmem:[%s285 + $0xd8] sm:$0xff]
        %v314 = vld [vmem:[%s285 + $0xe0] sm:$0xff]
        %v315 = vld [vmem:[%s285 + $0xe8] sm:$0xff]
        %v316 = vld [vmem:[%s285 + $0xf0] sm:$0xff]
        %v317 = vld [vmem:[%s285 + $0xf8] sm:$0xff]
        %v318 = vld [vmem:[%s285 + $0x100] sm:$0xff]
        %v319 = vld [vmem:[%s285 + $0x108] sm:$0xff]
        %v320 = vld [vmem:[%s285 + $0x110] sm:$0xff]
        %v321 = vld [vmem:[%s285 + $0x118] sm:$0xff]
        %v322 = vld [vmem:[%s285 + $0x120] sm:$0xff]
        %v323 = vld [vmem:[%s285 + $0x128] sm:$0xff]
        %v324 = vld [vmem:[%s285 + $0x130] sm:$0xff]
        %v325 = vld [vmem:[%s285 + $0x138] sm:$0xff]
        %v326 = vld [vmem:[%s285 + $0x140] sm:$0xff]
        %v327 = vld [vmem:[%s285 + $0x148] sm:$0xff]
        %v328 = vld [vmem:[%s285 + $0x150] sm:$0xff]
        %v329 = vld [vmem:[%s285 + $0x158] sm:$0xff]
        %v330 = vld [vmem:[%s285 + $0x160] sm:$0xff]
        %v331 = vld [vmem:[%s285 + $0x168] sm:$0xff]
        %v332 = vld [vmem:[%s285 + $0x170] sm:$0xff]
        %v333 = vld [vmem:[%s285 + $0x178] sm:$0xff]
        %v334 = vld [vmem:[%s285 + $0x180] sm:$0xff]
        %v335 = vld [vmem:[%s285 + $0x188] sm:$0xff]
        %v336 = vld [vmem:[%s285 + $0x190] sm:$0xff]
        %v337 = vld [vmem:[%s285 + $0x198] sm:$0xff]
        %v338 = vld [vmem:[%s285 + $0x1a0] sm:$0xff]
        %v339 = vld [vmem:[%s285 + $0x1a8] sm:$0xff]
        %v340 = vld [vmem:[%s285 + $0x1b0] sm:$0xff]
        %v341 = vld [vmem:[%s285 + $0x1b8] sm:$0xff]
        %v342 = vld [vmem:[%s285 + $0x1c0] sm:$0xff]
        %v343 = vld [vmem:[%s285 + $0x1c8] sm:$0xff]
        %v344 = vld [vmem:[%s285 + $0x1d0] sm:$0xff]
        %v345 = vld [vmem:[%s285 + $0x1d8] sm:$0xff]
        %v346 = vld [vmem:[%s285 + $0x1e0] sm:$0xff]
        %v347 = vld [vmem:[%s285 + $0x1e8] sm:$0xff]
        %v348 = vld [vmem:[%s285 + $0x1f0] sm:$0xff]
        %v349 = vld [vmem:[%s285 + $0x1f8] sm:$0xff]
        %v350 = vld [vmem:[#allocation2] sm:$0xff]
        %v351 = vld [vmem:[#allocation2 + $0x8] sm:$0xff]
        %v352 = vld [vmem:[#allocation2 + $0x10] sm:$0xff]
        %v353 = vld [vmem:[#allocation2 + $0x18] sm:$0xff]
        %v354 = vld [vmem:[#allocation2 + $0x20] sm:$0xff]
        %v355 = vld [vmem:[#allocation2 + $0x28] sm:$0xff]
        %v356 = vld [vmem:[#allocation2 + $0x30] sm:$0xff]
        %v357 = vld [vmem:[#allocation2 + $0x38] sm:$0xff]
        %v358 = vld [vmem:[%s215] sm:$0xff]
        %v359 = vld [vmem:[%s215 + $0x8] sm:$0xff]
        %v360 = vld [vmem:[%s215 + $0x10] sm:$0xff]
        %v361 = vld [vmem:[%s215 + $0x18] sm:$0xff]
        %v362 = vld [vmem:[%s215 + $0x20] sm:$0xff]
        %v363 = vld [vmem:[%s215 + $0x28] sm:$0xff]
        %v364 = vld [vmem:[%s215 + $0x30] sm:$0xff]
        %v365 = vld [vmem:[%s215 + $0x38] sm:$0xff]
        %v374 = vunpack.c.l.b16 %v358
        %v375 = vunpack.c.h.b16 %v358
        %v376 = vunpack.c.l.b16 %v359
        %v377 = vunpack.c.h.b16 %v359
        %v378 = vunpack.c.l.b16 %v360
        %v379 = vunpack.c.h.b16 %v360
        %v380 = vunpack.c.l.b16 %v361
        %v381 = vunpack.c.h.b16 %v361
        %v382 = vunpack.c.l.b16 %v362
        %v383 = vunpack.c.h.b16 %v362
        %v384 = vunpack.c.l.b16 %v363
        %v385 = vunpack.c.h.b16 %v363
        %v386 = vunpack.c.l.b16 %v364
        %v387 = vunpack.c.h.b16 %v364
        %v388 = vunpack.c.l.b16 %v365
        %v389 = vunpack.c.h.b16 %v365
        %v390 = vpack.c.b16 %v378, %v374
        %v391 = vpack.c.b16 %v379, %v375
        %v392 = vpack.c.b16 %v380, %v376
        %v393 = vpack.c.b16 %v381, %v377
        %v394 = vpack.c.b16 %v386, %v382
        %v395 = vpack.c.b16 %v387, %v383
        %v396 = vpack.c.b16 %v388, %v384
        %v397 = vpack.c.b16 %v389, %v385
        %v470 = vunpack.c.l.b16 %v286
        %v471 = vunpack.c.h.b16 %v286
        %v472 = vunpack.c.l.b16 %v287
        %v473 = vunpack.c.h.b16 %v287
        %v474 = vunpack.c.l.b16 %v288
        %v475 = vunpack.c.h.b16 %v288
        %v476 = vunpack.c.l.b16 %v289
        %v477 = vunpack.c.h.b16 %v289
        %v478 = vunpack.c.l.b16 %v290
        %v479 = vunpack.c.h.b16 %v290
        %v480 = vunpack.c.l.b16 %v291
        %v481 = vunpack.c.h.b16 %v291
        %v482 = vunpack.c.l.b16 %v292
        %v483 = vunpack.c.h.b16 %v292
        %v484 = vunpack.c.l.b16 %v293
        %v485 = vunpack.c.h.b16 %v293
        %v486 = vunpack.c.l.b16 %v294
        %v487 = vunpack.c.h.b16 %v294
        %v488 = vunpack.c.l.b16 %v295
        %v489 = vunpack.c.h.b16 %v295
        %v490 = vunpack.c.l.b16 %v296
        %v491 = vunpack.c.h.b16 %v296
        %v492 = vunpack.c.l.b16 %v297
        %v493 = vunpack.c.h.b16 %v297
        %v494 = vunpack.c.l.b16 %v298
        %v495 = vunpack.c.h.b16 %v298
        %v496 = vunpack.c.l.b16 %v299
        %v497 = vunpack.c.h.b16 %v299
        %v498 = vunpack.c.l.b16 %v300
        %v499 = vunpack.c.h.b16 %v300
        %v500 = vunpack.c.l.b16 %v301
        %v501 = vunpack.c.h.b16 %v301
        %v502 = vunpack.c.l.b16 %v302
        %v503 = vunpack.c.h.b16 %v302
        %v504 = vunpack.c.l.b16 %v303
        %v505 = vunpack.c.h.b16 %v303
        %v506 = vunpack.c.l.b16 %v304
        %v507 = vunpack.c.h.b16 %v304
        %v508 = vunpack.c.l.b16 %v305
        %v509 = vunpack.c.h.b16 %v305
        %v510 = vunpack.c.l.b16 %v306
        %v511 = vunpack.c.h.b16 %v306
        %v512 = vunpack.c.l.b16 %v307
        %v513 = vunpack.c.h.b16 %v307
        %v514 = vunpack.c.l.b16 %v308
        %v515 = vunpack.c.h.b16 %v308
        %v516 = vunpack.c.l.b16 %v309
        %v517 = vunpack.c.h.b16 %v309
        %v518 = vunpack.c.l.b16 %v310
        %v519 = vunpack.c.h.b16 %v310
        %v520 = vunpack.c.l.b16 %v311
        %v521 = vunpack.c.h.b16 %v311
        %v522 = vunpack.c.l.b16 %v312
        %v523 = vunpack.c.h.b16 %v312
        %v524 = vunpack.c.l.b16 %v313
        %v525 = vunpack.c.h.b16 %v313
        %v526 = vunpack.c.l.b16 %v314
        %v527 = vunpack.c.h.b16 %v314
        %v528 = vunpack.c.l.b16 %v315
        %v529 = vunpack.c.h.b16 %v315
        %v530 = vunpack.c.l.b16 %v316
        %v531 = vunpack.c.h.b16 %v316
        %v532 = vunpack.c.l.b16 %v317
        %v533 = vunpack.c.h.b16 %v317
        %v534 = vunpack.c.l.b16 %v318
        %v535 = vunpack.c.h.b16 %v318
        %v536 = vunpack.c.l.b16 %v319
        %v537 = vunpack.c.h.b16 %v319
        %v538 = vunpack.c.l.b16 %v320
        %v539 = vunpack.c.h.b16 %v320
        %v540 = vunpack.c.l.b16 %v321
        %v541 = vunpack.c.h.b16 %v321
        %v542 = vunpack.c.l.b16 %v322
        %v543 = vunpack.c.h.b16 %v322
        %v544 = vunpack.c.l.b16 %v323
        %v545 = vunpack.c.h.b16 %v323
        %v546 = vunpack.c.l.b16 %v324
        %v547 = vunpack.c.h.b16 %v324
        %v548 = vunpack.c.l.b16 %v325
        %v549 = vunpack.c.h.b16 %v325
        %v550 = vunpack.c.l.b16 %v326
        %v551 = vunpack.c.h.b16 %v326
        %v552 = vunpack.c.l.b16 %v327
        %v553 = vunpack.c.h.b16 %v327
        %v554 = vunpack.c.l.b16 %v328
        %v555 = vunpack.c.h.b16 %v328
        %v556 = vunpack.c.l.b16 %v329
        %v557 = vunpack.c.h.b16 %v329
        %v558 = vunpack.c.l.b16 %v330
        %v559 = vunpack.c.h.b16 %v330
        %v560 = vunpack.c.l.b16 %v331
        %v561 = vunpack.c.h.b16 %v331
        %v562 = vunpack.c.l.b16 %v332
        %v563 = vunpack.c.h.b16 %v332
        %v564 = vunpack.c.l.b16 %v333
        %v565 = vunpack.c.h.b16 %v333
        %v566 = vunpack.c.l.b16 %v334
        %v567 = vunpack.c.h.b16 %v334
        %v568 = vunpack.c.l.b16 %v335
        %v569 = vunpack.c.h.b16 %v335
        %v570 = vunpack.c.l.b16 %v336
        %v571 = vunpack.c.h.b16 %v336
        %v572 = vunpack.c.l.b16 %v337
        %v573 = vunpack.c.h.b16 %v337
        %v574 = vunpack.c.l.b16 %v338
        %v575 = vunpack.c.h.b16 %v338
        %v576 = vunpack.c.l.b16 %v339
        %v577 = vunpack.c.h.b16 %v339
        %v578 = vunpack.c.l.b16 %v340
        %v579 = vunpack.c.h.b16 %v340
        %v580 = vunpack.c.l.b16 %v341
        %v581 = vunpack.c.h.b16 %v341
        %v582 = vunpack.c.l.b16 %v342
        %v583 = vunpack.c.h.b16 %v342
        %v584 = vunpack.c.l.b16 %v343
        %v585 = vunpack.c.h.b16 %v343
        %v586 = vunpack.c.l.b16 %v344
        %v587 = vunpack.c.h.b16 %v344
        %v588 = vunpack.c.l.b16 %v345
        %v589 = vunpack.c.h.b16 %v345
        %v590 = vunpack.c.l.b16 %v346
        %v591 = vunpack.c.h.b16 %v346
        %v592 = vunpack.c.l.b16 %v347
        %v593 = vunpack.c.h.b16 %v347
        %v594 = vunpack.c.l.b16 %v348
        %v595 = vunpack.c.h.b16 %v348
        %v596 = vunpack.c.l.b16 %v349
        %v597 = vunpack.c.h.b16 %v349
        %v598 = vpack.c.b16 %v472, %v470
        %v599 = vpack.c.b16 %v473, %v471
        %v600 = vpack.c.b16 %v476, %v474
        %v601 = vpack.c.b16 %v477, %v475
        %v602 = vpack.c.b16 %v480, %v478
        %v603 = vpack.c.b16 %v481, %v479
        %v604 = vpack.c.b16 %v484, %v482
        %v605 = vpack.c.b16 %v485, %v483
        %v606 = vpack.c.b16 %v488, %v486
        %v607 = vpack.c.b16 %v489, %v487
        %v608 = vpack.c.b16 %v492, %v490
        %v609 = vpack.c.b16 %v493, %v491
        %v610 = vpack.c.b16 %v496, %v494
        %v611 = vpack.c.b16 %v497, %v495
        %v612 = vpack.c.b16 %v500, %v498
        %v613 = vpack.c.b16 %v501, %v499
        %v614 = vpack.c.b16 %v504, %v502
        %v615 = vpack.c.b16 %v505, %v503
        %v616 = vpack.c.b16 %v508, %v506
        %v617 = vpack.c.b16 %v509, %v507
        %v618 = vpack.c.b16 %v512, %v510
        %v619 = vpack.c.b16 %v513, %v511
        %v620 = vpack.c.b16 %v516, %v514
        %v621 = vpack.c.b16 %v517, %v515
        %v622 = vpack.c.b16 %v520, %v518
        %v623 = vpack.c.b16 %v521, %v519
        %v624 = vpack.c.b16 %v524, %v522
        %v625 = vpack.c.b16 %v525, %v523
        %v626 = vpack.c.b16 %v528, %v526
        %v627 = vpack.c.b16 %v529, %v527
        %v628 = vpack.c.b16 %v532, %v530
        %v629 = vpack.c.b16 %v533, %v531
        %v630 = vpack.c.b16 %v536, %v534
        %v631 = vpack.c.b16 %v537, %v535
        %v632 = vpack.c.b16 %v540, %v538
        %v633 = vpack.c.b16 %v541, %v539
        %v634 = vpack.c.b16 %v544, %v542
        %v635 = vpack.c.b16 %v545, %v543
        %v636 = vpack.c.b16 %v548, %v546
        %v637 = vpack.c.b16 %v549, %v547
        %v638 = vpack.c.b16 %v552, %v550
        %v639 = vpack.c.b16 %v553, %v551
        %v640 = vpack.c.b16 %v556, %v554
        %v641 = vpack.c.b16 %v557, %v555
        %v642 = vpack.c.b16 %v560, %v558
        %v643 = vpack.c.b16 %v561, %v559
        %v644 = vpack.c.b16 %v564, %v562
        %v645 = vpack.c.b16 %v565, %v563
        %v646 = vpack.c.b16 %v568, %v566
        %v647 = vpack.c.b16 %v569, %v567
        %v648 = vpack.c.b16 %v572, %v570
        %v649 = vpack.c.b16 %v573, %v571
        %v650 = vpack.c.b16 %v576, %v574
        %v651 = vpack.c.b16 %v577, %v575
        %v652 = vpack.c.b16 %v580, %v578
        %v653 = vpack.c.b16 %v581, %v579
        %v654 = vpack.c.b16 %v584, %v582
        %v655 = vpack.c.b16 %v585, %v583
        %v656 = vpack.c.b16 %v588, %v586
        %v657 = vpack.c.b16 %v589, %v587
        %v658 = vpack.c.b16 %v592, %v590
        %v659 = vpack.c.b16 %v593, %v591
        %v660 = vpack.c.b16 %v596, %v594
        %v661 = vpack.c.b16 %v597, %v595
        %726 = vmatprep.subr.bf16.mxu0 %v613
        %727 = vmatpush1.bf16.msra.mxu0 %v612
        %728 = vmatprep.subr.bf16.mxu0 %v611
        %729 = vmatpush1.bf16.msra.mxu0 %v610
        %730 = vmatprep.subr.bf16.mxu0 %v609
        %731 = vmatpush1.bf16.msra.mxu0 %v608
        %732 = vmatprep.subr.bf16.mxu0 %v607
        %733 = vmatpush1.bf16.msra.mxu0 %v606
        %734 = vmatprep.subr.bf16.mxu0 %v605
        %735 = vmatpush1.bf16.msra.mxu0 %v604
        %736 = vmatprep.subr.bf16.mxu0 %v603
        %737 = vmatpush1.bf16.msra.mxu0 %v602
        %738 = vmatprep.subr.bf16.mxu0 %v601
        %739 = vmatpush1.bf16.msra.mxu0 %v600
        %740 = vmatprep.subr.bf16.mxu0 %v599
        %741 = vmatpush1.bf16.msra.mxu0 %v598
        %742 = vmatprep.subr.bf16.mxu0 %v629
        %743 = vmatpush2.bf16.msra.mxu0 %v628
        %744 = vmatprep.subr.bf16.mxu0 %v627
        %745 = vmatpush2.bf16.msra.mxu0 %v626
        %746 = vmatprep.subr.bf16.mxu0 %v625
        %747 = vmatpush2.bf16.msra.mxu0 %v624
        %748 = vmatprep.subr.bf16.mxu0 %v623
        %749 = vmatpush2.bf16.msra.mxu0 %v622
        %750 = vmatprep.subr.bf16.mxu0 %v621
        %751 = vmatpush2.bf16.msra.mxu0 %v620
        %752 = vmatprep.subr.bf16.mxu0 %v619
        %753 = vmatpush2.bf16.msra.mxu0 %v618
        %754 = vmatprep.subr.bf16.mxu0 %v617
        %755 = vmatpush2.bf16.msra.mxu0 %v616
        %756 = vmatprep.subr.bf16.mxu0 %v615
        %757 = vmatpush2.bf16.msra.mxu0 %v614
        %758 = vmatprep.mubr.bf16.mxu0 %v391
        %759 = vmatmul.mubr.bf16.gmra.mxu0 %v390
        %v760 = vpop.f32.mrf.mxu0
        %v761 = vadd.f32 0.0, %v760
        %v762 = vpop.f32.mrf.mxu0
        %v763 = vadd.f32 0.0, %v762
        %v764 = vpop.f32.mrf.mxu0
        %v765 = vadd.f32 0.0, %v764
        %v766 = vpop.f32.mrf.mxu0
        %v767 = vadd.f32 0.0, %v766
        %768 = vmatprep.mubr.bf16.mxu0 %v395
        %769 = vmatmul.mubr.bf16.gmra.mxu0 %v394
        %v770 = vpop.f32.mrf.mxu0
        %v771 = vadd.f32 0.0, %v770
        %v772 = vpop.f32.mrf.mxu0
        %v773 = vadd.f32 0.0, %v772
        %v774 = vpop.f32.mrf.mxu0
        %v775 = vadd.f32 0.0, %v774
        %v776 = vpop.f32.mrf.mxu0
        %v777 = vadd.f32 0.0, %v776
        %778 = vdwg.mxu0
        %779 = vmatprep.subr.bf16.mxu0 %v645
        %780 = vmatpush1.bf16.msra.mxu0 %v644
        %781 = vmatprep.subr.bf16.mxu0 %v643
        %782 = vmatpush1.bf16.msra.mxu0 %v642
        %783 = vmatprep.subr.bf16.mxu0 %v641
        %784 = vmatpush1.bf16.msra.mxu0 %v640
        %785 = vmatprep.subr.bf16.mxu0 %v639
        %786 = vmatpush1.bf16.msra.mxu0 %v638
        %787 = vmatprep.subr.bf16.mxu0 %v637
        %788 = vmatpush1.bf16.msra.mxu0 %v636
        %789 = vmatprep.subr.bf16.mxu0 %v635
        %790 = vmatpush1.bf16.msra.mxu0 %v634
        %791 = vmatprep.subr.bf16.mxu0 %v633
        %792 = vmatpush1.bf16.msra.mxu0 %v632
        %793 = vmatprep.subr.bf16.mxu0 %v631
        %794 = vmatpush1.bf16.msra.mxu0 %v630
        %795 = vmatprep.subr.bf16.mxu0 %v661
        %796 = vmatpush2.bf16.msra.mxu0 %v660
        %797 = vmatprep.subr.bf16.mxu0 %v659
        %798 = vmatpush2.bf16.msra.mxu0 %v658
        %799 = vmatprep.subr.bf16.mxu0 %v657
        %800 = vmatpush2.bf16.msra.mxu0 %v656
        %801 = vmatprep.subr.bf16.mxu0 %v655
        %802 = vmatpush2.bf16.msra.mxu0 %v654
        %803 = vmatprep.subr.bf16.mxu0 %v653
        %804 = vmatpush2.bf16.msra.mxu0 %v652
        %805 = vmatprep.subr.bf16.mxu0 %v651
        %806 = vmatpush2.bf16.msra.mxu0 %v650
        %807 = vmatprep.subr.bf16.mxu0 %v649
        %808 = vmatpush2.bf16.msra.mxu0 %v648
        %809 = vmatprep.subr.bf16.mxu0 %v647
        %810 = vmatpush2.bf16.msra.mxu0 %v646
        %811 = vmatprep.mubr.bf16.mxu0 %v393
        %812 = vmatmul.mubr.bf16.gmra.mxu0 %v392
        %v813 = vpop.f32.mrf.mxu0
        %v814 = vadd.f32 %v761, %v813
        %v815 = vpop.f32.mrf.mxu0
        %v816 = vadd.f32 %v763, %v815
        %v817 = vpop.f32.mrf.mxu0
        %v818 = vadd.f32 %v765, %v817
        %v819 = vpop.f32.mrf.mxu0
        %v820 = vadd.f32 %v767, %v819
        %821 = vmatprep.mubr.bf16.mxu0 %v397
        %822 = vmatmul.mubr.bf16.gmra.mxu0 %v396
        %v823 = vpop.f32.mrf.mxu0
        %v824 = vadd.f32 %v771, %v823
        %v825 = vpop.f32.mrf.mxu0
        %v826 = vadd.f32 %v773, %v825
        %v827 = vpop.f32.mrf.mxu0
        %v828 = vadd.f32 %v775, %v827
        %v829 = vpop.f32.mrf.mxu0
        %v830 = vadd.f32 %v777, %v829
        %831 = vdwg.mxu0
        %v832 = vadd.f32 %v350, %v814
        %v833 = vadd.f32 %v351, %v816
        %v834 = vadd.f32 %v352, %v818
        %v835 = vadd.f32 %v353, %v820
        %v836 = vadd.f32 %v354, %v824
        %v837 = vadd.f32 %v355, %v826
        %v838 = vadd.f32 %v356, %v828
        %v839 = vadd.f32 %v357, %v830
        %840 = vst [vmem:[#allocation2] sm:$0xff] %v832
        %841 = vst [vmem:[#allocation2 + $0x8] sm:$0xff] %v833
        %842 = vst [vmem:[#allocation2 + $0x10] sm:$0xff] %v834
        %843 = vst [vmem:[#allocation2 + $0x18] sm:$0xff] %v835
        %844 = vst [vmem:[#allocation2 + $0x20] sm:$0xff] %v836
        %845 = vst [vmem:[#allocation2 + $0x28] sm:$0xff] %v837
        %846 = vst [vmem:[#allocation2 + $0x30] sm:$0xff] %v838
        %847 = vst [vmem:[#allocation2 + $0x38] sm:$0xff] %v839
        %p848 = scmp.eq.s32.totalorder %s21, 3
        // Predicated region
        $region60: #{discriminator_forward.15} parent=50 // pred_check
          %p849 = pneg %p848
        $region61: #{discriminator_forward.15} parent=50 // pred_check_branch
          %851 = sbr.rel (%p849) target = $region63
        $region62: #{discriminator_forward.15} parent=50 // pred_region
          %v852 = vld [vmem:[#allocation2] sm:$0xff]
          %v853 = vld [vmem:[#allocation2 + $0x8] sm:$0xff]
          %v854 = vld [vmem:[#allocation2 + $0x10] sm:$0xff]
          %v855 = vld [vmem:[#allocation2 + $0x18] sm:$0xff]
          %v856 = vld [vmem:[#allocation2 + $0x20] sm:$0xff]
          %v857 = vld [vmem:[#allocation2 + $0x28] sm:$0xff]
          %v858 = vld [vmem:[#allocation2 + $0x30] sm:$0xff]
          %v859 = vld [vmem:[#allocation2 + $0x38] sm:$0xff]
          %v860 = vld [vmem:[%s250] sm:$0x3]
          %v862 = vlaneseq
          %v863 = vshrl.u32 %v862, 7
          %v864 = vsub.s32 0, %v863
          %v865 = vrot.slane %v860, %v864
          %v866 = vlaneseq
          %v867 = vshrl.u32 %v866, 7
          %v868 = vsub.s32 1, %v867
          %v869 = vrot.slane %v860, %v868
          %v872 = vadd.f32 %v852, %v865
          %v873 = vadd.f32 %v853, %v869
          %v874 = vadd.f32 %v854, %v865
          %v875 = vadd.f32 %v855, %v869
          %v876 = vadd.f32 %v856, %v865
          %v877 = vadd.f32 %v857, %v869
          %v878 = vadd.f32 %v858, %v865
          %v879 = vadd.f32 %v859, %v869
          %v880 = vpack.c.bf16 %v874, %v872
          %v881 = vpack.c.bf16 %v875, %v873
          %v882 = vpack.c.bf16 %v878, %v876
          %v883 = vpack.c.bf16 %v879, %v877
          %v888 = vunpack.c.l.b16 %v880
          %v889 = vunpack.c.l.b16 %v881
          %v890 = vunpack.c.h.b16 %v880
          %v891 = vunpack.c.h.b16 %v881
          %v892 = vunpack.c.l.b16 %v882
          %v893 = vunpack.c.l.b16 %v883
          %v894 = vunpack.c.h.b16 %v882
          %v895 = vunpack.c.h.b16 %v883
          %v896 = vpack.c.b16 %v889, %v888
          %v897 = vpack.c.b16 %v891, %v890
          %v898 = vpack.c.b16 %v893, %v892
          %v899 = vpack.c.b16 %v895, %v894
          %904 = vst [vmem:[%s261] sm:$0xff] %v896
          %905 = vst [vmem:[%s261 + $0x8] sm:$0xff] %v897
          %906 = vst [vmem:[%s261 + $0x10] sm:$0xff] %v898
          %907 = vst [vmem:[%s261 + $0x18] sm:$0xff] %v899
        $region63: #{discriminator_forward.15} parent=50 // pred_fallthru
          _
        %s908 = smul.u32 4, %s19
        %s909 = smul.u32 2, %s20
        %p910 = scmp.lt.s32.totalorder %s908, 3
        %s911 = scalar_select %p910, %s908, 3
        %p912 = scmp.lt.s32.totalorder %s909, 1
        %s913 = scalar_select %p912, %s909, 1
        %s914 = smul.addr %s911, 2
        %s915 = sadd.s32 %s913, %s914
        %s916 = smul.addr %s915, 4
        %s917 = scalar_lea.vmem %s3, %s916
        // Predicated region
        $region64: #{discriminator_forward.15} parent=50 // pred_check
          %p918 = pneg %p128
        $region65: #{discriminator_forward.15} parent=50 // pred_check_branch
          %920 = sbr.rel (%p918) target = $region67
        $region66: #{discriminator_forward.15} parent=50 // pred_region
          %s921 = smul.u32 4, %s19
          %s922 = smul.u32 2, %s20
        $region67: #{discriminator_forward.15} parent=50 // pred_fallthru
          _
        // Predicated region
        $region68: #{discriminator_forward.15} parent=50 // pred_check
          %p923 = pneg %p128
        $region69: #{discriminator_forward.15} parent=50 // pred_check_branch
          %925 = sbr.rel (%p923) target = $region71
        $region70: #{discriminator_forward.15} parent=50 // pred_region
          %s926 = smul.u32 4, %s19
          %s927 = smul.u32 2, %s20
          %p928 = scmp.lt.s32.totalorder %s926, 3
          %s929 = scalar_select %p928, %s926, 3
          %p930 = scmp.lt.s32.totalorder %s927, 1
          %s931 = scalar_select %p930, %s927, 1
          %s932 = smul.addr %s929, 2
          %s933 = sadd.s32 %s931, %s932
          %s934 = smul.addr %s933, 4
          %s935 = scalar_lea.vmem %s3, %s934
        $region71: #{discriminator_forward.15} parent=50 // pred_fallthru
          _
      $region51: #{discriminator_forward.15} parent=5 // pred_fallthru
        _
      %p936 = scmp.le.s32.totalorder 2, %s9
      // Predicated region
      $region72: #{discriminator_forward.15} parent=5 // pred_check
        %p937 = pneg %p936
      $region73: #{discriminator_forward.15} parent=5 // pred_check_branch
        %939 = sbr.rel (%p937) target = $region75
      $region74: #{discriminator_forward.15} parent=5 // pred_region
        %s940 = ssub.s32 %s9, 2
      $region75: #{discriminator_forward.15} parent=5 // pred_fallthru
        _
    $region6: #{discriminator_forward.15} parent=1 // loop_footer
      %s13 = sadd.s32 1, %s9
    $region7: #{discriminator_forward.15} parent=1 // loop_footer_branch
      %8 = sbr.rel target = $region3
    $region8: #{discriminator_forward.15} parent=1 // loop_exit
      _

// kernel: discriminator_forward.16
$region0: #{discriminator_forward.16}
  #allocation0 [shape = 'u32[]', space=smem, size = 0x4, offset = 0x4, fixed_abs, tag = 'smem constant byte address 0x4 - core index']
  #allocation1 [shape = 'u32[144,128]{1,0:T(1,128)}', space=vmem, size = 0x12000, scoped, tag = 'internal scratch']
  %s0 = inlined_call_operand.vmem [shape: bf16[2,16,256], index: 0, kind: input, shape index: {}]
  %s1 = inlined_call_operand.vmem [shape: f32[2,1,256], index: 1, kind: output, shape index: {0}]
  %s2 = inlined_call_operand.vmem [shape: f32[2,1,256], index: 2, kind: output, shape index: {1}]
  %3 = xla_tuple %s1, %s2
  %s4 = sld [smem:[#allocation0]]
  $region53: #{discriminator_forward.16} parent=0
    _
  %s6 = ssub.s32 1, %s4
  %s7 = scalar_select 0, %s6, %s4
  loop: start=0, step=1, limit=4
  $region2: #{discriminator_forward.16} parent=0 // loop_pre_header
    _
  $region3: #{discriminator_forward.16} parent=0 // loop_header
    %s9 = sphi 0, %s13
    %p10 = scmp.ge.s32.totalorder %s9, 4
    %s16 = sphi 0, %s35
    %s17 = sphi 0, %s31
    %s18 = sphi 0, %s27
    %s19 = sphi 0, %s16
    %s20 = sphi 0, %s17
    %s21 = sphi 0, %s18
    %s22 = sphi 0, %s19
    %s23 = sphi 0, %s20
    %s24 = sphi 0, %s21
    %s42 = sphi 0, %s44
    %s45 = sphi 0, %s42
    %s46 = sphi 0, %s45
    %s62 = sphi 0, %s46
    %s70 = sphi 0, %s72
    %s73 = sphi 0, %s70
    %s74 = sphi 0, %s73
    %s90 = sphi 0, %s74
    %s98 = sphi 0, %s100
    %s101 = sphi 0, %s98
    %s102 = sphi 0, %s101
    %s118 = sphi 0, %s102
  $region4: #{discriminator_forward.16} parent=0 // loop_header_branch
    %12 = sbr.rel (%p10) target = $region8
  $region5: #{discriminator_forward.16} parent=0 // loop_body
    %s14 = ssub.s32 %s9, 1
    %s15 = ssub.s32 %s9, 2
    %s25 = sadd.s32 1, %s18
    %p26 = scmp.ge.s32.totalorder %s25, 1
    %s27 = scalar_select %p26, 0, %s25
    %s28 = sadd.s32 1, %s17
    %s29 = scalar_select %p26, %s28, %s17
    %p30 = scmp.ge.s32.totalorder %s29, 1
    %s31 = scalar_select %p30, 0, %s29
    %s32 = sadd.s32 1, %s16
    %s33 = scalar_select %p30, %s32, %s16
    %p34 = scmp.ge.s32.totalorder %s33, 2
    %s35 = scalar_select %p34, 0, %s33
    %s36 = ssub.s32 %s16, %s35
    %s37 = ssub.s32 %s18, %s27
    %s38 = sor.u32 %s36, %s37
    %s39 = ssub.s32 %s17, %s31
    %s40 = sor.u32 %s38, %s39
    %p41 = scmp.eq.s32.totalorder %s40, 0
    %s43 = sadd.s32 %s42, 1
    %s44 = scalar_select %p41, %s42, %s43
    %p47 = pneg %p41
    %p48 = scmp.eq.s32.totalorder %s9, 1
    %p49 = por %p47, %p48
    %p50 = scmp.ne.s32.totalorder %s42, %s45
    %p51 = scmp.eq.s32.totalorder %s9, 0
    %p52 = por %p50, %p51
    %p53 = scmp.ne.s32.totalorder %s42, %s45
    %p54 = scmp.eq.s32.totalorder %s14, 1
    %p55 = por %p53, %p54
    %p56 = scmp.ne.s32.totalorder %s45, %s46
    %p57 = scmp.eq.s32.totalorder %s14, 0
    %p58 = por %p56, %p57
    %p59 = scmp.ne.s32.totalorder %s45, %s46
    %p60 = scmp.eq.s32.totalorder %s15, 1
    %p61 = por %p59, %p60
    %p63 = scmp.ne.s32.totalorder %s46, %s62
    %p64 = scmp.eq.s32.totalorder %s15, 0
    %p65 = por %p63, %p64
    %s66 = ssub.s32 %s16, %s35
    %s67 = ssub.s32 %s17, %s31
    %s68 = sor.u32 %s66, %s67
    %p69 = scmp.eq.s32.totalorder %s68, 0
    %s71 = sadd.s32 %s70, 1
    %s72 = scalar_select %p69, %s70, %s71
    %p75 = pneg %p69
    %p76 = scmp.eq.s32.totalorder %s9, 1
    %p77 = por %p75, %p76
    %p78 = scmp.ne.s32.totalorder %s70, %s73
    %p79 = scmp.eq.s32.totalorder %s9, 0
    %p80 = por %p78, %p79
    %p81 = scmp.ne.s32.totalorder %s70, %s73
    %p82 = scmp.eq.s32.totalorder %s14, 1
    %p83 = por %p81, %p82
    %p84 = scmp.ne.s32.totalorder %s73, %s74
    %p85 = scmp.eq.s32.totalorder %s14, 0
    %p86 = por %p84, %p85
    %p87 = scmp.ne.s32.totalorder %s73, %s74
    %p88 = scmp.eq.s32.totalorder %s15, 1
    %p89 = por %p87, %p88
    %p91 = scmp.ne.s32.totalorder %s74, %s90
    %p92 = scmp.eq.s32.totalorder %s15, 0
    %p93 = por %p91, %p92
    %s94 = ssub.s32 %s16, %s35
    %s95 = ssub.s32 %s17, %s31
    %s96 = sor.u32 %s94, %s95
    %p97 = scmp.eq.s32.totalorder %s96, 0
    %s99 = sadd.s32 %s98, 1
    %s100 = scalar_select %p97, %s98, %s99
    %p103 = pneg %p97
    %p104 = scmp.eq.s32.totalorder %s9, 1
    %p105 = por %p103, %p104
    %p106 = scmp.ne.s32.totalorder %s98, %s101
    %p107 = scmp.eq.s32.totalorder %s9, 0
    %p108 = por %p106, %p107
    %p109 = scmp.ne.s32.totalorder %s98, %s101
    %p110 = scmp.eq.s32.totalorder %s14, 1
    %p111 = por %p109, %p110
    %p112 = scmp.ne.s32.totalorder %s101, %s102
    %p113 = scmp.eq.s32.totalorder %s14, 0
    %p114 = por %p112, %p113
    %p115 = scmp.ne.s32.totalorder %s101, %s102
    %p116 = scmp.eq.s32.totalorder %s15, 1
    %p117 = por %p115, %p116
    %p119 = scmp.ne.s32.totalorder %s102, %s118
    %p120 = scmp.eq.s32.totalorder %s15, 0
    %p121 = por %p119, %p120
    %p122 = scmp.le.s32.totalorder 1, %s9
    %p123 = scmp.lt.s32.totalorder %s9, 3
    %p124 = pnand %p122, %p123
    %p125 = pneg %p124
    // Predicated region
    $region9: #{discriminator_forward.16} parent=5 // pred_check
      _
    $region10: #{discriminator_forward.16} parent=5 // pred_check_branch
      %127 = sbr.rel (%p124) target = $region12
    $region11: #{discriminator_forward.16} parent=5 // pred_region
      %s128 = ssub.s32 %s9, 1
    $region12: #{discriminator_forward.16} parent=5 // pred_fallthru
      _
    %p129 = scmp.lt.s32.totalorder %s9, 2
    // Predicated region
    $region13: #{discriminator_forward.16} parent=5 // pred_check
      %p130 = pneg %p129
    $region14: #{discriminator_forward.16} parent=5 // pred_check_branch
      %132 = sbr.rel (%p130) target = $region16
    $region15: #{discriminator_forward.16} parent=5 // pred_region
      // Predicated region
      $region17: #{discriminator_forward.16} parent=15 // pred_check
        %p133 = pneg %p52
      $region18: #{discriminator_forward.16} parent=15 // pred_check_branch
        %135 = sbr.rel (%p133) target = $region20
      $region19: #{discriminator_forward.16} parent=15 // pred_region
        %s136 = smul.u32 2, %s18
        %s137 = smul.u32 2, %s17
        %p138 = scmp.lt.s32.totalorder %s16, 1
        %s139 = scalar_select %p138, %s16, 1
        %p140 = scmp.lt.s32.totalorder %s136, 1
        %s141 = scalar_select %p140, %s136, 1
        %p142 = scmp.lt.s32.totalorder %s137, 1
        %s143 = scalar_select %p142, %s137, 1
        %s144 = smul.addr %s141, 2
        %s145 = sadd.s32 %s143, %s144
        %s146 = smul.addr %s139, 4
        %s147 = sadd.s32 %s145, %s146
        %s148 = smul.addr %s147, 4
        %s149 = scalar_lea.vmem %s0, %s148
        %s150 = smul.u32 2, %s18
        %s151 = smul.u32 2, %s17
      $region20: #{discriminator_forward.16} parent=15 // pred_fallthru
        _
    $region16: #{discriminator_forward.16} parent=5 // pred_fallthru
      _
    %p152 = scmp.le.s32.totalorder 1, %s9
    %p153 = scmp.lt.s32.totalorder %s9, 3
    %p154 = pnand %p152, %p153
    %p155 = pneg %p154
    // Predicated region
    $region21: #{discriminator_forward.16} parent=5 // pred_check
      _
    $region22: #{discriminator_forward.16} parent=5 // pred_check_branch
      %157 = sbr.rel (%p154) target = $region24
    $region23: #{discriminator_forward.16} parent=5 // pred_region
      %s158 = ssub.s32 %s9, 1
      %s159 = smul.u32 2, %s21
      %s160 = smul.u32 2, %s20
      %p161 = scmp.lt.s32.totalorder %s19, 1
      %s162 = scalar_select %p161, %s19, 1
      %p163 = scmp.lt.s32.totalorder %s159, 1
      %s164 = scalar_select %p163, %s159, 1
      %p165 = scmp.lt.s32.totalorder %s160, 1
      %s166 = scalar_select %p165, %s160, 1
      %s167 = smul.addr %s164, 2
      %s168 = sadd.s32 %s166, %s167
      %s169 = smul.addr %s162, 4
      %s170 = sadd.s32 %s168, %s169
      %s171 = smul.addr %s170, 4
      %s172 = scalar_lea.vmem %s0, %s171
      %p173 = pneg %p58
      %p174 = pneg %p55
      %p175 = pneg %p86
      %p176 = pneg %p83
      %s177 = smul.u32 2, %s20
      %p178 = scmp.lt.s32.totalorder %s19, 1
      %s179 = scalar_select %p178, %s19, 1
      %p180 = scmp.lt.s32.totalorder %s177, 1
      %s181 = scalar_select %p180, %s177, 1
      %s182 = smul.addr %s179, 2
      %s183 = sadd.s32 %s181, %s182
      %s184 = scalar_lea.vmem %s1, %s183
      %p185 = pneg %p114
      %p186 = pneg %p111
      %s187 = smul.u32 2, %s20
      %p188 = scmp.lt.s32.totalorder %s19, 1
      %s189 = scalar_select %p188, %s19, 1
      %p190 = scmp.lt.s32.totalorder %s187, 1
      %s191 = scalar_select %p190, %s187, 1
      %s192 = smul.addr %s189, 2
      %s193 = sadd.s32 %s191, %s192
      %s194 = scalar_lea.vmem %s2, %s193
      %s195 = smul.u32 2, %s21
      %s196 = smul.u32 2, %s20
      %p197 = scmp.lt.s32.totalorder %s19, 1
      %s198 = scalar_select %p197, %s19, 1
      %p199 = scmp.lt.s32.totalorder %s195, 1
      %s200 = scalar_select %p199, %s195, 1
      %p201 = scmp.lt.s32.totalorder %s196, 1
      %s202 = scalar_select %p201, %s196, 1
      %s203 = smul.addr %s200, 2
      %s204 = sadd.s32 %s202, %s203
      %s205 = smul.addr %s198, 4
      %s206 = sadd.s32 %s204, %s205
      %s207 = smul.addr %s206, 4
      %s208 = scalar_lea.vmem %s0, %s207
      %s209 = smul.u32 2, %s21
      %s210 = smul.u32 2, %s20
      %s211 = smul.u32 2, %s20
      %p212 = scmp.lt.s32.totalorder %s19, 1
      %s213 = scalar_select %p212, %s19, 1
      %p214 = scmp.lt.s32.totalorder %s211, 1
      %s215 = scalar_select %p214, %s211, 1
      %s216 = smul.addr %s213, 2
      %s217 = sadd.s32 %s215, %s216
      %s218 = scalar_lea.vmem %s1, %s217
      %s219 = smul.u32 2, %s20
      %s220 = smul.u32 2, %s20
      %p221 = scmp.lt.s32.totalorder %s19, 1
      %s222 = scalar_select %p221, %s19, 1
      %p223 = scmp.lt.s32.totalorder %s220, 1
      %s224 = scalar_select %p223, %s220, 1
      %s225 = smul.addr %s222, 2
      %s226 = sadd.s32 %s224, %s225
      %s227 = scalar_lea.vmem %s2, %s226
      %s228 = smul.u32 2, %s20
      %p229 = scmp.eq.s32.totalorder %s21, 0
      // Predicated region
      $region25: #{discriminator_forward.16} parent=23 // pred_check
        %p230 = pneg %p229
      $region26: #{discriminator_forward.16} parent=23 // pred_check_branch
        %232 = sbr.rel (%p230) target = $region28
      $region27: #{discriminator_forward.16} parent=23 // pred_region
        %v233 = vlaneseq
        %vm234 = vcmp.ge.s32.totalorder %v233, 0
        %vm235 = vcmp.lt.s32.totalorder %v233, 256
        %vm236 = vmand %vm234, %vm235
        %237 = vst.msk [vmem:[%s218] sm:$0x3] %vm236, 0.0
        %238 = vst.msk [vmem:[%s227] sm:$0x3] %vm236, 0.0
      $region28: #{discriminator_forward.16} parent=23 // pred_fallthru
        _
      %v239 = vld [vmem:[%s208] sm:$0xff]
      %v240 = vld [vmem:[%s208 + $0x8] sm:$0xff]
      %v241 = vunpack.c.l.bf16 %v239
      %v242 = vunpack.c.h.bf16 %v239
      %v243 = vunpack.c.l.bf16 %v240
      %v244 = vunpack.c.h.bf16 %v240
      %v245 = vld [vmem:[%s218] sm:$0x3]
      %v246 = vadd.f32 %v241, %v243
      %v247 = vrot.slane %v246, 4
      %v248 = vadd.f32 %v246, %v247
      %v249 = vrot.slane %v248, 2
      %v250 = vadd.f32 %v248, %v249
      %v251 = vrot.slane %v250, 1
      %v252 = vadd.f32 %v250, %v251
      %v253 = vadd.f32 %v242, %v244
      %v254 = vrot.slane %v253, 4
      %v255 = vadd.f32 %v253, %v254
      %v256 = vrot.slane %v255, 2
      %v257 = vadd.f32 %v255, %v256
      %v258 = vrot.slane %v257, 1
      %v259 = vadd.f32 %v257, %v258
      %v262 = vcombine.low %v252, %v259
      %v264 = vunpack.c.l.s4 1966171168
      %v265 = vunpack.c.0.s8 %v264
      %v266 = vlaneseq
      %v267 = vshrl.u32 %v266, 7
      %v268 = vsub.s32 %v265, %v267
      %v269 = vrot.slane %v262, %v268
      %v271 = vunpack.c.l.s4 1966171168
      %v272 = vunpack.c.0.s8 %v271
      %v273 = vlaneseq
      %v274 = vshrl.u32 %v273, 7
      %v275 = vsub.s32 %v272, %v274
      %v276 = vrot.slane %v269, %v275
      %v278 = vadd.f32 %v245, %v276
      %v279 = vlaneseq
      %vm280 = vcmp.ge.s32.totalorder %v279, 0
      %vm281 = vcmp.lt.s32.totalorder %v279, 256
      %vm282 = vmand %vm280, %vm281
      %283 = vst.msk [vmem:[%s218] sm:$0x3] %vm282, %v278
      %v284 = vld [vmem:[%s227] sm:$0x3]
      %v285 = vmul.f32 %v241, %v241
      %v286 = vmul.f32 %v242, %v242
      %v287 = vmul.f32 %v243, %v243
      %v288 = vmul.f32 %v244, %v244
      %v289 = vadd.f32 %v285, %v287
      %v290 = vrot.slane %v289, 4
      %v291 = vadd.f32 %v289, %v290
      %v292 = vrot.slane %v291, 2
      %v293 = vadd.f32 %v291, %v292
      %v294 = vrot.slane %v293, 1
      %v295 = vadd.f32 %v293, %v294
      %v296 = vadd.f32 %v286, %v288
      %v297 = vrot.slane %v296, 4
      %v298 = vadd.f32 %v296, %v297
      %v299 = vrot.slane %v298, 2
      %v300 = vadd.f32 %v298, %v299
      %v301 = vrot.slane %v300, 1
      %v302 = vadd.f32 %v300, %v301
      %v305 = vcombine.low %v295, %v302
      %v307 = vunpack.c.l.s4 1966171168
      %v308 = vunpack.c.0.s8 %v307
      %v309 = vlaneseq
      %v310 = vshrl.u32 %v309, 7
      %v311 = vsub.s32 %v308, %v310
      %v312 = vrot.slane %v305, %v311
      %v314 = vunpack.c.l.s4 1966171168
      %v315 = vunpack.c.0.s8 %v314
      %v316 = vlaneseq
      %v317 = vshrl.u32 %v316, 7
      %v318 = vsub.s32 %v315, %v317
      %v319 = vrot.slane %v312, %v318
      %v321 = vadd.f32 %v284, %v319
      %322 = vst.msk [vmem:[%s227] sm:$0x3] %vm282, %v321
      // Predicated region
      $region29: #{discriminator_forward.16} parent=23 // pred_check
        %p323 = pneg %p229
      $region30: #{discriminator_forward.16} parent=23 // pred_check_branch
        %325 = sbr.rel (%p323) target = $region32
      $region31: #{discriminator_forward.16} parent=23 // pred_region
        %v326 = vld [vmem:[%s218] sm:$0x3]
        %v327 = vmul.f32 %v326, 0.0625
        %v328 = vld [vmem:[%s227] sm:$0x3]
        %v329 = vmul.f32 %v328, 0.0625
        %v330 = vmul.f32 %v327, %v327
        %v331 = vsub.f32 %v329, %v330
        %v332 = vmax.f32 %v331, 0.0
        %333 = vst.msk [vmem:[%s218] sm:$0x3] %vm282, %v327
        %v334 = vadd.f32 %v332, 1e-05
        %v335 = vrsqrt.pop %v334
        %336 = vst.msk [vmem:[%s227] sm:$0x3] %vm282, %v335
      $region32: #{discriminator_forward.16} parent=23 // pred_fallthru
        _
      %s337 = smul.u32 2, %s20
      %p338 = scmp.lt.s32.totalorder %s19, 1
      %s339 = scalar_select %p338, %s19, 1
      %p340 = scmp.lt.s32.totalorder %s337, 1
      %s341 = scalar_select %p340, %s337, 1
      %s342 = smul.addr %s339, 2
      %s343 = sadd.s32 %s341, %s342
      %s344 = scalar_lea.vmem %s1, %s343
      %s345 = smul.u32 2, %s20
      %p346 = scmp.lt.s32.totalorder %s19, 1
      %s347 = scalar_select %p346, %s19, 1
      %p348 = scmp.lt.s32.totalorder %s345, 1
      %s349 = scalar_select %p348, %s345, 1
      %s350 = smul.addr %s347, 2
      %s351 = sadd.s32 %s349, %s350
      %s352 = scalar_lea.vmem %s2, %s351
      // Predicated region
      $region33: #{discriminator_forward.16} parent=23 // pred_check
        %p353 = pneg %p83
      $region34: #{discriminator_forward.16} parent=23 // pred_check_branch
        %355 = sbr.rel (%p353) target = $region36
      $region35: #{discriminator_forward.16} parent=23 // pred_region
        %s356 = smul.u32 2, %s20
      $region36: #{discriminator_forward.16} parent=23 // pred_fallthru
        _
      // Predicated region
      $region37: #{discriminator_forward.16} parent=23 // pred_check
        %p357 = pneg %p111
      $region38: #{discriminator_forward.16} parent=23 // pred_check_branch
        %359 = sbr.rel (%p357) target = $region40
      $region39: #{discriminator_forward.16} parent=23 // pred_region
        %s360 = smul.u32 2, %s20
      $region40: #{discriminator_forward.16} parent=23 // pred_fallthru
        _
    $region24: #{discriminator_forward.16} parent=5 // pred_fallthru
      _
    %p361 = scmp.le.s32.totalorder 2, %s9
    // Predicated region
    $region41: #{discriminator_forward.16} parent=5 // pred_check
      %p362 = pneg %p361
    $region42: #{discriminator_forward.16} parent=5 // pred_check_branch
      %364 = sbr.rel (%p362) target = $region44
    $region43: #{discriminator_forward.16} parent=5 // pred_region
      %s365 = ssub.s32 %s9, 2
      // Predicated region
      $region45: #{discriminator_forward.16} parent=43 // pred_check
        %p366 = pneg %p89
      $region46: #{discriminator_forward.16} parent=43 // pred_check_branch
        %368 = sbr.rel (%p366) target = $region48
      $region47: #{discriminator_forward.16} parent=43 // pred_region
        %s369 = smul.u32 2, %s23
        %p370 = scmp.lt.s32.totalorder %s22, 1
        %s371 = scalar_select %p370, %s22, 1
        %p372 = scmp.lt.s32.totalorder %s369, 1
        %s373 = scalar_select %p372, %s369, 1
        %s374 = smul.addr %s371, 2
        %s375 = sadd.s32 %s373, %s374
        %s376 = scalar_lea.vmem %s1, %s375
      $region48: #{discriminator_forward.16} parent=43 // pred_fallthru
        _
      // Predicated region
      $region49: #{discriminator_forward.16} parent=43 // pred_check
        %p377 = pneg %p117
      $region50: #{discriminator_forward.16} parent=43 // pred_check_branch
        %379 = sbr.rel (%p377) target = $region52
      $region51: #{discriminator_forward.16} parent=43 // pred_region
        %s380 = smul.u32 2, %s23
        %p381 = scmp.lt.s32.totalorder %s22, 1
        %s382 = scalar_select %p381, %s22, 1
        %p383 = scmp.lt.s32.totalorder %s380, 1
        %s384 = scalar_select %p383, %s380, 1
        %s385 = smul.addr %s382, 2
        %s386 = sadd.s32 %s384, %s385
        %s387 = scalar_lea.vmem %s2, %s386
      $region52: #{discriminator_forward.16} parent=43 // pred_fallthru
        _
    $region44: #{discriminator_forward.16} parent=5 // pred_fallthru
      _
  $region6: #{discriminator_forward.16} parent=0 // loop_footer
    %s13 = sadd.s32 1, %s9
  $region7: #{discriminator_forward.16} parent=0 // loop_footer_branch
    %8 = sbr.rel target = $region3
  $region8: #{discriminator_forward.16} parent=0 // loop_exit
    _

// kernel: discriminator_forward.17
$region0: #{discriminator_forward.17}
  #allocation0 [shape = 'u32[]', space=smem, size = 0x4, offset = 0x4, fixed_abs, tag = 'smem constant byte address 0x4 - core index']
  #allocation1 [shape = 'u32[144,128]{1,0:T(1,128)}', space=vmem, size = 0x12000, scoped, tag = 'internal scratch']
  %s0 = inlined_call_operand.vmem [shape: bf16[2,16,256], index: 0, kind: input, shape index: {}]
  %s1 = inlined_call_operand.vmem [shape: f32[2,1,256], index: 1, kind: input, shape index: {}]
  %s2 = inlined_call_operand.vmem [shape: f32[2,1,256], index: 2, kind: input, shape index: {}]
  %s3 = inlined_call_operand.vmem [shape: bf16[2,16,256], index: 3, kind: output, shape index: {}]
  %s4 = sld [smem:[#allocation0]]
  $region45: #{discriminator_forward.17} parent=0
    _
  %s6 = ssub.s32 1, %s4
  %s7 = scalar_select 0, %s6, %s4
  loop: start=0, step=1, limit=4
  $region2: #{discriminator_forward.17} parent=0 // loop_pre_header
    _
  $region3: #{discriminator_forward.17} parent=0 // loop_header
    %s9 = sphi 0, %s13
    %p10 = scmp.ge.s32.totalorder %s9, 4
    %s16 = sphi 0, %s35
    %s17 = sphi 0, %s31
    %s18 = sphi 0, %s27
    %s19 = sphi 0, %s16
    %s20 = sphi 0, %s17
    %s21 = sphi 0, %s18
    %s22 = sphi 0, %s19
    %s23 = sphi 0, %s20
    %s24 = sphi 0, %s21
    %s42 = sphi 0, %s44
    %s45 = sphi 0, %s42
    %s46 = sphi 0, %s45
    %s62 = sphi 0, %s46
    %s70 = sphi 0, %s72
    %s73 = sphi 0, %s70
    %s74 = sphi 0, %s73
    %s90 = sphi 0, %s74
    %s98 = sphi 0, %s100
    %s101 = sphi 0, %s98
    %s102 = sphi 0, %s101
    %s118 = sphi 0, %s102
    %s128 = sphi 0, %s130
    %s131 = sphi 0, %s128
    %s132 = sphi 0, %s131
    %s148 = sphi 0, %s132
  $region4: #{discriminator_forward.17} parent=0 // loop_header_branch
    %12 = sbr.rel (%p10) target = $region8
  $region5: #{discriminator_forward.17} parent=0 // loop_body
    %s14 = ssub.s32 %s9, 1
    %s15 = ssub.s32 %s9, 2
    %s25 = sadd.s32 1, %s18
    %p26 = scmp.ge.s32.totalorder %s25, 1
    %s27 = scalar_select %p26, 0, %s25
    %s28 = sadd.s32 1, %s17
    %s29 = scalar_select %p26, %s28, %s17
    %p30 = scmp.ge.s32.totalorder %s29, 1
    %s31 = scalar_select %p30, 0, %s29
    %s32 = sadd.s32 1, %s16
    %s33 = scalar_select %p30, %s32, %s16
    %p34 = scmp.ge.s32.totalorder %s33, 2
    %s35 = scalar_select %p34, 0, %s33
    %s36 = ssub.s32 %s16, %s35
    %s37 = ssub.s32 %s18, %s27
    %s38 = sor.u32 %s36, %s37
    %s39 = ssub.s32 %s17, %s31
    %s40 = sor.u32 %s38, %s39
    %p41 = scmp.eq.s32.totalorder %s40, 0
    %s43 = sadd.s32 %s42, 1
    %s44 = scalar_select %p41, %s42, %s43
    %p47 = pneg %p41
    %p48 = scmp.eq.s32.totalorder %s9, 1
    %p49 = por %p47, %p48
    %p50 = scmp.ne.s32.totalorder %s42, %s45
    %p51 = scmp.eq.s32.totalorder %s9, 0
    %p52 = por %p50, %p51
    %p53 = scmp.ne.s32.totalorder %s42, %s45
    %p54 = scmp.eq.s32.totalorder %s14, 1
    %p55 = por %p53, %p54
    %p56 = scmp.ne.s32.totalorder %s45, %s46
    %p57 = scmp.eq.s32.totalorder %s14, 0
    %p58 = por %p56, %p57
    %p59 = scmp.ne.s32.totalorder %s45, %s46
    %p60 = scmp.eq.s32.totalorder %s15, 1
    %p61 = por %p59, %p60
    %p63 = scmp.ne.s32.totalorder %s46, %s62
    %p64 = scmp.eq.s32.totalorder %s15, 0
    %p65 = por %p63, %p64
    %s66 = ssub.s32 %s16, %s35
    %s67 = ssub.s32 %s17, %s31
    %s68 = sor.u32 %s66, %s67
    %p69 = scmp.eq.s32.totalorder %s68, 0
    %s71 = sadd.s32 %s70, 1
    %s72 = scalar_select %p69, %s70, %s71
    %p75 = pneg %p69
    %p76 = scmp.eq.s32.totalorder %s9, 1
    %p77 = por %p75, %p76
    %p78 = scmp.ne.s32.totalorder %s70, %s73
    %p79 = scmp.eq.s32.totalorder %s9, 0
    %p80 = por %p78, %p79
    %p81 = scmp.ne.s32.totalorder %s70, %s73
    %p82 = scmp.eq.s32.totalorder %s14, 1
    %p83 = por %p81, %p82
    %p84 = scmp.ne.s32.totalorder %s73, %s74
    %p85 = scmp.eq.s32.totalorder %s14, 0
    %p86 = por %p84, %p85
    %p87 = scmp.ne.s32.totalorder %s73, %s74
    %p88 = scmp.eq.s32.totalorder %s15, 1
    %p89 = por %p87, %p88
    %p91 = scmp.ne.s32.totalorder %s74, %s90
    %p92 = scmp.eq.s32.totalorder %s15, 0
    %p93 = por %p91, %p92
    %s94 = ssub.s32 %s16, %s35
    %s95 = ssub.s32 %s17, %s31
    %s96 = sor.u32 %s94, %s95
    %p97 = scmp.eq.s32.totalorder %s96, 0
    %s99 = sadd.s32 %s98, 1
    %s100 = scalar_select %p97, %s98, %s99
    %p103 = pneg %p97
    %p104 = scmp.eq.s32.totalorder %s9, 1
    %p105 = por %p103, %p104
    %p106 = scmp.ne.s32.totalorder %s98, %s101
    %p107 = scmp.eq.s32.totalorder %s9, 0
    %p108 = por %p106, %p107
    %p109 = scmp.ne.s32.totalorder %s98, %s101
    %p110 = scmp.eq.s32.totalorder %s14, 1
    %p111 = por %p109, %p110
    %p112 = scmp.ne.s32.totalorder %s101, %s102
    %p113 = scmp.eq.s32.totalorder %s14, 0
    %p114 = por %p112, %p113
    %p115 = scmp.ne.s32.totalorder %s101, %s102
    %p116 = scmp.eq.s32.totalorder %s15, 1
    %p117 = por %p115, %p116
    %p119 = scmp.ne.s32.totalorder %s102, %s118
    %p120 = scmp.eq.s32.totalorder %s15, 0
    %p121 = por %p119, %p120
    %s122 = ssub.s32 %s16, %s35
    %s123 = ssub.s32 %s18, %s27
    %s124 = sor.u32 %s122, %s123
    %s125 = ssub.s32 %s17, %s31
    %s126 = sor.u32 %s124, %s125
    %p127 = scmp.eq.s32.totalorder %s126, 0
    %s129 = sadd.s32 %s128, 1
    %s130 = scalar_select %p127, %s128, %s129
    %p133 = pneg %p127
    %p134 = scmp.eq.s32.totalorder %s9, 1
    %p135 = por %p133, %p134
    %p136 = scmp.ne.s32.totalorder %s128, %s131
    %p137 = scmp.eq.s32.totalorder %s9, 0
    %p138 = por %p136, %p137
    %p139 = scmp.ne.s32.totalorder %s128, %s131
    %p140 = scmp.eq.s32.totalorder %s14, 1
    %p141 = por %p139, %p140
    %p142 = scmp.ne.s32.totalorder %s131, %s132
    %p143 = scmp.eq.s32.totalorder %s14, 0
    %p144 = por %p142, %p143
    %p145 = scmp.ne.s32.totalorder %s131, %s132
    %p146 = scmp.eq.s32.totalorder %s15, 1
    %p147 = por %p145, %p146
    %p149 = scmp.ne.s32.totalorder %s132, %s148
    %p150 = scmp.eq.s32.totalorder %s15, 0
    %p151 = por %p149, %p150
    %p152 = scmp.le.s32.totalorder 1, %s9
    %p153 = scmp.lt.s32.totalorder %s9, 3
    %p154 = pnand %p152, %p153
    %p155 = pneg %p154
    // Predicated region
    $region9: #{discriminator_forward.17} parent=5 // pred_check
      _
    $region10: #{discriminator_forward.17} parent=5 // pred_check_branch
      %157 = sbr.rel (%p154) target = $region12
    $region11: #{discriminator_forward.17} parent=5 // pred_region
      %s158 = ssub.s32 %s9, 1
    $region12: #{discriminator_forward.17} parent=5 // pred_fallthru
      _
    %p159 = scmp.lt.s32.totalorder %s9, 2
    // Predicated region
    $region13: #{discriminator_forward.17} parent=5 // pred_check
      %p160 = pneg %p159
    $region14: #{discriminator_forward.17} parent=5 // pred_check_branch
      %162 = sbr.rel (%p160) target = $region16
    $region15: #{discriminator_forward.17} parent=5 // pred_region
      // Predicated region
      $region17: #{discriminator_forward.17} parent=15 // pred_check
        %p163 = pneg %p52
      $region18: #{discriminator_forward.17} parent=15 // pred_check_branch
        %165 = sbr.rel (%p163) target = $region20
      $region19: #{discriminator_forward.17} parent=15 // pred_region
        %s166 = smul.u32 2, %s18
        %s167 = smul.u32 2, %s17
        %p168 = scmp.lt.s32.totalorder %s16, 1
        %s169 = scalar_select %p168, %s16, 1
        %p170 = scmp.lt.s32.totalorder %s166, 1
        %s171 = scalar_select %p170, %s166, 1
        %p172 = scmp.lt.s32.totalorder %s167, 1
        %s173 = scalar_select %p172, %s167, 1
        %s174 = smul.addr %s171, 2
        %s175 = sadd.s32 %s173, %s174
        %s176 = smul.addr %s169, 4
        %s177 = sadd.s32 %s175, %s176
        %s178 = smul.addr %s177, 4
        %s179 = scalar_lea.vmem %s0, %s178
        %s180 = smul.u32 2, %s18
        %s181 = smul.u32 2, %s17
      $region20: #{discriminator_forward.17} parent=15 // pred_fallthru
        _
      // Predicated region
      $region21: #{discriminator_forward.17} parent=15 // pred_check
        %p182 = pneg %p80
      $region22: #{discriminator_forward.17} parent=15 // pred_check_branch
        %184 = sbr.rel (%p182) target = $region24
      $region23: #{discriminator_forward.17} parent=15 // pred_region
        %s185 = smul.u32 2, %s17
        %p186 = scmp.lt.s32.totalorder %s16, 1
        %s187 = scalar_select %p186, %s16, 1
        %p188 = scmp.lt.s32.totalorder %s185, 1
        %s189 = scalar_select %p188, %s185, 1
        %s190 = smul.addr %s187, 2
        %s191 = sadd.s32 %s189, %s190
        %s192 = scalar_lea.vmem %s1, %s191
        %s193 = smul.u32 2, %s17
      $region24: #{discriminator_forward.17} parent=15 // pred_fallthru
        _
      // Predicated region
      $region25: #{discriminator_forward.17} parent=15 // pred_check
        %p194 = pneg %p108
      $region26: #{discriminator_forward.17} parent=15 // pred_check_branch
        %196 = sbr.rel (%p194) target = $region28
      $region27: #{discriminator_forward.17} parent=15 // pred_region
        %s197 = smul.u32 2, %s17
        %p198 = scmp.lt.s32.totalorder %s16, 1
        %s199 = scalar_select %p198, %s16, 1
        %p200 = scmp.lt.s32.totalorder %s197, 1
        %s201 = scalar_select %p200, %s197, 1
        %s202 = smul.addr %s199, 2
        %s203 = sadd.s32 %s201, %s202
        %s204 = scalar_lea.vmem %s2, %s203
        %s205 = smul.u32 2, %s17
      $region28: #{discriminator_forward.17} parent=15 // pred_fallthru
        _
    $region16: #{discriminator_forward.17} parent=5 // pred_fallthru
      _
    %p206 = scmp.le.s32.totalorder 1, %s9
    %p207 = scmp.lt.s32.totalorder %s9, 3
    %p208 = pnand %p206, %p207
    %p209 = pneg %p208
    // Predicated region
    $region29: #{discriminator_forward.17} parent=5 // pred_check
      _
    $region30: #{discriminator_forward.17} parent=5 // pred_check_branch
      %211 = sbr.rel (%p208) target = $region32
    $region31: #{discriminator_forward.17} parent=5 // pred_region
      %s212 = ssub.s32 %s9, 1
      %s213 = smul.u32 2, %s21
      %s214 = smul.u32 2, %s20
      %p215 = scmp.lt.s32.totalorder %s19, 1
      %s216 = scalar_select %p215, %s19, 1
      %p217 = scmp.lt.s32.totalorder %s213, 1
      %s218 = scalar_select %p217, %s213, 1
      %p219 = scmp.lt.s32.totalorder %s214, 1
      %s220 = scalar_select %p219, %s214, 1
      %s221 = smul.addr %s218, 2
      %s222 = sadd.s32 %s220, %s221
      %s223 = smul.addr %s216, 4
      %s224 = sadd.s32 %s222, %s223
      %s225 = smul.addr %s224, 4
      %s226 = scalar_lea.vmem %s0, %s225
      %p227 = pneg %p58
      %p228 = pneg %p55
      %s229 = smul.u32 2, %s20
      %p230 = scmp.lt.s32.totalorder %s19, 1
      %s231 = scalar_select %p230, %s19, 1
      %p232 = scmp.lt.s32.totalorder %s229, 1
      %s233 = scalar_select %p232, %s229, 1
      %s234 = smul.addr %s231, 2
      %s235 = sadd.s32 %s233, %s234
      %s236 = scalar_lea.vmem %s1, %s235
      %p237 = pneg %p86
      %p238 = pneg %p83
      %s239 = smul.u32 2, %s20
      %p240 = scmp.lt.s32.totalorder %s19, 1
      %s241 = scalar_select %p240, %s19, 1
      %p242 = scmp.lt.s32.totalorder %s239, 1
      %s243 = scalar_select %p242, %s239, 1
      %s244 = smul.addr %s241, 2
      %s245 = sadd.s32 %s243, %s244
      %s246 = scalar_lea.vmem %s2, %s245
      %p247 = pneg %p114
      %p248 = pneg %p111
      %p249 = pneg %p144
      %p250 = pneg %p141
      %s251 = smul.u32 2, %s21
      %s252 = smul.u32 2, %s20
      %p253 = scmp.lt.s32.totalorder %s19, 1
      %s254 = scalar_select %p253, %s19, 1
      %p255 = scmp.lt.s32.totalorder %s251, 1
      %s256 = scalar_select %p255, %s251, 1
      %p257 = scmp.lt.s32.totalorder %s252, 1
      %s258 = scalar_select %p257, %s252, 1
      %s259 = smul.addr %s256, 2
      %s260 = sadd.s32 %s258, %s259
      %s261 = smul.addr %s254, 4
      %s262 = sadd.s32 %s260, %s261
      %s263 = smul.addr %s262, 4
      %s264 = scalar_lea.vmem %s3, %s263
      %s265 = smul.u32 2, %s21
      %s266 = smul.u32 2, %s20
      %p267 = scmp.lt.s32.totalorder %s19, 1
      %s268 = scalar_select %p267, %s19, 1
      %p269 = scmp.lt.s32.totalorder %s265, 1
      %s270 = scalar_select %p269, %s265, 1
      %p271 = scmp.lt.s32.totalorder %s266, 1
      %s272 = scalar_select %p271, %s266, 1
      %s273 = smul.addr %s270, 2
      %s274 = sadd.s32 %s272, %s273
      %s275 = smul.addr %s268, 4
      %s276 = sadd.s32 %s274, %s275
      %s277 = smul.addr %s276, 4
      %s278 = scalar_lea.vmem %s0, %s277
      %s279 = smul.u32 2, %s21
      %s280 = smul.u32 2, %s20
      %s281 = smul.u32 2, %s20
      %p282 = scmp.lt.s32.totalorder %s19, 1
      %s283 = scalar_select %p282, %s19, 1
      %p284 = scmp.lt.s32.totalorder %s281, 1
      %s285 = scalar_select %p284, %s281, 1
      %s286 = smul.addr %s283, 2
      %s287 = sadd.s32 %s285, %s286
      %s288 = scalar_lea.vmem %s1, %s287
      %s289 = smul.u32 2, %s20
      %s290 = smul.u32 2, %s20
      %p291 = scmp.lt.s32.totalorder %s19, 1
      %s292 = scalar_select %p291, %s19, 1
      %p293 = scmp.lt.s32.totalorder %s290, 1
      %s294 = scalar_select %p293, %s290, 1
      %s295 = smul.addr %s292, 2
      %s296 = sadd.s32 %s294, %s295
      %s297 = scalar_lea.vmem %s2, %s296
      %s298 = smul.u32 2, %s20
      %s299 = smul.u32 2, %s21
      %s300 = smul.u32 2, %s20
      %p301 = scmp.lt.s32.totalorder %s19, 1
      %s302 = scalar_select %p301, %s19, 1
      %p303 = scmp.lt.s32.totalorder %s299, 1
      %s304 = scalar_select %p303, %s299, 1
      %p305 = scmp.lt.s32.totalorder %s300, 1
      %s306 = scalar_select %p305, %s300, 1
      %s307 = smul.addr %s304, 2
      %s308 = sadd.s32 %s306, %s307
      %s309 = smul.addr %s302, 4
      %s310 = sadd.s32 %s308, %s309
      %s311 = smul.addr %s310, 4
      %s312 = scalar_lea.vmem %s3, %s311
      %s313 = smul.u32 2, %s21
      %s314 = smul.u32 2, %s20
      %v315 = vld [vmem:[%s278] sm:$0xff]
      %v316 = vld [vmem:[%s278 + $0x8] sm:$0xff]
      %v317 = vunpack.c.l.bf16 %v315
      %v318 = vunpack.c.h.bf16 %v315
      %v319 = vunpack.c.l.bf16 %v316
      %v320 = vunpack.c.h.bf16 %v316
      %v321 = vld [vmem:[%s288] sm:$0x3]
      %v323 = vlaneseq
      %v324 = vshrl.u32 %v323, 7
      %v325 = vsub.s32 0, %v324
      %v326 = vrot.slane %v321, %v325
      %v327 = vlaneseq
      %v328 = vshrl.u32 %v327, 7
      %v329 = vsub.s32 1, %v328
      %v330 = vrot.slane %v321, %v329
      %v333 = vsub.f32 %v317, %v326
      %v334 = vsub.f32 %v318, %v330
      %v335 = vsub.f32 %v319, %v326
      %v336 = vsub.f32 %v320, %v330
      %v337 = vld [vmem:[%s297] sm:$0x3]
      %v339 = vlaneseq
      %v340 = vshrl.u32 %v339, 7
      %v341 = vsub.s32 0, %v340
      %v342 = vrot.slane %v337, %v341
      %v343 = vlaneseq
      %v344 = vshrl.u32 %v343, 7
      %v345 = vsub.s32 1, %v344
      %v346 = vrot.slane %v337, %v345
      %v349 = vmul.f32 %v333, %v342
      %v350 = vmul.f32 %v334, %v346
      %v351 = vmul.f32 %v335, %v342
      %v352 = vmul.f32 %v336, %v346
      %vm353 = vcmp.ge.f32.partialorder %v349, 0.0
      %vm354 = vcmp.ge.f32.partialorder %v350, 0.0
      %vm355 = vcmp.ge.f32.partialorder %v351, 0.0
      %vm356 = vcmp.ge.f32.partialorder %v352, 0.0
      %v357 = vmul.f32 %v349, 0.2
      %v358 = vmul.f32 %v350, 0.2
      %v359 = vmul.f32 %v351, 0.2
      %v360 = vmul.f32 %v352, 0.2
      %v361 = vsel %vm353, %v349, %v357
      %v362 = vsel %vm354, %v350, %v358
      %v363 = vsel %vm355, %v351, %v359
      %v364 = vsel %vm356, %v352, %v360
      %v365 = vpack.c.bf16 %v363, %v361
      %v366 = vpack.c.bf16 %v364, %v362
      %v369 = vunpack.c.l.b16 %v365
      %v370 = vunpack.c.l.b16 %v366
      %v371 = vunpack.c.h.b16 %v365
      %v372 = vunpack.c.h.b16 %v366
      %v373 = vpack.c.b16 %v370, %v369
      %v374 = vpack.c.b16 %v372, %v371
      %377 = vst [vmem:[%s312] sm:$0xff] %v373
      %378 = vst [vmem:[%s312 + $0x8] sm:$0xff] %v374
      %s379 = smul.u32 2, %s21
      %s380 = smul.u32 2, %s20
      %p381 = scmp.lt.s32.totalorder %s19, 1
      %s382 = scalar_select %p381, %s19, 1
      %p383 = scmp.lt.s32.totalorder %s379, 1
      %s384 = scalar_select %p383, %s379, 1
      %p385 = scmp.lt.s32.totalorder %s380, 1
      %s386 = scalar_select %p385, %s380, 1
      %s387 = smul.addr %s384, 2
      %s388 = sadd.s32 %s386, %s387
      %s389 = smul.addr %s382, 4
      %s390 = sadd.s32 %s388, %s389
      %s391 = smul.addr %s390, 4
      %s392 = scalar_lea.vmem %s3, %s391
      // Predicated region
      $region33: #{discriminator_forward.17} parent=31 // pred_check
        %p393 = pneg %p141
      $region34: #{discriminator_forward.17} parent=31 // pred_check_branch
        %395 = sbr.rel (%p393) target = $region36
      $region35: #{discriminator_forward.17} parent=31 // pred_region
        %s396 = smul.u32 2, %s21
        %s397 = smul.u32 2, %s20
      $region36: #{discriminator_forward.17} parent=31 // pred_fallthru
        _
    $region32: #{discriminator_forward.17} parent=5 // pred_fallthru
      _
    %p398 = scmp.le.s32.totalorder 2, %s9
    // Predicated region
    $region37: #{discriminator_forward.17} parent=5 // pred_check
      %p399 = pneg %p398
    $region38: #{discriminator_forward.17} parent=5 // pred_check_branch
      %401 = sbr.rel (%p399) target = $region40
    $region39: #{discriminator_forward.17} parent=5 // pred_region
      %s402 = ssub.s32 %s9, 2
      // Predicated region
      $region41: #{discriminator_forward.17} parent=39 // pred_check
        %p403 = pneg %p147
      $region42: #{discriminator_forward.17} parent=39 // pred_check_branch
        %405 = sbr.rel (%p403) target = $region44
      $region43: #{discriminator_forward.17} parent=39 // pred_region
        %s406 = smul.u32 2, %s24
        %s407 = smul.u32 2, %s23
        %p408 = scmp.lt.s32.totalorder %s22, 1
        %s409 = scalar_select %p408, %s22, 1
        %p410 = scmp.lt.s32.totalorder %s406, 1
        %s411 = scalar_select %p410, %s406, 1
        %p412 = scmp.lt.s32.totalorder %s407, 1
        %s413 = scalar_select %p412, %s407, 1
        %s414 = smul.addr %s411, 2
        %s415 = sadd.s32 %s413, %s414
        %s416 = smul.addr %s409, 4
        %s417 = sadd.s32 %s415, %s416
        %s418 = smul.addr %s417, 4
        %s419 = scalar_lea.vmem %s3, %s418
      $region44: #{discriminator_forward.17} parent=39 // pred_fallthru
        _
    $region40: #{discriminator_forward.17} parent=5 // pred_fallthru
      _
  $region6: #{discriminator_forward.17} parent=0 // loop_footer
    %s13 = sadd.s32 1, %s9
  $region7: #{discriminator_forward.17} parent=0 // loop_footer_branch
    %8 = sbr.rel target = $region3
  $region8: #{discriminator_forward.17} parent=0 // loop_exit
    _

// kernel: discriminator_forward.18
$region0: #{discriminator_forward.18}
  #allocation0 [shape = 'u32[]', space=smem, size = 0x4, offset = 0x4, fixed_abs, tag = 'smem constant byte address 0x4 - core index']
  #allocation1 [shape = 'u32[144,128]{1,0:T(1,128)}', space=vmem, size = 0x12000, scoped, tag = 'internal scratch']
  #allocation2 [shape = 'f32[16,256]{1,0:T(8,128)}', space=vmem, size = 0x4000, scoped, tag = 'scratch operand']
  %s0 = inlined_call_operand.vmem [shape: bf16[16,4096], index: 0, kind: input, shape index: {}]
  %s1 = inlined_call_operand.vmem [shape: bf16[4096,512], index: 1, kind: input, shape index: {}]
  %s2 = inlined_call_operand.vmem [shape: f32[1,512], index: 2, kind: input, shape index: {}]
  %s3 = inlined_call_operand.vmem [shape: bf16[16,512], index: 3, kind: output, shape index: {}]
  %s4 = sld [smem:[#allocation0]]
  $region110: #{discriminator_forward.18} parent=0
    _
  %s6 = ssub.s32 1, %s4
  %s7 = scalar_select 0, %s6, %s4
  $region1: #{discriminator_forward.18} parent=0
    #allocation3 [shape = 'u8[32768]{0}', space=vmem, size = 0x8000, scoped, tag = 'input window, operand 0']
    #allocation4 [shape = 'u8[16384]{0}', space=vmem, size = 0x4000, scoped, tag = 'output window, operand 0']
    loop: start=0, step=1, limit=18
    $region2: #{discriminator_forward.18} parent=1 // loop_pre_header
      _
    $region3: #{discriminator_forward.18} parent=1 // loop_header
      %s9 = sphi 0, %s13
      %p10 = scmp.ge.s32.totalorder %s9, 18
      %s16 = sphi 0, %s35
      %s17 = sphi 0, %s31
      %s18 = sphi 0, %s27
      %s19 = sphi 0, %s16
      %s20 = sphi 0, %s17
      %s21 = sphi 0, %s18
      %s22 = sphi 0, %s19
      %s23 = sphi 0, %s20
      %s24 = sphi 0, %s21
      %s40 = sphi 0, %s42
      %s43 = sphi 0, %s40
      %s44 = sphi 0, %s43
      %s60 = sphi 0, %s44
      %s64 = sphi 0, %s64
      %s66 = sphi 0, %s64
      %s67 = sphi 0, %s66
      %s81 = sphi 0, %s67
      %s87 = sphi 0, %s89
      %s90 = sphi 0, %s87
      %s91 = sphi 0, %s90
      %s107 = sphi 0, %s91
      %s115 = sphi 0, %s117
      %s118 = sphi 0, %s115
      %s119 = sphi 0, %s118
      %s135 = sphi 0, %s119
    $region4: #{discriminator_forward.18} parent=1 // loop_header_branch
      %12 = sbr.rel (%p10) target = $region8
    $region5: #{discriminator_forward.18} parent=1 // loop_body
      %s14 = ssub.s32 %s9, 1
      %s15 = ssub.s32 %s9, 2
      %s25 = sadd.s32 1, %s18
      %p26 = scmp.ge.s32.totalorder %s25, 8
      %s27 = scalar_select %p26, 0, %s25
      %s28 = sadd.s32 1, %s17
      %s29 = scalar_select %p26, %s28, %s17
      %p30 = scmp.ge.s32.totalorder %s29, 2
      %s31 = scalar_select %p30, 0, %s29
      %s32 = sadd.s32 1, %s16
      %s33 = scalar_select %p30, %s32, %s16
      %p34 = scmp.ge.s32.totalorder %s33, 1
      %s35 = scalar_select %p34, 0, %s33
      %s36 = ssub.s32 %s16, %s35
      %s37 = ssub.s32 %s18, %s27
      %s38 = sor.u32 %s36, %s37
      %p39 = scmp.eq.s32.totalorder %s38, 0
      %s41 = sadd.s32 %s40, 1
      %s42 = scalar_select %p39, %s40, %s41
      %p45 = pneg %p39
      %p46 = scmp.eq.s32.totalorder %s9, 15
      %p47 = por %p45, %p46
      %p48 = scmp.ne.s32.totalorder %s40, %s43
      %p49 = scmp.eq.s32.totalorder %s9, 0
      %p50 = por %p48, %p49
      %p51 = scmp.ne.s32.totalorder %s40, %s43
      %p52 = scmp.eq.s32.totalorder %s14, 15
      %p53 = por %p51, %p52
      %p54 = scmp.ne.s32.totalorder %s43, %s44
      %p55 = scmp.eq.s32.totalorder %s14, 0
      %p56 = por %p54, %p55
      %p57 = scmp.ne.s32.totalorder %s43, %s44
      %p58 = scmp.eq.s32.totalorder %s15, 15
      %p59 = por %p57, %p58
      %p61 = scmp.ne.s32.totalorder %s44, %s60
      %p62 = scmp.eq.s32.totalorder %s15, 0
      %p63 = por %p61, %p62
      %s65 = sadd.s32 %s64, 1
      %p68 = scmp.eq.s32.totalorder %s9, 15
      %p69 = scmp.ne.s32.totalorder %s64, %s66
      %p70 = scmp.eq.s32.totalorder %s9, 0
      %p71 = por %p69, %p70
      %p72 = scmp.ne.s32.totalorder %s64, %s66
      %p73 = scmp.eq.s32.totalorder %s14, 15
      %p74 = por %p72, %p73
      %p75 = scmp.ne.s32.totalorder %s66, %s67
      %p76 = scmp.eq.s32.totalorder %s14, 0
      %p77 = por %p75, %p76
      %p78 = scmp.ne.s32.totalorder %s66, %s67
      %p79 = scmp.eq.s32.totalorder %s15, 15
      %p80 = por %p78, %p79
      %p82 = scmp.ne.s32.totalorder %s67, %s81
      %p83 = scmp.eq.s32.totalorder %s15, 0
      %p84 = por %p82, %p83
      %s85 = ssub.s32 %s17, %s31
      %p86 = scmp.eq.s32.totalorder %s85, 0
      %s88 = sadd.s32 %s87, 1
      %s89 = scalar_select %p86, %s87, %s88
      %p92 = pneg %p86
      %p93 = scmp.eq.s32.totalorder %s9, 15
      %p94 = por %p92, %p93
      %p95 = scmp.ne.s32.totalorder %s87, %s90
      %p96 = scmp.eq.s32.totalorder %s9, 0
      %p97 = por %p95, %p96
      %p98 = scmp.ne.s32.totalorder %s87, %s90
      %p99 = scmp.eq.s32.totalorder %s14, 15
      %p100 = por %p98, %p99
      %p101 = scmp.ne.s32.totalorder %s90, %s91
      %p102 = scmp.eq.s32.totalorder %s14, 0
      %p103 = por %p101, %p102
      %p104 = scmp.ne.s32.totalorder %s90, %s91
      %p105 = scmp.eq.s32.totalorder %s15, 15
      %p106 = por %p104, %p105
      %p108 = scmp.ne.s32.totalorder %s91, %s107
      %p109 = scmp.eq.s32.totalorder %s15, 0
      %p110 = por %p108, %p109
      %s111 = ssub.s32 %s16, %s35
      %s112 = ssub.s32 %s17, %s31
      %s113 = sor.u32 %s111, %s112
      %p114 = scmp.eq.s32.totalorder %s113, 0
      %s116 = sadd.s32 %s115, 1
      %s117 = scalar_select %p114, %s115, %s116
      %p120 = pneg %p114
      %p121 = scmp.eq.s32.totalorder %s9, 15
      %p122 = por %p120, %p121
      %p123 = scmp.ne.s32.totalorder %s115, %s118
      %p124 = scmp.eq.s32.totalorder %s9, 0
      %p125 = por %p123, %p124
      %p126 = scmp.ne.s32.totalorder %s115, %s118
      %p127 = scmp.eq.s32.totalorder %s14, 15
      %p128 = por %p126, %p127
      %p129 = scmp.ne.s32.totalorder %s118, %s119
      %p130 = scmp.eq.s32.totalorder %s14, 0
      %p131 = por %p129, %p130
      %p132 = scmp.ne.s32.totalorder %s118, %s119
      %p133 = scmp.eq.s32.totalorder %s15, 15
      %p134 = por %p132, %p133
      %p136 = scmp.ne.s32.totalorder %s119, %s135
      %p137 = scmp.eq.s32.totalorder %s15, 0
      %p138 = por %p136, %p137
      %p139 = scmp.le.s32.totalorder 1, %s9
      %p140 = scmp.lt.s32.totalorder %s9, 17
      %p141 = pnand %p139, %p140
      %p142 = pneg %p141
      // Predicated region
      $region9: #{discriminator_forward.18} parent=5 // pred_check
        _
      $region10: #{discriminator_forward.18} parent=5 // pred_check_branch
        %144 = sbr.rel (%p141) target = $region12
      $region11: #{discriminator_forward.18} parent=5 // pred_region
        %s145 = ssub.s32 %s9, 1
        // Predicated region
        $region13: #{discriminator_forward.18} parent=11 // pred_check
          %p146 = pneg %p77
        $region14: #{discriminator_forward.18} parent=11 // pred_check_branch
          %148 = sbr.rel (%p146) target = $region16
        $region15: #{discriminator_forward.18} parent=11 // pred_region
          _
        $region16: #{discriminator_forward.18} parent=11 // pred_fallthru
          _
      $region12: #{discriminator_forward.18} parent=5 // pred_fallthru
        _
      %p149 = scmp.lt.s32.totalorder %s9, 16
      // Predicated region
      $region17: #{discriminator_forward.18} parent=5 // pred_check
        %p150 = pneg %p149
      $region18: #{discriminator_forward.18} parent=5 // pred_check_branch
        %152 = sbr.rel (%p150) target = $region20
      $region19: #{discriminator_forward.18} parent=5 // pred_region
        // Predicated region
        $region21: #{discriminator_forward.18} parent=19 // pred_check
          %p153 = pneg %p50
        $region22: #{discriminator_forward.18} parent=19 // pred_check_branch
          %155 = sbr.rel (%p153) target = $region24
        $region23: #{discriminator_forward.18} parent=19 // pred_region
          %s156 = sand.u32 %s40, 1
          %s157 = sand.u32 %s40, 1
          %s158 = smul.addr %s157, 32
          %s159 = scalar_lea.vmem [#allocation3], %s158
          %s160 = smul.u32 2, %s16
          %s161 = smul.u32 4, %s18
          %s162 = smul.addr %s160, 32
          %s163 = sadd.s32 %s161, %s162
          %s164 = smul.addr %s163, 4
          %s165 = scalar_lea.vmem %s0, %s164
          // Predicated region
          $region25: #{discriminator_forward.18} parent=23 // pred_check
            _
          $region26: #{discriminator_forward.18} parent=23 // pred_check_branch
            %167 = sbr.rel (0) target = $region28
          $region27: #{discriminator_forward.18} parent=23 // pred_region
            // Predicated region
            $region29: #{discriminator_forward.18} parent=27 // pred_check
              _
            $region30: #{discriminator_forward.18} parent=27 // pred_check_branch
              %169 = sbr.rel (0) target = $region32
            $region31: #{discriminator_forward.18} parent=27 // pred_region
              loop: start=0, step=1, limit=1
              $region33: #{discriminator_forward.18} parent=31 // loop_pre_header
                _
              $region34: #{discriminator_forward.18} parent=31 // loop_header
                %s171 = sphi 0, %s175
                %p172 = scmp.ge.s32.totalorder %s171, 1
                %s176 = sphi %s165, %s165
                %s177 = sphi %s159, %s159
              $region35: #{discriminator_forward.18} parent=31 // loop_header_branch
                %174 = sbr.rel (%p172) target = $region39
              $region36: #{discriminator_forward.18} parent=31 // loop_body
                %v178 = vld [vmem:[%s176] sm:$0xff]
                %179 = vst [vmem:[%s177] sm:$0xff] %v178
                %v180 = vld [vmem:[%s176 + $0x8] sm:$0xff]
                %181 = vst [vmem:[%s177 + $0x8] sm:$0xff] %v180
                %v182 = vld [vmem:[%s176 + $0x80] sm:$0xff]
                %183 = vst [vmem:[%s177 + $0x10] sm:$0xff] %v182
                %v184 = vld [vmem:[%s176 + $0x88] sm:$0xff]
                %185 = vst [vmem:[%s177 + $0x18] sm:$0xff] %v184
              $region37: #{discriminator_forward.18} parent=31 // loop_footer
                %s175 = sadd.s32 1, %s171
              $region38: #{discriminator_forward.18} parent=31 // loop_footer_branch
                %170 = sbr.rel target = $region34
              $region39: #{discriminator_forward.18} parent=31 // loop_exit
                _
            $region32: #{discriminator_forward.18} parent=27 // pred_fallthru
              _
            // Predicated region
            $region40: #{discriminator_forward.18} parent=27 // pred_check
              _
            $region41: #{discriminator_forward.18} parent=27 // pred_check_branch
              %187 = sbr.rel target = $region43
            $region42: #{discriminator_forward.18} parent=27 // pred_region
              _
            $region43: #{discriminator_forward.18} parent=27 // pred_fallthru
              _
          $region28: #{discriminator_forward.18} parent=23 // pred_fallthru
            _
          %188 = vnop
        $region24: #{discriminator_forward.18} parent=19 // pred_fallthru
          _
        // Predicated region
        $region44: #{discriminator_forward.18} parent=19 // pred_check
          %p189 = pneg %p97
        $region45: #{discriminator_forward.18} parent=19 // pred_check_branch
          %191 = sbr.rel (%p189) target = $region47
        $region46: #{discriminator_forward.18} parent=19 // pred_region
          %s192 = smul.u32 2, %s17
          %p193 = scmp.lt.s32.totalorder %s192, 3
          %s194 = scalar_select %p193, %s192, 3
          %s195 = scalar_lea.vmem %s2, %s194
          %s196 = smul.u32 2, %s17
        $region47: #{discriminator_forward.18} parent=19 // pred_fallthru
          _
      $region20: #{discriminator_forward.18} parent=5 // pred_fallthru
        _
      %p197 = scmp.le.s32.totalorder 1, %s9
      %p198 = scmp.lt.s32.totalorder %s9, 17
      %p199 = pnand %p197, %p198
      %p200 = pneg %p199
      // Predicated region
      $region48: #{discriminator_forward.18} parent=5 // pred_check
        _
      $region49: #{discriminator_forward.18} parent=5 // pred_check_branch
        %202 = sbr.rel (%p199) target = $region51
      $region50: #{discriminator_forward.18} parent=5 // pred_region
        %s203 = ssub.s32 %s9, 1
        %s204 = sand.u32 %s43, 1
        %s205 = sand.u32 %s43, 1
        %s206 = smul.addr %s205, 32
        %s207 = scalar_lea.vmem [#allocation3], %s206
        // Predicated region
        $region52: #{discriminator_forward.18} parent=50 // pred_check
          %p208 = pneg %p56
        $region53: #{discriminator_forward.18} parent=50 // pred_check_branch
          %210 = sbr.rel (%p208) target = $region55
        $region54: #{discriminator_forward.18} parent=50 // pred_region
          _
        $region55: #{discriminator_forward.18} parent=50 // pred_fallthru
          _
        %s211 = sand.u32 %s43, 1
        %s212 = sand.u32 %s43, 1
        %s213 = smul.addr %s212, 32
        %s214 = scalar_lea.vmem [#allocation3], %s213
        %p215 = pneg %p56
        %p216 = pneg %p53
        %p217 = pneg %p77
        %p218 = pneg %p74
        %s219 = smul.u32 2, %s20
        %p220 = scmp.lt.s32.totalorder %s219, 3
        %s221 = scalar_select %p220, %s219, 3
        %s222 = scalar_lea.vmem %s2, %s221
        %p223 = pneg %p103
        %p224 = pneg %p100
        %p225 = pneg %p131
        %p226 = pneg %p128
        %s227 = sand.u32 %s118, 1
        %s228 = sand.u32 %s118, 1
        %s229 = smul.addr %s228, 16
        %s230 = scalar_lea.vmem [#allocation4], %s229
        %s231 = smul.u32 2, %s19
        %s232 = smul.u32 4, %s21
        %s233 = smul.u32 2, %s20
        %p234 = scmp.lt.s32.totalorder %s233, 3
        %s235 = scalar_select %p234, %s233, 3
        %s236 = scalar_lea.vmem %s2, %s235
        %s237 = smul.u32 2, %s20
        %s238 = smul.u32 2, %s19
        %s239 = smul.u32 2, %s20
        %p240 = scmp.eq.s32.totalorder %s21, 0
        // Predicated region
        $region56: #{discriminator_forward.18} parent=50 // pred_check
          %p241 = pneg %p240
        $region57: #{discriminator_forward.18} parent=50 // pred_check_branch
          %243 = sbr.rel (%p241) target = $region59
        $region58: #{discriminator_forward.18} parent=50 // pred_region
          %244 = vst [vmem:[#allocation2] sm:$0xff] 0.0
          %245 = vst [vmem:[#allocation2 + $0x8] sm:$0xff] 0.0
          %246 = vst [vmem:[#allocation2 + $0x10] sm:$0xff] 0.0
          %247 = vst [vmem:[#allocation2 + $0x18] sm:$0xff] 0.0
        $region59: #{discriminator_forward.18} parent=50 // pred_fallthru
          _
        %s248 = smul.u32 %s21, 512
        %s249 = smul.u32 %s20, 256
        %s250 = sshra.s32 %s249, 7
        %s251 = sand.u32 %s249, 127
        %s252 = sshra.s32 %s248, 3
        %s253 = sand.u32 %s248, 7
        %s254 = smul.u32 %s252, 4
        %s255 = sadd.s32 %s250, %s254
        %s256 = smul.addr %s255, 4
        %s257 = scalar_lea.vmem %s1, %s256
        %v258 = vld [vmem:[%s257] sm:$0xff]
        %v259 = vld [vmem:[%s257 + $0x10] sm:$0xff]
        %v260 = vld [vmem:[%s257 + $0x20] sm:$0xff]
        %v261 = vld [vmem:[%s257 + $0x30] sm:$0xff]
        %v262 = vld [vmem:[%s257 + $0x40] sm:$0xff]
        %v263 = vld [vmem:[%s257 + $0x50] sm:$0xff]
        %v264 = vld [vmem:[%s257 + $0x60] sm:$0xff]
        %v265 = vld [vmem:[%s257 + $0x70] sm:$0xff]
        %v266 = vld [vmem:[%s257 + $0x80] sm:$0xff]
        %v267 = vld [vmem:[%s257 + $0x90] sm:$0xff]
        %v268 = vld [vmem:[%s257 + $0xa0] sm:$0xff]
        %v269 = vld [vmem:[%s257 + $0xb0] sm:$0xff]
        %v270 = vld [vmem:[%s257 + $0xc0] sm:$0xff]
        %v271 = vld [vmem:[%s257 + $0xd0] sm:$0xff]
        %v272 = vld [vmem:[%s257 + $0xe0] sm:$0xff]
        %v273 = vld [vmem:[%s257 + $0xf0] sm:$0xff]
        %v274 = vld [vmem:[%s257 + $0x100] sm:$0xff]
        %v275 = vld [vmem:[%s257 + $0x110] sm:$0xff]
        %v276 = vld [vmem:[%s257 + $0x120] sm:$0xff]
        %v277 = vld [vmem:[%s257 + $0x130] sm:$0xff]
        %v278 = vld [vmem:[%s257 + $0x140] sm:$0xff]
        %v279 = vld [vmem:[%s257 + $0x150] sm:$0xff]
        %v280 = vld [vmem:[%s257 + $0x160] sm:$0xff]
        %v281 = vld [vmem:[%s257 + $0x170] sm:$0xff]
        %v282 = vld [vmem:[%s257 + $0x180] sm:$0xff]
        %v283 = vld [vmem:[%s257 + $0x190] sm:$0xff]
        %v284 = vld [vmem:[%s257 + $0x1a0] sm:$0xff]
        %v285 = vld [vmem:[%s257 + $0x1b0] sm:$0xff]
        %v286 = vld [vmem:[%s257 + $0x1c0] sm:$0xff]
        %v287 = vld [vmem:[%s257 + $0x1d0] sm:$0xff]
        %v288 = vld [vmem:[%s257 + $0x1e0] sm:$0xff]
        %v289 = vld [vmem:[%s257 + $0x1f0] sm:$0xff]
        %v290 = vld [vmem:[%s257 + $0x200] sm:$0xff]
        %v291 = vld [vmem:[%s257 + $0x210] sm:$0xff]
        %v292 = vld [vmem:[%s257 + $0x220] sm:$0xff]
        %v293 = vld [vmem:[%s257 + $0x230] sm:$0xff]
        %v294 = vld [vmem:[%s257 + $0x240] sm:$0xff]
        %v295 = vld [vmem:[%s257 + $0x250] sm:$0xff]
        %v296 = vld [vmem:[%s257 + $0x260] sm:$0xff]
        %v297 = vld [vmem:[%s257 + $0x270] sm:$0xff]
        %v298 = vld [vmem:[%s257 + $0x280] sm:$0xff]
        %v299 = vld [vmem:[%s257 + $0x290] sm:$0xff]
        %v300 = vld [vmem:[%s257 + $0x2a0] sm:$0xff]
        %v301 = vld [vmem:[%s257 + $0x2b0] sm:$0xff]
        %v302 = vld [vmem:[%s257 + $0x2c0] sm:$0xff]
        %v303 = vld [vmem:[%s257 + $0x2d0] sm:$0xff]
        %v304 = vld [vmem:[%s257 + $0x2e0] sm:$0xff]
        %v305 = vld [vmem:[%s257 + $0x2f0] sm:$0xff]
        %v306 = vld [vmem:[%s257 + $0x300] sm:$0xff]
        %v307 = vld [vmem:[%s257 + $0x310] sm:$0xff]
        %v308 = vld [vmem:[%s257 + $0x320] sm:$0xff]
        %v309 = vld [vmem:[%s257 + $0x330] sm:$0xff]
        %v310 = vld [vmem:[%s257 + $0x340] sm:$0xff]
        %v311 = vld [vmem:[%s257 + $0x350] sm:$0xff]
        %v312 = vld [vmem:[%s257 + $0x360] sm:$0xff]
        %v313 = vld [vmem:[%s257 + $0x370] sm:$0xff]
        %v314 = vld [vmem:[%s257 + $0x380] sm:$0xff]
        %v315 = vld [vmem:[%s257 + $0x390] sm:$0xff]
        %v316 = vld [vmem:[%s257 + $0x3a0] sm:$0xff]
        %v317 = vld [vmem:[%s257 + $0x3b0] sm:$0xff]
        %v318 = vld [vmem:[%s257 + $0x3c0] sm:$0xff]
        %v319 = vld [vmem:[%s257 + $0x3d0] sm:$0xff]
        %v320 = vld [vmem:[%s257 + $0x3e0] sm:$0xff]
        %v321 = vld [vmem:[%s257 + $0x3f0] sm:$0xff]
        %v322 = vld [vmem:[#allocation2] sm:$0xff]
        %v323 = vld [vmem:[#allocation2 + $0x8] sm:$0xff]
        %v324 = vld [vmem:[#allocation2 + $0x10] sm:$0xff]
        %v325 = vld [vmem:[#allocation2 + $0x18] sm:$0xff]
        %v326 = vld [vmem:[%s207] sm:$0xff]
        %v327 = vld [vmem:[%s207 + $0x8] sm:$0xff]
        %v328 = vld [vmem:[%s207 + $0x10] sm:$0xff]
        %v329 = vld [vmem:[%s207 + $0x18] sm:$0xff]
        %v334 = vunpack.c.l.b16 %v326
        %v335 = vunpack.c.h.b16 %v326
        %v336 = vunpack.c.l.b16 %v327
        %v337 = vunpack.c.h.b16 %v327
        %v338 = vunpack.c.l.b16 %v328
        %v339 = vunpack.c.h.b16 %v328
        %v340 = vunpack.c.l.b16 %v329
        %v341 = vunpack.c.h.b16 %v329
        %v342 = vpack.c.b16 %v338, %v334
        %v343 = vpack.c.b16 %v339, %v335
        %v344 = vpack.c.b16 %v340, %v336
        %v345 = vpack.c.b16 %v341, %v337
        %v414 = vunpack.c.l.b16 %v258
        %v415 = vunpack.c.h.b16 %v258
        %v416 = vunpack.c.l.b16 %v259
        %v417 = vunpack.c.h.b16 %v259
        %v418 = vunpack.c.l.b16 %v260
        %v419 = vunpack.c.h.b16 %v260
        %v420 = vunpack.c.l.b16 %v261
        %v421 = vunpack.c.h.b16 %v261
        %v422 = vunpack.c.l.b16 %v262
        %v423 = vunpack.c.h.b16 %v262
        %v424 = vunpack.c.l.b16 %v263
        %v425 = vunpack.c.h.b16 %v263
        %v426 = vunpack.c.l.b16 %v264
        %v427 = vunpack.c.h.b16 %v264
        %v428 = vunpack.c.l.b16 %v265
        %v429 = vunpack.c.h.b16 %v265
        %v430 = vunpack.c.l.b16 %v266
        %v431 = vunpack.c.h.b16 %v266
        %v432 = vunpack.c.l.b16 %v267
        %v433 = vunpack.c.h.b16 %v267
        %v434 = vunpack.c.l.b16 %v268
        %v435 = vunpack.c.h.b16 %v268
        %v436 = vunpack.c.l.b16 %v269
        %v437 = vunpack.c.h.b16 %v269
        %v438 = vunpack.c.l.b16 %v270
        %v439 = vunpack.c.h.b16 %v270
        %v440 = vunpack.c.l.b16 %v271
        %v441 = vunpack.c.h.b16 %v271
        %v442 = vunpack.c.l.b16 %v272
        %v443 = vunpack.c.h.b16 %v272
        %v444 = vunpack.c.l.b16 %v273
        %v445 = vunpack.c.h.b16 %v273
        %v446 = vunpack.c.l.b16 %v274
        %v447 = vunpack.c.h.b16 %v274
        %v448 = vunpack.c.l.b16 %v275
        %v449 = vunpack.c.h.b16 %v275
        %v450 = vunpack.c.l.b16 %v276
        %v451 = vunpack.c.h.b16 %v276
        %v452 = vunpack.c.l.b16 %v277
        %v453 = vunpack.c.h.b16 %v277
        %v454 = vunpack.c.l.b16 %v278
        %v455 = vunpack.c.h.b16 %v278
        %v456 = vunpack.c.l.b16 %v279
        %v457 = vunpack.c.h.b16 %v279
        %v458 = vunpack.c.l.b16 %v280
        %v459 = vunpack.c.h.b16 %v280
        %v460 = vunpack.c.l.b16 %v281
        %v461 = vunpack.c.h.b16 %v281
        %v462 = vunpack.c.l.b16 %v282
        %v463 = vunpack.c.h.b16 %v282
        %v464 = vunpack.c.l.b16 %v283
        %v465 = vunpack.c.h.b16 %v283
        %v466 = vunpack.c.l.b16 %v284
        %v467 = vunpack.c.h.b16 %v284
        %v468 = vunpack.c.l.b16 %v285
        %v469 = vunpack.c.h.b16 %v285
        %v470 = vunpack.c.l.b16 %v286
        %v471 = vunpack.c.h.b16 %v286
        %v472 = vunpack.c.l.b16 %v287
        %v473 = vunpack.c.h.b16 %v287
        %v474 = vunpack.c.l.b16 %v288
        %v475 = vunpack.c.h.b16 %v288
        %v476 = vunpack.c.l.b16 %v289
        %v477 = vunpack.c.h.b16 %v289
        %v478 = vunpack.c.l.b16 %v290
        %v479 = vunpack.c.h.b16 %v290
        %v480 = vunpack.c.l.b16 %v291
        %v481 = vunpack.c.h.b16 %v291
        %v482 = vunpack.c.l.b16 %v292
        %v483 = vunpack.c.h.b16 %v292
        %v484 = vunpack.c.l.b16 %v293
        %v485 = vunpack.c.h.b16 %v293
        %v486 = vunpack.c.l.b16 %v294
        %v487 = vunpack.c.h.b16 %v294
        %v488 = vunpack.c.l.b16 %v295
        %v489 = vunpack.c.h.b16 %v295
        %v490 = vunpack.c.l.b16 %v296
        %v491 = vunpack.c.h.b16 %v296
        %v492 = vunpack.c.l.b16 %v297
        %v493 = vunpack.c.h.b16 %v297
        %v494 = vunpack.c.l.b16 %v298
        %v495 = vunpack.c.h.b16 %v298
        %v496 = vunpack.c.l.b16 %v299
        %v497 = vunpack.c.h.b16 %v299
        %v498 = vunpack.c.l.b16 %v300
        %v499 = vunpack.c.h.b16 %v300
        %v500 = vunpack.c.l.b16 %v301
        %v501 = vunpack.c.h.b16 %v301
        %v502 = vunpack.c.l.b16 %v302
        %v503 = vunpack.c.h.b16 %v302
        %v504 = vunpack.c.l.b16 %v303
        %v505 = vunpack.c.h.b16 %v303
        %v506 = vunpack.c.l.b16 %v304
        %v507 = vunpack.c.h.b16 %v304
        %v508 = vunpack.c.l.b16 %v305
        %v509 = vunpack.c.h.b16 %v305
        %v510 = vunpack.c.l.b16 %v306
        %v511 = vunpack.c.h.b16 %v306
        %v512 = vunpack.c.l.b16 %v307
        %v513 = vunpack.c.h.b16 %v307
        %v514 = vunpack.c.l.b16 %v308
        %v515 = vunpack.c.h.b16 %v308
        %v516 = vunpack.c.l.b16 %v309
        %v517 = vunpack.c.h.b16 %v309
        %v518 = vunpack.c.l.b16 %v310
        %v519 = vunpack.c.h.b16 %v310
        %v520 = vunpack.c.l.b16 %v311
        %v521 = vunpack.c.h.b16 %v311
        %v522 = vunpack.c.l.b16 %v312
        %v523 = vunpack.c.h.b16 %v312
        %v524 = vunpack.c.l.b16 %v313
        %v525 = vunpack.c.h.b16 %v313
        %v526 = vunpack.c.l.b16 %v314
        %v527 = vunpack.c.h.b16 %v314
        %v528 = vunpack.c.l.b16 %v315
        %v529 = vunpack.c.h.b16 %v315
        %v530 = vunpack.c.l.b16 %v316
        %v531 = vunpack.c.h.b16 %v316
        %v532 = vunpack.c.l.b16 %v317
        %v533 = vunpack.c.h.b16 %v317
        %v534 = vunpack.c.l.b16 %v318
        %v535 = vunpack.c.h.b16 %v318
        %v536 = vunpack.c.l.b16 %v319
        %v537 = vunpack.c.h.b16 %v319
        %v538 = vunpack.c.l.b16 %v320
        %v539 = vunpack.c.h.b16 %v320
        %v540 = vunpack.c.l.b16 %v321
        %v541 = vunpack.c.h.b16 %v321
        %v542 = vpack.c.b16 %v416, %v414
        %v543 = vpack.c.b16 %v417, %v415
        %v544 = vpack.c.b16 %v420, %v418
        %v545 = vpack.c.b16 %v421, %v419
        %v546 = vpack.c.b16 %v424, %v422
        %v547 = vpack.c.b16 %v425, %v423
        %v548 = vpack.c.b16 %v428, %v426
        %v549 = vpack.c.b16 %v429, %v427
        %v550 = vpack.c.b16 %v432, %v430
        %v551 = vpack.c.b16 %v433, %v431
        %v552 = vpack.c.b16 %v436, %v434
        %v553 = vpack.c.b16 %v437, %v435
        %v554 = vpack.c.b16 %v440, %v438
        %v555 = vpack.c.b16 %v441, %v439
        %v556 = vpack.c.b16 %v444, %v442
        %v557 = vpack.c.b16 %v445, %v443
        %v558 = vpack.c.b16 %v448, %v446
        %v559 = vpack.c.b16 %v449, %v447
        %v560 = vpack.c.b16 %v452, %v450
        %v561 = vpack.c.b16 %v453, %v451
        %v562 = vpack.c.b16 %v456, %v454
        %v563 = vpack.c.b16 %v457, %v455
        %v564 = vpack.c.b16 %v460, %v458
        %v565 = vpack.c.b16 %v461, %v459
        %v566 = vpack.c.b16 %v464, %v462
        %v567 = vpack.c.b16 %v465, %v463
        %v568 = vpack.c.b16 %v468, %v466
        %v569 = vpack.c.b16 %v469, %v467
        %v570 = vpack.c.b16 %v472, %v470
        %v571 = vpack.c.b16 %v473, %v471
        %v572 = vpack.c.b16 %v476, %v474
        %v573 = vpack.c.b16 %v477, %v475
        %v574 = vpack.c.b16 %v480, %v478
        %v575 = vpack.c.b16 %v481, %v479
        %v576 = vpack.c.b16 %v484, %v482
        %v577 = vpack.c.b16 %v485, %v483
        %v578 = vpack.c.b16 %v488, %v486
        %v579 = vpack.c.b16 %v489, %v487
        %v580 = vpack.c.b16 %v492, %v490
        %v581 = vpack.c.b16 %v493, %v491
        %v582 = vpack.c.b16 %v496, %v494
        %v583 = vpack.c.b16 %v497, %v495
        %v584 = vpack.c.b16 %v500, %v498
        %v585 = vpack.c.b16 %v501, %v499
        %v586 = vpack.c.b16 %v504, %v502
        %v587 = vpack.c.b16 %v505, %v503
        %v588 = vpack.c.b16 %v508, %v506
        %v589 = vpack.c.b16 %v509, %v507
        %v590 = vpack.c.b16 %v512, %v510
        %v591 = vpack.c.b16 %v513, %v511
        %v592 = vpack.c.b16 %v516, %v514
        %v593 = vpack.c.b16 %v517, %v515
        %v594 = vpack.c.b16 %v520, %v518
        %v595 = vpack.c.b16 %v521, %v519
        %v596 = vpack.c.b16 %v524, %v522
        %v597 = vpack.c.b16 %v525, %v523
        %v598 = vpack.c.b16 %v528, %v526
        %v599 = vpack.c.b16 %v529, %v527
        %v600 = vpack.c.b16 %v532, %v530
        %v601 = vpack.c.b16 %v533, %v531
        %v602 = vpack.c.b16 %v536, %v534
        %v603 = vpack.c.b16 %v537, %v535
        %v604 = vpack.c.b16 %v540, %v538
        %v605 = vpack.c.b16 %v541, %v539
        %670 = vmatprep.subr.bf16.mxu0 %v557
        %671 = vmatpush1.bf16.msra.mxu0 %v556
        %672 = vmatprep.subr.bf16.mxu0 %v555
        %673 = vmatpush1.bf16.msra.mxu0 %v554
        %674 = vmatprep.subr.bf16.mxu0 %v553
        %675 = vmatpush1.bf16.msra.mxu0 %v552
        %676 = vmatprep.subr.bf16.mxu0 %v551
        %677 = vmatpush1.bf16.msra.mxu0 %v550
        %678 = vmatprep.subr.bf16.mxu0 %v549
        %679 = vmatpush1.bf16.msra.mxu0 %v548
        %680 = vmatprep.subr.bf16.mxu0 %v547
        %681 = vmatpush1.bf16.msra.mxu0 %v546
        %682 = vmatprep.subr.bf16.mxu0 %v545
        %683 = vmatpush1.bf16.msra.mxu0 %v544
        %684 = vmatprep.subr.bf16.mxu0 %v543
        %685 = vmatpush1.bf16.msra.mxu0 %v542
        %686 = vmatprep.subr.bf16.mxu0 %v573
        %687 = vmatpush2.bf16.msra.mxu0 %v572
        %688 = vmatprep.subr.bf16.mxu0 %v571
        %689 = vmatpush2.bf16.msra.mxu0 %v570
        %690 = vmatprep.subr.bf16.mxu0 %v569
        %691 = vmatpush2.bf16.msra.mxu0 %v568
        %692 = vmatprep.subr.bf16.mxu0 %v567
        %693 = vmatpush2.bf16.msra.mxu0 %v566
        %694 = vmatprep.subr.bf16.mxu0 %v565
        %695 = vmatpush2.bf16.msra.mxu0 %v564
        %696 = vmatprep.subr.bf16.mxu0 %v563
        %697 = vmatpush2.bf16.msra.mxu0 %v562
        %698 = vmatprep.subr.bf16.mxu0 %v561
        %699 = vmatpush2.bf16.msra.mxu0 %v560
        %700 = vmatprep.subr.bf16.mxu0 %v559
        %701 = vmatpush2.bf16.msra.mxu0 %v558
        %702 = vmatprep.mubr.bf16.mxu0 %v343
        %703 = vmatmul.mubr.bf16.gmra.mxu0 %v342
        %v704 = vpop.f32.mrf.mxu0
        %v705 = vadd.f32 0.0, %v704
        %v706 = vpop.f32.mrf.mxu0
        %v707 = vadd.f32 0.0, %v706
        %v708 = vpop.f32.mrf.mxu0
        %v709 = vadd.f32 0.0, %v708
        %v710 = vpop.f32.mrf.mxu0
        %v711 = vadd.f32 0.0, %v710
        %712 = vdwg.mxu0
        %713 = vmatprep.subr.bf16.mxu0 %v589
        %714 = vmatpush1.bf16.msra.mxu0 %v588
        %715 = vmatprep.subr.bf16.mxu0 %v587
        %716 = vmatpush1.bf16.msra.mxu0 %v586
        %717 = vmatprep.subr.bf16.mxu0 %v585
        %718 = vmatpush1.bf16.msra.mxu0 %v584
        %719 = vmatprep.subr.bf16.mxu0 %v583
        %720 = vmatpush1.bf16.msra.mxu0 %v582
        %721 = vmatprep.subr.bf16.mxu0 %v581
        %722 = vmatpush1.bf16.msra.mxu0 %v580
        %723 = vmatprep.subr.bf16.mxu0 %v579
        %724 = vmatpush1.bf16.msra.mxu0 %v578
        %725 = vmatprep.subr.bf16.mxu0 %v577
        %726 = vmatpush1.bf16.msra.mxu0 %v576
        %727 = vmatprep.subr.bf16.mxu0 %v575
        %728 = vmatpush1.bf16.msra.mxu0 %v574
        %729 = vmatprep.subr.bf16.mxu0 %v605
        %730 = vmatpush2.bf16.msra.mxu0 %v604
        %731 = vmatprep.subr.bf16.mxu0 %v603
        %732 = vmatpush2.bf16.msra.mxu0 %v602
        %733 = vmatprep.subr.bf16.mxu0 %v601
        %734 = vmatpush2.bf16.msra.mxu0 %v600
        %735 = vmatprep.subr.bf16.mxu0 %v599
        %736 = vmatpush2.bf16.msra.mxu0 %v598
        %737 = vmatprep.subr.bf16.mxu0 %v597
        %738 = vmatpush2.bf16.msra.mxu0 %v596
        %739 = vmatprep.subr.bf16.mxu0 %v595
        %740 = vmatpush2.bf16.msra.mxu0 %v594
        %741 = vmatprep.subr.bf16.mxu0 %v593
        %742 = vmatpush2.bf16.msra.mxu0 %v592
        %743 = vmatprep.subr.bf16.mxu0 %v591
        %744 = vmatpush2.bf16.msra.mxu0 %v590
        %745 = vmatprep.mubr.bf16.mxu0 %v345
        %746 = vmatmul.mubr.bf16.gmra.mxu0 %v344
        %v747 = vpop.f32.mrf.mxu0
        %v748 = vadd.f32 %v705, %v747
        %v749 = vpop.f32.mrf.mxu0
        %v750 = vadd.f32 %v707, %v749
        %v751 = vpop.f32.mrf.mxu0
        %v752 = vadd.f32 %v709, %v751
        %v753 = vpop.f32.mrf.mxu0
        %v754 = vadd.f32 %v711, %v753
        %755 = vdwg.mxu0
        %v756 = vadd.f32 %v322, %v748
        %v757 = vadd.f32 %v323, %v750
        %v758 = vadd.f32 %v324, %v752
        %v759 = vadd.f32 %v325, %v754
        %760 = vst [vmem:[#allocation2] sm:$0xff] %v756
        %761 = vst [vmem:[#allocation2 + $0x8] sm:$0xff] %v757
        %762 = vst [vmem:[#allocation2 + $0x10] sm:$0xff] %v758
        %763 = vst [vmem:[#allocation2 + $0x18] sm:$0xff] %v759
        %p764 = scmp.eq.s32.totalorder %s21, 7
        // Predicated region
        $region60: #{discriminator_forward.18} parent=50 // pred_check
          %p765 = pneg %p764
        $region61: #{discriminator_forward.18} parent=50 // pred_check_branch
          %767 = sbr.rel (%p765) target = $region63
        $region62: #{discriminator_forward.18} parent=50 // pred_region
          %v768 = vld [vmem:[#allocation2] sm:$0xff]
          %v769 = vld [vmem:[#allocation2 + $0x8] sm:$0xff]
          %v770 = vld [vmem:[#allocation2 + $0x10] sm:$0xff]
          %v771 = vld [vmem:[#allocation2 + $0x18] sm:$0xff]
          %v772 = vld [vmem:[%s236] sm:$0x3]
          %v774 = vlaneseq
          %v775 = vshrl.u32 %v774, 7
          %v776 = vsub.s32 0, %v775
          %v777 = vrot.slane %v772, %v776
          %v778 = vlaneseq
          %v779 = vshrl.u32 %v778, 7
          %v780 = vsub.s32 1, %v779
          %v781 = vrot.slane %v772, %v780
          %v784 = vadd.f32 %v768, %v777
          %v785 = vadd.f32 %v769, %v781
          %v786 = vadd.f32 %v770, %v777
          %v787 = vadd.f32 %v771, %v781
          %v788 = vpack.c.bf16 %v786, %v784
          %v789 = vpack.c.bf16 %v787, %v785
          %v792 = vunpack.c.l.b16 %v788
          %v793 = vunpack.c.l.b16 %v789
          %v794 = vunpack.c.h.b16 %v788
          %v795 = vunpack.c.h.b16 %v789
          %v796 = vpack.c.b16 %v793, %v792
          %v797 = vpack.c.b16 %v795, %v794
          %800 = vst [vmem:[%s230] sm:$0xff] %v796
          %801 = vst [vmem:[%s230 + $0x8] sm:$0xff] %v797
        $region63: #{discriminator_forward.18} parent=50 // pred_fallthru
          _
        %s802 = sand.u32 %s118, 1
        %s803 = sand.u32 %s118, 1
        %s804 = smul.addr %s803, 16
        %s805 = scalar_lea.vmem [#allocation4], %s804
        // Predicated region
        $region64: #{discriminator_forward.18} parent=50 // pred_check
          %p806 = pneg %p128
        $region65: #{discriminator_forward.18} parent=50 // pred_check_branch
          %808 = sbr.rel (%p806) target = $region67
        $region66: #{discriminator_forward.18} parent=50 // pred_region
          %s809 = smul.u32 2, %s19
          %s810 = smul.u32 2, %s20
          %s811 = smul.addr %s809, 4
          %s812 = sadd.s32 %s810, %s811
          %s813 = smul.addr %s812, 4
          %s814 = scalar_lea.vmem %s3, %s813
          // Predicated region
          $region68: #{discriminator_forward.18} parent=66 // pred_check
            _
          $region69: #{discriminator_forward.18} parent=66 // pred_check_branch
            %816 = sbr.rel (0) target = $region71
          $region70: #{discriminator_forward.18} parent=66 // pred_region
            // Predicated region
            $region72: #{discriminator_forward.18} parent=70 // pred_check
              _
            $region73: #{discriminator_forward.18} parent=70 // pred_check_branch
              %818 = sbr.rel (0) target = $region75
            $region74: #{discriminator_forward.18} parent=70 // pred_region
              // Predicated region
              $region87: #{discriminator_forward.18} parent=74 // pred_check
                _
              $region88: #{discriminator_forward.18} parent=74 // pred_check_branch
                %836 = sbr.rel (0) target = $region90
              $region89: #{discriminator_forward.18} parent=74 // pred_region
                loop: start=0, step=1, limit=1
                $region91: #{discriminator_forward.18} parent=89 // loop_pre_header
                  _
                $region92: #{discriminator_forward.18} parent=89 // loop_header
                  %s838 = sphi 0, %s842
                  %p839 = scmp.ge.s32.totalorder %s838, 1
                  %s843 = sphi %s805, %s805
                  %s844 = sphi %s814, %s814
                $region93: #{discriminator_forward.18} parent=89 // loop_header_branch
                  %841 = sbr.rel (%p839) target = $region97
                $region94: #{discriminator_forward.18} parent=89 // loop_body
                  %v845 = vld [vmem:[%s843] sm:$0xff]
                  %846 = vst [vmem:[%s844] sm:$0xff] %v845
                  %v847 = vld [vmem:[%s843 + $0x8] sm:$0xff]
                  %848 = vst [vmem:[%s844 + $0x10] sm:$0xff] %v847
                $region95: #{discriminator_forward.18} parent=89 // loop_footer
                  %s842 = sadd.s32 1, %s838
                $region96: #{discriminator_forward.18} parent=89 // loop_footer_branch
                  %837 = sbr.rel target = $region92
                $region97: #{discriminator_forward.18} parent=89 // loop_exit
                  _
              $region90: #{discriminator_forward.18} parent=74 // pred_fallthru
                _
              // Predicated region
              $region98: #{discriminator_forward.18} parent=74 // pred_check
                _
              $region99: #{discriminator_forward.18} parent=74 // pred_check_branch
                %850 = sbr.rel target = $region101
              $region100: #{discriminator_forward.18} parent=74 // pred_region
                _
              $region101: #{discriminator_forward.18} parent=74 // pred_fallthru
                _
            $region75: #{discriminator_forward.18} parent=70 // pred_fallthru
              _
            // Predicated region
            $region76: #{discriminator_forward.18} parent=70 // pred_check
              _
            $region77: #{discriminator_forward.18} parent=70 // pred_check_branch
              %820 = sbr.rel target = $region79
            $region78: #{discriminator_forward.18} parent=70 // pred_region
              %s822 = ssub.s32 256, 1
              loop: start=0, step=1, limit=1
              $region80: #{discriminator_forward.18} parent=78 // loop_pre_header
                _
              $region81: #{discriminator_forward.18} parent=78 // loop_header
                %s824 = sphi 0, %s828
                %p825 = scmp.ge.s32.totalorder %s824, 1
                %s829 = sphi %s805, %s805
                %s830 = sphi %s814, %s814
              $region82: #{discriminator_forward.18} parent=78 // loop_header_branch
                %827 = sbr.rel (%p825) target = $region86
              $region83: #{discriminator_forward.18} parent=78 // loop_body
                %v831 = vld [vmem:[%s829] sm:%s822]
                %832 = vst [vmem:[%s830] sm:%s822] %v831
                %v833 = vld [vmem:[%s829 + $0x8] sm:%s822]
                %834 = vst [vmem:[%s830 + $0x10] sm:%s822] %v833
              $region84: #{discriminator_forward.18} parent=78 // loop_footer
                %s828 = sadd.s32 1, %s824
              $region85: #{discriminator_forward.18} parent=78 // loop_footer_branch
                %823 = sbr.rel target = $region81
              $region86: #{discriminator_forward.18} parent=78 // loop_exit
                _
            $region79: #{discriminator_forward.18} parent=70 // pred_fallthru
              _
          $region71: #{discriminator_forward.18} parent=66 // pred_fallthru
            _
          %851 = vnop
        $region67: #{discriminator_forward.18} parent=50 // pred_fallthru
          _
      $region51: #{discriminator_forward.18} parent=5 // pred_fallthru
        _
      %p852 = scmp.le.s32.totalorder 2, %s9
      // Predicated region
      $region102: #{discriminator_forward.18} parent=5 // pred_check
        %p853 = pneg %p852
      $region103: #{discriminator_forward.18} parent=5 // pred_check_branch
        %855 = sbr.rel (%p853) target = $region105
      $region104: #{discriminator_forward.18} parent=5 // pred_region
        %s856 = ssub.s32 %s9, 2
        // Predicated region
        $region106: #{discriminator_forward.18} parent=104 // pred_check
          %p857 = pneg %p134
        $region107: #{discriminator_forward.18} parent=104 // pred_check_branch
          %859 = sbr.rel (%p857) target = $region109
        $region108: #{discriminator_forward.18} parent=104 // pred_region
          %s860 = sand.u32 %s119, 1
          %s861 = sand.u32 %s119, 1
          %s862 = smul.addr %s861, 16
          %s863 = scalar_lea.vmem [#allocation4], %s862
        $region109: #{discriminator_forward.18} parent=104 // pred_fallthru
          _
      $region105: #{discriminator_forward.18} parent=5 // pred_fallthru
        _
    $region6: #{discriminator_forward.18} parent=1 // loop_footer
      %s13 = sadd.s32 1, %s9
    $region7: #{discriminator_forward.18} parent=1 // loop_footer_branch
      %8 = sbr.rel target = $region3
    $region8: #{discriminator_forward.18} parent=1 // loop_exit
      _

// kernel: discriminator_forward.19
$region0: #{discriminator_forward.19}
  #allocation0 [shape = 'u32[]', space=smem, size = 0x4, offset = 0x4, fixed_abs, tag = 'smem constant byte address 0x4 - core index']
  #allocation1 [shape = 'u32[144,128]{1,0:T(1,128)}', space=vmem, size = 0x12000, scoped, tag = 'internal scratch']
  %s0 = inlined_call_operand.vmem [shape: bf16[2,4,512], index: 0, kind: input, shape index: {}]
  %s1 = inlined_call_operand.vmem [shape: f32[2,1,512], index: 1, kind: output, shape index: {0}]
  %s2 = inlined_call_operand.vmem [shape: f32[2,1,512], index: 2, kind: output, shape index: {1}]
  %3 = xla_tuple %s1, %s2
  %s4 = sld [smem:[#allocation0]]
  $region53: #{discriminator_forward.19} parent=0
    _
  %s6 = ssub.s32 1, %s4
  %s7 = scalar_select 0, %s6, %s4
  loop: start=0, step=1, limit=6
  $region2: #{discriminator_forward.19} parent=0 // loop_pre_header
    _
  $region3: #{discriminator_forward.19} parent=0 // loop_header
    %s9 = sphi 0, %s13
    %p10 = scmp.ge.s32.totalorder %s9, 6
    %s16 = sphi 0, %s35
    %s17 = sphi 0, %s31
    %s18 = sphi 0, %s27
    %s19 = sphi 0, %s16
    %s20 = sphi 0, %s17
    %s21 = sphi 0, %s18
    %s22 = sphi 0, %s19
    %s23 = sphi 0, %s20
    %s24 = sphi 0, %s21
    %s42 = sphi 0, %s44
    %s45 = sphi 0, %s42
    %s46 = sphi 0, %s45
    %s62 = sphi 0, %s46
    %s70 = sphi 0, %s72
    %s73 = sphi 0, %s70
    %s74 = sphi 0, %s73
    %s90 = sphi 0, %s74
    %s98 = sphi 0, %s100
    %s101 = sphi 0, %s98
    %s102 = sphi 0, %s101
    %s118 = sphi 0, %s102
  $region4: #{discriminator_forward.19} parent=0 // loop_header_branch
    %12 = sbr.rel (%p10) target = $region8
  $region5: #{discriminator_forward.19} parent=0 // loop_body
    %s14 = ssub.s32 %s9, 1
    %s15 = ssub.s32 %s9, 2
    %s25 = sadd.s32 1, %s18
    %p26 = scmp.ge.s32.totalorder %s25, 1
    %s27 = scalar_select %p26, 0, %s25
    %s28 = sadd.s32 1, %s17
    %s29 = scalar_select %p26, %s28, %s17
    %p30 = scmp.ge.s32.totalorder %s29, 2
    %s31 = scalar_select %p30, 0, %s29
    %s32 = sadd.s32 1, %s16
    %s33 = scalar_select %p30, %s32, %s16
    %p34 = scmp.ge.s32.totalorder %s33, 2
    %s35 = scalar_select %p34, 0, %s33
    %s36 = ssub.s32 %s16, %s35
    %s37 = ssub.s32 %s18, %s27
    %s38 = sor.u32 %s36, %s37
    %s39 = ssub.s32 %s17, %s31
    %s40 = sor.u32 %s38, %s39
    %p41 = scmp.eq.s32.totalorder %s40, 0
    %s43 = sadd.s32 %s42, 1
    %s44 = scalar_select %p41, %s42, %s43
    %p47 = pneg %p41
    %p48 = scmp.eq.s32.totalorder %s9, 3
    %p49 = por %p47, %p48
    %p50 = scmp.ne.s32.totalorder %s42, %s45
    %p51 = scmp.eq.s32.totalorder %s9, 0
    %p52 = por %p50, %p51
    %p53 = scmp.ne.s32.totalorder %s42, %s45
    %p54 = scmp.eq.s32.totalorder %s14, 3
    %p55 = por %p53, %p54
    %p56 = scmp.ne.s32.totalorder %s45, %s46
    %p57 = scmp.eq.s32.totalorder %s14, 0
    %p58 = por %p56, %p57
    %p59 = scmp.ne.s32.totalorder %s45, %s46
    %p60 = scmp.eq.s32.totalorder %s15, 3
    %p61 = por %p59, %p60
    %p63 = scmp.ne.s32.totalorder %s46, %s62
    %p64 = scmp.eq.s32.totalorder %s15, 0
    %p65 = por %p63, %p64
    %s66 = ssub.s32 %s16, %s35
    %s67 = ssub.s32 %s17, %s31
    %s68 = sor.u32 %s66, %s67
    %p69 = scmp.eq.s32.totalorder %s68, 0
    %s71 = sadd.s32 %s70, 1
    %s72 = scalar_select %p69, %s70, %s71
    %p75 = pneg %p69
    %p76 = scmp.eq.s32.totalorder %s9, 3
    %p77 = por %p75, %p76
    %p78 = scmp.ne.s32.totalorder %s70, %s73
    %p79 = scmp.eq.s32.totalorder %s9, 0
    %p80 = por %p78, %p79
    %p81 = scmp.ne.s32.totalorder %s70, %s73
    %p82 = scmp.eq.s32.totalorder %s14, 3
    %p83 = por %p81, %p82
    %p84 = scmp.ne.s32.totalorder %s73, %s74
    %p85 = scmp.eq.s32.totalorder %s14, 0
    %p86 = por %p84, %p85
    %p87 = scmp.ne.s32.totalorder %s73, %s74
    %p88 = scmp.eq.s32.totalorder %s15, 3
    %p89 = por %p87, %p88
    %p91 = scmp.ne.s32.totalorder %s74, %s90
    %p92 = scmp.eq.s32.totalorder %s15, 0
    %p93 = por %p91, %p92
    %s94 = ssub.s32 %s16, %s35
    %s95 = ssub.s32 %s17, %s31
    %s96 = sor.u32 %s94, %s95
    %p97 = scmp.eq.s32.totalorder %s96, 0
    %s99 = sadd.s32 %s98, 1
    %s100 = scalar_select %p97, %s98, %s99
    %p103 = pneg %p97
    %p104 = scmp.eq.s32.totalorder %s9, 3
    %p105 = por %p103, %p104
    %p106 = scmp.ne.s32.totalorder %s98, %s101
    %p107 = scmp.eq.s32.totalorder %s9, 0
    %p108 = por %p106, %p107
    %p109 = scmp.ne.s32.totalorder %s98, %s101
    %p110 = scmp.eq.s32.totalorder %s14, 3
    %p111 = por %p109, %p110
    %p112 = scmp.ne.s32.totalorder %s101, %s102
    %p113 = scmp.eq.s32.totalorder %s14, 0
    %p114 = por %p112, %p113
    %p115 = scmp.ne.s32.totalorder %s101, %s102
    %p116 = scmp.eq.s32.totalorder %s15, 3
    %p117 = por %p115, %p116
    %p119 = scmp.ne.s32.totalorder %s102, %s118
    %p120 = scmp.eq.s32.totalorder %s15, 0
    %p121 = por %p119, %p120
    %p122 = scmp.le.s32.totalorder 1, %s9
    %p123 = scmp.lt.s32.totalorder %s9, 5
    %p124 = pnand %p122, %p123
    %p125 = pneg %p124
    // Predicated region
    $region9: #{discriminator_forward.19} parent=5 // pred_check
      _
    $region10: #{discriminator_forward.19} parent=5 // pred_check_branch
      %127 = sbr.rel (%p124) target = $region12
    $region11: #{discriminator_forward.19} parent=5 // pred_region
      %s128 = ssub.s32 %s9, 1
    $region12: #{discriminator_forward.19} parent=5 // pred_fallthru
      _
    %p129 = scmp.lt.s32.totalorder %s9, 4
    // Predicated region
    $region13: #{discriminator_forward.19} parent=5 // pred_check
      %p130 = pneg %p129
    $region14: #{discriminator_forward.19} parent=5 // pred_check_branch
      %132 = sbr.rel (%p130) target = $region16
    $region15: #{discriminator_forward.19} parent=5 // pred_region
      // Predicated region
      $region17: #{discriminator_forward.19} parent=15 // pred_check
        %p133 = pneg %p52
      $region18: #{discriminator_forward.19} parent=15 // pred_check_branch
        %135 = sbr.rel (%p133) target = $region20
      $region19: #{discriminator_forward.19} parent=15 // pred_region
        %s136 = smul.u32 2, %s17
        %p137 = scmp.lt.s32.totalorder %s16, 1
        %s138 = scalar_select %p137, %s16, 1
        %p139 = scmp.lt.s32.totalorder %s18, 0
        %s140 = scalar_select %p139, %s18, 0
        %p141 = scmp.lt.s32.totalorder %s136, 3
        %s142 = scalar_select %p141, %s136, 3
        %s143 = smul.addr %s140, 4
        %s144 = sadd.s32 %s142, %s143
        %s145 = smul.addr %s138, 4
        %s146 = sadd.s32 %s144, %s145
        %s147 = smul.addr %s146, 2
        %s148 = scalar_lea.vmem %s0, %s147
        %s149 = smul.u32 2, %s17
      $region20: #{discriminator_forward.19} parent=15 // pred_fallthru
        _
    $region16: #{discriminator_forward.19} parent=5 // pred_fallthru
      _
    %p150 = scmp.le.s32.totalorder 1, %s9
    %p151 = scmp.lt.s32.totalorder %s9, 5
    %p152 = pnand %p150, %p151
    %p153 = pneg %p152
    // Predicated region
    $region21: #{discriminator_forward.19} parent=5 // pred_check
      _
    $region22: #{discriminator_forward.19} parent=5 // pred_check_branch
      %155 = sbr.rel (%p152) target = $region24
    $region23: #{discriminator_forward.19} parent=5 // pred_region
      %s156 = ssub.s32 %s9, 1
      %s157 = smul.u32 2, %s20
      %p158 = scmp.lt.s32.totalorder %s19, 1
      %s159 = scalar_select %p158, %s19, 1
      %p160 = scmp.lt.s32.totalorder %s21, 0
      %s161 = scalar_select %p160, %s21, 0
      %p162 = scmp.lt.s32.totalorder %s157, 3
      %s163 = scalar_select %p162, %s157, 3
      %s164 = smul.addr %s161, 4
      %s165 = sadd.s32 %s163, %s164
      %s166 = smul.addr %s159, 4
      %s167 = sadd.s32 %s165, %s166
      %s168 = smul.addr %s167, 2
      %s169 = scalar_lea.vmem %s0, %s168
      %p170 = pneg %p58
      %p171 = pneg %p55
      %p172 = pneg %p86
      %p173 = pneg %p83
      %s174 = smul.u32 2, %s20
      %p175 = scmp.lt.s32.totalorder %s19, 1
      %s176 = scalar_select %p175, %s19, 1
      %p177 = scmp.lt.s32.totalorder %s174, 3
      %s178 = scalar_select %p177, %s174, 3
      %s179 = smul.addr %s176, 4
      %s180 = sadd.s32 %s178, %s179
      %s181 = scalar_lea.vmem %s1, %s180
      %p182 = pneg %p114
      %p183 = pneg %p111
      %s184 = smul.u32 2, %s20
      %p185 = scmp.lt.s32.totalorder %s19, 1
      %s186 = scalar_select %p185, %s19, 1
      %p187 = scmp.lt.s32.totalorder %s184, 3
      %s188 = scalar_select %p187, %s184, 3
      %s189 = smul.addr %s186, 4
      %s190 = sadd.s32 %s188, %s189
      %s191 = scalar_lea.vmem %s2, %s190
      %s192 = smul.u32 2, %s20
      %p193 = scmp.lt.s32.totalorder %s19, 1
      %s194 = scalar_select %p193, %s19, 1
      %p195 = scmp.lt.s32.totalorder %s21, 0
      %s196 = scalar_select %p195, %s21, 0
      %p197 = scmp.lt.s32.totalorder %s192, 3
      %s198 = scalar_select %p197, %s192, 3
      %s199 = smul.addr %s196, 4
      %s200 = sadd.s32 %s198, %s199
      %s201 = smul.addr %s194, 4
      %s202 = sadd.s32 %s200, %s201
      %s203 = smul.addr %s202, 2
      %s204 = scalar_lea.vmem %s0, %s203
      %s205 = smul.u32 2, %s20
      %s206 = smul.u32 2, %s20
      %p207 = scmp.lt.s32.totalorder %s19, 1
      %s208 = scalar_select %p207, %s19, 1
      %p209 = scmp.lt.s32.totalorder %s206, 3
      %s210 = scalar_select %p209, %s206, 3
      %s211 = smul.addr %s208, 4
      %s212 = sadd.s32 %s210, %s211
      %s213 = scalar_lea.vmem %s1, %s212
      %s214 = smul.u32 2, %s20
      %s215 = smul.u32 2, %s20
      %p216 = scmp.lt.s32.totalorder %s19, 1
      %s217 = scalar_select %p216, %s19, 1
      %p218 = scmp.lt.s32.totalorder %s215, 3
      %s219 = scalar_select %p218, %s215, 3
      %s220 = smul.addr %s217, 4
      %s221 = sadd.s32 %s219, %s220
      %s222 = scalar_lea.vmem %s2, %s221
      %s223 = smul.u32 2, %s20
      %p224 = scmp.eq.s32.totalorder %s21, 0
      // Predicated region
      $region25: #{discriminator_forward.19} parent=23 // pred_check
        %p225 = pneg %p224
      $region26: #{discriminator_forward.19} parent=23 // pred_check_branch
        %227 = sbr.rel (%p225) target = $region28
      $region27: #{discriminator_forward.19} parent=23 // pred_region
        %v228 = vlaneseq
        %vm229 = vcmp.ge.s32.totalorder %v228, 0
        %vm230 = vcmp.lt.s32.totalorder %v228, 256
        %vm231 = vmand %vm229, %vm230
        %232 = vst.msk [vmem:[%s213] sm:$0x3] %vm231, 0.0
        %233 = vst.msk [vmem:[%s222] sm:$0x3] %vm231, 0.0
      $region28: #{discriminator_forward.19} parent=23 // pred_fallthru
        _
      %v234 = vld [vmem:[%s204] sm:$0xf]
      %v235 = vunpack.c.l.bf16 %v234
      %v236 = vld [vmem:[%s213] sm:$0x3]
      %v238 = vcombine.high %v235, %v235
      %vm240 = vcmask 1043456
      %v241 = vsel %vm240, %v235, 0.0
      %v242 = vrot.slane %v241, 4
      %v243 = vadd.f32 %v241, %v242
      %v244 = vrot.slane %v243, 2
      %v245 = vadd.f32 %v243, %v244
      %v246 = vrot.slane %v245, 1
      %v247 = vadd.f32 %v245, %v246
      %v248 = vsel %vm240, %v238, 0.0
      %v249 = vrot.slane %v248, 4
      %v250 = vadd.f32 %v248, %v249
      %v251 = vrot.slane %v250, 2
      %v252 = vadd.f32 %v250, %v251
      %v253 = vrot.slane %v252, 1
      %v254 = vadd.f32 %v252, %v253
      %v257 = vcombine.low %v247, %v254
      %v259 = vunpack.c.l.s4 1966171168
      %v260 = vunpack.c.0.s8 %v259
      %v261 = vlaneseq
      %v262 = vshrl.u32 %v261, 7
      %v263 = vsub.s32 %v260, %v262
      %v264 = vrot.slane %v257, %v263
      %v266 = vunpack.c.l.s4 1966171168
      %v267 = vunpack.c.0.s8 %v266
      %v268 = vlaneseq
      %v269 = vshrl.u32 %v268, 7
      %v270 = vsub.s32 %v267, %v269
      %v271 = vrot.slane %v264, %v270
      %v273 = vadd.f32 %v236, %v271
      %v274 = vlaneseq
      %vm275 = vcmp.ge.s32.totalorder %v274, 0
      %vm276 = vcmp.lt.s32.totalorder %v274, 256
      %vm277 = vmand %vm275, %vm276
      %278 = vst.msk [vmem:[%s213] sm:$0x3] %vm277, %v273
      %v279 = vld [vmem:[%s222] sm:$0x3]
      %v280 = vmul.f32 %v235, %v235
      %v282 = vcombine.high %v280, %v280
      %v284 = vsel %vm240, %v280, 0.0
      %v285 = vrot.slane %v284, 4
      %v286 = vadd.f32 %v284, %v285
      %v287 = vrot.slane %v286, 2
      %v288 = vadd.f32 %v286, %v287
      %v289 = vrot.slane %v288, 1
      %v290 = vadd.f32 %v288, %v289
      %v291 = vsel %vm240, %v282, 0.0
      %v292 = vrot.slane %v291, 4
      %v293 = vadd.f32 %v291, %v292
      %v294 = vrot.slane %v293, 2
      %v295 = vadd.f32 %v293, %v294
      %v296 = vrot.slane %v295, 1
      %v297 = vadd.f32 %v295, %v296
      %v300 = vcombine.low %v290, %v297
      %v302 = vunpack.c.l.s4 1966171168
      %v303 = vunpack.c.0.s8 %v302
      %v304 = vlaneseq
      %v305 = vshrl.u32 %v304, 7
      %v306 = vsub.s32 %v303, %v305
      %v307 = vrot.slane %v300, %v306
      %v309 = vunpack.c.l.s4 1966171168
      %v310 = vunpack.c.0.s8 %v309
      %v311 = vlaneseq
      %v312 = vshrl.u32 %v311, 7
      %v313 = vsub.s32 %v310, %v312
      %v314 = vrot.slane %v307, %v313
      %v316 = vadd.f32 %v279, %v314
      %317 = vst.msk [vmem:[%s222] sm:$0x3] %vm277, %v316
      // Predicated region
      $region29: #{discriminator_forward.19} parent=23 // pred_check
        %p318 = pneg %p224
      $region30: #{discriminator_forward.19} parent=23 // pred_check_branch
        %320 = sbr.rel (%p318) target = $region32
      $region31: #{discriminator_forward.19} parent=23 // pred_region
        %v321 = vld [vmem:[%s213] sm:$0x3]
        %v322 = vmul.f32 %v321, 0.25
        %v323 = vld [vmem:[%s222] sm:$0x3]
        %v324 = vmul.f32 %v323, 0.25
        %v325 = vmul.f32 %v322, %v322
        %v326 = vsub.f32 %v324, %v325
        %v327 = vmax.f32 %v326, 0.0
        %328 = vst.msk [vmem:[%s213] sm:$0x3] %vm277, %v322
        %v329 = vadd.f32 %v327, 1e-05
        %v330 = vrsqrt.pop %v329
        %331 = vst.msk [vmem:[%s222] sm:$0x3] %vm277, %v330
      $region32: #{discriminator_forward.19} parent=23 // pred_fallthru
        _
      %s332 = smul.u32 2, %s20
      %p333 = scmp.lt.s32.totalorder %s19, 1
      %s334 = scalar_select %p333, %s19, 1
      %p335 = scmp.lt.s32.totalorder %s332, 3
      %s336 = scalar_select %p335, %s332, 3
      %s337 = smul.addr %s334, 4
      %s338 = sadd.s32 %s336, %s337
      %s339 = scalar_lea.vmem %s1, %s338
      %s340 = smul.u32 2, %s20
      %p341 = scmp.lt.s32.totalorder %s19, 1
      %s342 = scalar_select %p341, %s19, 1
      %p343 = scmp.lt.s32.totalorder %s340, 3
      %s344 = scalar_select %p343, %s340, 3
      %s345 = smul.addr %s342, 4
      %s346 = sadd.s32 %s344, %s345
      %s347 = scalar_lea.vmem %s2, %s346
      // Predicated region
      $region33: #{discriminator_forward.19} parent=23 // pred_check
        %p348 = pneg %p83
      $region34: #{discriminator_forward.19} parent=23 // pred_check_branch
        %350 = sbr.rel (%p348) target = $region36
      $region35: #{discriminator_forward.19} parent=23 // pred_region
        %s351 = smul.u32 2, %s20
      $region36: #{discriminator_forward.19} parent=23 // pred_fallthru
        _
      // Predicated region
      $region37: #{discriminator_forward.19} parent=23 // pred_check
        %p352 = pneg %p111
      $region38: #{discriminator_forward.19} parent=23 // pred_check_branch
        %354 = sbr.rel (%p352) target = $region40
      $region39: #{discriminator_forward.19} parent=23 // pred_region
        %s355 = smul.u32 2, %s20
      $region40: #{discriminator_forward.19} parent=23 // pred_fallthru
        _
    $region24: #{discriminator_forward.19} parent=5 // pred_fallthru
      _
    %p356 = scmp.le.s32.totalorder 2, %s9
    // Predicated region
    $region41: #{discriminator_forward.19} parent=5 // pred_check
      %p357 = pneg %p356
    $region42: #{discriminator_forward.19} parent=5 // pred_check_branch
      %359 = sbr.rel (%p357) target = $region44
    $region43: #{discriminator_forward.19} parent=5 // pred_region
      %s360 = ssub.s32 %s9, 2
      // Predicated region
      $region45: #{discriminator_forward.19} parent=43 // pred_check
        %p361 = pneg %p89
      $region46: #{discriminator_forward.19} parent=43 // pred_check_branch
        %363 = sbr.rel (%p361) target = $region48
      $region47: #{discriminator_forward.19} parent=43 // pred_region
        %s364 = smul.u32 2, %s23
        %p365 = scmp.lt.s32.totalorder %s22, 1
        %s366 = scalar_select %p365, %s22, 1
        %p367 = scmp.lt.s32.totalorder %s364, 3
        %s368 = scalar_select %p367, %s364, 3
        %s369 = smul.addr %s366, 4
        %s370 = sadd.s32 %s368, %s369
        %s371 = scalar_lea.vmem %s1, %s370
      $region48: #{discriminator_forward.19} parent=43 // pred_fallthru
        _
      // Predicated region
      $region49: #{discriminator_forward.19} parent=43 // pred_check
        %p372 = pneg %p117
      $region50: #{discriminator_forward.19} parent=43 // pred_check_branch
        %374 = sbr.rel (%p372) target = $region52
      $region51: #{discriminator_forward.19} parent=43 // pred_region
        %s375 = smul.u32 2, %s23
        %p376 = scmp.lt.s32.totalorder %s22, 1
        %s377 = scalar_select %p376, %s22, 1
        %p378 = scmp.lt.s32.totalorder %s375, 3
        %s379 = scalar_select %p378, %s375, 3
        %s380 = smul.addr %s377, 4
        %s381 = sadd.s32 %s379, %s380
        %s382 = scalar_lea.vmem %s2, %s381
      $region52: #{discriminator_forward.19} parent=43 // pred_fallthru
        _
    $region44: #{discriminator_forward.19} parent=5 // pred_fallthru
      _
  $region6: #{discriminator_forward.19} parent=0 // loop_footer
    %s13 = sadd.s32 1, %s9
  $region7: #{discriminator_forward.19} parent=0 // loop_footer_branch
    %8 = sbr.rel target = $region3
  $region8: #{discriminator_forward.19} parent=0 // loop_exit
    _

// kernel: discriminator_forward.20
$region0: #{discriminator_forward.20}
  #allocation0 [shape = 'u32[]', space=smem, size = 0x4, offset = 0x4, fixed_abs, tag = 'smem constant byte address 0x4 - core index']
  #allocation1 [shape = 'u32[144,128]{1,0:T(1,128)}', space=vmem, size = 0x12000, scoped, tag = 'internal scratch']
  %s0 = inlined_call_operand.vmem [shape: bf16[2,4,512], index: 0, kind: input, shape index: {}]
  %s1 = inlined_call_operand.vmem [shape: f32[2,1,512], index: 1, kind: input, shape index: {}]
  %s2 = inlined_call_operand.vmem [shape: f32[2,1,512], index: 2, kind: input, shape index: {}]
  %s3 = inlined_call_operand.vmem [shape: bf16[2,4,512], index: 3, kind: output, shape index: {}]
  %s4 = sld [smem:[#allocation0]]
  $region45: #{discriminator_forward.20} parent=0
    _
  %s6 = ssub.s32 1, %s4
  %s7 = scalar_select 0, %s6, %s4
  loop: start=0, step=1, limit=6
  $region2: #{discriminator_forward.20} parent=0 // loop_pre_header
    _
  $region3: #{discriminator_forward.20} parent=0 // loop_header
    %s9 = sphi 0, %s13
    %p10 = scmp.ge.s32.totalorder %s9, 6
    %s16 = sphi 0, %s35
    %s17 = sphi 0, %s31
    %s18 = sphi 0, %s27
    %s19 = sphi 0, %s16
    %s20 = sphi 0, %s17
    %s21 = sphi 0, %s18
    %s22 = sphi 0, %s19
    %s23 = sphi 0, %s20
    %s24 = sphi 0, %s21
    %s42 = sphi 0, %s44
    %s45 = sphi 0, %s42
    %s46 = sphi 0, %s45
    %s62 = sphi 0, %s46
    %s70 = sphi 0, %s72
    %s73 = sphi 0, %s70
    %s74 = sphi 0, %s73
    %s90 = sphi 0, %s74
    %s98 = sphi 0, %s100
    %s101 = sphi 0, %s98
    %s102 = sphi 0, %s101
    %s118 = sphi 0, %s102
    %s128 = sphi 0, %s130
    %s131 = sphi 0, %s128
    %s132 = sphi 0, %s131
    %s148 = sphi 0, %s132
  $region4: #{discriminator_forward.20} parent=0 // loop_header_branch
    %12 = sbr.rel (%p10) target = $region8
  $region5: #{discriminator_forward.20} parent=0 // loop_body
    %s14 = ssub.s32 %s9, 1
    %s15 = ssub.s32 %s9, 2
    %s25 = sadd.s32 1, %s18
    %p26 = scmp.ge.s32.totalorder %s25, 1
    %s27 = scalar_select %p26, 0, %s25
    %s28 = sadd.s32 1, %s17
    %s29 = scalar_select %p26, %s28, %s17
    %p30 = scmp.ge.s32.totalorder %s29, 2
    %s31 = scalar_select %p30, 0, %s29
    %s32 = sadd.s32 1, %s16
    %s33 = scalar_select %p30, %s32, %s16
    %p34 = scmp.ge.s32.totalorder %s33, 2
    %s35 = scalar_select %p34, 0, %s33
    %s36 = ssub.s32 %s16, %s35
    %s37 = ssub.s32 %s18, %s27
    %s38 = sor.u32 %s36, %s37
    %s39 = ssub.s32 %s17, %s31
    %s40 = sor.u32 %s38, %s39
    %p41 = scmp.eq.s32.totalorder %s40, 0
    %s43 = sadd.s32 %s42, 1
    %s44 = scalar_select %p41, %s42, %s43
    %p47 = pneg %p41
    %p48 = scmp.eq.s32.totalorder %s9, 3
    %p49 = por %p47, %p48
    %p50 = scmp.ne.s32.totalorder %s42, %s45
    %p51 = scmp.eq.s32.totalorder %s9, 0
    %p52 = por %p50, %p51
    %p53 = scmp.ne.s32.totalorder %s42, %s45
    %p54 = scmp.eq.s32.totalorder %s14, 3
    %p55 = por %p53, %p54
    %p56 = scmp.ne.s32.totalorder %s45, %s46
    %p57 = scmp.eq.s32.totalorder %s14, 0
    %p58 = por %p56, %p57
    %p59 = scmp.ne.s32.totalorder %s45, %s46
    %p60 = scmp.eq.s32.totalorder %s15, 3
    %p61 = por %p59, %p60
    %p63 = scmp.ne.s32.totalorder %s46, %s62
    %p64 = scmp.eq.s32.totalorder %s15, 0
    %p65 = por %p63, %p64
    %s66 = ssub.s32 %s16, %s35
    %s67 = ssub.s32 %s17, %s31
    %s68 = sor.u32 %s66, %s67
    %p69 = scmp.eq.s32.totalorder %s68, 0
    %s71 = sadd.s32 %s70, 1
    %s72 = scalar_select %p69, %s70, %s71
    %p75 = pneg %p69
    %p76 = scmp.eq.s32.totalorder %s9, 3
    %p77 = por %p75, %p76
    %p78 = scmp.ne.s32.totalorder %s70, %s73
    %p79 = scmp.eq.s32.totalorder %s9, 0
    %p80 = por %p78, %p79
    %p81 = scmp.ne.s32.totalorder %s70, %s73
    %p82 = scmp.eq.s32.totalorder %s14, 3
    %p83 = por %p81, %p82
    %p84 = scmp.ne.s32.totalorder %s73, %s74
    %p85 = scmp.eq.s32.totalorder %s14, 0
    %p86 = por %p84, %p85
    %p87 = scmp.ne.s32.totalorder %s73, %s74
    %p88 = scmp.eq.s32.totalorder %s15, 3
    %p89 = por %p87, %p88
    %p91 = scmp.ne.s32.totalorder %s74, %s90
    %p92 = scmp.eq.s32.totalorder %s15, 0
    %p93 = por %p91, %p92
    %s94 = ssub.s32 %s16, %s35
    %s95 = ssub.s32 %s17, %s31
    %s96 = sor.u32 %s94, %s95
    %p97 = scmp.eq.s32.totalorder %s96, 0
    %s99 = sadd.s32 %s98, 1
    %s100 = scalar_select %p97, %s98, %s99
    %p103 = pneg %p97
    %p104 = scmp.eq.s32.totalorder %s9, 3
    %p105 = por %p103, %p104
    %p106 = scmp.ne.s32.totalorder %s98, %s101
    %p107 = scmp.eq.s32.totalorder %s9, 0
    %p108 = por %p106, %p107
    %p109 = scmp.ne.s32.totalorder %s98, %s101
    %p110 = scmp.eq.s32.totalorder %s14, 3
    %p111 = por %p109, %p110
    %p112 = scmp.ne.s32.totalorder %s101, %s102
    %p113 = scmp.eq.s32.totalorder %s14, 0
    %p114 = por %p112, %p113
    %p115 = scmp.ne.s32.totalorder %s101, %s102
    %p116 = scmp.eq.s32.totalorder %s15, 3
    %p117 = por %p115, %p116
    %p119 = scmp.ne.s32.totalorder %s102, %s118
    %p120 = scmp.eq.s32.totalorder %s15, 0
    %p121 = por %p119, %p120
    %s122 = ssub.s32 %s16, %s35
    %s123 = ssub.s32 %s18, %s27
    %s124 = sor.u32 %s122, %s123
    %s125 = ssub.s32 %s17, %s31
    %s126 = sor.u32 %s124, %s125
    %p127 = scmp.eq.s32.totalorder %s126, 0
    %s129 = sadd.s32 %s128, 1
    %s130 = scalar_select %p127, %s128, %s129
    %p133 = pneg %p127
    %p134 = scmp.eq.s32.totalorder %s9, 3
    %p135 = por %p133, %p134
    %p136 = scmp.ne.s32.totalorder %s128, %s131
    %p137 = scmp.eq.s32.totalorder %s9, 0
    %p138 = por %p136, %p137
    %p139 = scmp.ne.s32.totalorder %s128, %s131
    %p140 = scmp.eq.s32.totalorder %s14, 3
    %p141 = por %p139, %p140
    %p142 = scmp.ne.s32.totalorder %s131, %s132
    %p143 = scmp.eq.s32.totalorder %s14, 0
    %p144 = por %p142, %p143
    %p145 = scmp.ne.s32.totalorder %s131, %s132
    %p146 = scmp.eq.s32.totalorder %s15, 3
    %p147 = por %p145, %p146
    %p149 = scmp.ne.s32.totalorder %s132, %s148
    %p150 = scmp.eq.s32.totalorder %s15, 0
    %p151 = por %p149, %p150
    %p152 = scmp.le.s32.totalorder 1, %s9
    %p153 = scmp.lt.s32.totalorder %s9, 5
    %p154 = pnand %p152, %p153
    %p155 = pneg %p154
    // Predicated region
    $region9: #{discriminator_forward.20} parent=5 // pred_check
      _
    $region10: #{discriminator_forward.20} parent=5 // pred_check_branch
      %157 = sbr.rel (%p154) target = $region12
    $region11: #{discriminator_forward.20} parent=5 // pred_region
      %s158 = ssub.s32 %s9, 1
    $region12: #{discriminator_forward.20} parent=5 // pred_fallthru
      _
    %p159 = scmp.lt.s32.totalorder %s9, 4
    // Predicated region
    $region13: #{discriminator_forward.20} parent=5 // pred_check
      %p160 = pneg %p159
    $region14: #{discriminator_forward.20} parent=5 // pred_check_branch
      %162 = sbr.rel (%p160) target = $region16
    $region15: #{discriminator_forward.20} parent=5 // pred_region
      // Predicated region
      $region17: #{discriminator_forward.20} parent=15 // pred_check
        %p163 = pneg %p52
      $region18: #{discriminator_forward.20} parent=15 // pred_check_branch
        %165 = sbr.rel (%p163) target = $region20
      $region19: #{discriminator_forward.20} parent=15 // pred_region
        %s166 = smul.u32 2, %s17
        %p167 = scmp.lt.s32.totalorder %s16, 1
        %s168 = scalar_select %p167, %s16, 1
        %p169 = scmp.lt.s32.totalorder %s18, 0
        %s170 = scalar_select %p169, %s18, 0
        %p171 = scmp.lt.s32.totalorder %s166, 3
        %s172 = scalar_select %p171, %s166, 3
        %s173 = smul.addr %s170, 4
        %s174 = sadd.s32 %s172, %s173
        %s175 = smul.addr %s168, 4
        %s176 = sadd.s32 %s174, %s175
        %s177 = smul.addr %s176, 2
        %s178 = scalar_lea.vmem %s0, %s177
        %s179 = smul.u32 2, %s17
      $region20: #{discriminator_forward.20} parent=15 // pred_fallthru
        _
      // Predicated region
      $region21: #{discriminator_forward.20} parent=15 // pred_check
        %p180 = pneg %p80
      $region22: #{discriminator_forward.20} parent=15 // pred_check_branch
        %182 = sbr.rel (%p180) target = $region24
      $region23: #{discriminator_forward.20} parent=15 // pred_region
        %s183 = smul.u32 2, %s17
        %p184 = scmp.lt.s32.totalorder %s16, 1
        %s185 = scalar_select %p184, %s16, 1
        %p186 = scmp.lt.s32.totalorder %s183, 3
        %s187 = scalar_select %p186, %s183, 3
        %s188 = smul.addr %s185, 4
        %s189 = sadd.s32 %s187, %s188
        %s190 = scalar_lea.vmem %s1, %s189
        %s191 = smul.u32 2, %s17
      $region24: #{discriminator_forward.20} parent=15 // pred_fallthru
        _
      // Predicated region
      $region25: #{discriminator_forward.20} parent=15 // pred_check
        %p192 = pneg %p108
      $region26: #{discriminator_forward.20} parent=15 // pred_check_branch
        %194 = sbr.rel (%p192) target = $region28
      $region27: #{discriminator_forward.20} parent=15 // pred_region
        %s195 = smul.u32 2, %s17
        %p196 = scmp.lt.s32.totalorder %s16, 1
        %s197 = scalar_select %p196, %s16, 1
        %p198 = scmp.lt.s32.totalorder %s195, 3
        %s199 = scalar_select %p198, %s195, 3
        %s200 = smul.addr %s197, 4
        %s201 = sadd.s32 %s199, %s200
        %s202 = scalar_lea.vmem %s2, %s201
        %s203 = smul.u32 2, %s17
      $region28: #{discriminator_forward.20} parent=15 // pred_fallthru
        _
    $region16: #{discriminator_forward.20} parent=5 // pred_fallthru
      _
    %p204 = scmp.le.s32.totalorder 1, %s9
    %p205 = scmp.lt.s32.totalorder %s9, 5
    %p206 = pnand %p204, %p205
    %p207 = pneg %p206
    // Predicated region
    $region29: #{discriminator_forward.20} parent=5 // pred_check
      _
    $region30: #{discriminator_forward.20} parent=5 // pred_check_branch
      %209 = sbr.rel (%p206) target = $region32
    $region31: #{discriminator_forward.20} parent=5 // pred_region
      %s210 = ssub.s32 %s9, 1
      %s211 = smul.u32 2, %s20
      %p212 = scmp.lt.s32.totalorder %s19, 1
      %s213 = scalar_select %p212, %s19, 1
      %p214 = scmp.lt.s32.totalorder %s21, 0
      %s215 = scalar_select %p214, %s21, 0
      %p216 = scmp.lt.s32.totalorder %s211, 3
      %s217 = scalar_select %p216, %s211, 3
      %s218 = smul.addr %s215, 4
      %s219 = sadd.s32 %s217, %s218
      %s220 = smul.addr %s213, 4
      %s221 = sadd.s32 %s219, %s220
      %s222 = smul.addr %s221, 2
      %s223 = scalar_lea.vmem %s0, %s222
      %p224 = pneg %p58
      %p225 = pneg %p55
      %s226 = smul.u32 2, %s20
      %p227 = scmp.lt.s32.totalorder %s19, 1
      %s228 = scalar_select %p227, %s19, 1
      %p229 = scmp.lt.s32.totalorder %s226, 3
      %s230 = scalar_select %p229, %s226, 3
      %s231 = smul.addr %s228, 4
      %s232 = sadd.s32 %s230, %s231
      %s233 = scalar_lea.vmem %s1, %s232
      %p234 = pneg %p86
      %p235 = pneg %p83
      %s236 = smul.u32 2, %s20
      %p237 = scmp.lt.s32.totalorder %s19, 1
      %s238 = scalar_select %p237, %s19, 1
      %p239 = scmp.lt.s32.totalorder %s236, 3
      %s240 = scalar_select %p239, %s236, 3
      %s241 = smul.addr %s238, 4
      %s242 = sadd.s32 %s240, %s241
      %s243 = scalar_lea.vmem %s2, %s242
      %p244 = pneg %p114
      %p245 = pneg %p111
      %p246 = pneg %p144
      %p247 = pneg %p141
      %s248 = smul.u32 2, %s20
      %p249 = scmp.lt.s32.totalorder %s19, 1
      %s250 = scalar_select %p249, %s19, 1
      %p251 = scmp.lt.s32.totalorder %s21, 0
      %s252 = scalar_select %p251, %s21, 0
      %p253 = scmp.lt.s32.totalorder %s248, 3
      %s254 = scalar_select %p253, %s248, 3
      %s255 = smul.addr %s252, 4
      %s256 = sadd.s32 %s254, %s255
      %s257 = smul.addr %s250, 4
      %s258 = sadd.s32 %s256, %s257
      %s259 = smul.addr %s258, 2
      %s260 = scalar_lea.vmem %s3, %s259
      %s261 = smul.u32 2, %s20
      %p262 = scmp.lt.s32.totalorder %s19, 1
      %s263 = scalar_select %p262, %s19, 1
      %p264 = scmp.lt.s32.totalorder %s21, 0
      %s265 = scalar_select %p264, %s21, 0
      %p266 = scmp.lt.s32.totalorder %s261, 3
      %s267 = scalar_select %p266, %s261, 3
      %s268 = smul.addr %s265, 4
      %s269 = sadd.s32 %s267, %s268
      %s270 = smul.addr %s263, 4
      %s271 = sadd.s32 %s269, %s270
      %s272 = smul.addr %s271, 2
      %s273 = scalar_lea.vmem %s0, %s272
      %s274 = smul.u32 2, %s20
      %s275 = smul.u32 2, %s20
      %p276 = scmp.lt.s32.totalorder %s19, 1
      %s277 = scalar_select %p276, %s19, 1
      %p278 = scmp.lt.s32.totalorder %s275, 3
      %s279 = scalar_select %p278, %s275, 3
      %s280 = smul.addr %s277, 4
      %s281 = sadd.s32 %s279, %s280
      %s282 = scalar_lea.vmem %s1, %s281
      %s283 = smul.u32 2, %s20
      %s284 = smul.u32 2, %s20
      %p285 = scmp.lt.s32.totalorder %s19, 1
      %s286 = scalar_select %p285, %s19, 1
      %p287 = scmp.lt.s32.totalorder %s284, 3
      %s288 = scalar_select %p287, %s284, 3
      %s289 = smul.addr %s286, 4
      %s290 = sadd.s32 %s288, %s289
      %s291 = scalar_lea.vmem %s2, %s290
      %s292 = smul.u32 2, %s20
      %s293 = smul.u32 2, %s20
      %p294 = scmp.lt.s32.totalorder %s19, 1
      %s295 = scalar_select %p294, %s19, 1
      %p296 = scmp.lt.s32.totalorder %s21, 0
      %s297 = scalar_select %p296, %s21, 0
      %p298 = scmp.lt.s32.totalorder %s293, 3
      %s299 = scalar_select %p298, %s293, 3
      %s300 = smul.addr %s297, 4
      %s301 = sadd.s32 %s299, %s300
      %s302 = smul.addr %s295, 4
      %s303 = sadd.s32 %s301, %s302
      %s304 = smul.addr %s303, 2
      %s305 = scalar_lea.vmem %s3, %s304
      %s306 = smul.u32 2, %s20
      %v307 = vld [vmem:[%s273] sm:$0xf]
      %v308 = vunpack.c.l.bf16 %v307
      %v309 = vld [vmem:[%s282] sm:$0x3]
      %v311 = vlaneseq
      %v312 = vshrl.u32 %v311, 7
      %v313 = vsub.s32 0, %v312
      %v314 = vrot.slane %v309, %v313
      %v315 = vlaneseq
      %v316 = vshrl.u32 %v315, 7
      %v317 = vsub.s32 1, %v316
      %v318 = vrot.slane %v309, %v317
      %v319 = vcombine.low %v314, %v318
      %v321 = vsub.f32 %v308, %v319
      %v322 = vld [vmem:[%s291] sm:$0x3]
      %v324 = vlaneseq
      %v325 = vshrl.u32 %v324, 7
      %v326 = vsub.s32 0, %v325
      %v327 = vrot.slane %v322, %v326
      %v328 = vlaneseq
      %v329 = vshrl.u32 %v328, 7
      %v330 = vsub.s32 1, %v329
      %v331 = vrot.slane %v322, %v330
      %v332 = vcombine.low %v327, %v331
      %v334 = vmul.f32 %v321, %v332
      %vm335 = vcmp.ge.f32.partialorder %v334, 0.0
      %v336 = vmul.f32 %v334, 0.2
      %v337 = vsel %vm335, %v334, %v336
      %v339 = vcombine.high %v337, %v337
      %v341 = vpack.c.bf16 %v337, %v337
      %v342 = vpack.c.bf16 %v339, %v339
      %v345 = vcombine.low %v341, %v342
      %v347 = vunpack.c.l.s4 1983009808
      %v348 = vunpack.c.0.s8 %v347
      %v349 = vlaneseq
      %v350 = vshrl.u32 %v349, 7
      %v351 = vsub.s32 %v348, %v350
      %v352 = vrot.slane %v345, %v351
      %354 = vst [vmem:[%s305] sm:$0xf] %v352
      %s355 = smul.u32 2, %s20
      %p356 = scmp.lt.s32.totalorder %s19, 1
      %s357 = scalar_select %p356, %s19, 1
      %p358 = scmp.lt.s32.totalorder %s21, 0
      %s359 = scalar_select %p358, %s21, 0
      %p360 = scmp.lt.s32.totalorder %s355, 3
      %s361 = scalar_select %p360, %s355, 3
      %s362 = smul.addr %s359, 4
      %s363 = sadd.s32 %s361, %s362
      %s364 = smul.addr %s357, 4
      %s365 = sadd.s32 %s363, %s364
      %s366 = smul.addr %s365, 2
      %s367 = scalar_lea.vmem %s3, %s366
      // Predicated region
      $region33: #{discriminator_forward.20} parent=31 // pred_check
        %p368 = pneg %p141
      $region34: #{discriminator_forward.20} parent=31 // pred_check_branch
        %370 = sbr.rel (%p368) target = $region36
      $region35: #{discriminator_forward.20} parent=31 // pred_region
        %s371 = smul.u32 2, %s20
      $region36: #{discriminator_forward.20} parent=31 // pred_fallthru
        _
    $region32: #{discriminator_forward.20} parent=5 // pred_fallthru
      _
    %p372 = scmp.le.s32.totalorder 2, %s9
    // Predicated region
    $region37: #{discriminator_forward.20} parent=5 // pred_check
      %p373 = pneg %p372
    $region38: #{discriminator_forward.20} parent=5 // pred_check_branch
      %375 = sbr.rel (%p373) target = $region40
    $region39: #{discriminator_forward.20} parent=5 // pred_region
      %s376 = ssub.s32 %s9, 2
      // Predicated region
      $region41: #{discriminator_forward.20} parent=39 // pred_check
        %p377 = pneg %p147
      $region42: #{discriminator_forward.20} parent=39 // pred_check_branch
        %379 = sbr.rel (%p377) target = $region44
      $region43: #{discriminator_forward.20} parent=39 // pred_region
        %s380 = smul.u32 2, %s23
        %p381 = scmp.lt.s32.totalorder %s22, 1
        %s382 = scalar_select %p381, %s22, 1
        %p383 = scmp.lt.s32.totalorder %s24, 0
        %s384 = scalar_select %p383, %s24, 0
        %p385 = scmp.lt.s32.totalorder %s380, 3
        %s386 = scalar_select %p385, %s380, 3
        %s387 = smul.addr %s384, 4
        %s388 = sadd.s32 %s386, %s387
        %s389 = smul.addr %s382, 4
        %s390 = sadd.s32 %s388, %s389
        %s391 = smul.addr %s390, 2
        %s392 = scalar_lea.vmem %s3, %s391
      $region44: #{discriminator_forward.20} parent=39 // pred_fallthru
        _
    $region40: #{discriminator_forward.20} parent=5 // pred_fallthru
      _
  $region6: #{discriminator_forward.20} parent=0 // loop_footer
    %s13 = sadd.s32 1, %s9
  $region7: #{discriminator_forward.20} parent=0 // loop_footer_branch
    %8 = sbr.rel target = $region3
  $region8: #{discriminator_forward.20} parent=0 // loop_exit
    _

// kernel: discriminator_forward.21
$region0: #{discriminator_forward.21}
  #allocation0 [shape = 'u32[]', space=smem, size = 0x4, offset = 0x4, fixed_abs, tag = 'smem constant byte address 0x4 - core index']
  #allocation1 [shape = 'u32[144,128]{1,0:T(1,128)}', space=vmem, size = 0x12000, scoped, tag = 'internal scratch']
  #allocation2 [shape = 'f32[16,128]{1,0:T(8,128)}', space=vmem, size = 0x2000, scoped, tag = 'scratch operand']
  %s0 = inlined_call_operand.vmem [shape: bf16[16,8192], index: 0, kind: input, shape index: {}]
  %s1 = inlined_call_operand.vmem [shape: bf16[8192,128], index: 1, kind: input, shape index: {}]
  %s2 = inlined_call_operand.vmem [shape: f32[1,128], index: 2, kind: input, shape index: {}]
  %s3 = inlined_call_operand.vmem [shape: f32[16,128], index: 3, kind: output, shape index: {}]
  %s4 = sld [smem:[#allocation0]]
  $region76: #{discriminator_forward.21} parent=0
    _
  %s6 = ssub.s32 1, %s4
  %s7 = scalar_select 0, %s6, %s4
  $region1: #{discriminator_forward.21} parent=0
    #allocation3 [shape = 'u8[32768]{0}', space=vmem, size = 0x8000, scoped, tag = 'input window, operand 0']
    loop: start=0, step=1, limit=18
    $region2: #{discriminator_forward.21} parent=1 // loop_pre_header
      _
    $region3: #{discriminator_forward.21} parent=1 // loop_header
      %s9 = sphi 0, %s13
      %p10 = scmp.ge.s32.totalorder %s9, 18
      %s16 = sphi 0, %s35
      %s17 = sphi 0, %s31
      %s18 = sphi 0, %s27
      %s19 = sphi 0, %s16
      %s20 = sphi 0, %s17
      %s21 = sphi 0, %s18
      %s22 = sphi 0, %s19
      %s23 = sphi 0, %s20
      %s24 = sphi 0, %s21
      %s40 = sphi 0, %s42
      %s43 = sphi 0, %s40
      %s44 = sphi 0, %s43
      %s60 = sphi 0, %s44
      %s64 = sphi 0, %s64
      %s66 = sphi 0, %s64
      %s67 = sphi 0, %s66
      %s81 = sphi 0, %s67
      %s87 = sphi 0, %s89
      %s90 = sphi 0, %s87
      %s91 = sphi 0, %s90
      %s107 = sphi 0, %s91
      %s115 = sphi 0, %s117
      %s118 = sphi 0, %s115
      %s119 = sphi 0, %s118
      %s135 = sphi 0, %s119
    $region4: #{discriminator_forward.21} parent=1 // loop_header_branch
      %12 = sbr.rel (%p10) target = $region8
    $region5: #{discriminator_forward.21} parent=1 // loop_body
      %s14 = ssub.s32 %s9, 1
      %s15 = ssub.s32 %s9, 2
      %s25 = sadd.s32 1, %s18
      %p26 = scmp.ge.s32.totalorder %s25, 16
      %s27 = scalar_select %p26, 0, %s25
      %s28 = sadd.s32 1, %s17
      %s29 = scalar_select %p26, %s28, %s17
      %p30 = scmp.ge.s32.totalorder %s29, 1
      %s31 = scalar_select %p30, 0, %s29
      %s32 = sadd.s32 1, %s16
      %s33 = scalar_select %p30, %s32, %s16
      %p34 = scmp.ge.s32.totalorder %s33, 1
      %s35 = scalar_select %p34, 0, %s33
      %s36 = ssub.s32 %s16, %s35
      %s37 = ssub.s32 %s18, %s27
      %s38 = sor.u32 %s36, %s37
      %p39 = scmp.eq.s32.totalorder %s38, 0
      %s41 = sadd.s32 %s40, 1
      %s42 = scalar_select %p39, %s40, %s41
      %p45 = pneg %p39
      %p46 = scmp.eq.s32.totalorder %s9, 15
      %p47 = por %p45, %p46
      %p48 = scmp.ne.s32.totalorder %s40, %s43
      %p49 = scmp.eq.s32.totalorder %s9, 0
      %p50 = por %p48, %p49
      %p51 = scmp.ne.s32.totalorder %s40, %s43
      %p52 = scmp.eq.s32.totalorder %s14, 15
      %p53 = por %p51, %p52
      %p54 = scmp.ne.s32.totalorder %s43, %s44
      %p55 = scmp.eq.s32.totalorder %s14, 0
      %p56 = por %p54, %p55
      %p57 = scmp.ne.s32.totalorder %s43, %s44
      %p58 = scmp.eq.s32.totalorder %s15, 15
      %p59 = por %p57, %p58
      %p61 = scmp.ne.s32.totalorder %s44, %s60
      %p62 = scmp.eq.s32.totalorder %s15, 0
      %p63 = por %p61, %p62
      %s65 = sadd.s32 %s64, 1
      %p68 = scmp.eq.s32.totalorder %s9, 15
      %p69 = scmp.ne.s32.totalorder %s64, %s66
      %p70 = scmp.eq.s32.totalorder %s9, 0
      %p71 = por %p69, %p70
      %p72 = scmp.ne.s32.totalorder %s64, %s66
      %p73 = scmp.eq.s32.totalorder %s14, 15
      %p74 = por %p72, %p73
      %p75 = scmp.ne.s32.totalorder %s66, %s67
      %p76 = scmp.eq.s32.totalorder %s14, 0
      %p77 = por %p75, %p76
      %p78 = scmp.ne.s32.totalorder %s66, %s67
      %p79 = scmp.eq.s32.totalorder %s15, 15
      %p80 = por %p78, %p79
      %p82 = scmp.ne.s32.totalorder %s67, %s81
      %p83 = scmp.eq.s32.totalorder %s15, 0
      %p84 = por %p82, %p83
      %s85 = ssub.s32 %s17, %s31
      %p86 = scmp.eq.s32.totalorder %s85, 0
      %s88 = sadd.s32 %s87, 1
      %s89 = scalar_select %p86, %s87, %s88
      %p92 = pneg %p86
      %p93 = scmp.eq.s32.totalorder %s9, 15
      %p94 = por %p92, %p93
      %p95 = scmp.ne.s32.totalorder %s87, %s90
      %p96 = scmp.eq.s32.totalorder %s9, 0
      %p97 = por %p95, %p96
      %p98 = scmp.ne.s32.totalorder %s87, %s90
      %p99 = scmp.eq.s32.totalorder %s14, 15
      %p100 = por %p98, %p99
      %p101 = scmp.ne.s32.totalorder %s90, %s91
      %p102 = scmp.eq.s32.totalorder %s14, 0
      %p103 = por %p101, %p102
      %p104 = scmp.ne.s32.totalorder %s90, %s91
      %p105 = scmp.eq.s32.totalorder %s15, 15
      %p106 = por %p104, %p105
      %p108 = scmp.ne.s32.totalorder %s91, %s107
      %p109 = scmp.eq.s32.totalorder %s15, 0
      %p110 = por %p108, %p109
      %s111 = ssub.s32 %s16, %s35
      %s112 = ssub.s32 %s17, %s31
      %s113 = sor.u32 %s111, %s112
      %p114 = scmp.eq.s32.totalorder %s113, 0
      %s116 = sadd.s32 %s115, 1
      %s117 = scalar_select %p114, %s115, %s116
      %p120 = pneg %p114
      %p121 = scmp.eq.s32.totalorder %s9, 15
      %p122 = por %p120, %p121
      %p123 = scmp.ne.s32.totalorder %s115, %s118
      %p124 = scmp.eq.s32.totalorder %s9, 0
      %p125 = por %p123, %p124
      %p126 = scmp.ne.s32.totalorder %s115, %s118
      %p127 = scmp.eq.s32.totalorder %s14, 15
      %p128 = por %p126, %p127
      %p129 = scmp.ne.s32.totalorder %s118, %s119
      %p130 = scmp.eq.s32.totalorder %s14, 0
      %p131 = por %p129, %p130
      %p132 = scmp.ne.s32.totalorder %s118, %s119
      %p133 = scmp.eq.s32.totalorder %s15, 15
      %p134 = por %p132, %p133
      %p136 = scmp.ne.s32.totalorder %s119, %s135
      %p137 = scmp.eq.s32.totalorder %s15, 0
      %p138 = por %p136, %p137
      %p139 = scmp.le.s32.totalorder 1, %s9
      %p140 = scmp.lt.s32.totalorder %s9, 17
      %p141 = pnand %p139, %p140
      %p142 = pneg %p141
      // Predicated region
      $region9: #{discriminator_forward.21} parent=5 // pred_check
        _
      $region10: #{discriminator_forward.21} parent=5 // pred_check_branch
        %144 = sbr.rel (%p141) target = $region12
      $region11: #{discriminator_forward.21} parent=5 // pred_region
        %s145 = ssub.s32 %s9, 1
        // Predicated region
        $region13: #{discriminator_forward.21} parent=11 // pred_check
          %p146 = pneg %p77
        $region14: #{discriminator_forward.21} parent=11 // pred_check_branch
          %148 = sbr.rel (%p146) target = $region16
        $region15: #{discriminator_forward.21} parent=11 // pred_region
          _
        $region16: #{discriminator_forward.21} parent=11 // pred_fallthru
          _
        // Predicated region
        $region17: #{discriminator_forward.21} parent=11 // pred_check
          %p149 = pneg %p103
        $region18: #{discriminator_forward.21} parent=11 // pred_check_branch
          %151 = sbr.rel (%p149) target = $region20
        $region19: #{discriminator_forward.21} parent=11 // pred_region
          %p152 = scmp.lt.s32.totalorder %s20, 0
          %s153 = scalar_select %p152, %s20, 0
          %s154 = scalar_lea.vmem %s2, %s153
        $region20: #{discriminator_forward.21} parent=11 // pred_fallthru
          _
      $region12: #{discriminator_forward.21} parent=5 // pred_fallthru
        _
      %p155 = scmp.lt.s32.totalorder %s9, 16
      // Predicated region
      $region21: #{discriminator_forward.21} parent=5 // pred_check
        %p156 = pneg %p155
      $region22: #{discriminator_forward.21} parent=5 // pred_check_branch
        %158 = sbr.rel (%p156) target = $region24
      $region23: #{discriminator_forward.21} parent=5 // pred_region
        // Predicated region
        $region25: #{discriminator_forward.21} parent=23 // pred_check
          %p159 = pneg %p50
        $region26: #{discriminator_forward.21} parent=23 // pred_check_branch
          %161 = sbr.rel (%p159) target = $region28
        $region27: #{discriminator_forward.21} parent=23 // pred_region
          %s162 = sand.u32 %s40, 1
          %s163 = sand.u32 %s40, 1
          %s164 = smul.addr %s163, 32
          %s165 = scalar_lea.vmem [#allocation3], %s164
          %s166 = smul.u32 2, %s16
          %s167 = smul.u32 4, %s18
          %s168 = smul.addr %s166, 64
          %s169 = sadd.s32 %s167, %s168
          %s170 = smul.addr %s169, 4
          %s171 = scalar_lea.vmem %s0, %s170
          // Predicated region
          $region29: #{discriminator_forward.21} parent=27 // pred_check
            _
          $region30: #{discriminator_forward.21} parent=27 // pred_check_branch
            %173 = sbr.rel (0) target = $region32
          $region31: #{discriminator_forward.21} parent=27 // pred_region
            // Predicated region
            $region33: #{discriminator_forward.21} parent=31 // pred_check
              _
            $region34: #{discriminator_forward.21} parent=31 // pred_check_branch
              %175 = sbr.rel (0) target = $region36
            $region35: #{discriminator_forward.21} parent=31 // pred_region
              loop: start=0, step=1, limit=1
              $region37: #{discriminator_forward.21} parent=35 // loop_pre_header
                _
              $region38: #{discriminator_forward.21} parent=35 // loop_header
                %s177 = sphi 0, %s181
                %p178 = scmp.ge.s32.totalorder %s177, 1
                %s182 = sphi %s171, %s171
                %s183 = sphi %s165, %s165
              $region39: #{discriminator_forward.21} parent=35 // loop_header_branch
                %180 = sbr.rel (%p178) target = $region43
              $region40: #{discriminator_forward.21} parent=35 // loop_body
                %v184 = vld [vmem:[%s182] sm:$0xff]
                %185 = vst [vmem:[%s183] sm:$0xff] %v184
                %v186 = vld [vmem:[%s182 + $0x8] sm:$0xff]
                %187 = vst [vmem:[%s183 + $0x8] sm:$0xff] %v186
                %v188 = vld [vmem:[%s182 + $0x100] sm:$0xff]
                %189 = vst [vmem:[%s183 + $0x10] sm:$0xff] %v188
                %v190 = vld [vmem:[%s182 + $0x108] sm:$0xff]
                %191 = vst [vmem:[%s183 + $0x18] sm:$0xff] %v190
              $region41: #{discriminator_forward.21} parent=35 // loop_footer
                %s181 = sadd.s32 1, %s177
              $region42: #{discriminator_forward.21} parent=35 // loop_footer_branch
                %176 = sbr.rel target = $region38
              $region43: #{discriminator_forward.21} parent=35 // loop_exit
                _
            $region36: #{discriminator_forward.21} parent=31 // pred_fallthru
              _
            // Predicated region
            $region44: #{discriminator_forward.21} parent=31 // pred_check
              _
            $region45: #{discriminator_forward.21} parent=31 // pred_check_branch
              %193 = sbr.rel target = $region47
            $region46: #{discriminator_forward.21} parent=31 // pred_region
              _
            $region47: #{discriminator_forward.21} parent=31 // pred_fallthru
              _
          $region32: #{discriminator_forward.21} parent=27 // pred_fallthru
            _
          %194 = vnop
        $region28: #{discriminator_forward.21} parent=23 // pred_fallthru
          _
      $region24: #{discriminator_forward.21} parent=5 // pred_fallthru
        _
      %p195 = scmp.le.s32.totalorder 1, %s9
      %p196 = scmp.lt.s32.totalorder %s9, 17
      %p197 = pnand %p195, %p196
      %p198 = pneg %p197
      // Predicated region
      $region48: #{discriminator_forward.21} parent=5 // pred_check
        _
      $region49: #{discriminator_forward.21} parent=5 // pred_check_branch
        %200 = sbr.rel (%p197) target = $region51
      $region50: #{discriminator_forward.21} parent=5 // pred_region
        %s201 = ssub.s32 %s9, 1
        %s202 = sand.u32 %s43, 1
        %s203 = sand.u32 %s43, 1
        %s204 = smul.addr %s203, 32
        %s205 = scalar_lea.vmem [#allocation3], %s204
        // Predicated region
        $region52: #{discriminator_forward.21} parent=50 // pred_check
          %p206 = pneg %p56
        $region53: #{discriminator_forward.21} parent=50 // pred_check_branch
          %208 = sbr.rel (%p206) target = $region55
        $region54: #{discriminator_forward.21} parent=50 // pred_region
          _
        $region55: #{discriminator_forward.21} parent=50 // pred_fallthru
          _
        %s209 = sand.u32 %s43, 1
        %s210 = sand.u32 %s43, 1
        %s211 = smul.addr %s210, 32
        %s212 = scalar_lea.vmem [#allocation3], %s211
        %p213 = pneg %p56
        %p214 = pneg %p53
        %p215 = pneg %p77
        %p216 = pneg %p74
        %p217 = scmp.lt.s32.totalorder %s20, 0
        %s218 = scalar_select %p217, %s20, 0
        %s219 = scalar_lea.vmem %s2, %s218
        %p220 = pneg %p103
        %p221 = pneg %p100
        %p222 = pneg %p131
        %p223 = pneg %p128
        %s224 = smul.u32 2, %s19
        %p225 = scmp.lt.s32.totalorder %s224, 1
        %s226 = scalar_select %p225, %s224, 1
        %p227 = scmp.lt.s32.totalorder %s20, 0
        %s228 = scalar_select %p227, %s20, 0
        %s229 = sadd.s32 %s228, %s226
        %s230 = smul.addr %s229, 8
        %s231 = scalar_lea.vmem %s3, %s230
        %s232 = smul.u32 2, %s19
        %s233 = smul.u32 4, %s21
        %p234 = scmp.lt.s32.totalorder %s20, 0
        %s235 = scalar_select %p234, %s20, 0
        %s236 = scalar_lea.vmem %s2, %s235
        %s237 = smul.u32 2, %s19
        %p238 = scmp.lt.s32.totalorder %s237, 1
        %s239 = scalar_select %p238, %s237, 1
        %p240 = scmp.lt.s32.totalorder %s20, 0
        %s241 = scalar_select %p240, %s20, 0
        %s242 = sadd.s32 %s241, %s239
        %s243 = smul.addr %s242, 8
        %s244 = scalar_lea.vmem %s3, %s243
        %s245 = smul.u32 2, %s19
        %p247 = scmp.eq.s32.totalorder %s21, 0
        // Predicated region
        $region56: #{discriminator_forward.21} parent=50 // pred_check
          %p248 = pneg %p247
        $region57: #{discriminator_forward.21} parent=50 // pred_check_branch
          %250 = sbr.rel (%p248) target = $region59
        $region58: #{discriminator_forward.21} parent=50 // pred_region
          %251 = vst [vmem:[#allocation2] sm:$0xff] 0.0
          %252 = vst [vmem:[#allocation2 + $0x8] sm:$0xff] 0.0
        $region59: #{discriminator_forward.21} parent=50 // pred_fallthru
          _
        %s253 = smul.u32 %s21, 512
        %s254 = smul.u32 %s20, 128
        %s255 = sshra.s32 %s254, 7
        %s256 = sand.u32 %s254, 127
        %s257 = sshra.s32 %s253, 3
        %s258 = sand.u32 %s253, 7
        %s259 = sadd.s32 %s255, %s257
        %s260 = smul.addr %s259, 4
        %s261 = scalar_lea.vmem %s1, %s260
        %v262 = vld [vmem:[%s261] sm:$0xf]
        %v263 = vld [vmem:[%s261 + $0x4] sm:$0xf]
        %v264 = vld [vmem:[%s261 + $0x8] sm:$0xf]
        %v265 = vld [vmem:[%s261 + $0xc] sm:$0xf]
        %v266 = vld [vmem:[%s261 + $0x10] sm:$0xf]
        %v267 = vld [vmem:[%s261 + $0x14] sm:$0xf]
        %v268 = vld [vmem:[%s261 + $0x18] sm:$0xf]
        %v269 = vld [vmem:[%s261 + $0x1c] sm:$0xf]
        %v270 = vld [vmem:[%s261 + $0x20] sm:$0xf]
        %v271 = vld [vmem:[%s261 + $0x24] sm:$0xf]
        %v272 = vld [vmem:[%s261 + $0x28] sm:$0xf]
        %v273 = vld [vmem:[%s261 + $0x2c] sm:$0xf]
        %v274 = vld [vmem:[%s261 + $0x30] sm:$0xf]
        %v275 = vld [vmem:[%s261 + $0x34] sm:$0xf]
        %v276 = vld [vmem:[%s261 + $0x38] sm:$0xf]
        %v277 = vld [vmem:[%s261 + $0x3c] sm:$0xf]
        %v278 = vld [vmem:[%s261 + $0x40] sm:$0xf]
        %v279 = vld [vmem:[%s261 + $0x44] sm:$0xf]
        %v280 = vld [vmem:[%s261 + $0x48] sm:$0xf]
        %v281 = vld [vmem:[%s261 + $0x4c] sm:$0xf]
        %v282 = vld [vmem:[%s261 + $0x50] sm:$0xf]
        %v283 = vld [vmem:[%s261 + $0x54] sm:$0xf]
        %v284 = vld [vmem:[%s261 + $0x58] sm:$0xf]
        %v285 = vld [vmem:[%s261 + $0x5c] sm:$0xf]
        %v286 = vld [vmem:[%s261 + $0x60] sm:$0xf]
        %v287 = vld [vmem:[%s261 + $0x64] sm:$0xf]
        %v288 = vld [vmem:[%s261 + $0x68] sm:$0xf]
        %v289 = vld [vmem:[%s261 + $0x6c] sm:$0xf]
        %v290 = vld [vmem:[%s261 + $0x70] sm:$0xf]
        %v291 = vld [vmem:[%s261 + $0x74] sm:$0xf]
        %v292 = vld [vmem:[%s261 + $0x78] sm:$0xf]
        %v293 = vld [vmem:[%s261 + $0x7c] sm:$0xf]
        %v294 = vld [vmem:[%s261 + $0x80] sm:$0xf]
        %v295 = vld [vmem:[%s261 + $0x84] sm:$0xf]
        %v296 = vld [vmem:[%s261 + $0x88] sm:$0xf]
        %v297 = vld [vmem:[%s261 + $0x8c] sm:$0xf]
        %v298 = vld [vmem:[%s261 + $0x90] sm:$0xf]
        %v299 = vld [vmem:[%s261 + $0x94] sm:$0xf]
        %v300 = vld [vmem:[%s261 + $0x98] sm:$0xf]
        %v301 = vld [vmem:[%s261 + $0x9c] sm:$0xf]
        %v302 = vld [vmem:[%s261 + $0xa0] sm:$0xf]
        %v303 = vld [vmem:[%s261 + $0xa4] sm:$0xf]
        %v304 = vld [vmem:[%s261 + $0xa8] sm:$0xf]
        %v305 = vld [vmem:[%s261 + $0xac] sm:$0xf]
        %v306 = vld [vmem:[%s261 + $0xb0] sm:$0xf]
        %v307 = vld [vmem:[%s261 + $0xb4] sm:$0xf]
        %v308 = vld [vmem:[%s261 + $0xb8] sm:$0xf]
        %v309 = vld [vmem:[%s261 + $0xbc] sm:$0xf]
        %v310 = vld [vmem:[%s261 + $0xc0] sm:$0xf]
        %v311 = vld [vmem:[%s261 + $0xc4] sm:$0xf]
        %v312 = vld [vmem:[%s261 + $0xc8] sm:$0xf]
        %v313 = vld [vmem:[%s261 + $0xcc] sm:$0xf]
        %v314 = vld [vmem:[%s261 + $0xd0] sm:$0xf]
        %v315 = vld [vmem:[%s261 + $0xd4] sm:$0xf]
        %v316 = vld [vmem:[%s261 + $0xd8] sm:$0xf]
        %v317 = vld [vmem:[%s261 + $0xdc] sm:$0xf]
        %v318 = vld [vmem:[%s261 + $0xe0] sm:$0xf]
        %v319 = vld [vmem:[%s261 + $0xe4] sm:$0xf]
        %v320 = vld [vmem:[%s261 + $0xe8] sm:$0xf]
        %v321 = vld [vmem:[%s261 + $0xec] sm:$0xf]
        %v322 = vld [vmem:[%s261 + $0xf0] sm:$0xf]
        %v323 = vld [vmem:[%s261 + $0xf4] sm:$0xf]
        %v324 = vld [vmem:[%s261 + $0xf8] sm:$0xf]
        %v325 = vld [vmem:[%s261 + $0xfc] sm:$0xf]
        %v326 = vld [vmem:[#allocation2] sm:$0xff]
        %v327 = vld [vmem:[#allocation2 + $0x8] sm:$0xff]
        %v328 = vld [vmem:[%s205] sm:$0xff]
        %v329 = vld [vmem:[%s205 + $0x8] sm:$0xff]
        %v330 = vld [vmem:[%s205 + $0x10] sm:$0xff]
        %v331 = vld [vmem:[%s205 + $0x18] sm:$0xff]
        %v336 = vunpack.c.l.b16 %v328
        %v337 = vunpack.c.h.b16 %v328
        %v338 = vunpack.c.l.b16 %v329
        %v339 = vunpack.c.h.b16 %v329
        %v340 = vunpack.c.l.b16 %v330
        %v341 = vunpack.c.h.b16 %v330
        %v342 = vunpack.c.l.b16 %v331
        %v343 = vunpack.c.h.b16 %v331
        %v344 = vpack.c.b16 %v340, %v336
        %v345 = vpack.c.b16 %v341, %v337
        %v346 = vpack.c.b16 %v342, %v338
        %v347 = vpack.c.b16 %v343, %v339
        %v416 = vunpack.c.l.b16 %v262
        %v417 = vunpack.c.l.b16 %v263
        %v418 = vunpack.c.l.b16 %v264
        %v419 = vunpack.c.l.b16 %v265
        %v420 = vunpack.c.l.b16 %v266
        %v421 = vunpack.c.l.b16 %v267
        %v422 = vunpack.c.l.b16 %v268
        %v423 = vunpack.c.l.b16 %v269
        %v424 = vunpack.c.l.b16 %v270
        %v425 = vunpack.c.l.b16 %v271
        %v426 = vunpack.c.l.b16 %v272
        %v427 = vunpack.c.l.b16 %v273
        %v428 = vunpack.c.l.b16 %v274
        %v429 = vunpack.c.l.b16 %v275
        %v430 = vunpack.c.l.b16 %v276
        %v431 = vunpack.c.l.b16 %v277
        %v432 = vunpack.c.l.b16 %v278
        %v433 = vunpack.c.l.b16 %v279
        %v434 = vunpack.c.l.b16 %v280
        %v435 = vunpack.c.l.b16 %v281
        %v436 = vunpack.c.l.b16 %v282
        %v437 = vunpack.c.l.b16 %v283
        %v438 = vunpack.c.l.b16 %v284
        %v439 = vunpack.c.l.b16 %v285
        %v440 = vunpack.c.l.b16 %v286
        %v441 = vunpack.c.l.b16 %v287
        %v442 = vunpack.c.l.b16 %v288
        %v443 = vunpack.c.l.b16 %v289
        %v444 = vunpack.c.l.b16 %v290
        %v445 = vunpack.c.l.b16 %v291
        %v446 = vunpack.c.l.b16 %v292
        %v447 = vunpack.c.l.b16 %v293
        %v448 = vunpack.c.l.b16 %v294
        %v449 = vunpack.c.l.b16 %v295
        %v450 = vunpack.c.l.b16 %v296
        %v451 = vunpack.c.l.b16 %v297
        %v452 = vunpack.c.l.b16 %v298
        %v453 = vunpack.c.l.b16 %v299
        %v454 = vunpack.c.l.b16 %v300
        %v455 = vunpack.c.l.b16 %v301
        %v456 = vunpack.c.l.b16 %v302
        %v457 = vunpack.c.l.b16 %v303
        %v458 = vunpack.c.l.b16 %v304
        %v459 = vunpack.c.l.b16 %v305
        %v460 = vunpack.c.l.b16 %v306
        %v461 = vunpack.c.l.b16 %v307
        %v462 = vunpack.c.l.b16 %v308
        %v463 = vunpack.c.l.b16 %v309
        %v464 = vunpack.c.l.b16 %v310
        %v465 = vunpack.c.l.b16 %v311
        %v466 = vunpack.c.l.b16 %v312
        %v467 = vunpack.c.l.b16 %v313
        %v468 = vunpack.c.l.b16 %v314
        %v469 = vunpack.c.l.b16 %v315
        %v470 = vunpack.c.l.b16 %v316
        %v471 = vunpack.c.l.b16 %v317
        %v472 = vunpack.c.l.b16 %v318
        %v473 = vunpack.c.l.b16 %v319
        %v474 = vunpack.c.l.b16 %v320
        %v475 = vunpack.c.l.b16 %v321
        %v476 = vunpack.c.l.b16 %v322
        %v477 = vunpack.c.l.b16 %v323
        %v478 = vunpack.c.l.b16 %v324
        %v479 = vunpack.c.l.b16 %v325
        %v480 = vpack.c.b16 %v417, %v416
        %v481 = vpack.c.b16 %v419, %v418
        %v482 = vpack.c.b16 %v421, %v420
        %v483 = vpack.c.b16 %v423, %v422
        %v484 = vpack.c.b16 %v425, %v424
        %v485 = vpack.c.b16 %v427, %v426
        %v486 = vpack.c.b16 %v429, %v428
        %v487 = vpack.c.b16 %v431, %v430
        %v488 = vpack.c.b16 %v433, %v432
        %v489 = vpack.c.b16 %v435, %v434
        %v490 = vpack.c.b16 %v437, %v436
        %v491 = vpack.c.b16 %v439, %v438
        %v492 = vpack.c.b16 %v441, %v440
        %v493 = vpack.c.b16 %v443, %v442
        %v494 = vpack.c.b16 %v445, %v444
        %v495 = vpack.c.b16 %v447, %v446
        %v496 = vpack.c.b16 %v449, %v448
        %v497 = vpack.c.b16 %v451, %v450
        %v498 = vpack.c.b16 %v453, %v452
        %v499 = vpack.c.b16 %v455, %v454
        %v500 = vpack.c.b16 %v457, %v456
        %v501 = vpack.c.b16 %v459, %v458
        %v502 = vpack.c.b16 %v461, %v460
        %v503 = vpack.c.b16 %v463, %v462
        %v504 = vpack.c.b16 %v465, %v464
        %v505 = vpack.c.b16 %v467, %v466
        %v506 = vpack.c.b16 %v469, %v468
        %v507 = vpack.c.b16 %v471, %v470
        %v508 = vpack.c.b16 %v473, %v472
        %v509 = vpack.c.b16 %v475, %v474
        %v510 = vpack.c.b16 %v477, %v476
        %v511 = vpack.c.b16 %v479, %v478
        %544 = vmatprep.subr.bf16.mxu0 0
        %545 = vmatpush1.bf16.msra.mxu0 %v487
        %546 = vmatprep.subr.bf16.mxu0 0
        %547 = vmatpush1.bf16.msra.mxu0 %v486
        %548 = vmatprep.subr.bf16.mxu0 0
        %549 = vmatpush1.bf16.msra.mxu0 %v485
        %550 = vmatprep.subr.bf16.mxu0 0
        %551 = vmatpush1.bf16.msra.mxu0 %v484
        %552 = vmatprep.subr.bf16.mxu0 0
        %553 = vmatpush1.bf16.msra.mxu0 %v483
        %554 = vmatprep.subr.bf16.mxu0 0
        %555 = vmatpush1.bf16.msra.mxu0 %v482
        %556 = vmatprep.subr.bf16.mxu0 0
        %557 = vmatpush1.bf16.msra.mxu0 %v481
        %558 = vmatprep.subr.bf16.mxu0 0
        %559 = vmatpush1.bf16.msra.mxu0 %v480
        %560 = vmatprep.subr.bf16.mxu0 0
        %561 = vmatpush2.bf16.msra.mxu0 %v495
        %562 = vmatprep.subr.bf16.mxu0 0
        %563 = vmatpush2.bf16.msra.mxu0 %v494
        %564 = vmatprep.subr.bf16.mxu0 0
        %565 = vmatpush2.bf16.msra.mxu0 %v493
        %566 = vmatprep.subr.bf16.mxu0 0
        %567 = vmatpush2.bf16.msra.mxu0 %v492
        %568 = vmatprep.subr.bf16.mxu0 0
        %569 = vmatpush2.bf16.msra.mxu0 %v491
        %570 = vmatprep.subr.bf16.mxu0 0
        %571 = vmatpush2.bf16.msra.mxu0 %v490
        %572 = vmatprep.subr.bf16.mxu0 0
        %573 = vmatpush2.bf16.msra.mxu0 %v489
        %574 = vmatprep.subr.bf16.mxu0 0
        %575 = vmatpush2.bf16.msra.mxu0 %v488
        %576 = vmatprep.mubr.bf16.mxu0 %v345
        %577 = vmatmul.mubr.bf16.gmra.mxu0 %v344
        %v578 = vpop.f32.mrf.mxu0
        %v579 = vadd.f32 0.0, %v578
        %v580 = vpop.f32.mrf.mxu0
        %v581 = vpop.f32.mrf.mxu0
        %v582 = vadd.f32 0.0, %v581
        %v583 = vpop.f32.mrf.mxu0
        %584 = vdwg.mxu0
        %585 = vmatprep.subr.bf16.mxu0 0
        %586 = vmatpush1.bf16.msra.mxu0 %v503
        %587 = vmatprep.subr.bf16.mxu0 0
        %588 = vmatpush1.bf16.msra.mxu0 %v502
        %589 = vmatprep.subr.bf16.mxu0 0
        %590 = vmatpush1.bf16.msra.mxu0 %v501
        %591 = vmatprep.subr.bf16.mxu0 0
        %592 = vmatpush1.bf16.msra.mxu0 %v500
        %593 = vmatprep.subr.bf16.mxu0 0
        %594 = vmatpush1.bf16.msra.mxu0 %v499
        %595 = vmatprep.subr.bf16.mxu0 0
        %596 = vmatpush1.bf16.msra.mxu0 %v498
        %597 = vmatprep.subr.bf16.mxu0 0
        %598 = vmatpush1.bf16.msra.mxu0 %v497
        %599 = vmatprep.subr.bf16.mxu0 0
        %600 = vmatpush1.bf16.msra.mxu0 %v496
        %601 = vmatprep.subr.bf16.mxu0 0
        %602 = vmatpush2.bf16.msra.mxu0 %v511
        %603 = vmatprep.subr.bf16.mxu0 0
        %604 = vmatpush2.bf16.msra.mxu0 %v510
        %605 = vmatprep.subr.bf16.mxu0 0
        %606 = vmatpush2.bf16.msra.mxu0 %v509
        %607 = vmatprep.subr.bf16.mxu0 0
        %608 = vmatpush2.bf16.msra.mxu0 %v508
        %609 = vmatprep.subr.bf16.mxu0 0
        %610 = vmatpush2.bf16.msra.mxu0 %v507
        %611 = vmatprep.subr.bf16.mxu0 0
        %612 = vmatpush2.bf16.msra.mxu0 %v506
        %613 = vmatprep.subr.bf16.mxu0 0
        %614 = vmatpush2.bf16.msra.mxu0 %v505
        %615 = vmatprep.subr.bf16.mxu0 0
        %616 = vmatpush2.bf16.msra.mxu0 %v504
        %617 = vmatprep.mubr.bf16.mxu0 %v347
        %618 = vmatmul.mubr.bf16.gmra.mxu0 %v346
        %v619 = vpop.f32.mrf.mxu0
        %v620 = vadd.f32 %v579, %v619
        %v621 = vpop.f32.mrf.mxu0
        %v622 = vpop.f32.mrf.mxu0
        %v623 = vadd.f32 %v582, %v622
        %v624 = vpop.f32.mrf.mxu0
        %625 = vdwg.mxu0
        %v626 = vadd.f32 %v326, %v620
        %v627 = vadd.f32 %v327, %v623
        %628 = vst [vmem:[#allocation2] sm:$0xff] %v626
        %629 = vst [vmem:[#allocation2 + $0x8] sm:$0xff] %v627
        %p630 = scmp.eq.s32.totalorder %s21, 15
        // Predicated region
        $region60: #{discriminator_forward.21} parent=50 // pred_check
          %p631 = pneg %p630
        $region61: #{discriminator_forward.21} parent=50 // pred_check_branch
          %633 = sbr.rel (%p631) target = $region63
        $region62: #{discriminator_forward.21} parent=50 // pred_region
          %v634 = vld [vmem:[#allocation2] sm:$0xff]
          %v635 = vld [vmem:[#allocation2 + $0x8] sm:$0xff]
          %v636 = vld [vmem:[%s236] sm:$0x1]
          %v638 = vlaneseq
          %v639 = vshrl.u32 %v638, 7
          %v640 = vsub.s32 0, %v639
          %v641 = vrot.slane %v636, %v640
          %v643 = vadd.f32 %v634, %v641
          %v644 = vadd.f32 %v635, %v641
          %645 = vst [vmem:[%s244] sm:$0xff] %v643
          %646 = vst [vmem:[%s244 + $0x8] sm:$0xff] %v644
        $region63: #{discriminator_forward.21} parent=50 // pred_fallthru
          _
        %s647 = smul.u32 2, %s19
        %p648 = scmp.lt.s32.totalorder %s647, 1
        %s649 = scalar_select %p648, %s647, 1
        %p650 = scmp.lt.s32.totalorder %s20, 0
        %s651 = scalar_select %p650, %s20, 0
        %s652 = sadd.s32 %s651, %s649
        %s653 = smul.addr %s652, 8
        %s654 = scalar_lea.vmem %s3, %s653
        // Predicated region
        $region64: #{discriminator_forward.21} parent=50 // pred_check
          %p655 = pneg %p128
        $region65: #{discriminator_forward.21} parent=50 // pred_check_branch
          %657 = sbr.rel (%p655) target = $region67
        $region66: #{discriminator_forward.21} parent=50 // pred_region
          %s658 = smul.u32 2, %s19
        $region67: #{discriminator_forward.21} parent=50 // pred_fallthru
          _
        // Predicated region
        $region68: #{discriminator_forward.21} parent=50 // pred_check
          %p659 = pneg %p128
        $region69: #{discriminator_forward.21} parent=50 // pred_check_branch
          %661 = sbr.rel (%p659) target = $region71
        $region70: #{discriminator_forward.21} parent=50 // pred_region
          %s662 = smul.u32 2, %s19
          %p663 = scmp.lt.s32.totalorder %s662, 1
          %s664 = scalar_select %p663, %s662, 1
          %p665 = scmp.lt.s32.totalorder %s20, 0
          %s666 = scalar_select %p665, %s20, 0
          %s667 = sadd.s32 %s666, %s664
          %s668 = smul.addr %s667, 8
          %s669 = scalar_lea.vmem %s3, %s668
        $region71: #{discriminator_forward.21} parent=50 // pred_fallthru
          _
      $region51: #{discriminator_forward.21} parent=5 // pred_fallthru
        _
      %p670 = scmp.le.s32.totalorder 2, %s9
      // Predicated region
      $region72: #{discriminator_forward.21} parent=5 // pred_check
        %p671 = pneg %p670
      $region73: #{discriminator_forward.21} parent=5 // pred_check_branch
        %673 = sbr.rel (%p671) target = $region75
      $region74: #{discriminator_forward.21} parent=5 // pred_region
        %s674 = ssub.s32 %s9, 2
      $region75: #{discriminator_forward.21} parent=5 // pred_fallthru
        _
    $region6: #{discriminator_forward.21} parent=1 // loop_footer
      %s13 = sadd.s32 1, %s9
    $region7: #{discriminator_forward.21} parent=1 // loop_footer_branch
      %8 = sbr.rel target = $region3
    $region8: #{discriminator_forward.21} parent=1 // loop_exit
      _

</llo_original>
